<compile_context>
chip_gen: v6e
topology: v6e:2x2x1
jax: 0.10.0
libtpu: 0.0.40
codegen_flags: <defaults>
</compile_context>

<pallas_src>
import jax
import jax.numpy as jnp
from jax import lax
from jax.experimental import pallas as pl
from jax.experimental.pallas import tpu as pltpu


def _round_up(x, m):
    return ((x + m - 1) // m) * m


# ----------------------------------------------------------------------------
# Pallas kernel: whole decoder (T steps x 2 stacked LSTM cells) in one call
# ----------------------------------------------------------------------------
def _decoder_kernel(x_ref, h_init_ref, c_init_ref,
                    w0_ref, b0_ref, w1_ref, b1_ref,
                    out_ref, c_final_ref):
    T = x_ref.shape[0]
    Hp = h_init_ref.shape[-1]            # padded hidden size (multiple of 128)
    bf16 = jnp.bfloat16

    # Loop-invariant bias vregs (hoisted out of the time loop).
    b0 = b0_ref[...]
    b1 = b1_ref[...]

    def cell(xh_bf16, c, w_ref, b):
        # xh_bf16: (Bp, K) bf16; w_ref: (K, 4*Hp) bf16 stacked [[W_ih],[W_hh]].
        # One fused MXU matmul with f32 accumulation; gate blocks are 128-lane
        # aligned so the slices below are free views.
        gates = jnp.dot(xh_bf16, w_ref[...],
                        preferred_element_type=jnp.float32) + b
        i_g = jax.nn.sigmoid(gates[:, 0 * Hp:1 * Hp])
        f_g = jax.nn.sigmoid(gates[:, 1 * Hp:2 * Hp])
        g_g = jnp.tanh(gates[:, 2 * Hp:3 * Hp])
        o_g = jax.nn.sigmoid(gates[:, 3 * Hp:4 * Hp])
        c_new = f_g * c + i_g * g_g
        h_new = o_g * jnp.tanh(c_new)
        return h_new, c_new

    def step(t, carry):
        h0, c0, h1, c1 = carry                       # f32 (Bp, Hp) in vregs
        x_t = x_ref[t]                               # (Bp, Ip) bf16, from VMEM
        # layer 0: gates = [x, h0] @ [[W_ih0],[W_hh0]]
        xh0 = jnp.concatenate([x_t, h0.astype(bf16)], axis=-1)
        h0, c0 = cell(xh0, c0, w0_ref, b0)
        # layer 1: gates = [h0, h1] @ [[W_ih1],[W_hh1]]
        xh1 = jnp.concatenate([h0.astype(bf16), h1.astype(bf16)], axis=-1)
        h1, c1 = cell(xh1, c1, w1_ref, b1)
        out_ref[t] = h1                              # dense (Bp, Hp) store
        return h0, c0, h1, c1

    h_init = h_init_ref[...]
    c_init = c_init_ref[...]
    carry = (h_init, c_init, h_init, c_init)         # h0 = h1 = enc_h, c0 = c1 = enc_c
    unroll = True if T <= 32 else 4                  # give LLO scheduler visibility
    _, _, _, c1 = lax.fori_loop(0, T, step, carry, unroll=unroll)
    c_final_ref[...] = c1                            # written once, after the loop


# ----------------------------------------------------------------------------
# Wrapper: mirrors LSTM_Decoder.forward for inter_modal_out is None
# ----------------------------------------------------------------------------
def lstm_decoder_forward(inputs, encoder_out, encoder_h, params,
                         inter_modal_out=None):
    """inputs: (B, T, I); encoder_h = (h, c), each (B, H)."""
    _enc_out, _enc_c_out = encoder_out      # unpacked but unused on this path
    enc_h, enc_c = encoder_h
    if inter_modal_out is not None:
        # TODO(synk): Attention module definition is not provided; only the
        # inter_modal_out=None path of forward() is implemented.
        raise NotImplementedError("inter-modal attention path not implemented")

    B, T, I = inputs.shape
    H = enc_h.shape[-1]
    Bp = _round_up(B, 8)        # sublane-aligned batch
    Ip = _round_up(I, 128)      # lane-aligned input features
    Hp = _round_up(H, 128)      # lane-aligned hidden features
    f32, bf16 = jnp.float32, jnp.bfloat16

    # --- time-major, batch+feature padded, bf16 input ------------------------
    x_t = jnp.zeros((T, Bp, Ip), bf16)
    x_t = x_t.at[:, :B, :I].set(jnp.transpose(inputs, (1, 0, 2)).astype(bf16))

    # --- weights: stacked [[W_ih],[W_hh]] with gate-blocked, 128-aligned cols
    def gate_cols(w_t, dtype):
        # w_t: (rows, 4H) in PyTorch gate order (i, f, g, o)
        # -> (rows, 4*Hp) with gate g's H real columns at offset g*Hp.
        rows = w_t.shape[0]
        out = jnp.zeros((rows, 4 * Hp), dtype)
        for g in range(4):
            out = out.at[:, g * Hp:g * Hp + H].set(
                w_t[:, g * H:(g + 1) * H].astype(dtype))
        return out

    w0 = jnp.zeros((Ip + Hp, 4 * Hp), bf16)
    w0 = w0.at[:I].set(gate_cols(jnp.transpose(params["w_ih0"]), bf16))
    w0 = w0.at[Ip:Ip + H].set(gate_cols(jnp.transpose(params["w_hh0"]), bf16))

    w1 = jnp.zeros((2 * Hp, 4 * Hp), bf16)
    w1 = w1.at[:H].set(gate_cols(jnp.transpose(params["w_ih1"]), bf16))
    w1 = w1.at[Hp:Hp + H].set(gate_cols(jnp.transpose(params["w_hh1"]), bf16))

    b0 = gate_cols((params["b_ih0"] + params["b_hh0"]).reshape(1, 4 * H), f32)
    b1 = gate_cols((params["b_ih1"] + params["b_hh1"]).reshape(1, 4 * H), f32)

    # --- initial states, batch+hidden padded (padded weight rows are zero, so
    #     padded lanes never contaminate real lanes) ---------------------------
    h0p = jnp.zeros((Bp, Hp), f32).at[:B, :H].set(enc_h.astype(f32))
    c0p = jnp.zeros((Bp, Hp), f32).at[:B, :H].set(enc_c.astype(f32))

    vmem = lambda: pl.BlockSpec(memory_space=pltpu.MemorySpace.VMEM)
    out_t, c_final = pl.pallas_call(
        _decoder_kernel,
        out_shape=(
            jax.ShapeDtypeStruct((T, Bp, Hp), f32),  # h1 per step (padded)
            jax.ShapeDtypeStruct((Bp, Hp), f32),     # final c1 (padded)
        ),
        in_specs=[vmem() for _ in range(7)],
        out_specs=(vmem(), vmem()),
        compiler_params=pltpu.CompilerParams(
            vmem_limit_bytes=32 * 1024 * 1024),
    )(x_t, h0p, c0p, w0, b0, w1, b1)

    out = jnp.transpose(out_t[:, :B, :H], (1, 0, 2))   # (B, T, H)
    h_final = out_t[T - 1, :B, :H]                      # h_final == out[:, -1]
    return out, (h_final, c_final[:B, :H])


# ----------------------------------------------------------------------------
# Pure-JAX f32 reference (matches torch.nn.LSTMCell semantics) for validation
# ----------------------------------------------------------------------------
def _reference(inputs, enc_h, enc_c, params):
    H = enc_h.shape[-1]

    def cell(x, h, c, w_ih, w_hh, b_ih, b_hh):
        gates = x @ w_ih.T + b_ih + h @ w_hh.T + b_hh
        i = jax.nn.sigmoid(gates[:, 0 * H:1 * H])
        f = jax.nn.sigmoid(gates[:, 1 * H:2 * H])
        g = jnp.tanh(gates[:, 2 * H:3 * H])
        o = jax.nn.sigmoid(gates[:, 3 * H:4 * H])
        c_new = f * c + i * g
        return o * jnp.tanh(c_new), c_new

    h0 = h1 = enc_h
    c0 = c1 = enc_c
    outs = []
    for t in range(inputs.shape[1]):
        h0, c0 = cell(inputs[:, t, :], h0, c0, params["w_ih0"], params["w_hh0"],
                      params["b_ih0"], params["b_hh0"])
        h1, c1 = cell(h0, h1, c1, params["w_ih1"], params["w_hh1"],
                      params["b_ih1"], params["b_hh1"])
        outs.append(h1)
    return jnp.stack(outs, axis=1), (h1, c1)


if __name__ == "__main__":
    B, T, I, H = 2, 8, 4, 32   # batch, seq, input_size, hidden_size
    key = jax.random.PRNGKey(0)
    keys = jax.random.split(key, 16)
    bound = 1.0 / jnp.sqrt(jnp.float32(H))   # PyTorch LSTMCell init range

    def u(k, shape):
        return jax.random.uniform(k, shape, jnp.float32, -bound, bound)

    params = {
        "w_ih0": u(keys[0], (4 * H, I)),
        "w_hh0": u(keys[1], (4 * H, H)),
        "b_ih0": u(keys[2], (4 * H,)),
        "b_hh0": u(keys[3], (4 * H,)),
        "w_ih1": u(keys[4], (4 * H, H)),
        "w_hh1": u(keys[5], (4 * H, H)),
        "b_ih1": u(keys[6], (4 * H,)),
        "b_hh1": u(keys[7], (4 * H,)),
    }

    x = jax.random.normal(keys[8], (B, T, I), jnp.float32)
    encoder_h = jax.random.normal(keys[9], (B, H), jnp.float32)
    encoder_c = jax.random.normal(keys[10], (B, H), jnp.float32)
    # encoder_out tuple is accepted (to match the torch signature) but unused
    # on the inter_modal_out=None path.
    encoder_out = (jax.random.normal(keys[11], (B, T, H), jnp.float32),
                   jax.random.normal(keys[12], (B, T, H), jnp.float32))

    fwd = jax.jit(lambda xx, eo, eh, pp: lstm_decoder_forward(xx, eo, eh, pp))
    out, (hT, cT) = fwd(x, encoder_out, (encoder_h, encoder_c), params)
    jax.block_until_ready((out, hT, cT))

    ref_out, (ref_h, ref_c) = _reference(x, encoder_h, encoder_c, params)
    assert out.shape == (B, T, H) and hT.shape == (B, H) and cT.shape == (B, H)
    # bf16 matmul operands (f32 accumulation/state) -> slightly looser tolerance.
    assert jnp.allclose(out, ref_out, rtol=2e-2, atol=2e-2)
    assert jnp.allclose(hT, ref_h, rtol=2e-2, atol=2e-2)
    assert jnp.allclose(cT, ref_c, rtol=2e-2, atol=2e-2)

    print("KERNEL_OK")
</pallas_src>

<mosaic_0001>
module attributes {stable_mosaic.version = 11 : i64} {
  func.func @_decoder_kernel(%arg0: memref<8x8x128xbf16, #tpu.memory_space<vmem>>, %arg1: memref<8x128xf32, #tpu.memory_space<vmem>>, %arg2: memref<8x128xf32, #tpu.memory_space<vmem>>, %arg3: memref<256x512xbf16, #tpu.memory_space<vmem>>, %arg4: memref<1x512xf32, #tpu.memory_space<vmem>>, %arg5: memref<256x512xbf16, #tpu.memory_space<vmem>>, %arg6: memref<1x512xf32, #tpu.memory_space<vmem>>, %arg7: memref<8x8x128xf32, #tpu.memory_space<vmem>>, %arg8: memref<8x128xf32, #tpu.memory_space<vmem>>) attributes {dimension_semantics = [], scalar_prefetch = 0 : i64, scratch_operands = 0 : i64, tpu.core_type = #tpu.core_type<tc>} {
    %c0 = arith.constant 0 : index
    %c0_0 = arith.constant 0 : index
    %0 = vector.load %arg4[%c0, %c0_0] : memref<1x512xf32, #tpu.memory_space<vmem>>, vector<1x512xf32>
    %c0_1 = arith.constant 0 : index
    %c0_2 = arith.constant 0 : index
    %1 = vector.load %arg6[%c0_1, %c0_2] : memref<1x512xf32, #tpu.memory_space<vmem>>, vector<1x512xf32>
    %c0_3 = arith.constant 0 : index
    %c0_4 = arith.constant 0 : index
    %2 = vector.load %arg1[%c0_3, %c0_4] : memref<8x128xf32, #tpu.memory_space<vmem>>, vector<8x128xf32>
    %c0_5 = arith.constant 0 : index
    %c0_6 = arith.constant 0 : index
    %3 = vector.load %arg2[%c0_5, %c0_6] : memref<8x128xf32, #tpu.memory_space<vmem>>, vector<8x128xf32>
    %c0_i32 = arith.constant 0 : i32
    %4 = arith.index_cast %c0_i32 : i32 to index
    %c0_7 = arith.constant 0 : index
    %c0_8 = arith.constant 0 : index
    %5 = vector.load %arg0[%4, %c0_7, %c0_8] : memref<8x8x128xbf16, #tpu.memory_space<vmem>>, vector<1x8x128xbf16>
    %6 = vector.shape_cast %5 : vector<1x8x128xbf16> to vector<8x128xbf16>
    %7 = arith.truncf %2 : vector<8x128xf32> to vector<8x128xbf16>
    %8 = tpu.concatenate %6, %7 in 1 : vector<8x128xbf16>, vector<8x128xbf16> -> vector<8x256xbf16>
    %c0_9 = arith.constant 0 : index
    %c0_10 = arith.constant 0 : index
    %9 = vector.load %arg3[%c0_9, %c0_10] : memref<256x512xbf16, #tpu.memory_space<vmem>>, vector<256x512xbf16>
    %cst = arith.constant dense<0.000000e+00> : vector<8x512xf32>
    %10 = tpu.matmul %8, %9, %cst {dimension_numbers = #tpu.dot_dimension_numbers<[1], [0], [0], [1], [0, 0, 1, 1], [], []>} : vector<8x256xbf16>, vector<256x512xbf16>, vector<8x512xf32> -> vector<8x512xf32>
    %11 = vector.broadcast %0 : vector<1x512xf32> to vector<8x512xf32>
    %12 = arith.addf %10, %11 : vector<8x512xf32>
    %13 = vector.extract_strided_slice %12 {offsets = [0, 0], sizes = [8, 128], strides = [1, 1]} : vector<8x512xf32> to vector<8x128xf32>
    %14 = arith.negf %13 : vector<8x128xf32>
    %15 = math.exp %14 : vector<8x128xf32>
    %cst_11 = arith.constant 1.000000e+00 : f32
    %16 = vector.broadcast %cst_11 : f32 to vector<8x128xf32>
    %17 = arith.addf %16, %15 : vector<8x128xf32>
    %18 = arith.divf %16, %17 : vector<8x128xf32>
    %19 = vector.extract_strided_slice %12 {offsets = [0, 128], sizes = [8, 128], strides = [1, 1]} : vector<8x512xf32> to vector<8x128xf32>
    %20 = arith.negf %19 : vector<8x128xf32>
    %21 = math.exp %20 : vector<8x128xf32>
    %cst_12 = arith.constant 1.000000e+00 : f32
    %22 = vector.broadcast %cst_12 : f32 to vector<8x128xf32>
    %23 = arith.addf %22, %21 : vector<8x128xf32>
    %24 = arith.divf %22, %23 : vector<8x128xf32>
    %25 = vector.extract_strided_slice %12 {offsets = [0, 256], sizes = [8, 128], strides = [1, 1]} : vector<8x512xf32> to vector<8x128xf32>
    %26 = math.tanh %25 : vector<8x128xf32>
    %27 = vector.extract_strided_slice %12 {offsets = [0, 384], sizes = [8, 128], strides = [1, 1]} : vector<8x512xf32> to vector<8x128xf32>
    %28 = arith.negf %27 : vector<8x128xf32>
    %29 = math.exp %28 : vector<8x128xf32>
    %cst_13 = arith.constant 1.000000e+00 : f32
    %30 = vector.broadcast %cst_13 : f32 to vector<8x128xf32>
    %31 = arith.addf %30, %29 : vector<8x128xf32>
    %32 = arith.divf %30, %31 : vector<8x128xf32>
    %33 = arith.mulf %24, %3 : vector<8x128xf32>
    %34 = arith.mulf %18, %26 : vector<8x128xf32>
    %35 = arith.addf %33, %34 : vector<8x128xf32>
    %36 = math.tanh %35 : vector<8x128xf32>
    %37 = arith.mulf %32, %36 : vector<8x128xf32>
    %38 = arith.truncf %37 : vector<8x128xf32> to vector<8x128xbf16>
    %39 = arith.truncf %2 : vector<8x128xf32> to vector<8x128xbf16>
    %40 = tpu.concatenate %38, %39 in 1 : vector<8x128xbf16>, vector<8x128xbf16> -> vector<8x256xbf16>
    %c0_14 = arith.constant 0 : index
    %c0_15 = arith.constant 0 : index
    %41 = vector.load %arg5[%c0_14, %c0_15] : memref<256x512xbf16, #tpu.memory_space<vmem>>, vector<256x512xbf16>
    %cst_16 = arith.constant dense<0.000000e+00> : vector<8x512xf32>
    %42 = tpu.matmul %40, %41, %cst_16 {dimension_numbers = #tpu.dot_dimension_numbers<[1], [0], [0], [1], [0, 0, 1, 1], [], []>} : vector<8x256xbf16>, vector<256x512xbf16>, vector<8x512xf32> -> vector<8x512xf32>
    %43 = vector.broadcast %1 : vector<1x512xf32> to vector<8x512xf32>
    %44 = arith.addf %42, %43 : vector<8x512xf32>
    %45 = vector.extract_strided_slice %44 {offsets = [0, 0], sizes = [8, 128], strides = [1, 1]} : vector<8x512xf32> to vector<8x128xf32>
    %46 = arith.negf %45 : vector<8x128xf32>
    %47 = math.exp %46 : vector<8x128xf32>
    %cst_17 = arith.constant 1.000000e+00 : f32
    %48 = vector.broadcast %cst_17 : f32 to vector<8x128xf32>
    %49 = arith.addf %48, %47 : vector<8x128xf32>
    %50 = arith.divf %48, %49 : vector<8x128xf32>
    %51 = vector.extract_strided_slice %44 {offsets = [0, 128], sizes = [8, 128], strides = [1, 1]} : vector<8x512xf32> to vector<8x128xf32>
    %52 = arith.negf %51 : vector<8x128xf32>
    %53 = math.exp %52 : vector<8x128xf32>
    %cst_18 = arith.constant 1.000000e+00 : f32
    %54 = vector.broadcast %cst_18 : f32 to vector<8x128xf32>
    %55 = arith.addf %54, %53 : vector<8x128xf32>
    %56 = arith.divf %54, %55 : vector<8x128xf32>
    %57 = vector.extract_strided_slice %44 {offsets = [0, 256], sizes = [8, 128], strides = [1, 1]} : vector<8x512xf32> to vector<8x128xf32>
    %58 = math.tanh %57 : vector<8x128xf32>
    %59 = vector.extract_strided_slice %44 {offsets = [0, 384], sizes = [8, 128], strides = [1, 1]} : vector<8x512xf32> to vector<8x128xf32>
    %60 = arith.negf %59 : vector<8x128xf32>
    %61 = math.exp %60 : vector<8x128xf32>
    %cst_19 = arith.constant 1.000000e+00 : f32
    %62 = vector.broadcast %cst_19 : f32 to vector<8x128xf32>
    %63 = arith.addf %62, %61 : vector<8x128xf32>
    %64 = arith.divf %62, %63 : vector<8x128xf32>
    %65 = arith.mulf %56, %3 : vector<8x128xf32>
    %66 = arith.mulf %50, %58 : vector<8x128xf32>
    %67 = arith.addf %65, %66 : vector<8x128xf32>
    %68 = math.tanh %67 : vector<8x128xf32>
    %69 = arith.mulf %64, %68 : vector<8x128xf32>
    %70 = arith.index_cast %c0_i32 : i32 to index
    %c0_20 = arith.constant 0 : index
    %c0_21 = arith.constant 0 : index
    %71 = vector.load %arg7[%70, %c0_20, %c0_21] : memref<8x8x128xf32, #tpu.memory_space<vmem>>, vector<1x8x128xf32>
    %72 = vector.shape_cast %71 : vector<1x8x128xf32> to vector<8x128xf32>
    %73 = vector.shape_cast %69 : vector<8x128xf32> to vector<1x8x128xf32>
    tpu.vector_store %arg7[%70, %c0_20, %c0_21], %73 {strides = array<i32>} : memref<8x8x128xf32, #tpu.memory_space<vmem>>, vector<1x8x128xf32>,
    %c1_i32 = arith.constant 1 : i32
    %74 = arith.index_cast %c1_i32 : i32 to index
    %c0_22 = arith.constant 0 : index
    %c0_23 = arith.constant 0 : index
    %75 = vector.load %arg0[%74, %c0_22, %c0_23] : memref<8x8x128xbf16, #tpu.memory_space<vmem>>, vector<1x8x128xbf16>
    %76 = vector.shape_cast %75 : vector<1x8x128xbf16> to vector<8x128xbf16>
    %77 = arith.truncf %37 : vector<8x128xf32> to vector<8x128xbf16>
    %78 = tpu.concatenate %76, %77 in 1 : vector<8x128xbf16>, vector<8x128xbf16> -> vector<8x256xbf16>
    %c0_24 = arith.constant 0 : index
    %c0_25 = arith.constant 0 : index
    %79 = vector.load %arg3[%c0_24, %c0_25] : memref<256x512xbf16, #tpu.memory_space<vmem>>, vector<256x512xbf16>
    %cst_26 = arith.constant dense<0.000000e+00> : vector<8x512xf32>
    %80 = tpu.matmul %78, %79, %cst_26 {dimension_numbers = #tpu.dot_dimension_numbers<[1], [0], [0], [1], [0, 0, 1, 1], [], []>} : vector<8x256xbf16>, vector<256x512xbf16>, vector<8x512xf32> -> vector<8x512xf32>
    %81 = vector.broadcast %0 : vector<1x512xf32> to vector<8x512xf32>
    %82 = arith.addf %80, %81 : vector<8x512xf32>
    %83 = vector.extract_strided_slice %82 {offsets = [0, 0], sizes = [8, 128], strides = [1, 1]} : vector<8x512xf32> to vector<8x128xf32>
    %84 = arith.negf %83 : vector<8x128xf32>
    %85 = math.exp %84 : vector<8x128xf32>
    %cst_27 = arith.constant 1.000000e+00 : f32
    %86 = vector.broadcast %cst_27 : f32 to vector<8x128xf32>
    %87 = arith.addf %86, %85 : vector<8x128xf32>
    %88 = arith.divf %86, %87 : vector<8x128xf32>
    %89 = vector.extract_strided_slice %82 {offsets = [0, 128], sizes = [8, 128], strides = [1, 1]} : vector<8x512xf32> to vector<8x128xf32>
    %90 = arith.negf %89 : vector<8x128xf32>
    %91 = math.exp %90 : vector<8x128xf32>
    %cst_28 = arith.constant 1.000000e+00 : f32
    %92 = vector.broadcast %cst_28 : f32 to vector<8x128xf32>
    %93 = arith.addf %92, %91 : vector<8x128xf32>
    %94 = arith.divf %92, %93 : vector<8x128xf32>
    %95 = vector.extract_strided_slice %82 {offsets = [0, 256], sizes = [8, 128], strides = [1, 1]} : vector<8x512xf32> to vector<8x128xf32>
    %96 = math.tanh %95 : vector<8x128xf32>
    %97 = vector.extract_strided_slice %82 {offsets = [0, 384], sizes = [8, 128], strides = [1, 1]} : vector<8x512xf32> to vector<8x128xf32>
    %98 = arith.negf %97 : vector<8x128xf32>
    %99 = math.exp %98 : vector<8x128xf32>
    %cst_29 = arith.constant 1.000000e+00 : f32
    %100 = vector.broadcast %cst_29 : f32 to vector<8x128xf32>
    %101 = arith.addf %100, %99 : vector<8x128xf32>
    %102 = arith.divf %100, %101 : vector<8x128xf32>
    %103 = arith.mulf %94, %35 : vector<8x128xf32>
    %104 = arith.mulf %88, %96 : vector<8x128xf32>
    %105 = arith.addf %103, %104 : vector<8x128xf32>
    %106 = math.tanh %105 : vector<8x128xf32>
    %107 = arith.mulf %102, %106 : vector<8x128xf32>
    %108 = arith.truncf %107 : vector<8x128xf32> to vector<8x128xbf16>
    %109 = arith.truncf %69 : vector<8x128xf32> to vector<8x128xbf16>
    %110 = tpu.concatenate %108, %109 in 1 : vector<8x128xbf16>, vector<8x128xbf16> -> vector<8x256xbf16>
    %c0_30 = arith.constant 0 : index
    %c0_31 = arith.constant 0 : index
    %111 = vector.load %arg5[%c0_30, %c0_31] : memref<256x512xbf16, #tpu.memory_space<vmem>>, vector<256x512xbf16>
    %cst_32 = arith.constant dense<0.000000e+00> : vector<8x512xf32>
    %112 = tpu.matmul %110, %111, %cst_32 {dimension_numbers = #tpu.dot_dimension_numbers<[1], [0], [0], [1], [0, 0, 1, 1], [], []>} : vector<8x256xbf16>, vector<256x512xbf16>, vector<8x512xf32> -> vector<8x512xf32>
    %113 = vector.broadcast %1 : vector<1x512xf32> to vector<8x512xf32>
    %114 = arith.addf %112, %113 : vector<8x512xf32>
    %115 = vector.extract_strided_slice %114 {offsets = [0, 0], sizes = [8, 128], strides = [1, 1]} : vector<8x512xf32> to vector<8x128xf32>
    %116 = arith.negf %115 : vector<8x128xf32>
    %117 = math.exp %116 : vector<8x128xf32>
    %cst_33 = arith.constant 1.000000e+00 : f32
    %118 = vector.broadcast %cst_33 : f32 to vector<8x128xf32>
    %119 = arith.addf %118, %117 : vector<8x128xf32>
    %120 = arith.divf %118, %119 : vector<8x128xf32>
    %121 = vector.extract_strided_slice %114 {offsets = [0, 128], sizes = [8, 128], strides = [1, 1]} : vector<8x512xf32> to vector<8x128xf32>
    %122 = arith.negf %121 : vector<8x128xf32>
    %123 = math.exp %122 : vector<8x128xf32>
    %cst_34 = arith.constant 1.000000e+00 : f32
    %124 = vector.broadcast %cst_34 : f32 to vector<8x128xf32>
    %125 = arith.addf %124, %123 : vector<8x128xf32>
    %126 = arith.divf %124, %125 : vector<8x128xf32>
    %127 = vector.extract_strided_slice %114 {offsets = [0, 256], sizes = [8, 128], strides = [1, 1]} : vector<8x512xf32> to vector<8x128xf32>
    %128 = math.tanh %127 : vector<8x128xf32>
    %129 = vector.extract_strided_slice %114 {offsets = [0, 384], sizes = [8, 128], strides = [1, 1]} : vector<8x512xf32> to vector<8x128xf32>
    %130 = arith.negf %129 : vector<8x128xf32>
    %131 = math.exp %130 : vector<8x128xf32>
    %cst_35 = arith.constant 1.000000e+00 : f32
    %132 = vector.broadcast %cst_35 : f32 to vector<8x128xf32>
    %133 = arith.addf %132, %131 : vector<8x128xf32>
    %134 = arith.divf %132, %133 : vector<8x128xf32>
    %135 = arith.mulf %126, %67 : vector<8x128xf32>
    %136 = arith.mulf %120, %128 : vector<8x128xf32>
    %137 = arith.addf %135, %136 : vector<8x128xf32>
    %138 = math.tanh %137 : vector<8x128xf32>
    %139 = arith.mulf %134, %138 : vector<8x128xf32>
    %140 = arith.index_cast %c1_i32 : i32 to index
    %c0_36 = arith.constant 0 : index
    %c0_37 = arith.constant 0 : index
    %141 = vector.load %arg7[%140, %c0_36, %c0_37] : memref<8x8x128xf32, #tpu.memory_space<vmem>>, vector<1x8x128xf32>
    %142 = vector.shape_cast %141 : vector<1x8x128xf32> to vector<8x128xf32>
    %143 = vector.shape_cast %139 : vector<8x128xf32> to vector<1x8x128xf32>
    tpu.vector_store %arg7[%140, %c0_36, %c0_37], %143 {strides = array<i32>} : memref<8x8x128xf32, #tpu.memory_space<vmem>>, vector<1x8x128xf32>,
    %c2_i32 = arith.constant 2 : i32
    %144 = arith.index_cast %c2_i32 : i32 to index
    %c0_38 = arith.constant 0 : index
    %c0_39 = arith.constant 0 : index
    %145 = vector.load %arg0[%144, %c0_38, %c0_39] : memref<8x8x128xbf16, #tpu.memory_space<vmem>>, vector<1x8x128xbf16>
    %146 = vector.shape_cast %145 : vector<1x8x128xbf16> to vector<8x128xbf16>
    %147 = arith.truncf %107 : vector<8x128xf32> to vector<8x128xbf16>
    %148 = tpu.concatenate %146, %147 in 1 : vector<8x128xbf16>, vector<8x128xbf16> -> vector<8x256xbf16>
    %c0_40 = arith.constant 0 : index
    %c0_41 = arith.constant 0 : index
    %149 = vector.load %arg3[%c0_40, %c0_41] : memref<256x512xbf16, #tpu.memory_space<vmem>>, vector<256x512xbf16>
    %cst_42 = arith.constant dense<0.000000e+00> : vector<8x512xf32>
    %150 = tpu.matmul %148, %149, %cst_42 {dimension_numbers = #tpu.dot_dimension_numbers<[1], [0], [0], [1], [0, 0, 1, 1], [], []>} : vector<8x256xbf16>, vector<256x512xbf16>, vector<8x512xf32> -> vector<8x512xf32>
    %151 = vector.broadcast %0 : vector<1x512xf32> to vector<8x512xf32>
    %152 = arith.addf %150, %151 : vector<8x512xf32>
    %153 = vector.extract_strided_slice %152 {offsets = [0, 0], sizes = [8, 128], strides = [1, 1]} : vector<8x512xf32> to vector<8x128xf32>
    %154 = arith.negf %153 : vector<8x128xf32>
    %155 = math.exp %154 : vector<8x128xf32>
    %cst_43 = arith.constant 1.000000e+00 : f32
    %156 = vector.broadcast %cst_43 : f32 to vector<8x128xf32>
    %157 = arith.addf %156, %155 : vector<8x128xf32>
    %158 = arith.divf %156, %157 : vector<8x128xf32>
    %159 = vector.extract_strided_slice %152 {offsets = [0, 128], sizes = [8, 128], strides = [1, 1]} : vector<8x512xf32> to vector<8x128xf32>
    %160 = arith.negf %159 : vector<8x128xf32>
    %161 = math.exp %160 : vector<8x128xf32>
    %cst_44 = arith.constant 1.000000e+00 : f32
    %162 = vector.broadcast %cst_44 : f32 to vector<8x128xf32>
    %163 = arith.addf %162, %161 : vector<8x128xf32>
    %164 = arith.divf %162, %163 : vector<8x128xf32>
    %165 = vector.extract_strided_slice %152 {offsets = [0, 256], sizes = [8, 128], strides = [1, 1]} : vector<8x512xf32> to vector<8x128xf32>
    %166 = math.tanh %165 : vector<8x128xf32>
    %167 = vector.extract_strided_slice %152 {offsets = [0, 384], sizes = [8, 128], strides = [1, 1]} : vector<8x512xf32> to vector<8x128xf32>
    %168 = arith.negf %167 : vector<8x128xf32>
    %169 = math.exp %168 : vector<8x128xf32>
    %cst_45 = arith.constant 1.000000e+00 : f32
    %170 = vector.broadcast %cst_45 : f32 to vector<8x128xf32>
    %171 = arith.addf %170, %169 : vector<8x128xf32>
    %172 = arith.divf %170, %171 : vector<8x128xf32>
    %173 = arith.mulf %164, %105 : vector<8x128xf32>
    %174 = arith.mulf %158, %166 : vector<8x128xf32>
    %175 = arith.addf %173, %174 : vector<8x128xf32>
    %176 = math.tanh %175 : vector<8x128xf32>
    %177 = arith.mulf %172, %176 : vector<8x128xf32>
    %178 = arith.truncf %177 : vector<8x128xf32> to vector<8x128xbf16>
    %179 = arith.truncf %139 : vector<8x128xf32> to vector<8x128xbf16>
    %180 = tpu.concatenate %178, %179 in 1 : vector<8x128xbf16>, vector<8x128xbf16> -> vector<8x256xbf16>
    %c0_46 = arith.constant 0 : index
    %c0_47 = arith.constant 0 : index
    %181 = vector.load %arg5[%c0_46, %c0_47] : memref<256x512xbf16, #tpu.memory_space<vmem>>, vector<256x512xbf16>
    %cst_48 = arith.constant dense<0.000000e+00> : vector<8x512xf32>
    %182 = tpu.matmul %180, %181, %cst_48 {dimension_numbers = #tpu.dot_dimension_numbers<[1], [0], [0], [1], [0, 0, 1, 1], [], []>} : vector<8x256xbf16>, vector<256x512xbf16>, vector<8x512xf32> -> vector<8x512xf32>
    %183 = vector.broadcast %1 : vector<1x512xf32> to vector<8x512xf32>
    %184 = arith.addf %182, %183 : vector<8x512xf32>
    %185 = vector.extract_strided_slice %184 {offsets = [0, 0], sizes = [8, 128], strides = [1, 1]} : vector<8x512xf32> to vector<8x128xf32>
    %186 = arith.negf %185 : vector<8x128xf32>
    %187 = math.exp %186 : vector<8x128xf32>
    %cst_49 = arith.constant 1.000000e+00 : f32
    %188 = vector.broadcast %cst_49 : f32 to vector<8x128xf32>
    %189 = arith.addf %188, %187 : vector<8x128xf32>
    %190 = arith.divf %188, %189 : vector<8x128xf32>
    %191 = vector.extract_strided_slice %184 {offsets = [0, 128], sizes = [8, 128], strides = [1, 1]} : vector<8x512xf32> to vector<8x128xf32>
    %192 = arith.negf %191 : vector<8x128xf32>
    %193 = math.exp %192 : vector<8x128xf32>
    %cst_50 = arith.constant 1.000000e+00 : f32
    %194 = vector.broadcast %cst_50 : f32 to vector<8x128xf32>
    %195 = arith.addf %194, %193 : vector<8x128xf32>
    %196 = arith.divf %194, %195 : vector<8x128xf32>
    %197 = vector.extract_strided_slice %184 {offsets = [0, 256], sizes = [8, 128], strides = [1, 1]} : vector<8x512xf32> to vector<8x128xf32>
    %198 = math.tanh %197 : vector<8x128xf32>
    %199 = vector.extract_strided_slice %184 {offsets = [0, 384], sizes = [8, 128], strides = [1, 1]} : vector<8x512xf32> to vector<8x128xf32>
    %200 = arith.negf %199 : vector<8x128xf32>
    %201 = math.exp %200 : vector<8x128xf32>
    %cst_51 = arith.constant 1.000000e+00 : f32
    %202 = vector.broadcast %cst_51 : f32 to vector<8x128xf32>
    %203 = arith.addf %202, %201 : vector<8x128xf32>
    %204 = arith.divf %202, %203 : vector<8x128xf32>
    %205 = arith.mulf %196, %137 : vector<8x128xf32>
    %206 = arith.mulf %190, %198 : vector<8x128xf32>
    %207 = arith.addf %205, %206 : vector<8x128xf32>
    %208 = math.tanh %207 : vector<8x128xf32>
    %209 = arith.mulf %204, %208 : vector<8x128xf32>
    %210 = arith.index_cast %c2_i32 : i32 to index
    %c0_52 = arith.constant 0 : index
    %c0_53 = arith.constant 0 : index
    %211 = vector.load %arg7[%210, %c0_52, %c0_53] : memref<8x8x128xf32, #tpu.memory_space<vmem>>, vector<1x8x128xf32>
    %212 = vector.shape_cast %211 : vector<1x8x128xf32> to vector<8x128xf32>
    %213 = vector.shape_cast %209 : vector<8x128xf32> to vector<1x8x128xf32>
    tpu.vector_store %arg7[%210, %c0_52, %c0_53], %213 {strides = array<i32>} : memref<8x8x128xf32, #tpu.memory_space<vmem>>, vector<1x8x128xf32>,
    %c3_i32 = arith.constant 3 : i32
    %214 = arith.index_cast %c3_i32 : i32 to index
    %c0_54 = arith.constant 0 : index
    %c0_55 = arith.constant 0 : index
    %215 = vector.load %arg0[%214, %c0_54, %c0_55] : memref<8x8x128xbf16, #tpu.memory_space<vmem>>, vector<1x8x128xbf16>
    %216 = vector.shape_cast %215 : vector<1x8x128xbf16> to vector<8x128xbf16>
    %217 = arith.truncf %177 : vector<8x128xf32> to vector<8x128xbf16>
    %218 = tpu.concatenate %216, %217 in 1 : vector<8x128xbf16>, vector<8x128xbf16> -> vector<8x256xbf16>
    %c0_56 = arith.constant 0 : index
    %c0_57 = arith.constant 0 : index
    %219 = vector.load %arg3[%c0_56, %c0_57] : memref<256x512xbf16, #tpu.memory_space<vmem>>, vector<256x512xbf16>
    %cst_58 = arith.constant dense<0.000000e+00> : vector<8x512xf32>
    %220 = tpu.matmul %218, %219, %cst_58 {dimension_numbers = #tpu.dot_dimension_numbers<[1], [0], [0], [1], [0, 0, 1, 1], [], []>} : vector<8x256xbf16>, vector<256x512xbf16>, vector<8x512xf32> -> vector<8x512xf32>
    %221 = vector.broadcast %0 : vector<1x512xf32> to vector<8x512xf32>
    %222 = arith.addf %220, %221 : vector<8x512xf32>
    %223 = vector.extract_strided_slice %222 {offsets = [0, 0], sizes = [8, 128], strides = [1, 1]} : vector<8x512xf32> to vector<8x128xf32>
    %224 = arith.negf %223 : vector<8x128xf32>
    %225 = math.exp %224 : vector<8x128xf32>
    %cst_59 = arith.constant 1.000000e+00 : f32
    %226 = vector.broadcast %cst_59 : f32 to vector<8x128xf32>
    %227 = arith.addf %226, %225 : vector<8x128xf32>
    %228 = arith.divf %226, %227 : vector<8x128xf32>
    %229 = vector.extract_strided_slice %222 {offsets = [0, 128], sizes = [8, 128], strides = [1, 1]} : vector<8x512xf32> to vector<8x128xf32>
    %230 = arith.negf %229 : vector<8x128xf32>
    %231 = math.exp %230 : vector<8x128xf32>
    %cst_60 = arith.constant 1.000000e+00 : f32
    %232 = vector.broadcast %cst_60 : f32 to vector<8x128xf32>
    %233 = arith.addf %232, %231 : vector<8x128xf32>
    %234 = arith.divf %232, %233 : vector<8x128xf32>
    %235 = vector.extract_strided_slice %222 {offsets = [0, 256], sizes = [8, 128], strides = [1, 1]} : vector<8x512xf32> to vector<8x128xf32>
    %236 = math.tanh %235 : vector<8x128xf32>
    %237 = vector.extract_strided_slice %222 {offsets = [0, 384], sizes = [8, 128], strides = [1, 1]} : vector<8x512xf32> to vector<8x128xf32>
    %238 = arith.negf %237 : vector<8x128xf32>
    %239 = math.exp %238 : vector<8x128xf32>
    %cst_61 = arith.constant 1.000000e+00 : f32
    %240 = vector.broadcast %cst_61 : f32 to vector<8x128xf32>
    %241 = arith.addf %240, %239 : vector<8x128xf32>
    %242 = arith.divf %240, %241 : vector<8x128xf32>
    %243 = arith.mulf %234, %175 : vector<8x128xf32>
    %244 = arith.mulf %228, %236 : vector<8x128xf32>
    %245 = arith.addf %243, %244 : vector<8x128xf32>
    %246 = math.tanh %245 : vector<8x128xf32>
    %247 = arith.mulf %242, %246 : vector<8x128xf32>
    %248 = arith.truncf %247 : vector<8x128xf32> to vector<8x128xbf16>
    %249 = arith.truncf %209 : vector<8x128xf32> to vector<8x128xbf16>
    %250 = tpu.concatenate %248, %249 in 1 : vector<8x128xbf16>, vector<8x128xbf16> -> vector<8x256xbf16>
    %c0_62 = arith.constant 0 : index
    %c0_63 = arith.constant 0 : index
    %251 = vector.load %arg5[%c0_62, %c0_63] : memref<256x512xbf16, #tpu.memory_space<vmem>>, vector<256x512xbf16>
    %cst_64 = arith.constant dense<0.000000e+00> : vector<8x512xf32>
    %252 = tpu.matmul %250, %251, %cst_64 {dimension_numbers = #tpu.dot_dimension_numbers<[1], [0], [0], [1], [0, 0, 1, 1], [], []>} : vector<8x256xbf16>, vector<256x512xbf16>, vector<8x512xf32> -> vector<8x512xf32>
    %253 = vector.broadcast %1 : vector<1x512xf32> to vector<8x512xf32>
    %254 = arith.addf %252, %253 : vector<8x512xf32>
    %255 = vector.extract_strided_slice %254 {offsets = [0, 0], sizes = [8, 128], strides = [1, 1]} : vector<8x512xf32> to vector<8x128xf32>
    %256 = arith.negf %255 : vector<8x128xf32>
    %257 = math.exp %256 : vector<8x128xf32>
    %cst_65 = arith.constant 1.000000e+00 : f32
    %258 = vector.broadcast %cst_65 : f32 to vector<8x128xf32>
    %259 = arith.addf %258, %257 : vector<8x128xf32>
    %260 = arith.divf %258, %259 : vector<8x128xf32>
    %261 = vector.extract_strided_slice %254 {offsets = [0, 128], sizes = [8, 128], strides = [1, 1]} : vector<8x512xf32> to vector<8x128xf32>
    %262 = arith.negf %261 : vector<8x128xf32>
    %263 = math.exp %262 : vector<8x128xf32>
    %cst_66 = arith.constant 1.000000e+00 : f32
    %264 = vector.broadcast %cst_66 : f32 to vector<8x128xf32>
    %265 = arith.addf %264, %263 : vector<8x128xf32>
    %266 = arith.divf %264, %265 : vector<8x128xf32>
    %267 = vector.extract_strided_slice %254 {offsets = [0, 256], sizes = [8, 128], strides = [1, 1]} : vector<8x512xf32> to vector<8x128xf32>
    %268 = math.tanh %267 : vector<8x128xf32>
    %269 = vector.extract_strided_slice %254 {offsets = [0, 384], sizes = [8, 128], strides = [1, 1]} : vector<8x512xf32> to vector<8x128xf32>
    %270 = arith.negf %269 : vector<8x128xf32>
    %271 = math.exp %270 : vector<8x128xf32>
    %cst_67 = arith.constant 1.000000e+00 : f32
    %272 = vector.broadcast %cst_67 : f32 to vector<8x128xf32>
    %273 = arith.addf %272, %271 : vector<8x128xf32>
    %274 = arith.divf %272, %273 : vector<8x128xf32>
    %275 = arith.mulf %266, %207 : vector<8x128xf32>
    %276 = arith.mulf %260, %268 : vector<8x128xf32>
    %277 = arith.addf %275, %276 : vector<8x128xf32>
    %278 = math.tanh %277 : vector<8x128xf32>
    %279 = arith.mulf %274, %278 : vector<8x128xf32>
    %280 = arith.index_cast %c3_i32 : i32 to index
    %c0_68 = arith.constant 0 : index
    %c0_69 = arith.constant 0 : index
    %281 = vector.load %arg7[%280, %c0_68, %c0_69] : memref<8x8x128xf32, #tpu.memory_space<vmem>>, vector<1x8x128xf32>
    %282 = vector.shape_cast %281 : vector<1x8x128xf32> to vector<8x128xf32>
    %283 = vector.shape_cast %279 : vector<8x128xf32> to vector<1x8x128xf32>
    tpu.vector_store %arg7[%280, %c0_68, %c0_69], %283 {strides = array<i32>} : memref<8x8x128xf32, #tpu.memory_space<vmem>>, vector<1x8x128xf32>,
    %c4_i32 = arith.constant 4 : i32
    %284 = arith.index_cast %c4_i32 : i32 to index
    %c0_70 = arith.constant 0 : index
    %c0_71 = arith.constant 0 : index
    %285 = vector.load %arg0[%284, %c0_70, %c0_71] : memref<8x8x128xbf16, #tpu.memory_space<vmem>>, vector<1x8x128xbf16>
    %286 = vector.shape_cast %285 : vector<1x8x128xbf16> to vector<8x128xbf16>
    %287 = arith.truncf %247 : vector<8x128xf32> to vector<8x128xbf16>
    %288 = tpu.concatenate %286, %287 in 1 : vector<8x128xbf16>, vector<8x128xbf16> -> vector<8x256xbf16>
    %c0_72 = arith.constant 0 : index
    %c0_73 = arith.constant 0 : index
    %289 = vector.load %arg3[%c0_72, %c0_73] : memref<256x512xbf16, #tpu.memory_space<vmem>>, vector<256x512xbf16>
    %cst_74 = arith.constant dense<0.000000e+00> : vector<8x512xf32>
    %290 = tpu.matmul %288, %289, %cst_74 {dimension_numbers = #tpu.dot_dimension_numbers<[1], [0], [0], [1], [0, 0, 1, 1], [], []>} : vector<8x256xbf16>, vector<256x512xbf16>, vector<8x512xf32> -> vector<8x512xf32>
    %291 = vector.broadcast %0 : vector<1x512xf32> to vector<8x512xf32>
    %292 = arith.addf %290, %291 : vector<8x512xf32>
    %293 = vector.extract_strided_slice %292 {offsets = [0, 0], sizes = [8, 128], strides = [1, 1]} : vector<8x512xf32> to vector<8x128xf32>
    %294 = arith.negf %293 : vector<8x128xf32>
    %295 = math.exp %294 : vector<8x128xf32>
    %cst_75 = arith.constant 1.000000e+00 : f32
    %296 = vector.broadcast %cst_75 : f32 to vector<8x128xf32>
    %297 = arith.addf %296, %295 : vector<8x128xf32>
    %298 = arith.divf %296, %297 : vector<8x128xf32>
    %299 = vector.extract_strided_slice %292 {offsets = [0, 128], sizes = [8, 128], strides = [1, 1]} : vector<8x512xf32> to vector<8x128xf32>
    %300 = arith.negf %299 : vector<8x128xf32>
    %301 = math.exp %300 : vector<8x128xf32>
    %cst_76 = arith.constant 1.000000e+00 : f32
    %302 = vector.broadcast %cst_76 : f32 to vector<8x128xf32>
    %303 = arith.addf %302, %301 : vector<8x128xf32>
    %304 = arith.divf %302, %303 : vector<8x128xf32>
    %305 = vector.extract_strided_slice %292 {offsets = [0, 256], sizes = [8, 128], strides = [1, 1]} : vector<8x512xf32> to vector<8x128xf32>
    %306 = math.tanh %305 : vector<8x128xf32>
    %307 = vector.extract_strided_slice %292 {offsets = [0, 384], sizes = [8, 128], strides = [1, 1]} : vector<8x512xf32> to vector<8x128xf32>
    %308 = arith.negf %307 : vector<8x128xf32>
    %309 = math.exp %308 : vector<8x128xf32>
    %cst_77 = arith.constant 1.000000e+00 : f32
    %310 = vector.broadcast %cst_77 : f32 to vector<8x128xf32>
    %311 = arith.addf %310, %309 : vector<8x128xf32>
    %312 = arith.divf %310, %311 : vector<8x128xf32>
    %313 = arith.mulf %304, %245 : vector<8x128xf32>
    %314 = arith.mulf %298, %306 : vector<8x128xf32>
    %315 = arith.addf %313, %314 : vector<8x128xf32>
    %316 = math.tanh %315 : vector<8x128xf32>
    %317 = arith.mulf %312, %316 : vector<8x128xf32>
    %318 = arith.truncf %317 : vector<8x128xf32> to vector<8x128xbf16>
    %319 = arith.truncf %279 : vector<8x128xf32> to vector<8x128xbf16>
    %320 = tpu.concatenate %318, %319 in 1 : vector<8x128xbf16>, vector<8x128xbf16> -> vector<8x256xbf16>
    %c0_78 = arith.constant 0 : index
    %c0_79 = arith.constant 0 : index
    %321 = vector.load %arg5[%c0_78, %c0_79] : memref<256x512xbf16, #tpu.memory_space<vmem>>, vector<256x512xbf16>
    %cst_80 = arith.constant dense<0.000000e+00> : vector<8x512xf32>
    %322 = tpu.matmul %320, %321, %cst_80 {dimension_numbers = #tpu.dot_dimension_numbers<[1], [0], [0], [1], [0, 0, 1, 1], [], []>} : vector<8x256xbf16>, vector<256x512xbf16>, vector<8x512xf32> -> vector<8x512xf32>
    %323 = vector.broadcast %1 : vector<1x512xf32> to vector<8x512xf32>
    %324 = arith.addf %322, %323 : vector<8x512xf32>
    %325 = vector.extract_strided_slice %324 {offsets = [0, 0], sizes = [8, 128], strides = [1, 1]} : vector<8x512xf32> to vector<8x128xf32>
    %326 = arith.negf %325 : vector<8x128xf32>
    %327 = math.exp %326 : vector<8x128xf32>
    %cst_81 = arith.constant 1.000000e+00 : f32
    %328 = vector.broadcast %cst_81 : f32 to vector<8x128xf32>
    %329 = arith.addf %328, %327 : vector<8x128xf32>
    %330 = arith.divf %328, %329 : vector<8x128xf32>
    %331 = vector.extract_strided_slice %324 {offsets = [0, 128], sizes = [8, 128], strides = [1, 1]} : vector<8x512xf32> to vector<8x128xf32>
    %332 = arith.negf %331 : vector<8x128xf32>
    %333 = math.exp %332 : vector<8x128xf32>
    %cst_82 = arith.constant 1.000000e+00 : f32
    %334 = vector.broadcast %cst_82 : f32 to vector<8x128xf32>
    %335 = arith.addf %334, %333 : vector<8x128xf32>
    %336 = arith.divf %334, %335 : vector<8x128xf32>
    %337 = vector.extract_strided_slice %324 {offsets = [0, 256], sizes = [8, 128], strides = [1, 1]} : vector<8x512xf32> to vector<8x128xf32>
    %338 = math.tanh %337 : vector<8x128xf32>
    %339 = vector.extract_strided_slice %324 {offsets = [0, 384], sizes = [8, 128], strides = [1, 1]} : vector<8x512xf32> to vector<8x128xf32>
    %340 = arith.negf %339 : vector<8x128xf32>
    %341 = math.exp %340 : vector<8x128xf32>
    %cst_83 = arith.constant 1.000000e+00 : f32
    %342 = vector.broadcast %cst_83 : f32 to vector<8x128xf32>
    %343 = arith.addf %342, %341 : vector<8x128xf32>
    %344 = arith.divf %342, %343 : vector<8x128xf32>
    %345 = arith.mulf %336, %277 : vector<8x128xf32>
    %346 = arith.mulf %330, %338 : vector<8x128xf32>
    %347 = arith.addf %345, %346 : vector<8x128xf32>
    %348 = math.tanh %347 : vector<8x128xf32>
    %349 = arith.mulf %344, %348 : vector<8x128xf32>
    %350 = arith.index_cast %c4_i32 : i32 to index
    %c0_84 = arith.constant 0 : index
    %c0_85 = arith.constant 0 : index
    %351 = vector.load %arg7[%350, %c0_84, %c0_85] : memref<8x8x128xf32, #tpu.memory_space<vmem>>, vector<1x8x128xf32>
    %352 = vector.shape_cast %351 : vector<1x8x128xf32> to vector<8x128xf32>
    %353 = vector.shape_cast %349 : vector<8x128xf32> to vector<1x8x128xf32>
    tpu.vector_store %arg7[%350, %c0_84, %c0_85], %353 {strides = array<i32>} : memref<8x8x128xf32, #tpu.memory_space<vmem>>, vector<1x8x128xf32>,
    %c5_i32 = arith.constant 5 : i32
    %354 = arith.index_cast %c5_i32 : i32 to index
    %c0_86 = arith.constant 0 : index
    %c0_87 = arith.constant 0 : index
    %355 = vector.load %arg0[%354, %c0_86, %c0_87] : memref<8x8x128xbf16, #tpu.memory_space<vmem>>, vector<1x8x128xbf16>
    %356 = vector.shape_cast %355 : vector<1x8x128xbf16> to vector<8x128xbf16>
    %357 = arith.truncf %317 : vector<8x128xf32> to vector<8x128xbf16>
    %358 = tpu.concatenate %356, %357 in 1 : vector<8x128xbf16>, vector<8x128xbf16> -> vector<8x256xbf16>
    %c0_88 = arith.constant 0 : index
    %c0_89 = arith.constant 0 : index
    %359 = vector.load %arg3[%c0_88, %c0_89] : memref<256x512xbf16, #tpu.memory_space<vmem>>, vector<256x512xbf16>
    %cst_90 = arith.constant dense<0.000000e+00> : vector<8x512xf32>
    %360 = tpu.matmul %358, %359, %cst_90 {dimension_numbers = #tpu.dot_dimension_numbers<[1], [0], [0], [1], [0, 0, 1, 1], [], []>} : vector<8x256xbf16>, vector<256x512xbf16>, vector<8x512xf32> -> vector<8x512xf32>
    %361 = vector.broadcast %0 : vector<1x512xf32> to vector<8x512xf32>
    %362 = arith.addf %360, %361 : vector<8x512xf32>
    %363 = vector.extract_strided_slice %362 {offsets = [0, 0], sizes = [8, 128], strides = [1, 1]} : vector<8x512xf32> to vector<8x128xf32>
    %364 = arith.negf %363 : vector<8x128xf32>
    %365 = math.exp %364 : vector<8x128xf32>
    %cst_91 = arith.constant 1.000000e+00 : f32
    %366 = vector.broadcast %cst_91 : f32 to vector<8x128xf32>
    %367 = arith.addf %366, %365 : vector<8x128xf32>
    %368 = arith.divf %366, %367 : vector<8x128xf32>
    %369 = vector.extract_strided_slice %362 {offsets = [0, 128], sizes = [8, 128], strides = [1, 1]} : vector<8x512xf32> to vector<8x128xf32>
    %370 = arith.negf %369 : vector<8x128xf32>
    %371 = math.exp %370 : vector<8x128xf32>
    %cst_92 = arith.constant 1.000000e+00 : f32
    %372 = vector.broadcast %cst_92 : f32 to vector<8x128xf32>
    %373 = arith.addf %372, %371 : vector<8x128xf32>
    %374 = arith.divf %372, %373 : vector<8x128xf32>
    %375 = vector.extract_strided_slice %362 {offsets = [0, 256], sizes = [8, 128], strides = [1, 1]} : vector<8x512xf32> to vector<8x128xf32>
    %376 = math.tanh %375 : vector<8x128xf32>
    %377 = vector.extract_strided_slice %362 {offsets = [0, 384], sizes = [8, 128], strides = [1, 1]} : vector<8x512xf32> to vector<8x128xf32>
    %378 = arith.negf %377 : vector<8x128xf32>
    %379 = math.exp %378 : vector<8x128xf32>
    %cst_93 = arith.constant 1.000000e+00 : f32
    %380 = vector.broadcast %cst_93 : f32 to vector<8x128xf32>
    %381 = arith.addf %380, %379 : vector<8x128xf32>
    %382 = arith.divf %380, %381 : vector<8x128xf32>
    %383 = arith.mulf %374, %315 : vector<8x128xf32>
    %384 = arith.mulf %368, %376 : vector<8x128xf32>
    %385 = arith.addf %383, %384 : vector<8x128xf32>
    %386 = math.tanh %385 : vector<8x128xf32>
    %387 = arith.mulf %382, %386 : vector<8x128xf32>
    %388 = arith.truncf %387 : vector<8x128xf32> to vector<8x128xbf16>
    %389 = arith.truncf %349 : vector<8x128xf32> to vector<8x128xbf16>
    %390 = tpu.concatenate %388, %389 in 1 : vector<8x128xbf16>, vector<8x128xbf16> -> vector<8x256xbf16>
    %c0_94 = arith.constant 0 : index
    %c0_95 = arith.constant 0 : index
    %391 = vector.load %arg5[%c0_94, %c0_95] : memref<256x512xbf16, #tpu.memory_space<vmem>>, vector<256x512xbf16>
    %cst_96 = arith.constant dense<0.000000e+00> : vector<8x512xf32>
    %392 = tpu.matmul %390, %391, %cst_96 {dimension_numbers = #tpu.dot_dimension_numbers<[1], [0], [0], [1], [0, 0, 1, 1], [], []>} : vector<8x256xbf16>, vector<256x512xbf16>, vector<8x512xf32> -> vector<8x512xf32>
    %393 = vector.broadcast %1 : vector<1x512xf32> to vector<8x512xf32>
    %394 = arith.addf %392, %393 : vector<8x512xf32>
    %395 = vector.extract_strided_slice %394 {offsets = [0, 0], sizes = [8, 128], strides = [1, 1]} : vector<8x512xf32> to vector<8x128xf32>
    %396 = arith.negf %395 : vector<8x128xf32>
    %397 = math.exp %396 : vector<8x128xf32>
    %cst_97 = arith.constant 1.000000e+00 : f32
    %398 = vector.broadcast %cst_97 : f32 to vector<8x128xf32>
    %399 = arith.addf %398, %397 : vector<8x128xf32>
    %400 = arith.divf %398, %399 : vector<8x128xf32>
    %401 = vector.extract_strided_slice %394 {offsets = [0, 128], sizes = [8, 128], strides = [1, 1]} : vector<8x512xf32> to vector<8x128xf32>
    %402 = arith.negf %401 : vector<8x128xf32>
    %403 = math.exp %402 : vector<8x128xf32>
    %cst_98 = arith.constant 1.000000e+00 : f32
    %404 = vector.broadcast %cst_98 : f32 to vector<8x128xf32>
    %405 = arith.addf %404, %403 : vector<8x128xf32>
    %406 = arith.divf %404, %405 : vector<8x128xf32>
    %407 = vector.extract_strided_slice %394 {offsets = [0, 256], sizes = [8, 128], strides = [1, 1]} : vector<8x512xf32> to vector<8x128xf32>
    %408 = math.tanh %407 : vector<8x128xf32>
    %409 = vector.extract_strided_slice %394 {offsets = [0, 384], sizes = [8, 128], strides = [1, 1]} : vector<8x512xf32> to vector<8x128xf32>
    %410 = arith.negf %409 : vector<8x128xf32>
    %411 = math.exp %410 : vector<8x128xf32>
    %cst_99 = arith.constant 1.000000e+00 : f32
    %412 = vector.broadcast %cst_99 : f32 to vector<8x128xf32>
    %413 = arith.addf %412, %411 : vector<8x128xf32>
    %414 = arith.divf %412, %413 : vector<8x128xf32>
    %415 = arith.mulf %406, %347 : vector<8x128xf32>
    %416 = arith.mulf %400, %408 : vector<8x128xf32>
    %417 = arith.addf %415, %416 : vector<8x128xf32>
    %418 = math.tanh %417 : vector<8x128xf32>
    %419 = arith.mulf %414, %418 : vector<8x128xf32>
    %420 = arith.index_cast %c5_i32 : i32 to index
    %c0_100 = arith.constant 0 : index
    %c0_101 = arith.constant 0 : index
    %421 = vector.load %arg7[%420, %c0_100, %c0_101] : memref<8x8x128xf32, #tpu.memory_space<vmem>>, vector<1x8x128xf32>
    %422 = vector.shape_cast %421 : vector<1x8x128xf32> to vector<8x128xf32>
    %423 = vector.shape_cast %419 : vector<8x128xf32> to vector<1x8x128xf32>
    tpu.vector_store %arg7[%420, %c0_100, %c0_101], %423 {strides = array<i32>} : memref<8x8x128xf32, #tpu.memory_space<vmem>>, vector<1x8x128xf32>,
    %c6_i32 = arith.constant 6 : i32
    %424 = arith.index_cast %c6_i32 : i32 to index
    %c0_102 = arith.constant 0 : index
    %c0_103 = arith.constant 0 : index
    %425 = vector.load %arg0[%424, %c0_102, %c0_103] : memref<8x8x128xbf16, #tpu.memory_space<vmem>>, vector<1x8x128xbf16>
    %426 = vector.shape_cast %425 : vector<1x8x128xbf16> to vector<8x128xbf16>
    %427 = arith.truncf %387 : vector<8x128xf32> to vector<8x128xbf16>
    %428 = tpu.concatenate %426, %427 in 1 : vector<8x128xbf16>, vector<8x128xbf16> -> vector<8x256xbf16>
    %c0_104 = arith.constant 0 : index
    %c0_105 = arith.constant 0 : index
    %429 = vector.load %arg3[%c0_104, %c0_105] : memref<256x512xbf16, #tpu.memory_space<vmem>>, vector<256x512xbf16>
    %cst_106 = arith.constant dense<0.000000e+00> : vector<8x512xf32>
    %430 = tpu.matmul %428, %429, %cst_106 {dimension_numbers = #tpu.dot_dimension_numbers<[1], [0], [0], [1], [0, 0, 1, 1], [], []>} : vector<8x256xbf16>, vector<256x512xbf16>, vector<8x512xf32> -> vector<8x512xf32>
    %431 = vector.broadcast %0 : vector<1x512xf32> to vector<8x512xf32>
    %432 = arith.addf %430, %431 : vector<8x512xf32>
    %433 = vector.extract_strided_slice %432 {offsets = [0, 0], sizes = [8, 128], strides = [1, 1]} : vector<8x512xf32> to vector<8x128xf32>
    %434 = arith.negf %433 : vector<8x128xf32>
    %435 = math.exp %434 : vector<8x128xf32>
    %cst_107 = arith.constant 1.000000e+00 : f32
    %436 = vector.broadcast %cst_107 : f32 to vector<8x128xf32>
    %437 = arith.addf %436, %435 : vector<8x128xf32>
    %438 = arith.divf %436, %437 : vector<8x128xf32>
    %439 = vector.extract_strided_slice %432 {offsets = [0, 128], sizes = [8, 128], strides = [1, 1]} : vector<8x512xf32> to vector<8x128xf32>
    %440 = arith.negf %439 : vector<8x128xf32>
    %441 = math.exp %440 : vector<8x128xf32>
    %cst_108 = arith.constant 1.000000e+00 : f32
    %442 = vector.broadcast %cst_108 : f32 to vector<8x128xf32>
    %443 = arith.addf %442, %441 : vector<8x128xf32>
    %444 = arith.divf %442, %443 : vector<8x128xf32>
    %445 = vector.extract_strided_slice %432 {offsets = [0, 256], sizes = [8, 128], strides = [1, 1]} : vector<8x512xf32> to vector<8x128xf32>
    %446 = math.tanh %445 : vector<8x128xf32>
    %447 = vector.extract_strided_slice %432 {offsets = [0, 384], sizes = [8, 128], strides = [1, 1]} : vector<8x512xf32> to vector<8x128xf32>
    %448 = arith.negf %447 : vector<8x128xf32>
    %449 = math.exp %448 : vector<8x128xf32>
    %cst_109 = arith.constant 1.000000e+00 : f32
    %450 = vector.broadcast %cst_109 : f32 to vector<8x128xf32>
    %451 = arith.addf %450, %449 : vector<8x128xf32>
    %452 = arith.divf %450, %451 : vector<8x128xf32>
    %453 = arith.mulf %444, %385 : vector<8x128xf32>
    %454 = arith.mulf %438, %446 : vector<8x128xf32>
    %455 = arith.addf %453, %454 : vector<8x128xf32>
    %456 = math.tanh %455 : vector<8x128xf32>
    %457 = arith.mulf %452, %456 : vector<8x128xf32>
    %458 = arith.truncf %457 : vector<8x128xf32> to vector<8x128xbf16>
    %459 = arith.truncf %419 : vector<8x128xf32> to vector<8x128xbf16>
    %460 = tpu.concatenate %458, %459 in 1 : vector<8x128xbf16>, vector<8x128xbf16> -> vector<8x256xbf16>
    %c0_110 = arith.constant 0 : index
    %c0_111 = arith.constant 0 : index
    %461 = vector.load %arg5[%c0_110, %c0_111] : memref<256x512xbf16, #tpu.memory_space<vmem>>, vector<256x512xbf16>
    %cst_112 = arith.constant dense<0.000000e+00> : vector<8x512xf32>
    %462 = tpu.matmul %460, %461, %cst_112 {dimension_numbers = #tpu.dot_dimension_numbers<[1], [0], [0], [1], [0, 0, 1, 1], [], []>} : vector<8x256xbf16>, vector<256x512xbf16>, vector<8x512xf32> -> vector<8x512xf32>
    %463 = vector.broadcast %1 : vector<1x512xf32> to vector<8x512xf32>
    %464 = arith.addf %462, %463 : vector<8x512xf32>
    %465 = vector.extract_strided_slice %464 {offsets = [0, 0], sizes = [8, 128], strides = [1, 1]} : vector<8x512xf32> to vector<8x128xf32>
    %466 = arith.negf %465 : vector<8x128xf32>
    %467 = math.exp %466 : vector<8x128xf32>
    %cst_113 = arith.constant 1.000000e+00 : f32
    %468 = vector.broadcast %cst_113 : f32 to vector<8x128xf32>
    %469 = arith.addf %468, %467 : vector<8x128xf32>
    %470 = arith.divf %468, %469 : vector<8x128xf32>
    %471 = vector.extract_strided_slice %464 {offsets = [0, 128], sizes = [8, 128], strides = [1, 1]} : vector<8x512xf32> to vector<8x128xf32>
    %472 = arith.negf %471 : vector<8x128xf32>
    %473 = math.exp %472 : vector<8x128xf32>
    %cst_114 = arith.constant 1.000000e+00 : f32
    %474 = vector.broadcast %cst_114 : f32 to vector<8x128xf32>
    %475 = arith.addf %474, %473 : vector<8x128xf32>
    %476 = arith.divf %474, %475 : vector<8x128xf32>
    %477 = vector.extract_strided_slice %464 {offsets = [0, 256], sizes = [8, 128], strides = [1, 1]} : vector<8x512xf32> to vector<8x128xf32>
    %478 = math.tanh %477 : vector<8x128xf32>
    %479 = vector.extract_strided_slice %464 {offsets = [0, 384], sizes = [8, 128], strides = [1, 1]} : vector<8x512xf32> to vector<8x128xf32>
    %480 = arith.negf %479 : vector<8x128xf32>
    %481 = math.exp %480 : vector<8x128xf32>
    %cst_115 = arith.constant 1.000000e+00 : f32
    %482 = vector.broadcast %cst_115 : f32 to vector<8x128xf32>
    %483 = arith.addf %482, %481 : vector<8x128xf32>
    %484 = arith.divf %482, %483 : vector<8x128xf32>
    %485 = arith.mulf %476, %417 : vector<8x128xf32>
    %486 = arith.mulf %470, %478 : vector<8x128xf32>
    %487 = arith.addf %485, %486 : vector<8x128xf32>
    %488 = math.tanh %487 : vector<8x128xf32>
    %489 = arith.mulf %484, %488 : vector<8x128xf32>
    %490 = arith.index_cast %c6_i32 : i32 to index
    %c0_116 = arith.constant 0 : index
    %c0_117 = arith.constant 0 : index
    %491 = vector.load %arg7[%490, %c0_116, %c0_117] : memref<8x8x128xf32, #tpu.memory_space<vmem>>, vector<1x8x128xf32>
    %492 = vector.shape_cast %491 : vector<1x8x128xf32> to vector<8x128xf32>
    %493 = vector.shape_cast %489 : vector<8x128xf32> to vector<1x8x128xf32>
    tpu.vector_store %arg7[%490, %c0_116, %c0_117], %493 {strides = array<i32>} : memref<8x8x128xf32, #tpu.memory_space<vmem>>, vector<1x8x128xf32>,
    %c7_i32 = arith.constant 7 : i32
    %494 = arith.index_cast %c7_i32 : i32 to index
    %c0_118 = arith.constant 0 : index
    %c0_119 = arith.constant 0 : index
    %495 = vector.load %arg0[%494, %c0_118, %c0_119] : memref<8x8x128xbf16, #tpu.memory_space<vmem>>, vector<1x8x128xbf16>
    %496 = vector.shape_cast %495 : vector<1x8x128xbf16> to vector<8x128xbf16>
    %497 = arith.truncf %457 : vector<8x128xf32> to vector<8x128xbf16>
    %498 = tpu.concatenate %496, %497 in 1 : vector<8x128xbf16>, vector<8x128xbf16> -> vector<8x256xbf16>
    %c0_120 = arith.constant 0 : index
    %c0_121 = arith.constant 0 : index
    %499 = vector.load %arg3[%c0_120, %c0_121] : memref<256x512xbf16, #tpu.memory_space<vmem>>, vector<256x512xbf16>
    %cst_122 = arith.constant dense<0.000000e+00> : vector<8x512xf32>
    %500 = tpu.matmul %498, %499, %cst_122 {dimension_numbers = #tpu.dot_dimension_numbers<[1], [0], [0], [1], [0, 0, 1, 1], [], []>} : vector<8x256xbf16>, vector<256x512xbf16>, vector<8x512xf32> -> vector<8x512xf32>
    %501 = vector.broadcast %0 : vector<1x512xf32> to vector<8x512xf32>
    %502 = arith.addf %500, %501 : vector<8x512xf32>
    %503 = vector.extract_strided_slice %502 {offsets = [0, 0], sizes = [8, 128], strides = [1, 1]} : vector<8x512xf32> to vector<8x128xf32>
    %504 = arith.negf %503 : vector<8x128xf32>
    %505 = math.exp %504 : vector<8x128xf32>
    %cst_123 = arith.constant 1.000000e+00 : f32
    %506 = vector.broadcast %cst_123 : f32 to vector<8x128xf32>
    %507 = arith.addf %506, %505 : vector<8x128xf32>
    %508 = arith.divf %506, %507 : vector<8x128xf32>
    %509 = vector.extract_strided_slice %502 {offsets = [0, 128], sizes = [8, 128], strides = [1, 1]} : vector<8x512xf32> to vector<8x128xf32>
    %510 = arith.negf %509 : vector<8x128xf32>
    %511 = math.exp %510 : vector<8x128xf32>
    %cst_124 = arith.constant 1.000000e+00 : f32
    %512 = vector.broadcast %cst_124 : f32 to vector<8x128xf32>
    %513 = arith.addf %512, %511 : vector<8x128xf32>
    %514 = arith.divf %512, %513 : vector<8x128xf32>
    %515 = vector.extract_strided_slice %502 {offsets = [0, 256], sizes = [8, 128], strides = [1, 1]} : vector<8x512xf32> to vector<8x128xf32>
    %516 = math.tanh %515 : vector<8x128xf32>
    %517 = vector.extract_strided_slice %502 {offsets = [0, 384], sizes = [8, 128], strides = [1, 1]} : vector<8x512xf32> to vector<8x128xf32>
    %518 = arith.negf %517 : vector<8x128xf32>
    %519 = math.exp %518 : vector<8x128xf32>
    %cst_125 = arith.constant 1.000000e+00 : f32
    %520 = vector.broadcast %cst_125 : f32 to vector<8x128xf32>
    %521 = arith.addf %520, %519 : vector<8x128xf32>
    %522 = arith.divf %520, %521 : vector<8x128xf32>
    %523 = arith.mulf %514, %455 : vector<8x128xf32>
    %524 = arith.mulf %508, %516 : vector<8x128xf32>
    %525 = arith.addf %523, %524 : vector<8x128xf32>
    %526 = math.tanh %525 : vector<8x128xf32>
    %527 = arith.mulf %522, %526 : vector<8x128xf32>
    %528 = arith.truncf %527 : vector<8x128xf32> to vector<8x128xbf16>
    %529 = arith.truncf %489 : vector<8x128xf32> to vector<8x128xbf16>
    %530 = tpu.concatenate %528, %529 in 1 : vector<8x128xbf16>, vector<8x128xbf16> -> vector<8x256xbf16>
    %c0_126 = arith.constant 0 : index
    %c0_127 = arith.constant 0 : index
    %531 = vector.load %arg5[%c0_126, %c0_127] : memref<256x512xbf16, #tpu.memory_space<vmem>>, vector<256x512xbf16>
    %cst_128 = arith.constant dense<0.000000e+00> : vector<8x512xf32>
    %532 = tpu.matmul %530, %531, %cst_128 {dimension_numbers = #tpu.dot_dimension_numbers<[1], [0], [0], [1], [0, 0, 1, 1], [], []>} : vector<8x256xbf16>, vector<256x512xbf16>, vector<8x512xf32> -> vector<8x512xf32>
    %533 = vector.broadcast %1 : vector<1x512xf32> to vector<8x512xf32>
    %534 = arith.addf %532, %533 : vector<8x512xf32>
    %535 = vector.extract_strided_slice %534 {offsets = [0, 0], sizes = [8, 128], strides = [1, 1]} : vector<8x512xf32> to vector<8x128xf32>
    %536 = arith.negf %535 : vector<8x128xf32>
    %537 = math.exp %536 : vector<8x128xf32>
    %cst_129 = arith.constant 1.000000e+00 : f32
    %538 = vector.broadcast %cst_129 : f32 to vector<8x128xf32>
    %539 = arith.addf %538, %537 : vector<8x128xf32>
    %540 = arith.divf %538, %539 : vector<8x128xf32>
    %541 = vector.extract_strided_slice %534 {offsets = [0, 128], sizes = [8, 128], strides = [1, 1]} : vector<8x512xf32> to vector<8x128xf32>
    %542 = arith.negf %541 : vector<8x128xf32>
    %543 = math.exp %542 : vector<8x128xf32>
    %cst_130 = arith.constant 1.000000e+00 : f32
    %544 = vector.broadcast %cst_130 : f32 to vector<8x128xf32>
    %545 = arith.addf %544, %543 : vector<8x128xf32>
    %546 = arith.divf %544, %545 : vector<8x128xf32>
    %547 = vector.extract_strided_slice %534 {offsets = [0, 256], sizes = [8, 128], strides = [1, 1]} : vector<8x512xf32> to vector<8x128xf32>
    %548 = math.tanh %547 : vector<8x128xf32>
    %549 = vector.extract_strided_slice %534 {offsets = [0, 384], sizes = [8, 128], strides = [1, 1]} : vector<8x512xf32> to vector<8x128xf32>
    %550 = arith.negf %549 : vector<8x128xf32>
    %551 = math.exp %550 : vector<8x128xf32>
    %cst_131 = arith.constant 1.000000e+00 : f32
    %552 = vector.broadcast %cst_131 : f32 to vector<8x128xf32>
    %553 = arith.addf %552, %551 : vector<8x128xf32>
    %554 = arith.divf %552, %553 : vector<8x128xf32>
    %555 = arith.mulf %546, %487 : vector<8x128xf32>
    %556 = arith.mulf %540, %548 : vector<8x128xf32>
    %557 = arith.addf %555, %556 : vector<8x128xf32>
    %558 = math.tanh %557 : vector<8x128xf32>
    %559 = arith.mulf %554, %558 : vector<8x128xf32>
    %560 = arith.index_cast %c7_i32 : i32 to index
    %c0_132 = arith.constant 0 : index
    %c0_133 = arith.constant 0 : index
    %561 = vector.load %arg7[%560, %c0_132, %c0_133] : memref<8x8x128xf32, #tpu.memory_space<vmem>>, vector<1x8x128xf32>
    %562 = vector.shape_cast %561 : vector<1x8x128xf32> to vector<8x128xf32>
    %563 = vector.shape_cast %559 : vector<8x128xf32> to vector<1x8x128xf32>
    tpu.vector_store %arg7[%560, %c0_132, %c0_133], %563 {strides = array<i32>} : memref<8x8x128xf32, #tpu.memory_space<vmem>>, vector<1x8x128xf32>,
    %c8_i32 = arith.constant 8 : i32
    %c0_134 = arith.constant 0 : index
    %c0_135 = arith.constant 0 : index
    %564 = vector.load %arg8[%c0_134, %c0_135] : memref<8x128xf32, #tpu.memory_space<vmem>>, vector<8x128xf32>
    tpu.vector_store %arg8[%c0_134, %c0_135], %557 {strides = array<i32>} : memref<8x128xf32, #tpu.memory_space<vmem>>, vector<8x128xf32>,
    return
  }
}

</mosaic_0001>

<llo_original>
// kernel: _lambda_.1
$region0: #{_lambda_.1}
  #allocation0 [shape = 'u32[]', space=smem, size = 0x4, offset = 0x4, fixed_abs, tag = 'smem constant byte address 0x4 - core index']
  #allocation1 [shape = 'u32[144,128]{1,0:T(1,128)}', space=vmem, size = 0x12000, scoped, tag = 'internal scratch']
  %s0 = inlined_call_operand.vmem [shape: bf16[8,8,128], index: 0, kind: input, shape index: {}]
  %s1 = inlined_call_operand.vmem [shape: f32[8,128], index: 1, kind: input, shape index: {}]
  %s2 = inlined_call_operand.vmem [shape: f32[8,128], index: 2, kind: input, shape index: {}]
  %s3 = inlined_call_operand.vmem [shape: bf16[256,512], index: 3, kind: input, shape index: {}]
  %s4 = inlined_call_operand.vmem [shape: f32[1,512], index: 4, kind: input, shape index: {}]
  %s5 = inlined_call_operand.vmem [shape: bf16[256,512], index: 5, kind: input, shape index: {}]
  %s6 = inlined_call_operand.vmem [shape: f32[1,512], index: 6, kind: input, shape index: {}]
  %s7 = inlined_call_operand.vmem [shape: f32[8,8,128], index: 7, kind: output, shape index: {0}]
  %s8 = inlined_call_operand.vmem [shape: f32[8,128], index: 8, kind: output, shape index: {1}]
  %9 = xla_tuple %s7, %s8
  %s10 = sld [smem:[#allocation0]]
  $region46: #{_lambda_.1} parent=0
    _
  %s12 = ssub.s32 1, %s10
  %s13 = scalar_select 0, %s12, %s10
  // Predicated region
  $region2: #{_lambda_.1} parent=0 // pred_check
    _
  $region3: #{_lambda_.1} parent=0 // pred_check_branch
    %15 = sbr.rel (0) target = $region5
  $region4: #{_lambda_.1} parent=0 // pred_region
    _
  $region5: #{_lambda_.1} parent=0 // pred_fallthru
    _
  // Predicated region
  $region6: #{_lambda_.1} parent=0 // pred_check
    _
  $region7: #{_lambda_.1} parent=0 // pred_check_branch
    %17 = sbr.rel (0) target = $region9
  $region8: #{_lambda_.1} parent=0 // pred_region
    _
  $region9: #{_lambda_.1} parent=0 // pred_fallthru
    _
  // Predicated region
  $region10: #{_lambda_.1} parent=0 // pred_check
    _
  $region11: #{_lambda_.1} parent=0 // pred_check_branch
    %19 = sbr.rel (0) target = $region13
  $region12: #{_lambda_.1} parent=0 // pred_region
    _
  $region13: #{_lambda_.1} parent=0 // pred_fallthru
    _
  // Predicated region
  $region14: #{_lambda_.1} parent=0 // pred_check
    _
  $region15: #{_lambda_.1} parent=0 // pred_check_branch
    %21 = sbr.rel (0) target = $region17
  $region16: #{_lambda_.1} parent=0 // pred_region
    _
  $region17: #{_lambda_.1} parent=0 // pred_fallthru
    _
  // Predicated region
  $region18: #{_lambda_.1} parent=0 // pred_check
    _
  $region19: #{_lambda_.1} parent=0 // pred_check_branch
    %23 = sbr.rel (0) target = $region21
  $region20: #{_lambda_.1} parent=0 // pred_region
    _
  $region21: #{_lambda_.1} parent=0 // pred_fallthru
    _
  // Predicated region
  $region22: #{_lambda_.1} parent=0 // pred_check
    _
  $region23: #{_lambda_.1} parent=0 // pred_check_branch
    %25 = sbr.rel (0) target = $region25
  $region24: #{_lambda_.1} parent=0 // pred_region
    _
  $region25: #{_lambda_.1} parent=0 // pred_fallthru
    _
  // Predicated region
  $region26: #{_lambda_.1} parent=0 // pred_check
    _
  $region27: #{_lambda_.1} parent=0 // pred_check_branch
    %27 = sbr.rel (0) target = $region29
  $region28: #{_lambda_.1} parent=0 // pred_region
    _
  $region29: #{_lambda_.1} parent=0 // pred_fallthru
    _
  %v28 = vld [vmem:[%s4] sm:$0xf]
  %v29 = vld [vmem:[%s6] sm:$0xf]
  %v30 = vld [vmem:[%s1] sm:$0xff]
  %v31 = vld [vmem:[%s2] sm:$0xff]
  %v32 = vld [vmem:[%s0] sm:$0xf]
  %v33 = vpack.c.bf16 %v30, %v30
  %v34 = vld [vmem:[%s3] sm:$0xff]
  %v35 = vld [vmem:[%s3 + $0x8] sm:$0xff]
  %v36 = vld [vmem:[%s3 + $0x10] sm:$0xff]
  %v37 = vld [vmem:[%s3 + $0x18] sm:$0xff]
  %v38 = vld [vmem:[%s3 + $0x20] sm:$0xff]
  %v39 = vld [vmem:[%s3 + $0x28] sm:$0xff]
  %v40 = vld [vmem:[%s3 + $0x30] sm:$0xff]
  %v41 = vld [vmem:[%s3 + $0x38] sm:$0xff]
  %v42 = vld [vmem:[%s3 + $0x40] sm:$0xff]
  %v43 = vld [vmem:[%s3 + $0x48] sm:$0xff]
  %v44 = vld [vmem:[%s3 + $0x50] sm:$0xff]
  %v45 = vld [vmem:[%s3 + $0x58] sm:$0xff]
  %v46 = vld [vmem:[%s3 + $0x60] sm:$0xff]
  %v47 = vld [vmem:[%s3 + $0x68] sm:$0xff]
  %v48 = vld [vmem:[%s3 + $0x70] sm:$0xff]
  %v49 = vld [vmem:[%s3 + $0x78] sm:$0xff]
  %v50 = vld [vmem:[%s3 + $0x80] sm:$0xff]
  %v51 = vld [vmem:[%s3 + $0x88] sm:$0xff]
  %v52 = vld [vmem:[%s3 + $0x90] sm:$0xff]
  %v53 = vld [vmem:[%s3 + $0x98] sm:$0xff]
  %v54 = vld [vmem:[%s3 + $0xa0] sm:$0xff]
  %v55 = vld [vmem:[%s3 + $0xa8] sm:$0xff]
  %v56 = vld [vmem:[%s3 + $0xb0] sm:$0xff]
  %v57 = vld [vmem:[%s3 + $0xb8] sm:$0xff]
  %v58 = vld [vmem:[%s3 + $0xc0] sm:$0xff]
  %v59 = vld [vmem:[%s3 + $0xc8] sm:$0xff]
  %v60 = vld [vmem:[%s3 + $0xd0] sm:$0xff]
  %v61 = vld [vmem:[%s3 + $0xd8] sm:$0xff]
  %v62 = vld [vmem:[%s3 + $0xe0] sm:$0xff]
  %v63 = vld [vmem:[%s3 + $0xe8] sm:$0xff]
  %v64 = vld [vmem:[%s3 + $0xf0] sm:$0xff]
  %v65 = vld [vmem:[%s3 + $0xf8] sm:$0xff]
  %v66 = vld [vmem:[%s3 + $0x100] sm:$0xff]
  %v67 = vld [vmem:[%s3 + $0x108] sm:$0xff]
  %v68 = vld [vmem:[%s3 + $0x110] sm:$0xff]
  %v69 = vld [vmem:[%s3 + $0x118] sm:$0xff]
  %v70 = vld [vmem:[%s3 + $0x120] sm:$0xff]
  %v71 = vld [vmem:[%s3 + $0x128] sm:$0xff]
  %v72 = vld [vmem:[%s3 + $0x130] sm:$0xff]
  %v73 = vld [vmem:[%s3 + $0x138] sm:$0xff]
  %v74 = vld [vmem:[%s3 + $0x140] sm:$0xff]
  %v75 = vld [vmem:[%s3 + $0x148] sm:$0xff]
  %v76 = vld [vmem:[%s3 + $0x150] sm:$0xff]
  %v77 = vld [vmem:[%s3 + $0x158] sm:$0xff]
  %v78 = vld [vmem:[%s3 + $0x160] sm:$0xff]
  %v79 = vld [vmem:[%s3 + $0x168] sm:$0xff]
  %v80 = vld [vmem:[%s3 + $0x170] sm:$0xff]
  %v81 = vld [vmem:[%s3 + $0x178] sm:$0xff]
  %v82 = vld [vmem:[%s3 + $0x180] sm:$0xff]
  %v83 = vld [vmem:[%s3 + $0x188] sm:$0xff]
  %v84 = vld [vmem:[%s3 + $0x190] sm:$0xff]
  %v85 = vld [vmem:[%s3 + $0x198] sm:$0xff]
  %v86 = vld [vmem:[%s3 + $0x1a0] sm:$0xff]
  %v87 = vld [vmem:[%s3 + $0x1a8] sm:$0xff]
  %v88 = vld [vmem:[%s3 + $0x1b0] sm:$0xff]
  %v89 = vld [vmem:[%s3 + $0x1b8] sm:$0xff]
  %v90 = vld [vmem:[%s3 + $0x1c0] sm:$0xff]
  %v91 = vld [vmem:[%s3 + $0x1c8] sm:$0xff]
  %v92 = vld [vmem:[%s3 + $0x1d0] sm:$0xff]
  %v93 = vld [vmem:[%s3 + $0x1d8] sm:$0xff]
  %v94 = vld [vmem:[%s3 + $0x1e0] sm:$0xff]
  %v95 = vld [vmem:[%s3 + $0x1e8] sm:$0xff]
  %v96 = vld [vmem:[%s3 + $0x1f0] sm:$0xff]
  %v97 = vld [vmem:[%s3 + $0x1f8] sm:$0xff]
  %v99 = vlaneseq
  %v100 = vshrl.u32 %v99, 7
  %v101 = vsub.s32 0, %v100
  %v102 = vrot.slane %v28, %v101
  %v103 = vlaneseq
  %v104 = vshrl.u32 %v103, 7
  %v105 = vsub.s32 1, %v104
  %v106 = vrot.slane %v28, %v105
  %v107 = vlaneseq
  %v108 = vshrl.u32 %v107, 7
  %v109 = vsub.s32 2, %v108
  %v110 = vrot.slane %v28, %v109
  %v111 = vlaneseq
  %v112 = vshrl.u32 %v111, 7
  %v113 = vsub.s32 3, %v112
  %v114 = vrot.slane %v28, %v113
  %v183 = vunpack.c.l.b16 %v34
  %v184 = vunpack.c.h.b16 %v34
  %v185 = vunpack.c.l.b16 %v35
  %v186 = vunpack.c.h.b16 %v35
  %v187 = vunpack.c.l.b16 %v36
  %v188 = vunpack.c.h.b16 %v36
  %v189 = vunpack.c.l.b16 %v37
  %v190 = vunpack.c.h.b16 %v37
  %v191 = vunpack.c.l.b16 %v38
  %v192 = vunpack.c.h.b16 %v38
  %v193 = vunpack.c.l.b16 %v39
  %v194 = vunpack.c.h.b16 %v39
  %v195 = vunpack.c.l.b16 %v40
  %v196 = vunpack.c.h.b16 %v40
  %v197 = vunpack.c.l.b16 %v41
  %v198 = vunpack.c.h.b16 %v41
  %v199 = vunpack.c.l.b16 %v42
  %v200 = vunpack.c.h.b16 %v42
  %v201 = vunpack.c.l.b16 %v43
  %v202 = vunpack.c.h.b16 %v43
  %v203 = vunpack.c.l.b16 %v44
  %v204 = vunpack.c.h.b16 %v44
  %v205 = vunpack.c.l.b16 %v45
  %v206 = vunpack.c.h.b16 %v45
  %v207 = vunpack.c.l.b16 %v46
  %v208 = vunpack.c.h.b16 %v46
  %v209 = vunpack.c.l.b16 %v47
  %v210 = vunpack.c.h.b16 %v47
  %v211 = vunpack.c.l.b16 %v48
  %v212 = vunpack.c.h.b16 %v48
  %v213 = vunpack.c.l.b16 %v49
  %v214 = vunpack.c.h.b16 %v49
  %v215 = vunpack.c.l.b16 %v50
  %v216 = vunpack.c.h.b16 %v50
  %v217 = vunpack.c.l.b16 %v51
  %v218 = vunpack.c.h.b16 %v51
  %v219 = vunpack.c.l.b16 %v52
  %v220 = vunpack.c.h.b16 %v52
  %v221 = vunpack.c.l.b16 %v53
  %v222 = vunpack.c.h.b16 %v53
  %v223 = vunpack.c.l.b16 %v54
  %v224 = vunpack.c.h.b16 %v54
  %v225 = vunpack.c.l.b16 %v55
  %v226 = vunpack.c.h.b16 %v55
  %v227 = vunpack.c.l.b16 %v56
  %v228 = vunpack.c.h.b16 %v56
  %v229 = vunpack.c.l.b16 %v57
  %v230 = vunpack.c.h.b16 %v57
  %v231 = vunpack.c.l.b16 %v58
  %v232 = vunpack.c.h.b16 %v58
  %v233 = vunpack.c.l.b16 %v59
  %v234 = vunpack.c.h.b16 %v59
  %v235 = vunpack.c.l.b16 %v60
  %v236 = vunpack.c.h.b16 %v60
  %v237 = vunpack.c.l.b16 %v61
  %v238 = vunpack.c.h.b16 %v61
  %v239 = vunpack.c.l.b16 %v62
  %v240 = vunpack.c.h.b16 %v62
  %v241 = vunpack.c.l.b16 %v63
  %v242 = vunpack.c.h.b16 %v63
  %v243 = vunpack.c.l.b16 %v64
  %v244 = vunpack.c.h.b16 %v64
  %v245 = vunpack.c.l.b16 %v65
  %v246 = vunpack.c.h.b16 %v65
  %v247 = vunpack.c.l.b16 %v66
  %v248 = vunpack.c.h.b16 %v66
  %v249 = vunpack.c.l.b16 %v67
  %v250 = vunpack.c.h.b16 %v67
  %v251 = vunpack.c.l.b16 %v68
  %v252 = vunpack.c.h.b16 %v68
  %v253 = vunpack.c.l.b16 %v69
  %v254 = vunpack.c.h.b16 %v69
  %v255 = vunpack.c.l.b16 %v70
  %v256 = vunpack.c.h.b16 %v70
  %v257 = vunpack.c.l.b16 %v71
  %v258 = vunpack.c.h.b16 %v71
  %v259 = vunpack.c.l.b16 %v72
  %v260 = vunpack.c.h.b16 %v72
  %v261 = vunpack.c.l.b16 %v73
  %v262 = vunpack.c.h.b16 %v73
  %v263 = vunpack.c.l.b16 %v74
  %v264 = vunpack.c.h.b16 %v74
  %v265 = vunpack.c.l.b16 %v75
  %v266 = vunpack.c.h.b16 %v75
  %v267 = vunpack.c.l.b16 %v76
  %v268 = vunpack.c.h.b16 %v76
  %v269 = vunpack.c.l.b16 %v77
  %v270 = vunpack.c.h.b16 %v77
  %v271 = vunpack.c.l.b16 %v78
  %v272 = vunpack.c.h.b16 %v78
  %v273 = vunpack.c.l.b16 %v79
  %v274 = vunpack.c.h.b16 %v79
  %v275 = vunpack.c.l.b16 %v80
  %v276 = vunpack.c.h.b16 %v80
  %v277 = vunpack.c.l.b16 %v81
  %v278 = vunpack.c.h.b16 %v81
  %v279 = vunpack.c.l.b16 %v82
  %v280 = vunpack.c.h.b16 %v82
  %v281 = vunpack.c.l.b16 %v83
  %v282 = vunpack.c.h.b16 %v83
  %v283 = vunpack.c.l.b16 %v84
  %v284 = vunpack.c.h.b16 %v84
  %v285 = vunpack.c.l.b16 %v85
  %v286 = vunpack.c.h.b16 %v85
  %v287 = vunpack.c.l.b16 %v86
  %v288 = vunpack.c.h.b16 %v86
  %v289 = vunpack.c.l.b16 %v87
  %v290 = vunpack.c.h.b16 %v87
  %v291 = vunpack.c.l.b16 %v88
  %v292 = vunpack.c.h.b16 %v88
  %v293 = vunpack.c.l.b16 %v89
  %v294 = vunpack.c.h.b16 %v89
  %v295 = vunpack.c.l.b16 %v90
  %v296 = vunpack.c.h.b16 %v90
  %v297 = vunpack.c.l.b16 %v91
  %v298 = vunpack.c.h.b16 %v91
  %v299 = vunpack.c.l.b16 %v92
  %v300 = vunpack.c.h.b16 %v92
  %v301 = vunpack.c.l.b16 %v93
  %v302 = vunpack.c.h.b16 %v93
  %v303 = vunpack.c.l.b16 %v94
  %v304 = vunpack.c.h.b16 %v94
  %v305 = vunpack.c.l.b16 %v95
  %v306 = vunpack.c.h.b16 %v95
  %v307 = vunpack.c.l.b16 %v96
  %v308 = vunpack.c.h.b16 %v96
  %v309 = vunpack.c.l.b16 %v97
  %v310 = vunpack.c.h.b16 %v97
  %v311 = vpack.c.b16 %v187, %v183
  %v312 = vpack.c.b16 %v188, %v184
  %v313 = vpack.c.b16 %v189, %v185
  %v314 = vpack.c.b16 %v190, %v186
  %v315 = vpack.c.b16 %v195, %v191
  %v316 = vpack.c.b16 %v196, %v192
  %v317 = vpack.c.b16 %v197, %v193
  %v318 = vpack.c.b16 %v198, %v194
  %v319 = vpack.c.b16 %v203, %v199
  %v320 = vpack.c.b16 %v204, %v200
  %v321 = vpack.c.b16 %v205, %v201
  %v322 = vpack.c.b16 %v206, %v202
  %v323 = vpack.c.b16 %v211, %v207
  %v324 = vpack.c.b16 %v212, %v208
  %v325 = vpack.c.b16 %v213, %v209
  %v326 = vpack.c.b16 %v214, %v210
  %v327 = vpack.c.b16 %v219, %v215
  %v328 = vpack.c.b16 %v220, %v216
  %v329 = vpack.c.b16 %v221, %v217
  %v330 = vpack.c.b16 %v222, %v218
  %v331 = vpack.c.b16 %v227, %v223
  %v332 = vpack.c.b16 %v228, %v224
  %v333 = vpack.c.b16 %v229, %v225
  %v334 = vpack.c.b16 %v230, %v226
  %v335 = vpack.c.b16 %v235, %v231
  %v336 = vpack.c.b16 %v236, %v232
  %v337 = vpack.c.b16 %v237, %v233
  %v338 = vpack.c.b16 %v238, %v234
  %v339 = vpack.c.b16 %v243, %v239
  %v340 = vpack.c.b16 %v244, %v240
  %v341 = vpack.c.b16 %v245, %v241
  %v342 = vpack.c.b16 %v246, %v242
  %v343 = vpack.c.b16 %v251, %v247
  %v344 = vpack.c.b16 %v252, %v248
  %v345 = vpack.c.b16 %v253, %v249
  %v346 = vpack.c.b16 %v254, %v250
  %v347 = vpack.c.b16 %v259, %v255
  %v348 = vpack.c.b16 %v260, %v256
  %v349 = vpack.c.b16 %v261, %v257
  %v350 = vpack.c.b16 %v262, %v258
  %v351 = vpack.c.b16 %v267, %v263
  %v352 = vpack.c.b16 %v268, %v264
  %v353 = vpack.c.b16 %v269, %v265
  %v354 = vpack.c.b16 %v270, %v266
  %v355 = vpack.c.b16 %v275, %v271
  %v356 = vpack.c.b16 %v276, %v272
  %v357 = vpack.c.b16 %v277, %v273
  %v358 = vpack.c.b16 %v278, %v274
  %v359 = vpack.c.b16 %v283, %v279
  %v360 = vpack.c.b16 %v284, %v280
  %v361 = vpack.c.b16 %v285, %v281
  %v362 = vpack.c.b16 %v286, %v282
  %v363 = vpack.c.b16 %v291, %v287
  %v364 = vpack.c.b16 %v292, %v288
  %v365 = vpack.c.b16 %v293, %v289
  %v366 = vpack.c.b16 %v294, %v290
  %v367 = vpack.c.b16 %v299, %v295
  %v368 = vpack.c.b16 %v300, %v296
  %v369 = vpack.c.b16 %v301, %v297
  %v370 = vpack.c.b16 %v302, %v298
  %v371 = vpack.c.b16 %v307, %v303
  %v372 = vpack.c.b16 %v308, %v304
  %v373 = vpack.c.b16 %v309, %v305
  %v374 = vpack.c.b16 %v310, %v306
  %439 = vmatprep.subr.bf16.mxu0 %v340
  %440 = vmatpush1.bf16.msra.mxu0 %v339
  %441 = vmatprep.subr.bf16.mxu0 %v336
  %442 = vmatpush1.bf16.msra.mxu0 %v335
  %443 = vmatprep.subr.bf16.mxu0 %v332
  %444 = vmatpush1.bf16.msra.mxu0 %v331
  %445 = vmatprep.subr.bf16.mxu0 %v328
  %446 = vmatpush1.bf16.msra.mxu0 %v327
  %447 = vmatprep.subr.bf16.mxu0 %v324
  %448 = vmatpush1.bf16.msra.mxu0 %v323
  %449 = vmatprep.subr.bf16.mxu0 %v320
  %450 = vmatpush1.bf16.msra.mxu0 %v319
  %451 = vmatprep.subr.bf16.mxu0 %v316
  %452 = vmatpush1.bf16.msra.mxu0 %v315
  %453 = vmatprep.subr.bf16.mxu0 %v312
  %454 = vmatpush1.bf16.msra.mxu0 %v311
  %455 = vmatprep.subr.bf16.mxu0 %v372
  %456 = vmatpush2.bf16.msra.mxu0 %v371
  %457 = vmatprep.subr.bf16.mxu0 %v368
  %458 = vmatpush2.bf16.msra.mxu0 %v367
  %459 = vmatprep.subr.bf16.mxu0 %v364
  %460 = vmatpush2.bf16.msra.mxu0 %v363
  %461 = vmatprep.subr.bf16.mxu0 %v360
  %462 = vmatpush2.bf16.msra.mxu0 %v359
  %463 = vmatprep.subr.bf16.mxu0 %v356
  %464 = vmatpush2.bf16.msra.mxu0 %v355
  %465 = vmatprep.subr.bf16.mxu0 %v352
  %466 = vmatpush2.bf16.msra.mxu0 %v351
  %467 = vmatprep.subr.bf16.mxu0 %v348
  %468 = vmatpush2.bf16.msra.mxu0 %v347
  %469 = vmatprep.subr.bf16.mxu0 %v344
  %470 = vmatpush2.bf16.msra.mxu0 %v343
  %471 = vmatprep.mubr.bf16.mxu0 %v33
  %472 = vmatmul.mubr.bf16.gmra.mxu0 %v32
  %v473 = vpop.f32.mrf.mxu0
  %v474 = vadd.f32 %v102, %v473
  %v475 = vpop.f32.mrf.mxu0
  %v476 = vadd.f32 %v106, %v475
  %v477 = vpop.f32.mrf.mxu0
  %v478 = vpop.f32.mrf.mxu0
  %479 = vdwg.mxu0
  %480 = vmatprep.subr.bf16.mxu0 %v342
  %481 = vmatpush1.bf16.msra.mxu0 %v341
  %482 = vmatprep.subr.bf16.mxu0 %v338
  %483 = vmatpush1.bf16.msra.mxu0 %v337
  %484 = vmatprep.subr.bf16.mxu0 %v334
  %485 = vmatpush1.bf16.msra.mxu0 %v333
  %486 = vmatprep.subr.bf16.mxu0 %v330
  %487 = vmatpush1.bf16.msra.mxu0 %v329
  %488 = vmatprep.subr.bf16.mxu0 %v326
  %489 = vmatpush1.bf16.msra.mxu0 %v325
  %490 = vmatprep.subr.bf16.mxu0 %v322
  %491 = vmatpush1.bf16.msra.mxu0 %v321
  %492 = vmatprep.subr.bf16.mxu0 %v318
  %493 = vmatpush1.bf16.msra.mxu0 %v317
  %494 = vmatprep.subr.bf16.mxu0 %v314
  %495 = vmatpush1.bf16.msra.mxu0 %v313
  %496 = vmatprep.subr.bf16.mxu0 %v374
  %497 = vmatpush2.bf16.msra.mxu0 %v373
  %498 = vmatprep.subr.bf16.mxu0 %v370
  %499 = vmatpush2.bf16.msra.mxu0 %v369
  %500 = vmatprep.subr.bf16.mxu0 %v366
  %501 = vmatpush2.bf16.msra.mxu0 %v365
  %502 = vmatprep.subr.bf16.mxu0 %v362
  %503 = vmatpush2.bf16.msra.mxu0 %v361
  %504 = vmatprep.subr.bf16.mxu0 %v358
  %505 = vmatpush2.bf16.msra.mxu0 %v357
  %506 = vmatprep.subr.bf16.mxu0 %v354
  %507 = vmatpush2.bf16.msra.mxu0 %v353
  %508 = vmatprep.subr.bf16.mxu0 %v350
  %509 = vmatpush2.bf16.msra.mxu0 %v349
  %510 = vmatprep.subr.bf16.mxu0 %v346
  %511 = vmatpush2.bf16.msra.mxu0 %v345
  %512 = vmatprep.mubr.bf16.mxu0 %v33
  %513 = vmatmul.mubr.bf16.gmra.mxu0 %v32
  %v514 = vpop.f32.mrf.mxu0
  %v515 = vadd.f32 %v110, %v514
  %v516 = vpop.f32.mrf.mxu0
  %v517 = vadd.f32 %v114, %v516
  %v518 = vpop.f32.mrf.mxu0
  %v519 = vpop.f32.mrf.mxu0
  %520 = vdwg.mxu0
  %v521 = vxor.u32 %v474, 2147483648
  %v522 = vmul.f32 %v521, 1.442695
  %v523 = vpow.pop %v522
  %v524 = vadd.f32 %v523, 1.0
  %v525 = vrcp.pop %v524
  %v526 = vmul.f32 1.0, %v525
  %v527 = vxor.u32 %v476, 2147483648
  %v528 = vmul.f32 %v527, 1.442695
  %v529 = vpow.pop %v528
  %v530 = vadd.f32 %v529, 1.0
  %v531 = vrcp.pop %v530
  %v532 = vmul.f32 1.0, %v531
  %v533 = vtanh.pop %v515
  %v534 = vxor.u32 %v517, 2147483648
  %v535 = vmul.f32 %v534, 1.442695
  %v536 = vpow.pop %v535
  %v537 = vadd.f32 %v536, 1.0
  %v538 = vrcp.pop %v537
  %v539 = vmul.f32 1.0, %v538
  %v540 = vmul.f32 %v532, %v31
  %v541 = vmul.f32 %v526, %v533
  %v542 = vadd.f32 %v540, %v541
  %v543 = vtanh.pop %v542
  %v544 = vmul.f32 %v539, %v543
  %v545 = vpack.c.bf16 %v544, %v544
  %v546 = vld [vmem:[%s5] sm:$0xff]
  %v547 = vld [vmem:[%s5 + $0x8] sm:$0xff]
  %v548 = vld [vmem:[%s5 + $0x10] sm:$0xff]
  %v549 = vld [vmem:[%s5 + $0x18] sm:$0xff]
  %v550 = vld [vmem:[%s5 + $0x20] sm:$0xff]
  %v551 = vld [vmem:[%s5 + $0x28] sm:$0xff]
  %v552 = vld [vmem:[%s5 + $0x30] sm:$0xff]
  %v553 = vld [vmem:[%s5 + $0x38] sm:$0xff]
  %v554 = vld [vmem:[%s5 + $0x40] sm:$0xff]
  %v555 = vld [vmem:[%s5 + $0x48] sm:$0xff]
  %v556 = vld [vmem:[%s5 + $0x50] sm:$0xff]
  %v557 = vld [vmem:[%s5 + $0x58] sm:$0xff]
  %v558 = vld [vmem:[%s5 + $0x60] sm:$0xff]
  %v559 = vld [vmem:[%s5 + $0x68] sm:$0xff]
  %v560 = vld [vmem:[%s5 + $0x70] sm:$0xff]
  %v561 = vld [vmem:[%s5 + $0x78] sm:$0xff]
  %v562 = vld [vmem:[%s5 + $0x80] sm:$0xff]
  %v563 = vld [vmem:[%s5 + $0x88] sm:$0xff]
  %v564 = vld [vmem:[%s5 + $0x90] sm:$0xff]
  %v565 = vld [vmem:[%s5 + $0x98] sm:$0xff]
  %v566 = vld [vmem:[%s5 + $0xa0] sm:$0xff]
  %v567 = vld [vmem:[%s5 + $0xa8] sm:$0xff]
  %v568 = vld [vmem:[%s5 + $0xb0] sm:$0xff]
  %v569 = vld [vmem:[%s5 + $0xb8] sm:$0xff]
  %v570 = vld [vmem:[%s5 + $0xc0] sm:$0xff]
  %v571 = vld [vmem:[%s5 + $0xc8] sm:$0xff]
  %v572 = vld [vmem:[%s5 + $0xd0] sm:$0xff]
  %v573 = vld [vmem:[%s5 + $0xd8] sm:$0xff]
  %v574 = vld [vmem:[%s5 + $0xe0] sm:$0xff]
  %v575 = vld [vmem:[%s5 + $0xe8] sm:$0xff]
  %v576 = vld [vmem:[%s5 + $0xf0] sm:$0xff]
  %v577 = vld [vmem:[%s5 + $0xf8] sm:$0xff]
  %v578 = vld [vmem:[%s5 + $0x100] sm:$0xff]
  %v579 = vld [vmem:[%s5 + $0x108] sm:$0xff]
  %v580 = vld [vmem:[%s5 + $0x110] sm:$0xff]
  %v581 = vld [vmem:[%s5 + $0x118] sm:$0xff]
  %v582 = vld [vmem:[%s5 + $0x120] sm:$0xff]
  %v583 = vld [vmem:[%s5 + $0x128] sm:$0xff]
  %v584 = vld [vmem:[%s5 + $0x130] sm:$0xff]
  %v585 = vld [vmem:[%s5 + $0x138] sm:$0xff]
  %v586 = vld [vmem:[%s5 + $0x140] sm:$0xff]
  %v587 = vld [vmem:[%s5 + $0x148] sm:$0xff]
  %v588 = vld [vmem:[%s5 + $0x150] sm:$0xff]
  %v589 = vld [vmem:[%s5 + $0x158] sm:$0xff]
  %v590 = vld [vmem:[%s5 + $0x160] sm:$0xff]
  %v591 = vld [vmem:[%s5 + $0x168] sm:$0xff]
  %v592 = vld [vmem:[%s5 + $0x170] sm:$0xff]
  %v593 = vld [vmem:[%s5 + $0x178] sm:$0xff]
  %v594 = vld [vmem:[%s5 + $0x180] sm:$0xff]
  %v595 = vld [vmem:[%s5 + $0x188] sm:$0xff]
  %v596 = vld [vmem:[%s5 + $0x190] sm:$0xff]
  %v597 = vld [vmem:[%s5 + $0x198] sm:$0xff]
  %v598 = vld [vmem:[%s5 + $0x1a0] sm:$0xff]
  %v599 = vld [vmem:[%s5 + $0x1a8] sm:$0xff]
  %v600 = vld [vmem:[%s5 + $0x1b0] sm:$0xff]
  %v601 = vld [vmem:[%s5 + $0x1b8] sm:$0xff]
  %v602 = vld [vmem:[%s5 + $0x1c0] sm:$0xff]
  %v603 = vld [vmem:[%s5 + $0x1c8] sm:$0xff]
  %v604 = vld [vmem:[%s5 + $0x1d0] sm:$0xff]
  %v605 = vld [vmem:[%s5 + $0x1d8] sm:$0xff]
  %v606 = vld [vmem:[%s5 + $0x1e0] sm:$0xff]
  %v607 = vld [vmem:[%s5 + $0x1e8] sm:$0xff]
  %v608 = vld [vmem:[%s5 + $0x1f0] sm:$0xff]
  %v609 = vld [vmem:[%s5 + $0x1f8] sm:$0xff]
  %v611 = vlaneseq
  %v612 = vshrl.u32 %v611, 7
  %v613 = vsub.s32 0, %v612
  %v614 = vrot.slane %v29, %v613
  %v615 = vlaneseq
  %v616 = vshrl.u32 %v615, 7
  %v617 = vsub.s32 1, %v616
  %v618 = vrot.slane %v29, %v617
  %v619 = vlaneseq
  %v620 = vshrl.u32 %v619, 7
  %v621 = vsub.s32 2, %v620
  %v622 = vrot.slane %v29, %v621
  %v623 = vlaneseq
  %v624 = vshrl.u32 %v623, 7
  %v625 = vsub.s32 3, %v624
  %v626 = vrot.slane %v29, %v625
  %v695 = vunpack.c.l.b16 %v546
  %v696 = vunpack.c.h.b16 %v546
  %v697 = vunpack.c.l.b16 %v547
  %v698 = vunpack.c.h.b16 %v547
  %v699 = vunpack.c.l.b16 %v548
  %v700 = vunpack.c.h.b16 %v548
  %v701 = vunpack.c.l.b16 %v549
  %v702 = vunpack.c.h.b16 %v549
  %v703 = vunpack.c.l.b16 %v550
  %v704 = vunpack.c.h.b16 %v550
  %v705 = vunpack.c.l.b16 %v551
  %v706 = vunpack.c.h.b16 %v551
  %v707 = vunpack.c.l.b16 %v552
  %v708 = vunpack.c.h.b16 %v552
  %v709 = vunpack.c.l.b16 %v553
  %v710 = vunpack.c.h.b16 %v553
  %v711 = vunpack.c.l.b16 %v554
  %v712 = vunpack.c.h.b16 %v554
  %v713 = vunpack.c.l.b16 %v555
  %v714 = vunpack.c.h.b16 %v555
  %v715 = vunpack.c.l.b16 %v556
  %v716 = vunpack.c.h.b16 %v556
  %v717 = vunpack.c.l.b16 %v557
  %v718 = vunpack.c.h.b16 %v557
  %v719 = vunpack.c.l.b16 %v558
  %v720 = vunpack.c.h.b16 %v558
  %v721 = vunpack.c.l.b16 %v559
  %v722 = vunpack.c.h.b16 %v559
  %v723 = vunpack.c.l.b16 %v560
  %v724 = vunpack.c.h.b16 %v560
  %v725 = vunpack.c.l.b16 %v561
  %v726 = vunpack.c.h.b16 %v561
  %v727 = vunpack.c.l.b16 %v562
  %v728 = vunpack.c.h.b16 %v562
  %v729 = vunpack.c.l.b16 %v563
  %v730 = vunpack.c.h.b16 %v563
  %v731 = vunpack.c.l.b16 %v564
  %v732 = vunpack.c.h.b16 %v564
  %v733 = vunpack.c.l.b16 %v565
  %v734 = vunpack.c.h.b16 %v565
  %v735 = vunpack.c.l.b16 %v566
  %v736 = vunpack.c.h.b16 %v566
  %v737 = vunpack.c.l.b16 %v567
  %v738 = vunpack.c.h.b16 %v567
  %v739 = vunpack.c.l.b16 %v568
  %v740 = vunpack.c.h.b16 %v568
  %v741 = vunpack.c.l.b16 %v569
  %v742 = vunpack.c.h.b16 %v569
  %v743 = vunpack.c.l.b16 %v570
  %v744 = vunpack.c.h.b16 %v570
  %v745 = vunpack.c.l.b16 %v571
  %v746 = vunpack.c.h.b16 %v571
  %v747 = vunpack.c.l.b16 %v572
  %v748 = vunpack.c.h.b16 %v572
  %v749 = vunpack.c.l.b16 %v573
  %v750 = vunpack.c.h.b16 %v573
  %v751 = vunpack.c.l.b16 %v574
  %v752 = vunpack.c.h.b16 %v574
  %v753 = vunpack.c.l.b16 %v575
  %v754 = vunpack.c.h.b16 %v575
  %v755 = vunpack.c.l.b16 %v576
  %v756 = vunpack.c.h.b16 %v576
  %v757 = vunpack.c.l.b16 %v577
  %v758 = vunpack.c.h.b16 %v577
  %v759 = vunpack.c.l.b16 %v578
  %v760 = vunpack.c.h.b16 %v578
  %v761 = vunpack.c.l.b16 %v579
  %v762 = vunpack.c.h.b16 %v579
  %v763 = vunpack.c.l.b16 %v580
  %v764 = vunpack.c.h.b16 %v580
  %v765 = vunpack.c.l.b16 %v581
  %v766 = vunpack.c.h.b16 %v581
  %v767 = vunpack.c.l.b16 %v582
  %v768 = vunpack.c.h.b16 %v582
  %v769 = vunpack.c.l.b16 %v583
  %v770 = vunpack.c.h.b16 %v583
  %v771 = vunpack.c.l.b16 %v584
  %v772 = vunpack.c.h.b16 %v584
  %v773 = vunpack.c.l.b16 %v585
  %v774 = vunpack.c.h.b16 %v585
  %v775 = vunpack.c.l.b16 %v586
  %v776 = vunpack.c.h.b16 %v586
  %v777 = vunpack.c.l.b16 %v587
  %v778 = vunpack.c.h.b16 %v587
  %v779 = vunpack.c.l.b16 %v588
  %v780 = vunpack.c.h.b16 %v588
  %v781 = vunpack.c.l.b16 %v589
  %v782 = vunpack.c.h.b16 %v589
  %v783 = vunpack.c.l.b16 %v590
  %v784 = vunpack.c.h.b16 %v590
  %v785 = vunpack.c.l.b16 %v591
  %v786 = vunpack.c.h.b16 %v591
  %v787 = vunpack.c.l.b16 %v592
  %v788 = vunpack.c.h.b16 %v592
  %v789 = vunpack.c.l.b16 %v593
  %v790 = vunpack.c.h.b16 %v593
  %v791 = vunpack.c.l.b16 %v594
  %v792 = vunpack.c.h.b16 %v594
  %v793 = vunpack.c.l.b16 %v595
  %v794 = vunpack.c.h.b16 %v595
  %v795 = vunpack.c.l.b16 %v596
  %v796 = vunpack.c.h.b16 %v596
  %v797 = vunpack.c.l.b16 %v597
  %v798 = vunpack.c.h.b16 %v597
  %v799 = vunpack.c.l.b16 %v598
  %v800 = vunpack.c.h.b16 %v598
  %v801 = vunpack.c.l.b16 %v599
  %v802 = vunpack.c.h.b16 %v599
  %v803 = vunpack.c.l.b16 %v600
  %v804 = vunpack.c.h.b16 %v600
  %v805 = vunpack.c.l.b16 %v601
  %v806 = vunpack.c.h.b16 %v601
  %v807 = vunpack.c.l.b16 %v602
  %v808 = vunpack.c.h.b16 %v602
  %v809 = vunpack.c.l.b16 %v603
  %v810 = vunpack.c.h.b16 %v603
  %v811 = vunpack.c.l.b16 %v604
  %v812 = vunpack.c.h.b16 %v604
  %v813 = vunpack.c.l.b16 %v605
  %v814 = vunpack.c.h.b16 %v605
  %v815 = vunpack.c.l.b16 %v606
  %v816 = vunpack.c.h.b16 %v606
  %v817 = vunpack.c.l.b16 %v607
  %v818 = vunpack.c.h.b16 %v607
  %v819 = vunpack.c.l.b16 %v608
  %v820 = vunpack.c.h.b16 %v608
  %v821 = vunpack.c.l.b16 %v609
  %v822 = vunpack.c.h.b16 %v609
  %v823 = vpack.c.b16 %v699, %v695
  %v824 = vpack.c.b16 %v700, %v696
  %v825 = vpack.c.b16 %v701, %v697
  %v826 = vpack.c.b16 %v702, %v698
  %v827 = vpack.c.b16 %v707, %v703
  %v828 = vpack.c.b16 %v708, %v704
  %v829 = vpack.c.b16 %v709, %v705
  %v830 = vpack.c.b16 %v710, %v706
  %v831 = vpack.c.b16 %v715, %v711
  %v832 = vpack.c.b16 %v716, %v712
  %v833 = vpack.c.b16 %v717, %v713
  %v834 = vpack.c.b16 %v718, %v714
  %v835 = vpack.c.b16 %v723, %v719
  %v836 = vpack.c.b16 %v724, %v720
  %v837 = vpack.c.b16 %v725, %v721
  %v838 = vpack.c.b16 %v726, %v722
  %v839 = vpack.c.b16 %v731, %v727
  %v840 = vpack.c.b16 %v732, %v728
  %v841 = vpack.c.b16 %v733, %v729
  %v842 = vpack.c.b16 %v734, %v730
  %v843 = vpack.c.b16 %v739, %v735
  %v844 = vpack.c.b16 %v740, %v736
  %v845 = vpack.c.b16 %v741, %v737
  %v846 = vpack.c.b16 %v742, %v738
  %v847 = vpack.c.b16 %v747, %v743
  %v848 = vpack.c.b16 %v748, %v744
  %v849 = vpack.c.b16 %v749, %v745
  %v850 = vpack.c.b16 %v750, %v746
  %v851 = vpack.c.b16 %v755, %v751
  %v852 = vpack.c.b16 %v756, %v752
  %v853 = vpack.c.b16 %v757, %v753
  %v854 = vpack.c.b16 %v758, %v754
  %v855 = vpack.c.b16 %v763, %v759
  %v856 = vpack.c.b16 %v764, %v760
  %v857 = vpack.c.b16 %v765, %v761
  %v858 = vpack.c.b16 %v766, %v762
  %v859 = vpack.c.b16 %v771, %v767
  %v860 = vpack.c.b16 %v772, %v768
  %v861 = vpack.c.b16 %v773, %v769
  %v862 = vpack.c.b16 %v774, %v770
  %v863 = vpack.c.b16 %v779, %v775
  %v864 = vpack.c.b16 %v780, %v776
  %v865 = vpack.c.b16 %v781, %v777
  %v866 = vpack.c.b16 %v782, %v778
  %v867 = vpack.c.b16 %v787, %v783
  %v868 = vpack.c.b16 %v788, %v784
  %v869 = vpack.c.b16 %v789, %v785
  %v870 = vpack.c.b16 %v790, %v786
  %v871 = vpack.c.b16 %v795, %v791
  %v872 = vpack.c.b16 %v796, %v792
  %v873 = vpack.c.b16 %v797, %v793
  %v874 = vpack.c.b16 %v798, %v794
  %v875 = vpack.c.b16 %v803, %v799
  %v876 = vpack.c.b16 %v804, %v800
  %v877 = vpack.c.b16 %v805, %v801
  %v878 = vpack.c.b16 %v806, %v802
  %v879 = vpack.c.b16 %v811, %v807
  %v880 = vpack.c.b16 %v812, %v808
  %v881 = vpack.c.b16 %v813, %v809
  %v882 = vpack.c.b16 %v814, %v810
  %v883 = vpack.c.b16 %v819, %v815
  %v884 = vpack.c.b16 %v820, %v816
  %v885 = vpack.c.b16 %v821, %v817
  %v886 = vpack.c.b16 %v822, %v818
  %951 = vmatprep.subr.bf16.mxu0 %v852
  %952 = vmatpush1.bf16.msra.mxu0 %v851
  %953 = vmatprep.subr.bf16.mxu0 %v848
  %954 = vmatpush1.bf16.msra.mxu0 %v847
  %955 = vmatprep.subr.bf16.mxu0 %v844
  %956 = vmatpush1.bf16.msra.mxu0 %v843
  %957 = vmatprep.subr.bf16.mxu0 %v840
  %958 = vmatpush1.bf16.msra.mxu0 %v839
  %959 = vmatprep.subr.bf16.mxu0 %v836
  %960 = vmatpush1.bf16.msra.mxu0 %v835
  %961 = vmatprep.subr.bf16.mxu0 %v832
  %962 = vmatpush1.bf16.msra.mxu0 %v831
  %963 = vmatprep.subr.bf16.mxu0 %v828
  %964 = vmatpush1.bf16.msra.mxu0 %v827
  %965 = vmatprep.subr.bf16.mxu0 %v824
  %966 = vmatpush1.bf16.msra.mxu0 %v823
  %967 = vmatprep.subr.bf16.mxu0 %v884
  %968 = vmatpush2.bf16.msra.mxu0 %v883
  %969 = vmatprep.subr.bf16.mxu0 %v880
  %970 = vmatpush2.bf16.msra.mxu0 %v879
  %971 = vmatprep.subr.bf16.mxu0 %v876
  %972 = vmatpush2.bf16.msra.mxu0 %v875
  %973 = vmatprep.subr.bf16.mxu0 %v872
  %974 = vmatpush2.bf16.msra.mxu0 %v871
  %975 = vmatprep.subr.bf16.mxu0 %v868
  %976 = vmatpush2.bf16.msra.mxu0 %v867
  %977 = vmatprep.subr.bf16.mxu0 %v864
  %978 = vmatpush2.bf16.msra.mxu0 %v863
  %979 = vmatprep.subr.bf16.mxu0 %v860
  %980 = vmatpush2.bf16.msra.mxu0 %v859
  %981 = vmatprep.subr.bf16.mxu0 %v856
  %982 = vmatpush2.bf16.msra.mxu0 %v855
  %983 = vmatprep.mubr.bf16.mxu0 %v33
  %984 = vmatmul.mubr.bf16.gmra.mxu0 %v545
  %v985 = vpop.f32.mrf.mxu0
  %v986 = vadd.f32 %v614, %v985
  %v987 = vpop.f32.mrf.mxu0
  %v988 = vadd.f32 %v618, %v987
  %v989 = vpop.f32.mrf.mxu0
  %v990 = vpop.f32.mrf.mxu0
  %991 = vdwg.mxu0
  %992 = vmatprep.subr.bf16.mxu0 %v854
  %993 = vmatpush1.bf16.msra.mxu0 %v853
  %994 = vmatprep.subr.bf16.mxu0 %v850
  %995 = vmatpush1.bf16.msra.mxu0 %v849
  %996 = vmatprep.subr.bf16.mxu0 %v846
  %997 = vmatpush1.bf16.msra.mxu0 %v845
  %998 = vmatprep.subr.bf16.mxu0 %v842
  %999 = vmatpush1.bf16.msra.mxu0 %v841
  %1000 = vmatprep.subr.bf16.mxu0 %v838
  %1001 = vmatpush1.bf16.msra.mxu0 %v837
  %1002 = vmatprep.subr.bf16.mxu0 %v834
  %1003 = vmatpush1.bf16.msra.mxu0 %v833
  %1004 = vmatprep.subr.bf16.mxu0 %v830
  %1005 = vmatpush1.bf16.msra.mxu0 %v829
  %1006 = vmatprep.subr.bf16.mxu0 %v826
  %1007 = vmatpush1.bf16.msra.mxu0 %v825
  %1008 = vmatprep.subr.bf16.mxu0 %v886
  %1009 = vmatpush2.bf16.msra.mxu0 %v885
  %1010 = vmatprep.subr.bf16.mxu0 %v882
  %1011 = vmatpush2.bf16.msra.mxu0 %v881
  %1012 = vmatprep.subr.bf16.mxu0 %v878
  %1013 = vmatpush2.bf16.msra.mxu0 %v877
  %1014 = vmatprep.subr.bf16.mxu0 %v874
  %1015 = vmatpush2.bf16.msra.mxu0 %v873
  %1016 = vmatprep.subr.bf16.mxu0 %v870
  %1017 = vmatpush2.bf16.msra.mxu0 %v869
  %1018 = vmatprep.subr.bf16.mxu0 %v866
  %1019 = vmatpush2.bf16.msra.mxu0 %v865
  %1020 = vmatprep.subr.bf16.mxu0 %v862
  %1021 = vmatpush2.bf16.msra.mxu0 %v861
  %1022 = vmatprep.subr.bf16.mxu0 %v858
  %1023 = vmatpush2.bf16.msra.mxu0 %v857
  %1024 = vmatprep.mubr.bf16.mxu0 %v33
  %1025 = vmatmul.mubr.bf16.gmra.mxu0 %v545
  %v1026 = vpop.f32.mrf.mxu0
  %v1027 = vadd.f32 %v622, %v1026
  %v1028 = vpop.f32.mrf.mxu0
  %v1029 = vadd.f32 %v626, %v1028
  %v1030 = vpop.f32.mrf.mxu0
  %v1031 = vpop.f32.mrf.mxu0
  %1032 = vdwg.mxu0
  %v1033 = vxor.u32 %v986, 2147483648
  %v1034 = vmul.f32 %v1033, 1.442695
  %v1035 = vpow.pop %v1034
  %v1036 = vadd.f32 %v1035, 1.0
  %v1037 = vrcp.pop %v1036
  %v1038 = vmul.f32 1.0, %v1037
  %v1039 = vxor.u32 %v988, 2147483648
  %v1040 = vmul.f32 %v1039, 1.442695
  %v1041 = vpow.pop %v1040
  %v1042 = vadd.f32 %v1041, 1.0
  %v1043 = vrcp.pop %v1042
  %v1044 = vmul.f32 1.0, %v1043
  %v1045 = vtanh.pop %v1027
  %v1046 = vxor.u32 %v1029, 2147483648
  %v1047 = vmul.f32 %v1046, 1.442695
  %v1048 = vpow.pop %v1047
  %v1049 = vadd.f32 %v1048, 1.0
  %v1050 = vrcp.pop %v1049
  %v1051 = vmul.f32 1.0, %v1050
  %v1052 = vmul.f32 %v1044, %v31
  %v1053 = vmul.f32 %v1038, %v1045
  %v1054 = vadd.f32 %v1052, %v1053
  %v1055 = vtanh.pop %v1054
  %v1056 = vmul.f32 %v1051, %v1055
  %1057 = vst [vmem:[%s7] sm:$0xff] %v1056
  %s1058 = scalar_lea.vmem %s0, 4
  %v1059 = vld [vmem:[%s1058] sm:$0xf]
  %v1060 = vld [vmem:[%s3] sm:$0xff]
  %v1061 = vld [vmem:[%s3 + $0x8] sm:$0xff]
  %v1062 = vld [vmem:[%s3 + $0x10] sm:$0xff]
  %v1063 = vld [vmem:[%s3 + $0x18] sm:$0xff]
  %v1064 = vld [vmem:[%s3 + $0x20] sm:$0xff]
  %v1065 = vld [vmem:[%s3 + $0x28] sm:$0xff]
  %v1066 = vld [vmem:[%s3 + $0x30] sm:$0xff]
  %v1067 = vld [vmem:[%s3 + $0x38] sm:$0xff]
  %v1068 = vld [vmem:[%s3 + $0x40] sm:$0xff]
  %v1069 = vld [vmem:[%s3 + $0x48] sm:$0xff]
  %v1070 = vld [vmem:[%s3 + $0x50] sm:$0xff]
  %v1071 = vld [vmem:[%s3 + $0x58] sm:$0xff]
  %v1072 = vld [vmem:[%s3 + $0x60] sm:$0xff]
  %v1073 = vld [vmem:[%s3 + $0x68] sm:$0xff]
  %v1074 = vld [vmem:[%s3 + $0x70] sm:$0xff]
  %v1075 = vld [vmem:[%s3 + $0x78] sm:$0xff]
  %v1076 = vld [vmem:[%s3 + $0x80] sm:$0xff]
  %v1077 = vld [vmem:[%s3 + $0x88] sm:$0xff]
  %v1078 = vld [vmem:[%s3 + $0x90] sm:$0xff]
  %v1079 = vld [vmem:[%s3 + $0x98] sm:$0xff]
  %v1080 = vld [vmem:[%s3 + $0xa0] sm:$0xff]
  %v1081 = vld [vmem:[%s3 + $0xa8] sm:$0xff]
  %v1082 = vld [vmem:[%s3 + $0xb0] sm:$0xff]
  %v1083 = vld [vmem:[%s3 + $0xb8] sm:$0xff]
  %v1084 = vld [vmem:[%s3 + $0xc0] sm:$0xff]
  %v1085 = vld [vmem:[%s3 + $0xc8] sm:$0xff]
  %v1086 = vld [vmem:[%s3 + $0xd0] sm:$0xff]
  %v1087 = vld [vmem:[%s3 + $0xd8] sm:$0xff]
  %v1088 = vld [vmem:[%s3 + $0xe0] sm:$0xff]
  %v1089 = vld [vmem:[%s3 + $0xe8] sm:$0xff]
  %v1090 = vld [vmem:[%s3 + $0xf0] sm:$0xff]
  %v1091 = vld [vmem:[%s3 + $0xf8] sm:$0xff]
  %v1092 = vld [vmem:[%s3 + $0x100] sm:$0xff]
  %v1093 = vld [vmem:[%s3 + $0x108] sm:$0xff]
  %v1094 = vld [vmem:[%s3 + $0x110] sm:$0xff]
  %v1095 = vld [vmem:[%s3 + $0x118] sm:$0xff]
  %v1096 = vld [vmem:[%s3 + $0x120] sm:$0xff]
  %v1097 = vld [vmem:[%s3 + $0x128] sm:$0xff]
  %v1098 = vld [vmem:[%s3 + $0x130] sm:$0xff]
  %v1099 = vld [vmem:[%s3 + $0x138] sm:$0xff]
  %v1100 = vld [vmem:[%s3 + $0x140] sm:$0xff]
  %v1101 = vld [vmem:[%s3 + $0x148] sm:$0xff]
  %v1102 = vld [vmem:[%s3 + $0x150] sm:$0xff]
  %v1103 = vld [vmem:[%s3 + $0x158] sm:$0xff]
  %v1104 = vld [vmem:[%s3 + $0x160] sm:$0xff]
  %v1105 = vld [vmem:[%s3 + $0x168] sm:$0xff]
  %v1106 = vld [vmem:[%s3 + $0x170] sm:$0xff]
  %v1107 = vld [vmem:[%s3 + $0x178] sm:$0xff]
  %v1108 = vld [vmem:[%s3 + $0x180] sm:$0xff]
  %v1109 = vld [vmem:[%s3 + $0x188] sm:$0xff]
  %v1110 = vld [vmem:[%s3 + $0x190] sm:$0xff]
  %v1111 = vld [vmem:[%s3 + $0x198] sm:$0xff]
  %v1112 = vld [vmem:[%s3 + $0x1a0] sm:$0xff]
  %v1113 = vld [vmem:[%s3 + $0x1a8] sm:$0xff]
  %v1114 = vld [vmem:[%s3 + $0x1b0] sm:$0xff]
  %v1115 = vld [vmem:[%s3 + $0x1b8] sm:$0xff]
  %v1116 = vld [vmem:[%s3 + $0x1c0] sm:$0xff]
  %v1117 = vld [vmem:[%s3 + $0x1c8] sm:$0xff]
  %v1118 = vld [vmem:[%s3 + $0x1d0] sm:$0xff]
  %v1119 = vld [vmem:[%s3 + $0x1d8] sm:$0xff]
  %v1120 = vld [vmem:[%s3 + $0x1e0] sm:$0xff]
  %v1121 = vld [vmem:[%s3 + $0x1e8] sm:$0xff]
  %v1122 = vld [vmem:[%s3 + $0x1f0] sm:$0xff]
  %v1123 = vld [vmem:[%s3 + $0x1f8] sm:$0xff]
  %v1188 = vunpack.c.l.b16 %v1060
  %v1189 = vunpack.c.h.b16 %v1060
  %v1190 = vunpack.c.l.b16 %v1061
  %v1191 = vunpack.c.h.b16 %v1061
  %v1192 = vunpack.c.l.b16 %v1062
  %v1193 = vunpack.c.h.b16 %v1062
  %v1194 = vunpack.c.l.b16 %v1063
  %v1195 = vunpack.c.h.b16 %v1063
  %v1196 = vunpack.c.l.b16 %v1064
  %v1197 = vunpack.c.h.b16 %v1064
  %v1198 = vunpack.c.l.b16 %v1065
  %v1199 = vunpack.c.h.b16 %v1065
  %v1200 = vunpack.c.l.b16 %v1066
  %v1201 = vunpack.c.h.b16 %v1066
  %v1202 = vunpack.c.l.b16 %v1067
  %v1203 = vunpack.c.h.b16 %v1067
  %v1204 = vunpack.c.l.b16 %v1068
  %v1205 = vunpack.c.h.b16 %v1068
  %v1206 = vunpack.c.l.b16 %v1069
  %v1207 = vunpack.c.h.b16 %v1069
  %v1208 = vunpack.c.l.b16 %v1070
  %v1209 = vunpack.c.h.b16 %v1070
  %v1210 = vunpack.c.l.b16 %v1071
  %v1211 = vunpack.c.h.b16 %v1071
  %v1212 = vunpack.c.l.b16 %v1072
  %v1213 = vunpack.c.h.b16 %v1072
  %v1214 = vunpack.c.l.b16 %v1073
  %v1215 = vunpack.c.h.b16 %v1073
  %v1216 = vunpack.c.l.b16 %v1074
  %v1217 = vunpack.c.h.b16 %v1074
  %v1218 = vunpack.c.l.b16 %v1075
  %v1219 = vunpack.c.h.b16 %v1075
  %v1220 = vunpack.c.l.b16 %v1076
  %v1221 = vunpack.c.h.b16 %v1076
  %v1222 = vunpack.c.l.b16 %v1077
  %v1223 = vunpack.c.h.b16 %v1077
  %v1224 = vunpack.c.l.b16 %v1078
  %v1225 = vunpack.c.h.b16 %v1078
  %v1226 = vunpack.c.l.b16 %v1079
  %v1227 = vunpack.c.h.b16 %v1079
  %v1228 = vunpack.c.l.b16 %v1080
  %v1229 = vunpack.c.h.b16 %v1080
  %v1230 = vunpack.c.l.b16 %v1081
  %v1231 = vunpack.c.h.b16 %v1081
  %v1232 = vunpack.c.l.b16 %v1082
  %v1233 = vunpack.c.h.b16 %v1082
  %v1234 = vunpack.c.l.b16 %v1083
  %v1235 = vunpack.c.h.b16 %v1083
  %v1236 = vunpack.c.l.b16 %v1084
  %v1237 = vunpack.c.h.b16 %v1084
  %v1238 = vunpack.c.l.b16 %v1085
  %v1239 = vunpack.c.h.b16 %v1085
  %v1240 = vunpack.c.l.b16 %v1086
  %v1241 = vunpack.c.h.b16 %v1086
  %v1242 = vunpack.c.l.b16 %v1087
  %v1243 = vunpack.c.h.b16 %v1087
  %v1244 = vunpack.c.l.b16 %v1088
  %v1245 = vunpack.c.h.b16 %v1088
  %v1246 = vunpack.c.l.b16 %v1089
  %v1247 = vunpack.c.h.b16 %v1089
  %v1248 = vunpack.c.l.b16 %v1090
  %v1249 = vunpack.c.h.b16 %v1090
  %v1250 = vunpack.c.l.b16 %v1091
  %v1251 = vunpack.c.h.b16 %v1091
  %v1252 = vunpack.c.l.b16 %v1092
  %v1253 = vunpack.c.h.b16 %v1092
  %v1254 = vunpack.c.l.b16 %v1093
  %v1255 = vunpack.c.h.b16 %v1093
  %v1256 = vunpack.c.l.b16 %v1094
  %v1257 = vunpack.c.h.b16 %v1094
  %v1258 = vunpack.c.l.b16 %v1095
  %v1259 = vunpack.c.h.b16 %v1095
  %v1260 = vunpack.c.l.b16 %v1096
  %v1261 = vunpack.c.h.b16 %v1096
  %v1262 = vunpack.c.l.b16 %v1097
  %v1263 = vunpack.c.h.b16 %v1097
  %v1264 = vunpack.c.l.b16 %v1098
  %v1265 = vunpack.c.h.b16 %v1098
  %v1266 = vunpack.c.l.b16 %v1099
  %v1267 = vunpack.c.h.b16 %v1099
  %v1268 = vunpack.c.l.b16 %v1100
  %v1269 = vunpack.c.h.b16 %v1100
  %v1270 = vunpack.c.l.b16 %v1101
  %v1271 = vunpack.c.h.b16 %v1101
  %v1272 = vunpack.c.l.b16 %v1102
  %v1273 = vunpack.c.h.b16 %v1102
  %v1274 = vunpack.c.l.b16 %v1103
  %v1275 = vunpack.c.h.b16 %v1103
  %v1276 = vunpack.c.l.b16 %v1104
  %v1277 = vunpack.c.h.b16 %v1104
  %v1278 = vunpack.c.l.b16 %v1105
  %v1279 = vunpack.c.h.b16 %v1105
  %v1280 = vunpack.c.l.b16 %v1106
  %v1281 = vunpack.c.h.b16 %v1106
  %v1282 = vunpack.c.l.b16 %v1107
  %v1283 = vunpack.c.h.b16 %v1107
  %v1284 = vunpack.c.l.b16 %v1108
  %v1285 = vunpack.c.h.b16 %v1108
  %v1286 = vunpack.c.l.b16 %v1109
  %v1287 = vunpack.c.h.b16 %v1109
  %v1288 = vunpack.c.l.b16 %v1110
  %v1289 = vunpack.c.h.b16 %v1110
  %v1290 = vunpack.c.l.b16 %v1111
  %v1291 = vunpack.c.h.b16 %v1111
  %v1292 = vunpack.c.l.b16 %v1112
  %v1293 = vunpack.c.h.b16 %v1112
  %v1294 = vunpack.c.l.b16 %v1113
  %v1295 = vunpack.c.h.b16 %v1113
  %v1296 = vunpack.c.l.b16 %v1114
  %v1297 = vunpack.c.h.b16 %v1114
  %v1298 = vunpack.c.l.b16 %v1115
  %v1299 = vunpack.c.h.b16 %v1115
  %v1300 = vunpack.c.l.b16 %v1116
  %v1301 = vunpack.c.h.b16 %v1116
  %v1302 = vunpack.c.l.b16 %v1117
  %v1303 = vunpack.c.h.b16 %v1117
  %v1304 = vunpack.c.l.b16 %v1118
  %v1305 = vunpack.c.h.b16 %v1118
  %v1306 = vunpack.c.l.b16 %v1119
  %v1307 = vunpack.c.h.b16 %v1119
  %v1308 = vunpack.c.l.b16 %v1120
  %v1309 = vunpack.c.h.b16 %v1120
  %v1310 = vunpack.c.l.b16 %v1121
  %v1311 = vunpack.c.h.b16 %v1121
  %v1312 = vunpack.c.l.b16 %v1122
  %v1313 = vunpack.c.h.b16 %v1122
  %v1314 = vunpack.c.l.b16 %v1123
  %v1315 = vunpack.c.h.b16 %v1123
  %v1316 = vpack.c.b16 %v1192, %v1188
  %v1317 = vpack.c.b16 %v1193, %v1189
  %v1318 = vpack.c.b16 %v1194, %v1190
  %v1319 = vpack.c.b16 %v1195, %v1191
  %v1320 = vpack.c.b16 %v1200, %v1196
  %v1321 = vpack.c.b16 %v1201, %v1197
  %v1322 = vpack.c.b16 %v1202, %v1198
  %v1323 = vpack.c.b16 %v1203, %v1199
  %v1324 = vpack.c.b16 %v1208, %v1204
  %v1325 = vpack.c.b16 %v1209, %v1205
  %v1326 = vpack.c.b16 %v1210, %v1206
  %v1327 = vpack.c.b16 %v1211, %v1207
  %v1328 = vpack.c.b16 %v1216, %v1212
  %v1329 = vpack.c.b16 %v1217, %v1213
  %v1330 = vpack.c.b16 %v1218, %v1214
  %v1331 = vpack.c.b16 %v1219, %v1215
  %v1332 = vpack.c.b16 %v1224, %v1220
  %v1333 = vpack.c.b16 %v1225, %v1221
  %v1334 = vpack.c.b16 %v1226, %v1222
  %v1335 = vpack.c.b16 %v1227, %v1223
  %v1336 = vpack.c.b16 %v1232, %v1228
  %v1337 = vpack.c.b16 %v1233, %v1229
  %v1338 = vpack.c.b16 %v1234, %v1230
  %v1339 = vpack.c.b16 %v1235, %v1231
  %v1340 = vpack.c.b16 %v1240, %v1236
  %v1341 = vpack.c.b16 %v1241, %v1237
  %v1342 = vpack.c.b16 %v1242, %v1238
  %v1343 = vpack.c.b16 %v1243, %v1239
  %v1344 = vpack.c.b16 %v1248, %v1244
  %v1345 = vpack.c.b16 %v1249, %v1245
  %v1346 = vpack.c.b16 %v1250, %v1246
  %v1347 = vpack.c.b16 %v1251, %v1247
  %v1348 = vpack.c.b16 %v1256, %v1252
  %v1349 = vpack.c.b16 %v1257, %v1253
  %v1350 = vpack.c.b16 %v1258, %v1254
  %v1351 = vpack.c.b16 %v1259, %v1255
  %v1352 = vpack.c.b16 %v1264, %v1260
  %v1353 = vpack.c.b16 %v1265, %v1261
  %v1354 = vpack.c.b16 %v1266, %v1262
  %v1355 = vpack.c.b16 %v1267, %v1263
  %v1356 = vpack.c.b16 %v1272, %v1268
  %v1357 = vpack.c.b16 %v1273, %v1269
  %v1358 = vpack.c.b16 %v1274, %v1270
  %v1359 = vpack.c.b16 %v1275, %v1271
  %v1360 = vpack.c.b16 %v1280, %v1276
  %v1361 = vpack.c.b16 %v1281, %v1277
  %v1362 = vpack.c.b16 %v1282, %v1278
  %v1363 = vpack.c.b16 %v1283, %v1279
  %v1364 = vpack.c.b16 %v1288, %v1284
  %v1365 = vpack.c.b16 %v1289, %v1285
  %v1366 = vpack.c.b16 %v1290, %v1286
  %v1367 = vpack.c.b16 %v1291, %v1287
  %v1368 = vpack.c.b16 %v1296, %v1292
  %v1369 = vpack.c.b16 %v1297, %v1293
  %v1370 = vpack.c.b16 %v1298, %v1294
  %v1371 = vpack.c.b16 %v1299, %v1295
  %v1372 = vpack.c.b16 %v1304, %v1300
  %v1373 = vpack.c.b16 %v1305, %v1301
  %v1374 = vpack.c.b16 %v1306, %v1302
  %v1375 = vpack.c.b16 %v1307, %v1303
  %v1376 = vpack.c.b16 %v1312, %v1308
  %v1377 = vpack.c.b16 %v1313, %v1309
  %v1378 = vpack.c.b16 %v1314, %v1310
  %v1379 = vpack.c.b16 %v1315, %v1311
  %1444 = vmatprep.subr.bf16.mxu0 %v1345
  %1445 = vmatpush1.bf16.msra.mxu0 %v1344
  %1446 = vmatprep.subr.bf16.mxu0 %v1341
  %1447 = vmatpush1.bf16.msra.mxu0 %v1340
  %1448 = vmatprep.subr.bf16.mxu0 %v1337
  %1449 = vmatpush1.bf16.msra.mxu0 %v1336
  %1450 = vmatprep.subr.bf16.mxu0 %v1333
  %1451 = vmatpush1.bf16.msra.mxu0 %v1332
  %1452 = vmatprep.subr.bf16.mxu0 %v1329
  %1453 = vmatpush1.bf16.msra.mxu0 %v1328
  %1454 = vmatprep.subr.bf16.mxu0 %v1325
  %1455 = vmatpush1.bf16.msra.mxu0 %v1324
  %1456 = vmatprep.subr.bf16.mxu0 %v1321
  %1457 = vmatpush1.bf16.msra.mxu0 %v1320
  %1458 = vmatprep.subr.bf16.mxu0 %v1317
  %1459 = vmatpush1.bf16.msra.mxu0 %v1316
  %1460 = vmatprep.subr.bf16.mxu0 %v1377
  %1461 = vmatpush2.bf16.msra.mxu0 %v1376
  %1462 = vmatprep.subr.bf16.mxu0 %v1373
  %1463 = vmatpush2.bf16.msra.mxu0 %v1372
  %1464 = vmatprep.subr.bf16.mxu0 %v1369
  %1465 = vmatpush2.bf16.msra.mxu0 %v1368
  %1466 = vmatprep.subr.bf16.mxu0 %v1365
  %1467 = vmatpush2.bf16.msra.mxu0 %v1364
  %1468 = vmatprep.subr.bf16.mxu0 %v1361
  %1469 = vmatpush2.bf16.msra.mxu0 %v1360
  %1470 = vmatprep.subr.bf16.mxu0 %v1357
  %1471 = vmatpush2.bf16.msra.mxu0 %v1356
  %1472 = vmatprep.subr.bf16.mxu0 %v1353
  %1473 = vmatpush2.bf16.msra.mxu0 %v1352
  %1474 = vmatprep.subr.bf16.mxu0 %v1349
  %1475 = vmatpush2.bf16.msra.mxu0 %v1348
  %1476 = vmatprep.mubr.bf16.mxu0 %v545
  %1477 = vmatmul.mubr.bf16.gmra.mxu0 %v1059
  %v1478 = vpop.f32.mrf.mxu0
  %v1479 = vadd.f32 %v102, %v1478
  %v1480 = vpop.f32.mrf.mxu0
  %v1481 = vadd.f32 %v106, %v1480
  %v1482 = vpop.f32.mrf.mxu0
  %v1483 = vpop.f32.mrf.mxu0
  %1484 = vdwg.mxu0
  %1485 = vmatprep.subr.bf16.mxu0 %v1347
  %1486 = vmatpush1.bf16.msra.mxu0 %v1346
  %1487 = vmatprep.subr.bf16.mxu0 %v1343
  %1488 = vmatpush1.bf16.msra.mxu0 %v1342
  %1489 = vmatprep.subr.bf16.mxu0 %v1339
  %1490 = vmatpush1.bf16.msra.mxu0 %v1338
  %1491 = vmatprep.subr.bf16.mxu0 %v1335
  %1492 = vmatpush1.bf16.msra.mxu0 %v1334
  %1493 = vmatprep.subr.bf16.mxu0 %v1331
  %1494 = vmatpush1.bf16.msra.mxu0 %v1330
  %1495 = vmatprep.subr.bf16.mxu0 %v1327
  %1496 = vmatpush1.bf16.msra.mxu0 %v1326
  %1497 = vmatprep.subr.bf16.mxu0 %v1323
  %1498 = vmatpush1.bf16.msra.mxu0 %v1322
  %1499 = vmatprep.subr.bf16.mxu0 %v1319
  %1500 = vmatpush1.bf16.msra.mxu0 %v1318
  %1501 = vmatprep.subr.bf16.mxu0 %v1379
  %1502 = vmatpush2.bf16.msra.mxu0 %v1378
  %1503 = vmatprep.subr.bf16.mxu0 %v1375
  %1504 = vmatpush2.bf16.msra.mxu0 %v1374
  %1505 = vmatprep.subr.bf16.mxu0 %v1371
  %1506 = vmatpush2.bf16.msra.mxu0 %v1370
  %1507 = vmatprep.subr.bf16.mxu0 %v1367
  %1508 = vmatpush2.bf16.msra.mxu0 %v1366
  %1509 = vmatprep.subr.bf16.mxu0 %v1363
  %1510 = vmatpush2.bf16.msra.mxu0 %v1362
  %1511 = vmatprep.subr.bf16.mxu0 %v1359
  %1512 = vmatpush2.bf16.msra.mxu0 %v1358
  %1513 = vmatprep.subr.bf16.mxu0 %v1355
  %1514 = vmatpush2.bf16.msra.mxu0 %v1354
  %1515 = vmatprep.subr.bf16.mxu0 %v1351
  %1516 = vmatpush2.bf16.msra.mxu0 %v1350
  %1517 = vmatprep.mubr.bf16.mxu0 %v545
  %1518 = vmatmul.mubr.bf16.gmra.mxu0 %v1059
  %v1519 = vpop.f32.mrf.mxu0
  %v1520 = vadd.f32 %v110, %v1519
  %v1521 = vpop.f32.mrf.mxu0
  %v1522 = vadd.f32 %v114, %v1521
  %v1523 = vpop.f32.mrf.mxu0
  %v1524 = vpop.f32.mrf.mxu0
  %1525 = vdwg.mxu0
  %v1526 = vxor.u32 %v1479, 2147483648
  %v1527 = vmul.f32 %v1526, 1.442695
  %v1528 = vpow.pop %v1527
  %v1529 = vadd.f32 %v1528, 1.0
  %v1530 = vrcp.pop %v1529
  %v1531 = vmul.f32 1.0, %v1530
  %v1532 = vxor.u32 %v1481, 2147483648
  %v1533 = vmul.f32 %v1532, 1.442695
  %v1534 = vpow.pop %v1533
  %v1535 = vadd.f32 %v1534, 1.0
  %v1536 = vrcp.pop %v1535
  %v1537 = vmul.f32 1.0, %v1536
  %v1538 = vtanh.pop %v1520
  %v1539 = vxor.u32 %v1522, 2147483648
  %v1540 = vmul.f32 %v1539, 1.442695
  %v1541 = vpow.pop %v1540
  %v1542 = vadd.f32 %v1541, 1.0
  %v1543 = vrcp.pop %v1542
  %v1544 = vmul.f32 1.0, %v1543
  %v1545 = vmul.f32 %v1537, %v542
  %v1546 = vmul.f32 %v1531, %v1538
  %v1547 = vadd.f32 %v1545, %v1546
  %v1548 = vtanh.pop %v1547
  %v1549 = vmul.f32 %v1544, %v1548
  %v1550 = vpack.c.bf16 %v1549, %v1549
  %v1551 = vpack.c.bf16 %v1056, %v1056
  %v1552 = vld [vmem:[%s5] sm:$0xff]
  %v1553 = vld [vmem:[%s5 + $0x8] sm:$0xff]
  %v1554 = vld [vmem:[%s5 + $0x10] sm:$0xff]
  %v1555 = vld [vmem:[%s5 + $0x18] sm:$0xff]
  %v1556 = vld [vmem:[%s5 + $0x20] sm:$0xff]
  %v1557 = vld [vmem:[%s5 + $0x28] sm:$0xff]
  %v1558 = vld [vmem:[%s5 + $0x30] sm:$0xff]
  %v1559 = vld [vmem:[%s5 + $0x38] sm:$0xff]
  %v1560 = vld [vmem:[%s5 + $0x40] sm:$0xff]
  %v1561 = vld [vmem:[%s5 + $0x48] sm:$0xff]
  %v1562 = vld [vmem:[%s5 + $0x50] sm:$0xff]
  %v1563 = vld [vmem:[%s5 + $0x58] sm:$0xff]
  %v1564 = vld [vmem:[%s5 + $0x60] sm:$0xff]
  %v1565 = vld [vmem:[%s5 + $0x68] sm:$0xff]
  %v1566 = vld [vmem:[%s5 + $0x70] sm:$0xff]
  %v1567 = vld [vmem:[%s5 + $0x78] sm:$0xff]
  %v1568 = vld [vmem:[%s5 + $0x80] sm:$0xff]
  %v1569 = vld [vmem:[%s5 + $0x88] sm:$0xff]
  %v1570 = vld [vmem:[%s5 + $0x90] sm:$0xff]
  %v1571 = vld [vmem:[%s5 + $0x98] sm:$0xff]
  %v1572 = vld [vmem:[%s5 + $0xa0] sm:$0xff]
  %v1573 = vld [vmem:[%s5 + $0xa8] sm:$0xff]
  %v1574 = vld [vmem:[%s5 + $0xb0] sm:$0xff]
  %v1575 = vld [vmem:[%s5 + $0xb8] sm:$0xff]
  %v1576 = vld [vmem:[%s5 + $0xc0] sm:$0xff]
  %v1577 = vld [vmem:[%s5 + $0xc8] sm:$0xff]
  %v1578 = vld [vmem:[%s5 + $0xd0] sm:$0xff]
  %v1579 = vld [vmem:[%s5 + $0xd8] sm:$0xff]
  %v1580 = vld [vmem:[%s5 + $0xe0] sm:$0xff]
  %v1581 = vld [vmem:[%s5 + $0xe8] sm:$0xff]
  %v1582 = vld [vmem:[%s5 + $0xf0] sm:$0xff]
  %v1583 = vld [vmem:[%s5 + $0xf8] sm:$0xff]
  %v1584 = vld [vmem:[%s5 + $0x100] sm:$0xff]
  %v1585 = vld [vmem:[%s5 + $0x108] sm:$0xff]
  %v1586 = vld [vmem:[%s5 + $0x110] sm:$0xff]
  %v1587 = vld [vmem:[%s5 + $0x118] sm:$0xff]
  %v1588 = vld [vmem:[%s5 + $0x120] sm:$0xff]
  %v1589 = vld [vmem:[%s5 + $0x128] sm:$0xff]
  %v1590 = vld [vmem:[%s5 + $0x130] sm:$0xff]
  %v1591 = vld [vmem:[%s5 + $0x138] sm:$0xff]
  %v1592 = vld [vmem:[%s5 + $0x140] sm:$0xff]
  %v1593 = vld [vmem:[%s5 + $0x148] sm:$0xff]
  %v1594 = vld [vmem:[%s5 + $0x150] sm:$0xff]
  %v1595 = vld [vmem:[%s5 + $0x158] sm:$0xff]
  %v1596 = vld [vmem:[%s5 + $0x160] sm:$0xff]
  %v1597 = vld [vmem:[%s5 + $0x168] sm:$0xff]
  %v1598 = vld [vmem:[%s5 + $0x170] sm:$0xff]
  %v1599 = vld [vmem:[%s5 + $0x178] sm:$0xff]
  %v1600 = vld [vmem:[%s5 + $0x180] sm:$0xff]
  %v1601 = vld [vmem:[%s5 + $0x188] sm:$0xff]
  %v1602 = vld [vmem:[%s5 + $0x190] sm:$0xff]
  %v1603 = vld [vmem:[%s5 + $0x198] sm:$0xff]
  %v1604 = vld [vmem:[%s5 + $0x1a0] sm:$0xff]
  %v1605 = vld [vmem:[%s5 + $0x1a8] sm:$0xff]
  %v1606 = vld [vmem:[%s5 + $0x1b0] sm:$0xff]
  %v1607 = vld [vmem:[%s5 + $0x1b8] sm:$0xff]
  %v1608 = vld [vmem:[%s5 + $0x1c0] sm:$0xff]
  %v1609 = vld [vmem:[%s5 + $0x1c8] sm:$0xff]
  %v1610 = vld [vmem:[%s5 + $0x1d0] sm:$0xff]
  %v1611 = vld [vmem:[%s5 + $0x1d8] sm:$0xff]
  %v1612 = vld [vmem:[%s5 + $0x1e0] sm:$0xff]
  %v1613 = vld [vmem:[%s5 + $0x1e8] sm:$0xff]
  %v1614 = vld [vmem:[%s5 + $0x1f0] sm:$0xff]
  %v1615 = vld [vmem:[%s5 + $0x1f8] sm:$0xff]
  %v1680 = vunpack.c.l.b16 %v1552
  %v1681 = vunpack.c.h.b16 %v1552
  %v1682 = vunpack.c.l.b16 %v1553
  %v1683 = vunpack.c.h.b16 %v1553
  %v1684 = vunpack.c.l.b16 %v1554
  %v1685 = vunpack.c.h.b16 %v1554
  %v1686 = vunpack.c.l.b16 %v1555
  %v1687 = vunpack.c.h.b16 %v1555
  %v1688 = vunpack.c.l.b16 %v1556
  %v1689 = vunpack.c.h.b16 %v1556
  %v1690 = vunpack.c.l.b16 %v1557
  %v1691 = vunpack.c.h.b16 %v1557
  %v1692 = vunpack.c.l.b16 %v1558
  %v1693 = vunpack.c.h.b16 %v1558
  %v1694 = vunpack.c.l.b16 %v1559
  %v1695 = vunpack.c.h.b16 %v1559
  %v1696 = vunpack.c.l.b16 %v1560
  %v1697 = vunpack.c.h.b16 %v1560
  %v1698 = vunpack.c.l.b16 %v1561
  %v1699 = vunpack.c.h.b16 %v1561
  %v1700 = vunpack.c.l.b16 %v1562
  %v1701 = vunpack.c.h.b16 %v1562
  %v1702 = vunpack.c.l.b16 %v1563
  %v1703 = vunpack.c.h.b16 %v1563
  %v1704 = vunpack.c.l.b16 %v1564
  %v1705 = vunpack.c.h.b16 %v1564
  %v1706 = vunpack.c.l.b16 %v1565
  %v1707 = vunpack.c.h.b16 %v1565
  %v1708 = vunpack.c.l.b16 %v1566
  %v1709 = vunpack.c.h.b16 %v1566
  %v1710 = vunpack.c.l.b16 %v1567
  %v1711 = vunpack.c.h.b16 %v1567
  %v1712 = vunpack.c.l.b16 %v1568
  %v1713 = vunpack.c.h.b16 %v1568
  %v1714 = vunpack.c.l.b16 %v1569
  %v1715 = vunpack.c.h.b16 %v1569
  %v1716 = vunpack.c.l.b16 %v1570
  %v1717 = vunpack.c.h.b16 %v1570
  %v1718 = vunpack.c.l.b16 %v1571
  %v1719 = vunpack.c.h.b16 %v1571
  %v1720 = vunpack.c.l.b16 %v1572
  %v1721 = vunpack.c.h.b16 %v1572
  %v1722 = vunpack.c.l.b16 %v1573
  %v1723 = vunpack.c.h.b16 %v1573
  %v1724 = vunpack.c.l.b16 %v1574
  %v1725 = vunpack.c.h.b16 %v1574
  %v1726 = vunpack.c.l.b16 %v1575
  %v1727 = vunpack.c.h.b16 %v1575
  %v1728 = vunpack.c.l.b16 %v1576
  %v1729 = vunpack.c.h.b16 %v1576
  %v1730 = vunpack.c.l.b16 %v1577
  %v1731 = vunpack.c.h.b16 %v1577
  %v1732 = vunpack.c.l.b16 %v1578
  %v1733 = vunpack.c.h.b16 %v1578
  %v1734 = vunpack.c.l.b16 %v1579
  %v1735 = vunpack.c.h.b16 %v1579
  %v1736 = vunpack.c.l.b16 %v1580
  %v1737 = vunpack.c.h.b16 %v1580
  %v1738 = vunpack.c.l.b16 %v1581
  %v1739 = vunpack.c.h.b16 %v1581
  %v1740 = vunpack.c.l.b16 %v1582
  %v1741 = vunpack.c.h.b16 %v1582
  %v1742 = vunpack.c.l.b16 %v1583
  %v1743 = vunpack.c.h.b16 %v1583
  %v1744 = vunpack.c.l.b16 %v1584
  %v1745 = vunpack.c.h.b16 %v1584
  %v1746 = vunpack.c.l.b16 %v1585
  %v1747 = vunpack.c.h.b16 %v1585
  %v1748 = vunpack.c.l.b16 %v1586
  %v1749 = vunpack.c.h.b16 %v1586
  %v1750 = vunpack.c.l.b16 %v1587
  %v1751 = vunpack.c.h.b16 %v1587
  %v1752 = vunpack.c.l.b16 %v1588
  %v1753 = vunpack.c.h.b16 %v1588
  %v1754 = vunpack.c.l.b16 %v1589
  %v1755 = vunpack.c.h.b16 %v1589
  %v1756 = vunpack.c.l.b16 %v1590
  %v1757 = vunpack.c.h.b16 %v1590
  %v1758 = vunpack.c.l.b16 %v1591
  %v1759 = vunpack.c.h.b16 %v1591
  %v1760 = vunpack.c.l.b16 %v1592
  %v1761 = vunpack.c.h.b16 %v1592
  %v1762 = vunpack.c.l.b16 %v1593
  %v1763 = vunpack.c.h.b16 %v1593
  %v1764 = vunpack.c.l.b16 %v1594
  %v1765 = vunpack.c.h.b16 %v1594
  %v1766 = vunpack.c.l.b16 %v1595
  %v1767 = vunpack.c.h.b16 %v1595
  %v1768 = vunpack.c.l.b16 %v1596
  %v1769 = vunpack.c.h.b16 %v1596
  %v1770 = vunpack.c.l.b16 %v1597
  %v1771 = vunpack.c.h.b16 %v1597
  %v1772 = vunpack.c.l.b16 %v1598
  %v1773 = vunpack.c.h.b16 %v1598
  %v1774 = vunpack.c.l.b16 %v1599
  %v1775 = vunpack.c.h.b16 %v1599
  %v1776 = vunpack.c.l.b16 %v1600
  %v1777 = vunpack.c.h.b16 %v1600
  %v1778 = vunpack.c.l.b16 %v1601
  %v1779 = vunpack.c.h.b16 %v1601
  %v1780 = vunpack.c.l.b16 %v1602
  %v1781 = vunpack.c.h.b16 %v1602
  %v1782 = vunpack.c.l.b16 %v1603
  %v1783 = vunpack.c.h.b16 %v1603
  %v1784 = vunpack.c.l.b16 %v1604
  %v1785 = vunpack.c.h.b16 %v1604
  %v1786 = vunpack.c.l.b16 %v1605
  %v1787 = vunpack.c.h.b16 %v1605
  %v1788 = vunpack.c.l.b16 %v1606
  %v1789 = vunpack.c.h.b16 %v1606
  %v1790 = vunpack.c.l.b16 %v1607
  %v1791 = vunpack.c.h.b16 %v1607
  %v1792 = vunpack.c.l.b16 %v1608
  %v1793 = vunpack.c.h.b16 %v1608
  %v1794 = vunpack.c.l.b16 %v1609
  %v1795 = vunpack.c.h.b16 %v1609
  %v1796 = vunpack.c.l.b16 %v1610
  %v1797 = vunpack.c.h.b16 %v1610
  %v1798 = vunpack.c.l.b16 %v1611
  %v1799 = vunpack.c.h.b16 %v1611
  %v1800 = vunpack.c.l.b16 %v1612
  %v1801 = vunpack.c.h.b16 %v1612
  %v1802 = vunpack.c.l.b16 %v1613
  %v1803 = vunpack.c.h.b16 %v1613
  %v1804 = vunpack.c.l.b16 %v1614
  %v1805 = vunpack.c.h.b16 %v1614
  %v1806 = vunpack.c.l.b16 %v1615
  %v1807 = vunpack.c.h.b16 %v1615
  %v1808 = vpack.c.b16 %v1684, %v1680
  %v1809 = vpack.c.b16 %v1685, %v1681
  %v1810 = vpack.c.b16 %v1686, %v1682
  %v1811 = vpack.c.b16 %v1687, %v1683
  %v1812 = vpack.c.b16 %v1692, %v1688
  %v1813 = vpack.c.b16 %v1693, %v1689
  %v1814 = vpack.c.b16 %v1694, %v1690
  %v1815 = vpack.c.b16 %v1695, %v1691
  %v1816 = vpack.c.b16 %v1700, %v1696
  %v1817 = vpack.c.b16 %v1701, %v1697
  %v1818 = vpack.c.b16 %v1702, %v1698
  %v1819 = vpack.c.b16 %v1703, %v1699
  %v1820 = vpack.c.b16 %v1708, %v1704
  %v1821 = vpack.c.b16 %v1709, %v1705
  %v1822 = vpack.c.b16 %v1710, %v1706
  %v1823 = vpack.c.b16 %v1711, %v1707
  %v1824 = vpack.c.b16 %v1716, %v1712
  %v1825 = vpack.c.b16 %v1717, %v1713
  %v1826 = vpack.c.b16 %v1718, %v1714
  %v1827 = vpack.c.b16 %v1719, %v1715
  %v1828 = vpack.c.b16 %v1724, %v1720
  %v1829 = vpack.c.b16 %v1725, %v1721
  %v1830 = vpack.c.b16 %v1726, %v1722
  %v1831 = vpack.c.b16 %v1727, %v1723
  %v1832 = vpack.c.b16 %v1732, %v1728
  %v1833 = vpack.c.b16 %v1733, %v1729
  %v1834 = vpack.c.b16 %v1734, %v1730
  %v1835 = vpack.c.b16 %v1735, %v1731
  %v1836 = vpack.c.b16 %v1740, %v1736
  %v1837 = vpack.c.b16 %v1741, %v1737
  %v1838 = vpack.c.b16 %v1742, %v1738
  %v1839 = vpack.c.b16 %v1743, %v1739
  %v1840 = vpack.c.b16 %v1748, %v1744
  %v1841 = vpack.c.b16 %v1749, %v1745
  %v1842 = vpack.c.b16 %v1750, %v1746
  %v1843 = vpack.c.b16 %v1751, %v1747
  %v1844 = vpack.c.b16 %v1756, %v1752
  %v1845 = vpack.c.b16 %v1757, %v1753
  %v1846 = vpack.c.b16 %v1758, %v1754
  %v1847 = vpack.c.b16 %v1759, %v1755
  %v1848 = vpack.c.b16 %v1764, %v1760
  %v1849 = vpack.c.b16 %v1765, %v1761
  %v1850 = vpack.c.b16 %v1766, %v1762
  %v1851 = vpack.c.b16 %v1767, %v1763
  %v1852 = vpack.c.b16 %v1772, %v1768
  %v1853 = vpack.c.b16 %v1773, %v1769
  %v1854 = vpack.c.b16 %v1774, %v1770
  %v1855 = vpack.c.b16 %v1775, %v1771
  %v1856 = vpack.c.b16 %v1780, %v1776
  %v1857 = vpack.c.b16 %v1781, %v1777
  %v1858 = vpack.c.b16 %v1782, %v1778
  %v1859 = vpack.c.b16 %v1783, %v1779
  %v1860 = vpack.c.b16 %v1788, %v1784
  %v1861 = vpack.c.b16 %v1789, %v1785
  %v1862 = vpack.c.b16 %v1790, %v1786
  %v1863 = vpack.c.b16 %v1791, %v1787
  %v1864 = vpack.c.b16 %v1796, %v1792
  %v1865 = vpack.c.b16 %v1797, %v1793
  %v1866 = vpack.c.b16 %v1798, %v1794
  %v1867 = vpack.c.b16 %v1799, %v1795
  %v1868 = vpack.c.b16 %v1804, %v1800
  %v1869 = vpack.c.b16 %v1805, %v1801
  %v1870 = vpack.c.b16 %v1806, %v1802
  %v1871 = vpack.c.b16 %v1807, %v1803
  %1936 = vmatprep.subr.bf16.mxu0 %v1837
  %1937 = vmatpush1.bf16.msra.mxu0 %v1836
  %1938 = vmatprep.subr.bf16.mxu0 %v1833
  %1939 = vmatpush1.bf16.msra.mxu0 %v1832
  %1940 = vmatprep.subr.bf16.mxu0 %v1829
  %1941 = vmatpush1.bf16.msra.mxu0 %v1828
  %1942 = vmatprep.subr.bf16.mxu0 %v1825
  %1943 = vmatpush1.bf16.msra.mxu0 %v1824
  %1944 = vmatprep.subr.bf16.mxu0 %v1821
  %1945 = vmatpush1.bf16.msra.mxu0 %v1820
  %1946 = vmatprep.subr.bf16.mxu0 %v1817
  %1947 = vmatpush1.bf16.msra.mxu0 %v1816
  %1948 = vmatprep.subr.bf16.mxu0 %v1813
  %1949 = vmatpush1.bf16.msra.mxu0 %v1812
  %1950 = vmatprep.subr.bf16.mxu0 %v1809
  %1951 = vmatpush1.bf16.msra.mxu0 %v1808
  %1952 = vmatprep.subr.bf16.mxu0 %v1869
  %1953 = vmatpush2.bf16.msra.mxu0 %v1868
  %1954 = vmatprep.subr.bf16.mxu0 %v1865
  %1955 = vmatpush2.bf16.msra.mxu0 %v1864
  %1956 = vmatprep.subr.bf16.mxu0 %v1861
  %1957 = vmatpush2.bf16.msra.mxu0 %v1860
  %1958 = vmatprep.subr.bf16.mxu0 %v1857
  %1959 = vmatpush2.bf16.msra.mxu0 %v1856
  %1960 = vmatprep.subr.bf16.mxu0 %v1853
  %1961 = vmatpush2.bf16.msra.mxu0 %v1852
  %1962 = vmatprep.subr.bf16.mxu0 %v1849
  %1963 = vmatpush2.bf16.msra.mxu0 %v1848
  %1964 = vmatprep.subr.bf16.mxu0 %v1845
  %1965 = vmatpush2.bf16.msra.mxu0 %v1844
  %1966 = vmatprep.subr.bf16.mxu0 %v1841
  %1967 = vmatpush2.bf16.msra.mxu0 %v1840
  %1968 = vmatprep.mubr.bf16.mxu0 %v1551
  %1969 = vmatmul.mubr.bf16.gmra.mxu0 %v1550
  %v1970 = vpop.f32.mrf.mxu0
  %v1971 = vadd.f32 %v614, %v1970
  %v1972 = vpop.f32.mrf.mxu0
  %v1973 = vadd.f32 %v618, %v1972
  %v1974 = vpop.f32.mrf.mxu0
  %v1975 = vpop.f32.mrf.mxu0
  %1976 = vdwg.mxu0
  %1977 = vmatprep.subr.bf16.mxu0 %v1839
  %1978 = vmatpush1.bf16.msra.mxu0 %v1838
  %1979 = vmatprep.subr.bf16.mxu0 %v1835
  %1980 = vmatpush1.bf16.msra.mxu0 %v1834
  %1981 = vmatprep.subr.bf16.mxu0 %v1831
  %1982 = vmatpush1.bf16.msra.mxu0 %v1830
  %1983 = vmatprep.subr.bf16.mxu0 %v1827
  %1984 = vmatpush1.bf16.msra.mxu0 %v1826
  %1985 = vmatprep.subr.bf16.mxu0 %v1823
  %1986 = vmatpush1.bf16.msra.mxu0 %v1822
  %1987 = vmatprep.subr.bf16.mxu0 %v1819
  %1988 = vmatpush1.bf16.msra.mxu0 %v1818
  %1989 = vmatprep.subr.bf16.mxu0 %v1815
  %1990 = vmatpush1.bf16.msra.mxu0 %v1814
  %1991 = vmatprep.subr.bf16.mxu0 %v1811
  %1992 = vmatpush1.bf16.msra.mxu0 %v1810
  %1993 = vmatprep.subr.bf16.mxu0 %v1871
  %1994 = vmatpush2.bf16.msra.mxu0 %v1870
  %1995 = vmatprep.subr.bf16.mxu0 %v1867
  %1996 = vmatpush2.bf16.msra.mxu0 %v1866
  %1997 = vmatprep.subr.bf16.mxu0 %v1863
  %1998 = vmatpush2.bf16.msra.mxu0 %v1862
  %1999 = vmatprep.subr.bf16.mxu0 %v1859
  %2000 = vmatpush2.bf16.msra.mxu0 %v1858
  %2001 = vmatprep.subr.bf16.mxu0 %v1855
  %2002 = vmatpush2.bf16.msra.mxu0 %v1854
  %2003 = vmatprep.subr.bf16.mxu0 %v1851
  %2004 = vmatpush2.bf16.msra.mxu0 %v1850
  %2005 = vmatprep.subr.bf16.mxu0 %v1847
  %2006 = vmatpush2.bf16.msra.mxu0 %v1846
  %2007 = vmatprep.subr.bf16.mxu0 %v1843
  %2008 = vmatpush2.bf16.msra.mxu0 %v1842
  %2009 = vmatprep.mubr.bf16.mxu0 %v1551
  %2010 = vmatmul.mubr.bf16.gmra.mxu0 %v1550
  %v2011 = vpop.f32.mrf.mxu0
  %v2012 = vadd.f32 %v622, %v2011
  %v2013 = vpop.f32.mrf.mxu0
  %v2014 = vadd.f32 %v626, %v2013
  %v2015 = vpop.f32.mrf.mxu0
  %v2016 = vpop.f32.mrf.mxu0
  %2017 = vdwg.mxu0
  %v2018 = vxor.u32 %v1971, 2147483648
  %v2019 = vmul.f32 %v2018, 1.442695
  %v2020 = vpow.pop %v2019
  %v2021 = vadd.f32 %v2020, 1.0
  %v2022 = vrcp.pop %v2021
  %v2023 = vmul.f32 1.0, %v2022
  %v2024 = vxor.u32 %v1973, 2147483648
  %v2025 = vmul.f32 %v2024, 1.442695
  %v2026 = vpow.pop %v2025
  %v2027 = vadd.f32 %v2026, 1.0
  %v2028 = vrcp.pop %v2027
  %v2029 = vmul.f32 1.0, %v2028
  %v2030 = vtanh.pop %v2012
  %v2031 = vxor.u32 %v2014, 2147483648
  %v2032 = vmul.f32 %v2031, 1.442695
  %v2033 = vpow.pop %v2032
  %v2034 = vadd.f32 %v2033, 1.0
  %v2035 = vrcp.pop %v2034
  %v2036 = vmul.f32 1.0, %v2035
  %v2037 = vmul.f32 %v2029, %v1054
  %v2038 = vmul.f32 %v2023, %v2030
  %v2039 = vadd.f32 %v2037, %v2038
  %v2040 = vtanh.pop %v2039
  %v2041 = vmul.f32 %v2036, %v2040
  %s2042 = scalar_lea.vmem %s7, 8
  %2043 = vst [vmem:[%s2042] sm:$0xff] %v2041
  %s2044 = scalar_lea.vmem %s0, 8
  %v2045 = vld [vmem:[%s2044] sm:$0xf]
  %v2046 = vld [vmem:[%s3] sm:$0xff]
  %v2047 = vld [vmem:[%s3 + $0x8] sm:$0xff]
  %v2048 = vld [vmem:[%s3 + $0x10] sm:$0xff]
  %v2049 = vld [vmem:[%s3 + $0x18] sm:$0xff]
  %v2050 = vld [vmem:[%s3 + $0x20] sm:$0xff]
  %v2051 = vld [vmem:[%s3 + $0x28] sm:$0xff]
  %v2052 = vld [vmem:[%s3 + $0x30] sm:$0xff]
  %v2053 = vld [vmem:[%s3 + $0x38] sm:$0xff]
  %v2054 = vld [vmem:[%s3 + $0x40] sm:$0xff]
  %v2055 = vld [vmem:[%s3 + $0x48] sm:$0xff]
  %v2056 = vld [vmem:[%s3 + $0x50] sm:$0xff]
  %v2057 = vld [vmem:[%s3 + $0x58] sm:$0xff]
  %v2058 = vld [vmem:[%s3 + $0x60] sm:$0xff]
  %v2059 = vld [vmem:[%s3 + $0x68] sm:$0xff]
  %v2060 = vld [vmem:[%s3 + $0x70] sm:$0xff]
  %v2061 = vld [vmem:[%s3 + $0x78] sm:$0xff]
  %v2062 = vld [vmem:[%s3 + $0x80] sm:$0xff]
  %v2063 = vld [vmem:[%s3 + $0x88] sm:$0xff]
  %v2064 = vld [vmem:[%s3 + $0x90] sm:$0xff]
  %v2065 = vld [vmem:[%s3 + $0x98] sm:$0xff]
  %v2066 = vld [vmem:[%s3 + $0xa0] sm:$0xff]
  %v2067 = vld [vmem:[%s3 + $0xa8] sm:$0xff]
  %v2068 = vld [vmem:[%s3 + $0xb0] sm:$0xff]
  %v2069 = vld [vmem:[%s3 + $0xb8] sm:$0xff]
  %v2070 = vld [vmem:[%s3 + $0xc0] sm:$0xff]
  %v2071 = vld [vmem:[%s3 + $0xc8] sm:$0xff]
  %v2072 = vld [vmem:[%s3 + $0xd0] sm:$0xff]
  %v2073 = vld [vmem:[%s3 + $0xd8] sm:$0xff]
  %v2074 = vld [vmem:[%s3 + $0xe0] sm:$0xff]
  %v2075 = vld [vmem:[%s3 + $0xe8] sm:$0xff]
  %v2076 = vld [vmem:[%s3 + $0xf0] sm:$0xff]
  %v2077 = vld [vmem:[%s3 + $0xf8] sm:$0xff]
  %v2078 = vld [vmem:[%s3 + $0x100] sm:$0xff]
  %v2079 = vld [vmem:[%s3 + $0x108] sm:$0xff]
  %v2080 = vld [vmem:[%s3 + $0x110] sm:$0xff]
  %v2081 = vld [vmem:[%s3 + $0x118] sm:$0xff]
  %v2082 = vld [vmem:[%s3 + $0x120] sm:$0xff]
  %v2083 = vld [vmem:[%s3 + $0x128] sm:$0xff]
  %v2084 = vld [vmem:[%s3 + $0x130] sm:$0xff]
  %v2085 = vld [vmem:[%s3 + $0x138] sm:$0xff]
  %v2086 = vld [vmem:[%s3 + $0x140] sm:$0xff]
  %v2087 = vld [vmem:[%s3 + $0x148] sm:$0xff]
  %v2088 = vld [vmem:[%s3 + $0x150] sm:$0xff]
  %v2089 = vld [vmem:[%s3 + $0x158] sm:$0xff]
  %v2090 = vld [vmem:[%s3 + $0x160] sm:$0xff]
  %v2091 = vld [vmem:[%s3 + $0x168] sm:$0xff]
  %v2092 = vld [vmem:[%s3 + $0x170] sm:$0xff]
  %v2093 = vld [vmem:[%s3 + $0x178] sm:$0xff]
  %v2094 = vld [vmem:[%s3 + $0x180] sm:$0xff]
  %v2095 = vld [vmem:[%s3 + $0x188] sm:$0xff]
  %v2096 = vld [vmem:[%s3 + $0x190] sm:$0xff]
  %v2097 = vld [vmem:[%s3 + $0x198] sm:$0xff]
  %v2098 = vld [vmem:[%s3 + $0x1a0] sm:$0xff]
  %v2099 = vld [vmem:[%s3 + $0x1a8] sm:$0xff]
  %v2100 = vld [vmem:[%s3 + $0x1b0] sm:$0xff]
  %v2101 = vld [vmem:[%s3 + $0x1b8] sm:$0xff]
  %v2102 = vld [vmem:[%s3 + $0x1c0] sm:$0xff]
  %v2103 = vld [vmem:[%s3 + $0x1c8] sm:$0xff]
  %v2104 = vld [vmem:[%s3 + $0x1d0] sm:$0xff]
  %v2105 = vld [vmem:[%s3 + $0x1d8] sm:$0xff]
  %v2106 = vld [vmem:[%s3 + $0x1e0] sm:$0xff]
  %v2107 = vld [vmem:[%s3 + $0x1e8] sm:$0xff]
  %v2108 = vld [vmem:[%s3 + $0x1f0] sm:$0xff]
  %v2109 = vld [vmem:[%s3 + $0x1f8] sm:$0xff]
  %v2174 = vunpack.c.l.b16 %v2046
  %v2175 = vunpack.c.h.b16 %v2046
  %v2176 = vunpack.c.l.b16 %v2047
  %v2177 = vunpack.c.h.b16 %v2047
  %v2178 = vunpack.c.l.b16 %v2048
  %v2179 = vunpack.c.h.b16 %v2048
  %v2180 = vunpack.c.l.b16 %v2049
  %v2181 = vunpack.c.h.b16 %v2049
  %v2182 = vunpack.c.l.b16 %v2050
  %v2183 = vunpack.c.h.b16 %v2050
  %v2184 = vunpack.c.l.b16 %v2051
  %v2185 = vunpack.c.h.b16 %v2051
  %v2186 = vunpack.c.l.b16 %v2052
  %v2187 = vunpack.c.h.b16 %v2052
  %v2188 = vunpack.c.l.b16 %v2053
  %v2189 = vunpack.c.h.b16 %v2053
  %v2190 = vunpack.c.l.b16 %v2054
  %v2191 = vunpack.c.h.b16 %v2054
  %v2192 = vunpack.c.l.b16 %v2055
  %v2193 = vunpack.c.h.b16 %v2055
  %v2194 = vunpack.c.l.b16 %v2056
  %v2195 = vunpack.c.h.b16 %v2056
  %v2196 = vunpack.c.l.b16 %v2057
  %v2197 = vunpack.c.h.b16 %v2057
  %v2198 = vunpack.c.l.b16 %v2058
  %v2199 = vunpack.c.h.b16 %v2058
  %v2200 = vunpack.c.l.b16 %v2059
  %v2201 = vunpack.c.h.b16 %v2059
  %v2202 = vunpack.c.l.b16 %v2060
  %v2203 = vunpack.c.h.b16 %v2060
  %v2204 = vunpack.c.l.b16 %v2061
  %v2205 = vunpack.c.h.b16 %v2061
  %v2206 = vunpack.c.l.b16 %v2062
  %v2207 = vunpack.c.h.b16 %v2062
  %v2208 = vunpack.c.l.b16 %v2063
  %v2209 = vunpack.c.h.b16 %v2063
  %v2210 = vunpack.c.l.b16 %v2064
  %v2211 = vunpack.c.h.b16 %v2064
  %v2212 = vunpack.c.l.b16 %v2065
  %v2213 = vunpack.c.h.b16 %v2065
  %v2214 = vunpack.c.l.b16 %v2066
  %v2215 = vunpack.c.h.b16 %v2066
  %v2216 = vunpack.c.l.b16 %v2067
  %v2217 = vunpack.c.h.b16 %v2067
  %v2218 = vunpack.c.l.b16 %v2068
  %v2219 = vunpack.c.h.b16 %v2068
  %v2220 = vunpack.c.l.b16 %v2069
  %v2221 = vunpack.c.h.b16 %v2069
  %v2222 = vunpack.c.l.b16 %v2070
  %v2223 = vunpack.c.h.b16 %v2070
  %v2224 = vunpack.c.l.b16 %v2071
  %v2225 = vunpack.c.h.b16 %v2071
  %v2226 = vunpack.c.l.b16 %v2072
  %v2227 = vunpack.c.h.b16 %v2072
  %v2228 = vunpack.c.l.b16 %v2073
  %v2229 = vunpack.c.h.b16 %v2073
  %v2230 = vunpack.c.l.b16 %v2074
  %v2231 = vunpack.c.h.b16 %v2074
  %v2232 = vunpack.c.l.b16 %v2075
  %v2233 = vunpack.c.h.b16 %v2075
  %v2234 = vunpack.c.l.b16 %v2076
  %v2235 = vunpack.c.h.b16 %v2076
  %v2236 = vunpack.c.l.b16 %v2077
  %v2237 = vunpack.c.h.b16 %v2077
  %v2238 = vunpack.c.l.b16 %v2078
  %v2239 = vunpack.c.h.b16 %v2078
  %v2240 = vunpack.c.l.b16 %v2079
  %v2241 = vunpack.c.h.b16 %v2079
  %v2242 = vunpack.c.l.b16 %v2080
  %v2243 = vunpack.c.h.b16 %v2080
  %v2244 = vunpack.c.l.b16 %v2081
  %v2245 = vunpack.c.h.b16 %v2081
  %v2246 = vunpack.c.l.b16 %v2082
  %v2247 = vunpack.c.h.b16 %v2082
  %v2248 = vunpack.c.l.b16 %v2083
  %v2249 = vunpack.c.h.b16 %v2083
  %v2250 = vunpack.c.l.b16 %v2084
  %v2251 = vunpack.c.h.b16 %v2084
  %v2252 = vunpack.c.l.b16 %v2085
  %v2253 = vunpack.c.h.b16 %v2085
  %v2254 = vunpack.c.l.b16 %v2086
  %v2255 = vunpack.c.h.b16 %v2086
  %v2256 = vunpack.c.l.b16 %v2087
  %v2257 = vunpack.c.h.b16 %v2087
  %v2258 = vunpack.c.l.b16 %v2088
  %v2259 = vunpack.c.h.b16 %v2088
  %v2260 = vunpack.c.l.b16 %v2089
  %v2261 = vunpack.c.h.b16 %v2089
  %v2262 = vunpack.c.l.b16 %v2090
  %v2263 = vunpack.c.h.b16 %v2090
  %v2264 = vunpack.c.l.b16 %v2091
  %v2265 = vunpack.c.h.b16 %v2091
  %v2266 = vunpack.c.l.b16 %v2092
  %v2267 = vunpack.c.h.b16 %v2092
  %v2268 = vunpack.c.l.b16 %v2093
  %v2269 = vunpack.c.h.b16 %v2093
  %v2270 = vunpack.c.l.b16 %v2094
  %v2271 = vunpack.c.h.b16 %v2094
  %v2272 = vunpack.c.l.b16 %v2095
  %v2273 = vunpack.c.h.b16 %v2095
  %v2274 = vunpack.c.l.b16 %v2096
  %v2275 = vunpack.c.h.b16 %v2096
  %v2276 = vunpack.c.l.b16 %v2097
  %v2277 = vunpack.c.h.b16 %v2097
  %v2278 = vunpack.c.l.b16 %v2098
  %v2279 = vunpack.c.h.b16 %v2098
  %v2280 = vunpack.c.l.b16 %v2099
  %v2281 = vunpack.c.h.b16 %v2099
  %v2282 = vunpack.c.l.b16 %v2100
  %v2283 = vunpack.c.h.b16 %v2100
  %v2284 = vunpack.c.l.b16 %v2101
  %v2285 = vunpack.c.h.b16 %v2101
  %v2286 = vunpack.c.l.b16 %v2102
  %v2287 = vunpack.c.h.b16 %v2102
  %v2288 = vunpack.c.l.b16 %v2103
  %v2289 = vunpack.c.h.b16 %v2103
  %v2290 = vunpack.c.l.b16 %v2104
  %v2291 = vunpack.c.h.b16 %v2104
  %v2292 = vunpack.c.l.b16 %v2105
  %v2293 = vunpack.c.h.b16 %v2105
  %v2294 = vunpack.c.l.b16 %v2106
  %v2295 = vunpack.c.h.b16 %v2106
  %v2296 = vunpack.c.l.b16 %v2107
  %v2297 = vunpack.c.h.b16 %v2107
  %v2298 = vunpack.c.l.b16 %v2108
  %v2299 = vunpack.c.h.b16 %v2108
  %v2300 = vunpack.c.l.b16 %v2109
  %v2301 = vunpack.c.h.b16 %v2109
  %v2302 = vpack.c.b16 %v2178, %v2174
  %v2303 = vpack.c.b16 %v2179, %v2175
  %v2304 = vpack.c.b16 %v2180, %v2176
  %v2305 = vpack.c.b16 %v2181, %v2177
  %v2306 = vpack.c.b16 %v2186, %v2182
  %v2307 = vpack.c.b16 %v2187, %v2183
  %v2308 = vpack.c.b16 %v2188, %v2184
  %v2309 = vpack.c.b16 %v2189, %v2185
  %v2310 = vpack.c.b16 %v2194, %v2190
  %v2311 = vpack.c.b16 %v2195, %v2191
  %v2312 = vpack.c.b16 %v2196, %v2192
  %v2313 = vpack.c.b16 %v2197, %v2193
  %v2314 = vpack.c.b16 %v2202, %v2198
  %v2315 = vpack.c.b16 %v2203, %v2199
  %v2316 = vpack.c.b16 %v2204, %v2200
  %v2317 = vpack.c.b16 %v2205, %v2201
  %v2318 = vpack.c.b16 %v2210, %v2206
  %v2319 = vpack.c.b16 %v2211, %v2207
  %v2320 = vpack.c.b16 %v2212, %v2208
  %v2321 = vpack.c.b16 %v2213, %v2209
  %v2322 = vpack.c.b16 %v2218, %v2214
  %v2323 = vpack.c.b16 %v2219, %v2215
  %v2324 = vpack.c.b16 %v2220, %v2216
  %v2325 = vpack.c.b16 %v2221, %v2217
  %v2326 = vpack.c.b16 %v2226, %v2222
  %v2327 = vpack.c.b16 %v2227, %v2223
  %v2328 = vpack.c.b16 %v2228, %v2224
  %v2329 = vpack.c.b16 %v2229, %v2225
  %v2330 = vpack.c.b16 %v2234, %v2230
  %v2331 = vpack.c.b16 %v2235, %v2231
  %v2332 = vpack.c.b16 %v2236, %v2232
  %v2333 = vpack.c.b16 %v2237, %v2233
  %v2334 = vpack.c.b16 %v2242, %v2238
  %v2335 = vpack.c.b16 %v2243, %v2239
  %v2336 = vpack.c.b16 %v2244, %v2240
  %v2337 = vpack.c.b16 %v2245, %v2241
  %v2338 = vpack.c.b16 %v2250, %v2246
  %v2339 = vpack.c.b16 %v2251, %v2247
  %v2340 = vpack.c.b16 %v2252, %v2248
  %v2341 = vpack.c.b16 %v2253, %v2249
  %v2342 = vpack.c.b16 %v2258, %v2254
  %v2343 = vpack.c.b16 %v2259, %v2255
  %v2344 = vpack.c.b16 %v2260, %v2256
  %v2345 = vpack.c.b16 %v2261, %v2257
  %v2346 = vpack.c.b16 %v2266, %v2262
  %v2347 = vpack.c.b16 %v2267, %v2263
  %v2348 = vpack.c.b16 %v2268, %v2264
  %v2349 = vpack.c.b16 %v2269, %v2265
  %v2350 = vpack.c.b16 %v2274, %v2270
  %v2351 = vpack.c.b16 %v2275, %v2271
  %v2352 = vpack.c.b16 %v2276, %v2272
  %v2353 = vpack.c.b16 %v2277, %v2273
  %v2354 = vpack.c.b16 %v2282, %v2278
  %v2355 = vpack.c.b16 %v2283, %v2279
  %v2356 = vpack.c.b16 %v2284, %v2280
  %v2357 = vpack.c.b16 %v2285, %v2281
  %v2358 = vpack.c.b16 %v2290, %v2286
  %v2359 = vpack.c.b16 %v2291, %v2287
  %v2360 = vpack.c.b16 %v2292, %v2288
  %v2361 = vpack.c.b16 %v2293, %v2289
  %v2362 = vpack.c.b16 %v2298, %v2294
  %v2363 = vpack.c.b16 %v2299, %v2295
  %v2364 = vpack.c.b16 %v2300, %v2296
  %v2365 = vpack.c.b16 %v2301, %v2297
  %2430 = vmatprep.subr.bf16.mxu0 %v2331
  %2431 = vmatpush1.bf16.msra.mxu0 %v2330
  %2432 = vmatprep.subr.bf16.mxu0 %v2327
  %2433 = vmatpush1.bf16.msra.mxu0 %v2326
  %2434 = vmatprep.subr.bf16.mxu0 %v2323
  %2435 = vmatpush1.bf16.msra.mxu0 %v2322
  %2436 = vmatprep.subr.bf16.mxu0 %v2319
  %2437 = vmatpush1.bf16.msra.mxu0 %v2318
  %2438 = vmatprep.subr.bf16.mxu0 %v2315
  %2439 = vmatpush1.bf16.msra.mxu0 %v2314
  %2440 = vmatprep.subr.bf16.mxu0 %v2311
  %2441 = vmatpush1.bf16.msra.mxu0 %v2310
  %2442 = vmatprep.subr.bf16.mxu0 %v2307
  %2443 = vmatpush1.bf16.msra.mxu0 %v2306
  %2444 = vmatprep.subr.bf16.mxu0 %v2303
  %2445 = vmatpush1.bf16.msra.mxu0 %v2302
  %2446 = vmatprep.subr.bf16.mxu0 %v2363
  %2447 = vmatpush2.bf16.msra.mxu0 %v2362
  %2448 = vmatprep.subr.bf16.mxu0 %v2359
  %2449 = vmatpush2.bf16.msra.mxu0 %v2358
  %2450 = vmatprep.subr.bf16.mxu0 %v2355
  %2451 = vmatpush2.bf16.msra.mxu0 %v2354
  %2452 = vmatprep.subr.bf16.mxu0 %v2351
  %2453 = vmatpush2.bf16.msra.mxu0 %v2350
  %2454 = vmatprep.subr.bf16.mxu0 %v2347
  %2455 = vmatpush2.bf16.msra.mxu0 %v2346
  %2456 = vmatprep.subr.bf16.mxu0 %v2343
  %2457 = vmatpush2.bf16.msra.mxu0 %v2342
  %2458 = vmatprep.subr.bf16.mxu0 %v2339
  %2459 = vmatpush2.bf16.msra.mxu0 %v2338
  %2460 = vmatprep.subr.bf16.mxu0 %v2335
  %2461 = vmatpush2.bf16.msra.mxu0 %v2334
  %2462 = vmatprep.mubr.bf16.mxu0 %v1550
  %2463 = vmatmul.mubr.bf16.gmra.mxu0 %v2045
  %v2464 = vpop.f32.mrf.mxu0
  %v2465 = vadd.f32 %v102, %v2464
  %v2466 = vpop.f32.mrf.mxu0
  %v2467 = vadd.f32 %v106, %v2466
  %v2468 = vpop.f32.mrf.mxu0
  %v2469 = vpop.f32.mrf.mxu0
  %2470 = vdwg.mxu0
  %2471 = vmatprep.subr.bf16.mxu0 %v2333
  %2472 = vmatpush1.bf16.msra.mxu0 %v2332
  %2473 = vmatprep.subr.bf16.mxu0 %v2329
  %2474 = vmatpush1.bf16.msra.mxu0 %v2328
  %2475 = vmatprep.subr.bf16.mxu0 %v2325
  %2476 = vmatpush1.bf16.msra.mxu0 %v2324
  %2477 = vmatprep.subr.bf16.mxu0 %v2321
  %2478 = vmatpush1.bf16.msra.mxu0 %v2320
  %2479 = vmatprep.subr.bf16.mxu0 %v2317
  %2480 = vmatpush1.bf16.msra.mxu0 %v2316
  %2481 = vmatprep.subr.bf16.mxu0 %v2313
  %2482 = vmatpush1.bf16.msra.mxu0 %v2312
  %2483 = vmatprep.subr.bf16.mxu0 %v2309
  %2484 = vmatpush1.bf16.msra.mxu0 %v2308
  %2485 = vmatprep.subr.bf16.mxu0 %v2305
  %2486 = vmatpush1.bf16.msra.mxu0 %v2304
  %2487 = vmatprep.subr.bf16.mxu0 %v2365
  %2488 = vmatpush2.bf16.msra.mxu0 %v2364
  %2489 = vmatprep.subr.bf16.mxu0 %v2361
  %2490 = vmatpush2.bf16.msra.mxu0 %v2360
  %2491 = vmatprep.subr.bf16.mxu0 %v2357
  %2492 = vmatpush2.bf16.msra.mxu0 %v2356
  %2493 = vmatprep.subr.bf16.mxu0 %v2353
  %2494 = vmatpush2.bf16.msra.mxu0 %v2352
  %2495 = vmatprep.subr.bf16.mxu0 %v2349
  %2496 = vmatpush2.bf16.msra.mxu0 %v2348
  %2497 = vmatprep.subr.bf16.mxu0 %v2345
  %2498 = vmatpush2.bf16.msra.mxu0 %v2344
  %2499 = vmatprep.subr.bf16.mxu0 %v2341
  %2500 = vmatpush2.bf16.msra.mxu0 %v2340
  %2501 = vmatprep.subr.bf16.mxu0 %v2337
  %2502 = vmatpush2.bf16.msra.mxu0 %v2336
  %2503 = vmatprep.mubr.bf16.mxu0 %v1550
  %2504 = vmatmul.mubr.bf16.gmra.mxu0 %v2045
  %v2505 = vpop.f32.mrf.mxu0
  %v2506 = vadd.f32 %v110, %v2505
  %v2507 = vpop.f32.mrf.mxu0
  %v2508 = vadd.f32 %v114, %v2507
  %v2509 = vpop.f32.mrf.mxu0
  %v2510 = vpop.f32.mrf.mxu0
  %2511 = vdwg.mxu0
  %v2512 = vxor.u32 %v2465, 2147483648
  %v2513 = vmul.f32 %v2512, 1.442695
  %v2514 = vpow.pop %v2513
  %v2515 = vadd.f32 %v2514, 1.0
  %v2516 = vrcp.pop %v2515
  %v2517 = vmul.f32 1.0, %v2516
  %v2518 = vxor.u32 %v2467, 2147483648
  %v2519 = vmul.f32 %v2518, 1.442695
  %v2520 = vpow.pop %v2519
  %v2521 = vadd.f32 %v2520, 1.0
  %v2522 = vrcp.pop %v2521
  %v2523 = vmul.f32 1.0, %v2522
  %v2524 = vtanh.pop %v2506
  %v2525 = vxor.u32 %v2508, 2147483648
  %v2526 = vmul.f32 %v2525, 1.442695
  %v2527 = vpow.pop %v2526
  %v2528 = vadd.f32 %v2527, 1.0
  %v2529 = vrcp.pop %v2528
  %v2530 = vmul.f32 1.0, %v2529
  %v2531 = vmul.f32 %v2523, %v1547
  %v2532 = vmul.f32 %v2517, %v2524
  %v2533 = vadd.f32 %v2531, %v2532
  %v2534 = vtanh.pop %v2533
  %v2535 = vmul.f32 %v2530, %v2534
  %v2536 = vpack.c.bf16 %v2535, %v2535
  %v2537 = vpack.c.bf16 %v2041, %v2041
  %v2538 = vld [vmem:[%s5] sm:$0xff]
  %v2539 = vld [vmem:[%s5 + $0x8] sm:$0xff]
  %v2540 = vld [vmem:[%s5 + $0x10] sm:$0xff]
  %v2541 = vld [vmem:[%s5 + $0x18] sm:$0xff]
  %v2542 = vld [vmem:[%s5 + $0x20] sm:$0xff]
  %v2543 = vld [vmem:[%s5 + $0x28] sm:$0xff]
  %v2544 = vld [vmem:[%s5 + $0x30] sm:$0xff]
  %v2545 = vld [vmem:[%s5 + $0x38] sm:$0xff]
  %v2546 = vld [vmem:[%s5 + $0x40] sm:$0xff]
  %v2547 = vld [vmem:[%s5 + $0x48] sm:$0xff]
  %v2548 = vld [vmem:[%s5 + $0x50] sm:$0xff]
  %v2549 = vld [vmem:[%s5 + $0x58] sm:$0xff]
  %v2550 = vld [vmem:[%s5 + $0x60] sm:$0xff]
  %v2551 = vld [vmem:[%s5 + $0x68] sm:$0xff]
  %v2552 = vld [vmem:[%s5 + $0x70] sm:$0xff]
  %v2553 = vld [vmem:[%s5 + $0x78] sm:$0xff]
  %v2554 = vld [vmem:[%s5 + $0x80] sm:$0xff]
  %v2555 = vld [vmem:[%s5 + $0x88] sm:$0xff]
  %v2556 = vld [vmem:[%s5 + $0x90] sm:$0xff]
  %v2557 = vld [vmem:[%s5 + $0x98] sm:$0xff]
  %v2558 = vld [vmem:[%s5 + $0xa0] sm:$0xff]
  %v2559 = vld [vmem:[%s5 + $0xa8] sm:$0xff]
  %v2560 = vld [vmem:[%s5 + $0xb0] sm:$0xff]
  %v2561 = vld [vmem:[%s5 + $0xb8] sm:$0xff]
  %v2562 = vld [vmem:[%s5 + $0xc0] sm:$0xff]
  %v2563 = vld [vmem:[%s5 + $0xc8] sm:$0xff]
  %v2564 = vld [vmem:[%s5 + $0xd0] sm:$0xff]
  %v2565 = vld [vmem:[%s5 + $0xd8] sm:$0xff]
  %v2566 = vld [vmem:[%s5 + $0xe0] sm:$0xff]
  %v2567 = vld [vmem:[%s5 + $0xe8] sm:$0xff]
  %v2568 = vld [vmem:[%s5 + $0xf0] sm:$0xff]
  %v2569 = vld [vmem:[%s5 + $0xf8] sm:$0xff]
  %v2570 = vld [vmem:[%s5 + $0x100] sm:$0xff]
  %v2571 = vld [vmem:[%s5 + $0x108] sm:$0xff]
  %v2572 = vld [vmem:[%s5 + $0x110] sm:$0xff]
  %v2573 = vld [vmem:[%s5 + $0x118] sm:$0xff]
  %v2574 = vld [vmem:[%s5 + $0x120] sm:$0xff]
  %v2575 = vld [vmem:[%s5 + $0x128] sm:$0xff]
  %v2576 = vld [vmem:[%s5 + $0x130] sm:$0xff]
  %v2577 = vld [vmem:[%s5 + $0x138] sm:$0xff]
  %v2578 = vld [vmem:[%s5 + $0x140] sm:$0xff]
  %v2579 = vld [vmem:[%s5 + $0x148] sm:$0xff]
  %v2580 = vld [vmem:[%s5 + $0x150] sm:$0xff]
  %v2581 = vld [vmem:[%s5 + $0x158] sm:$0xff]
  %v2582 = vld [vmem:[%s5 + $0x160] sm:$0xff]
  %v2583 = vld [vmem:[%s5 + $0x168] sm:$0xff]
  %v2584 = vld [vmem:[%s5 + $0x170] sm:$0xff]
  %v2585 = vld [vmem:[%s5 + $0x178] sm:$0xff]
  %v2586 = vld [vmem:[%s5 + $0x180] sm:$0xff]
  %v2587 = vld [vmem:[%s5 + $0x188] sm:$0xff]
  %v2588 = vld [vmem:[%s5 + $0x190] sm:$0xff]
  %v2589 = vld [vmem:[%s5 + $0x198] sm:$0xff]
  %v2590 = vld [vmem:[%s5 + $0x1a0] sm:$0xff]
  %v2591 = vld [vmem:[%s5 + $0x1a8] sm:$0xff]
  %v2592 = vld [vmem:[%s5 + $0x1b0] sm:$0xff]
  %v2593 = vld [vmem:[%s5 + $0x1b8] sm:$0xff]
  %v2594 = vld [vmem:[%s5 + $0x1c0] sm:$0xff]
  %v2595 = vld [vmem:[%s5 + $0x1c8] sm:$0xff]
  %v2596 = vld [vmem:[%s5 + $0x1d0] sm:$0xff]
  %v2597 = vld [vmem:[%s5 + $0x1d8] sm:$0xff]
  %v2598 = vld [vmem:[%s5 + $0x1e0] sm:$0xff]
  %v2599 = vld [vmem:[%s5 + $0x1e8] sm:$0xff]
  %v2600 = vld [vmem:[%s5 + $0x1f0] sm:$0xff]
  %v2601 = vld [vmem:[%s5 + $0x1f8] sm:$0xff]
  %v2666 = vunpack.c.l.b16 %v2538
  %v2667 = vunpack.c.h.b16 %v2538
  %v2668 = vunpack.c.l.b16 %v2539
  %v2669 = vunpack.c.h.b16 %v2539
  %v2670 = vunpack.c.l.b16 %v2540
  %v2671 = vunpack.c.h.b16 %v2540
  %v2672 = vunpack.c.l.b16 %v2541
  %v2673 = vunpack.c.h.b16 %v2541
  %v2674 = vunpack.c.l.b16 %v2542
  %v2675 = vunpack.c.h.b16 %v2542
  %v2676 = vunpack.c.l.b16 %v2543
  %v2677 = vunpack.c.h.b16 %v2543
  %v2678 = vunpack.c.l.b16 %v2544
  %v2679 = vunpack.c.h.b16 %v2544
  %v2680 = vunpack.c.l.b16 %v2545
  %v2681 = vunpack.c.h.b16 %v2545
  %v2682 = vunpack.c.l.b16 %v2546
  %v2683 = vunpack.c.h.b16 %v2546
  %v2684 = vunpack.c.l.b16 %v2547
  %v2685 = vunpack.c.h.b16 %v2547
  %v2686 = vunpack.c.l.b16 %v2548
  %v2687 = vunpack.c.h.b16 %v2548
  %v2688 = vunpack.c.l.b16 %v2549
  %v2689 = vunpack.c.h.b16 %v2549
  %v2690 = vunpack.c.l.b16 %v2550
  %v2691 = vunpack.c.h.b16 %v2550
  %v2692 = vunpack.c.l.b16 %v2551
  %v2693 = vunpack.c.h.b16 %v2551
  %v2694 = vunpack.c.l.b16 %v2552
  %v2695 = vunpack.c.h.b16 %v2552
  %v2696 = vunpack.c.l.b16 %v2553
  %v2697 = vunpack.c.h.b16 %v2553
  %v2698 = vunpack.c.l.b16 %v2554
  %v2699 = vunpack.c.h.b16 %v2554
  %v2700 = vunpack.c.l.b16 %v2555
  %v2701 = vunpack.c.h.b16 %v2555
  %v2702 = vunpack.c.l.b16 %v2556
  %v2703 = vunpack.c.h.b16 %v2556
  %v2704 = vunpack.c.l.b16 %v2557
  %v2705 = vunpack.c.h.b16 %v2557
  %v2706 = vunpack.c.l.b16 %v2558
  %v2707 = vunpack.c.h.b16 %v2558
  %v2708 = vunpack.c.l.b16 %v2559
  %v2709 = vunpack.c.h.b16 %v2559
  %v2710 = vunpack.c.l.b16 %v2560
  %v2711 = vunpack.c.h.b16 %v2560
  %v2712 = vunpack.c.l.b16 %v2561
  %v2713 = vunpack.c.h.b16 %v2561
  %v2714 = vunpack.c.l.b16 %v2562
  %v2715 = vunpack.c.h.b16 %v2562
  %v2716 = vunpack.c.l.b16 %v2563
  %v2717 = vunpack.c.h.b16 %v2563
  %v2718 = vunpack.c.l.b16 %v2564
  %v2719 = vunpack.c.h.b16 %v2564
  %v2720 = vunpack.c.l.b16 %v2565
  %v2721 = vunpack.c.h.b16 %v2565
  %v2722 = vunpack.c.l.b16 %v2566
  %v2723 = vunpack.c.h.b16 %v2566
  %v2724 = vunpack.c.l.b16 %v2567
  %v2725 = vunpack.c.h.b16 %v2567
  %v2726 = vunpack.c.l.b16 %v2568
  %v2727 = vunpack.c.h.b16 %v2568
  %v2728 = vunpack.c.l.b16 %v2569
  %v2729 = vunpack.c.h.b16 %v2569
  %v2730 = vunpack.c.l.b16 %v2570
  %v2731 = vunpack.c.h.b16 %v2570
  %v2732 = vunpack.c.l.b16 %v2571
  %v2733 = vunpack.c.h.b16 %v2571
  %v2734 = vunpack.c.l.b16 %v2572
  %v2735 = vunpack.c.h.b16 %v2572
  %v2736 = vunpack.c.l.b16 %v2573
  %v2737 = vunpack.c.h.b16 %v2573
  %v2738 = vunpack.c.l.b16 %v2574
  %v2739 = vunpack.c.h.b16 %v2574
  %v2740 = vunpack.c.l.b16 %v2575
  %v2741 = vunpack.c.h.b16 %v2575
  %v2742 = vunpack.c.l.b16 %v2576
  %v2743 = vunpack.c.h.b16 %v2576
  %v2744 = vunpack.c.l.b16 %v2577
  %v2745 = vunpack.c.h.b16 %v2577
  %v2746 = vunpack.c.l.b16 %v2578
  %v2747 = vunpack.c.h.b16 %v2578
  %v2748 = vunpack.c.l.b16 %v2579
  %v2749 = vunpack.c.h.b16 %v2579
  %v2750 = vunpack.c.l.b16 %v2580
  %v2751 = vunpack.c.h.b16 %v2580
  %v2752 = vunpack.c.l.b16 %v2581
  %v2753 = vunpack.c.h.b16 %v2581
  %v2754 = vunpack.c.l.b16 %v2582
  %v2755 = vunpack.c.h.b16 %v2582
  %v2756 = vunpack.c.l.b16 %v2583
  %v2757 = vunpack.c.h.b16 %v2583
  %v2758 = vunpack.c.l.b16 %v2584
  %v2759 = vunpack.c.h.b16 %v2584
  %v2760 = vunpack.c.l.b16 %v2585
  %v2761 = vunpack.c.h.b16 %v2585
  %v2762 = vunpack.c.l.b16 %v2586
  %v2763 = vunpack.c.h.b16 %v2586
  %v2764 = vunpack.c.l.b16 %v2587
  %v2765 = vunpack.c.h.b16 %v2587
  %v2766 = vunpack.c.l.b16 %v2588
  %v2767 = vunpack.c.h.b16 %v2588
  %v2768 = vunpack.c.l.b16 %v2589
  %v2769 = vunpack.c.h.b16 %v2589
  %v2770 = vunpack.c.l.b16 %v2590
  %v2771 = vunpack.c.h.b16 %v2590
  %v2772 = vunpack.c.l.b16 %v2591
  %v2773 = vunpack.c.h.b16 %v2591
  %v2774 = vunpack.c.l.b16 %v2592
  %v2775 = vunpack.c.h.b16 %v2592
  %v2776 = vunpack.c.l.b16 %v2593
  %v2777 = vunpack.c.h.b16 %v2593
  %v2778 = vunpack.c.l.b16 %v2594
  %v2779 = vunpack.c.h.b16 %v2594
  %v2780 = vunpack.c.l.b16 %v2595
  %v2781 = vunpack.c.h.b16 %v2595
  %v2782 = vunpack.c.l.b16 %v2596
  %v2783 = vunpack.c.h.b16 %v2596
  %v2784 = vunpack.c.l.b16 %v2597
  %v2785 = vunpack.c.h.b16 %v2597
  %v2786 = vunpack.c.l.b16 %v2598
  %v2787 = vunpack.c.h.b16 %v2598
  %v2788 = vunpack.c.l.b16 %v2599
  %v2789 = vunpack.c.h.b16 %v2599
  %v2790 = vunpack.c.l.b16 %v2600
  %v2791 = vunpack.c.h.b16 %v2600
  %v2792 = vunpack.c.l.b16 %v2601
  %v2793 = vunpack.c.h.b16 %v2601
  %v2794 = vpack.c.b16 %v2670, %v2666
  %v2795 = vpack.c.b16 %v2671, %v2667
  %v2796 = vpack.c.b16 %v2672, %v2668
  %v2797 = vpack.c.b16 %v2673, %v2669
  %v2798 = vpack.c.b16 %v2678, %v2674
  %v2799 = vpack.c.b16 %v2679, %v2675
  %v2800 = vpack.c.b16 %v2680, %v2676
  %v2801 = vpack.c.b16 %v2681, %v2677
  %v2802 = vpack.c.b16 %v2686, %v2682
  %v2803 = vpack.c.b16 %v2687, %v2683
  %v2804 = vpack.c.b16 %v2688, %v2684
  %v2805 = vpack.c.b16 %v2689, %v2685
  %v2806 = vpack.c.b16 %v2694, %v2690
  %v2807 = vpack.c.b16 %v2695, %v2691
  %v2808 = vpack.c.b16 %v2696, %v2692
  %v2809 = vpack.c.b16 %v2697, %v2693
  %v2810 = vpack.c.b16 %v2702, %v2698
  %v2811 = vpack.c.b16 %v2703, %v2699
  %v2812 = vpack.c.b16 %v2704, %v2700
  %v2813 = vpack.c.b16 %v2705, %v2701
  %v2814 = vpack.c.b16 %v2710, %v2706
  %v2815 = vpack.c.b16 %v2711, %v2707
  %v2816 = vpack.c.b16 %v2712, %v2708
  %v2817 = vpack.c.b16 %v2713, %v2709
  %v2818 = vpack.c.b16 %v2718, %v2714
  %v2819 = vpack.c.b16 %v2719, %v2715
  %v2820 = vpack.c.b16 %v2720, %v2716
  %v2821 = vpack.c.b16 %v2721, %v2717
  %v2822 = vpack.c.b16 %v2726, %v2722
  %v2823 = vpack.c.b16 %v2727, %v2723
  %v2824 = vpack.c.b16 %v2728, %v2724
  %v2825 = vpack.c.b16 %v2729, %v2725
  %v2826 = vpack.c.b16 %v2734, %v2730
  %v2827 = vpack.c.b16 %v2735, %v2731
  %v2828 = vpack.c.b16 %v2736, %v2732
  %v2829 = vpack.c.b16 %v2737, %v2733
  %v2830 = vpack.c.b16 %v2742, %v2738
  %v2831 = vpack.c.b16 %v2743, %v2739
  %v2832 = vpack.c.b16 %v2744, %v2740
  %v2833 = vpack.c.b16 %v2745, %v2741
  %v2834 = vpack.c.b16 %v2750, %v2746
  %v2835 = vpack.c.b16 %v2751, %v2747
  %v2836 = vpack.c.b16 %v2752, %v2748
  %v2837 = vpack.c.b16 %v2753, %v2749
  %v2838 = vpack.c.b16 %v2758, %v2754
  %v2839 = vpack.c.b16 %v2759, %v2755
  %v2840 = vpack.c.b16 %v2760, %v2756
  %v2841 = vpack.c.b16 %v2761, %v2757
  %v2842 = vpack.c.b16 %v2766, %v2762
  %v2843 = vpack.c.b16 %v2767, %v2763
  %v2844 = vpack.c.b16 %v2768, %v2764
  %v2845 = vpack.c.b16 %v2769, %v2765
  %v2846 = vpack.c.b16 %v2774, %v2770
  %v2847 = vpack.c.b16 %v2775, %v2771
  %v2848 = vpack.c.b16 %v2776, %v2772
  %v2849 = vpack.c.b16 %v2777, %v2773
  %v2850 = vpack.c.b16 %v2782, %v2778
  %v2851 = vpack.c.b16 %v2783, %v2779
  %v2852 = vpack.c.b16 %v2784, %v2780
  %v2853 = vpack.c.b16 %v2785, %v2781
  %v2854 = vpack.c.b16 %v2790, %v2786
  %v2855 = vpack.c.b16 %v2791, %v2787
  %v2856 = vpack.c.b16 %v2792, %v2788
  %v2857 = vpack.c.b16 %v2793, %v2789
  %2922 = vmatprep.subr.bf16.mxu0 %v2823
  %2923 = vmatpush1.bf16.msra.mxu0 %v2822
  %2924 = vmatprep.subr.bf16.mxu0 %v2819
  %2925 = vmatpush1.bf16.msra.mxu0 %v2818
  %2926 = vmatprep.subr.bf16.mxu0 %v2815
  %2927 = vmatpush1.bf16.msra.mxu0 %v2814
  %2928 = vmatprep.subr.bf16.mxu0 %v2811
  %2929 = vmatpush1.bf16.msra.mxu0 %v2810
  %2930 = vmatprep.subr.bf16.mxu0 %v2807
  %2931 = vmatpush1.bf16.msra.mxu0 %v2806
  %2932 = vmatprep.subr.bf16.mxu0 %v2803
  %2933 = vmatpush1.bf16.msra.mxu0 %v2802
  %2934 = vmatprep.subr.bf16.mxu0 %v2799
  %2935 = vmatpush1.bf16.msra.mxu0 %v2798
  %2936 = vmatprep.subr.bf16.mxu0 %v2795
  %2937 = vmatpush1.bf16.msra.mxu0 %v2794
  %2938 = vmatprep.subr.bf16.mxu0 %v2855
  %2939 = vmatpush2.bf16.msra.mxu0 %v2854
  %2940 = vmatprep.subr.bf16.mxu0 %v2851
  %2941 = vmatpush2.bf16.msra.mxu0 %v2850
  %2942 = vmatprep.subr.bf16.mxu0 %v2847
  %2943 = vmatpush2.bf16.msra.mxu0 %v2846
  %2944 = vmatprep.subr.bf16.mxu0 %v2843
  %2945 = vmatpush2.bf16.msra.mxu0 %v2842
  %2946 = vmatprep.subr.bf16.mxu0 %v2839
  %2947 = vmatpush2.bf16.msra.mxu0 %v2838
  %2948 = vmatprep.subr.bf16.mxu0 %v2835
  %2949 = vmatpush2.bf16.msra.mxu0 %v2834
  %2950 = vmatprep.subr.bf16.mxu0 %v2831
  %2951 = vmatpush2.bf16.msra.mxu0 %v2830
  %2952 = vmatprep.subr.bf16.mxu0 %v2827
  %2953 = vmatpush2.bf16.msra.mxu0 %v2826
  %2954 = vmatprep.mubr.bf16.mxu0 %v2537
  %2955 = vmatmul.mubr.bf16.gmra.mxu0 %v2536
  %v2956 = vpop.f32.mrf.mxu0
  %v2957 = vadd.f32 %v614, %v2956
  %v2958 = vpop.f32.mrf.mxu0
  %v2959 = vadd.f32 %v618, %v2958
  %v2960 = vpop.f32.mrf.mxu0
  %v2961 = vpop.f32.mrf.mxu0
  %2962 = vdwg.mxu0
  %2963 = vmatprep.subr.bf16.mxu0 %v2825
  %2964 = vmatpush1.bf16.msra.mxu0 %v2824
  %2965 = vmatprep.subr.bf16.mxu0 %v2821
  %2966 = vmatpush1.bf16.msra.mxu0 %v2820
  %2967 = vmatprep.subr.bf16.mxu0 %v2817
  %2968 = vmatpush1.bf16.msra.mxu0 %v2816
  %2969 = vmatprep.subr.bf16.mxu0 %v2813
  %2970 = vmatpush1.bf16.msra.mxu0 %v2812
  %2971 = vmatprep.subr.bf16.mxu0 %v2809
  %2972 = vmatpush1.bf16.msra.mxu0 %v2808
  %2973 = vmatprep.subr.bf16.mxu0 %v2805
  %2974 = vmatpush1.bf16.msra.mxu0 %v2804
  %2975 = vmatprep.subr.bf16.mxu0 %v2801
  %2976 = vmatpush1.bf16.msra.mxu0 %v2800
  %2977 = vmatprep.subr.bf16.mxu0 %v2797
  %2978 = vmatpush1.bf16.msra.mxu0 %v2796
  %2979 = vmatprep.subr.bf16.mxu0 %v2857
  %2980 = vmatpush2.bf16.msra.mxu0 %v2856
  %2981 = vmatprep.subr.bf16.mxu0 %v2853
  %2982 = vmatpush2.bf16.msra.mxu0 %v2852
  %2983 = vmatprep.subr.bf16.mxu0 %v2849
  %2984 = vmatpush2.bf16.msra.mxu0 %v2848
  %2985 = vmatprep.subr.bf16.mxu0 %v2845
  %2986 = vmatpush2.bf16.msra.mxu0 %v2844
  %2987 = vmatprep.subr.bf16.mxu0 %v2841
  %2988 = vmatpush2.bf16.msra.mxu0 %v2840
  %2989 = vmatprep.subr.bf16.mxu0 %v2837
  %2990 = vmatpush2.bf16.msra.mxu0 %v2836
  %2991 = vmatprep.subr.bf16.mxu0 %v2833
  %2992 = vmatpush2.bf16.msra.mxu0 %v2832
  %2993 = vmatprep.subr.bf16.mxu0 %v2829
  %2994 = vmatpush2.bf16.msra.mxu0 %v2828
  %2995 = vmatprep.mubr.bf16.mxu0 %v2537
  %2996 = vmatmul.mubr.bf16.gmra.mxu0 %v2536
  %v2997 = vpop.f32.mrf.mxu0
  %v2998 = vadd.f32 %v622, %v2997
  %v2999 = vpop.f32.mrf.mxu0
  %v3000 = vadd.f32 %v626, %v2999
  %v3001 = vpop.f32.mrf.mxu0
  %v3002 = vpop.f32.mrf.mxu0
  %3003 = vdwg.mxu0
  %v3004 = vxor.u32 %v2957, 2147483648
  %v3005 = vmul.f32 %v3004, 1.442695
  %v3006 = vpow.pop %v3005
  %v3007 = vadd.f32 %v3006, 1.0
  %v3008 = vrcp.pop %v3007
  %v3009 = vmul.f32 1.0, %v3008
  %v3010 = vxor.u32 %v2959, 2147483648
  %v3011 = vmul.f32 %v3010, 1.442695
  %v3012 = vpow.pop %v3011
  %v3013 = vadd.f32 %v3012, 1.0
  %v3014 = vrcp.pop %v3013
  %v3015 = vmul.f32 1.0, %v3014
  %v3016 = vtanh.pop %v2998
  %v3017 = vxor.u32 %v3000, 2147483648
  %v3018 = vmul.f32 %v3017, 1.442695
  %v3019 = vpow.pop %v3018
  %v3020 = vadd.f32 %v3019, 1.0
  %v3021 = vrcp.pop %v3020
  %v3022 = vmul.f32 1.0, %v3021
  %v3023 = vmul.f32 %v3015, %v2039
  %v3024 = vmul.f32 %v3009, %v3016
  %v3025 = vadd.f32 %v3023, %v3024
  %v3026 = vtanh.pop %v3025
  %v3027 = vmul.f32 %v3022, %v3026
  %s3028 = scalar_lea.vmem %s7, 16
  %3029 = vst [vmem:[%s3028] sm:$0xff] %v3027
  %s3030 = scalar_lea.vmem %s0, 12
  %v3031 = vld [vmem:[%s3030] sm:$0xf]
  %v3032 = vld [vmem:[%s3] sm:$0xff]
  %v3033 = vld [vmem:[%s3 + $0x8] sm:$0xff]
  %v3034 = vld [vmem:[%s3 + $0x10] sm:$0xff]
  %v3035 = vld [vmem:[%s3 + $0x18] sm:$0xff]
  %v3036 = vld [vmem:[%s3 + $0x20] sm:$0xff]
  %v3037 = vld [vmem:[%s3 + $0x28] sm:$0xff]
  %v3038 = vld [vmem:[%s3 + $0x30] sm:$0xff]
  %v3039 = vld [vmem:[%s3 + $0x38] sm:$0xff]
  %v3040 = vld [vmem:[%s3 + $0x40] sm:$0xff]
  %v3041 = vld [vmem:[%s3 + $0x48] sm:$0xff]
  %v3042 = vld [vmem:[%s3 + $0x50] sm:$0xff]
  %v3043 = vld [vmem:[%s3 + $0x58] sm:$0xff]
  %v3044 = vld [vmem:[%s3 + $0x60] sm:$0xff]
  %v3045 = vld [vmem:[%s3 + $0x68] sm:$0xff]
  %v3046 = vld [vmem:[%s3 + $0x70] sm:$0xff]
  %v3047 = vld [vmem:[%s3 + $0x78] sm:$0xff]
  %v3048 = vld [vmem:[%s3 + $0x80] sm:$0xff]
  %v3049 = vld [vmem:[%s3 + $0x88] sm:$0xff]
  %v3050 = vld [vmem:[%s3 + $0x90] sm:$0xff]
  %v3051 = vld [vmem:[%s3 + $0x98] sm:$0xff]
  %v3052 = vld [vmem:[%s3 + $0xa0] sm:$0xff]
  %v3053 = vld [vmem:[%s3 + $0xa8] sm:$0xff]
  %v3054 = vld [vmem:[%s3 + $0xb0] sm:$0xff]
  %v3055 = vld [vmem:[%s3 + $0xb8] sm:$0xff]
  %v3056 = vld [vmem:[%s3 + $0xc0] sm:$0xff]
  %v3057 = vld [vmem:[%s3 + $0xc8] sm:$0xff]
  %v3058 = vld [vmem:[%s3 + $0xd0] sm:$0xff]
  %v3059 = vld [vmem:[%s3 + $0xd8] sm:$0xff]
  %v3060 = vld [vmem:[%s3 + $0xe0] sm:$0xff]
  %v3061 = vld [vmem:[%s3 + $0xe8] sm:$0xff]
  %v3062 = vld [vmem:[%s3 + $0xf0] sm:$0xff]
  %v3063 = vld [vmem:[%s3 + $0xf8] sm:$0xff]
  %v3064 = vld [vmem:[%s3 + $0x100] sm:$0xff]
  %v3065 = vld [vmem:[%s3 + $0x108] sm:$0xff]
  %v3066 = vld [vmem:[%s3 + $0x110] sm:$0xff]
  %v3067 = vld [vmem:[%s3 + $0x118] sm:$0xff]
  %v3068 = vld [vmem:[%s3 + $0x120] sm:$0xff]
  %v3069 = vld [vmem:[%s3 + $0x128] sm:$0xff]
  %v3070 = vld [vmem:[%s3 + $0x130] sm:$0xff]
  %v3071 = vld [vmem:[%s3 + $0x138] sm:$0xff]
  %v3072 = vld [vmem:[%s3 + $0x140] sm:$0xff]
  %v3073 = vld [vmem:[%s3 + $0x148] sm:$0xff]
  %v3074 = vld [vmem:[%s3 + $0x150] sm:$0xff]
  %v3075 = vld [vmem:[%s3 + $0x158] sm:$0xff]
  %v3076 = vld [vmem:[%s3 + $0x160] sm:$0xff]
  %v3077 = vld [vmem:[%s3 + $0x168] sm:$0xff]
  %v3078 = vld [vmem:[%s3 + $0x170] sm:$0xff]
  %v3079 = vld [vmem:[%s3 + $0x178] sm:$0xff]
  %v3080 = vld [vmem:[%s3 + $0x180] sm:$0xff]
  %v3081 = vld [vmem:[%s3 + $0x188] sm:$0xff]
  %v3082 = vld [vmem:[%s3 + $0x190] sm:$0xff]
  %v3083 = vld [vmem:[%s3 + $0x198] sm:$0xff]
  %v3084 = vld [vmem:[%s3 + $0x1a0] sm:$0xff]
  %v3085 = vld [vmem:[%s3 + $0x1a8] sm:$0xff]
  %v3086 = vld [vmem:[%s3 + $0x1b0] sm:$0xff]
  %v3087 = vld [vmem:[%s3 + $0x1b8] sm:$0xff]
  %v3088 = vld [vmem:[%s3 + $0x1c0] sm:$0xff]
  %v3089 = vld [vmem:[%s3 + $0x1c8] sm:$0xff]
  %v3090 = vld [vmem:[%s3 + $0x1d0] sm:$0xff]
  %v3091 = vld [vmem:[%s3 + $0x1d8] sm:$0xff]
  %v3092 = vld [vmem:[%s3 + $0x1e0] sm:$0xff]
  %v3093 = vld [vmem:[%s3 + $0x1e8] sm:$0xff]
  %v3094 = vld [vmem:[%s3 + $0x1f0] sm:$0xff]
  %v3095 = vld [vmem:[%s3 + $0x1f8] sm:$0xff]
  %v3160 = vunpack.c.l.b16 %v3032
  %v3161 = vunpack.c.h.b16 %v3032
  %v3162 = vunpack.c.l.b16 %v3033
  %v3163 = vunpack.c.h.b16 %v3033
  %v3164 = vunpack.c.l.b16 %v3034
  %v3165 = vunpack.c.h.b16 %v3034
  %v3166 = vunpack.c.l.b16 %v3035
  %v3167 = vunpack.c.h.b16 %v3035
  %v3168 = vunpack.c.l.b16 %v3036
  %v3169 = vunpack.c.h.b16 %v3036
  %v3170 = vunpack.c.l.b16 %v3037
  %v3171 = vunpack.c.h.b16 %v3037
  %v3172 = vunpack.c.l.b16 %v3038
  %v3173 = vunpack.c.h.b16 %v3038
  %v3174 = vunpack.c.l.b16 %v3039
  %v3175 = vunpack.c.h.b16 %v3039
  %v3176 = vunpack.c.l.b16 %v3040
  %v3177 = vunpack.c.h.b16 %v3040
  %v3178 = vunpack.c.l.b16 %v3041
  %v3179 = vunpack.c.h.b16 %v3041
  %v3180 = vunpack.c.l.b16 %v3042
  %v3181 = vunpack.c.h.b16 %v3042
  %v3182 = vunpack.c.l.b16 %v3043
  %v3183 = vunpack.c.h.b16 %v3043
  %v3184 = vunpack.c.l.b16 %v3044
  %v3185 = vunpack.c.h.b16 %v3044
  %v3186 = vunpack.c.l.b16 %v3045
  %v3187 = vunpack.c.h.b16 %v3045
  %v3188 = vunpack.c.l.b16 %v3046
  %v3189 = vunpack.c.h.b16 %v3046
  %v3190 = vunpack.c.l.b16 %v3047
  %v3191 = vunpack.c.h.b16 %v3047
  %v3192 = vunpack.c.l.b16 %v3048
  %v3193 = vunpack.c.h.b16 %v3048
  %v3194 = vunpack.c.l.b16 %v3049
  %v3195 = vunpack.c.h.b16 %v3049
  %v3196 = vunpack.c.l.b16 %v3050
  %v3197 = vunpack.c.h.b16 %v3050
  %v3198 = vunpack.c.l.b16 %v3051
  %v3199 = vunpack.c.h.b16 %v3051
  %v3200 = vunpack.c.l.b16 %v3052
  %v3201 = vunpack.c.h.b16 %v3052
  %v3202 = vunpack.c.l.b16 %v3053
  %v3203 = vunpack.c.h.b16 %v3053
  %v3204 = vunpack.c.l.b16 %v3054
  %v3205 = vunpack.c.h.b16 %v3054
  %v3206 = vunpack.c.l.b16 %v3055
  %v3207 = vunpack.c.h.b16 %v3055
  %v3208 = vunpack.c.l.b16 %v3056
  %v3209 = vunpack.c.h.b16 %v3056
  %v3210 = vunpack.c.l.b16 %v3057
  %v3211 = vunpack.c.h.b16 %v3057
  %v3212 = vunpack.c.l.b16 %v3058
  %v3213 = vunpack.c.h.b16 %v3058
  %v3214 = vunpack.c.l.b16 %v3059
  %v3215 = vunpack.c.h.b16 %v3059
  %v3216 = vunpack.c.l.b16 %v3060
  %v3217 = vunpack.c.h.b16 %v3060
  %v3218 = vunpack.c.l.b16 %v3061
  %v3219 = vunpack.c.h.b16 %v3061
  %v3220 = vunpack.c.l.b16 %v3062
  %v3221 = vunpack.c.h.b16 %v3062
  %v3222 = vunpack.c.l.b16 %v3063
  %v3223 = vunpack.c.h.b16 %v3063
  %v3224 = vunpack.c.l.b16 %v3064
  %v3225 = vunpack.c.h.b16 %v3064
  %v3226 = vunpack.c.l.b16 %v3065
  %v3227 = vunpack.c.h.b16 %v3065
  %v3228 = vunpack.c.l.b16 %v3066
  %v3229 = vunpack.c.h.b16 %v3066
  %v3230 = vunpack.c.l.b16 %v3067
  %v3231 = vunpack.c.h.b16 %v3067
  %v3232 = vunpack.c.l.b16 %v3068
  %v3233 = vunpack.c.h.b16 %v3068
  %v3234 = vunpack.c.l.b16 %v3069
  %v3235 = vunpack.c.h.b16 %v3069
  %v3236 = vunpack.c.l.b16 %v3070
  %v3237 = vunpack.c.h.b16 %v3070
  %v3238 = vunpack.c.l.b16 %v3071
  %v3239 = vunpack.c.h.b16 %v3071
  %v3240 = vunpack.c.l.b16 %v3072
  %v3241 = vunpack.c.h.b16 %v3072
  %v3242 = vunpack.c.l.b16 %v3073
  %v3243 = vunpack.c.h.b16 %v3073
  %v3244 = vunpack.c.l.b16 %v3074
  %v3245 = vunpack.c.h.b16 %v3074
  %v3246 = vunpack.c.l.b16 %v3075
  %v3247 = vunpack.c.h.b16 %v3075
  %v3248 = vunpack.c.l.b16 %v3076
  %v3249 = vunpack.c.h.b16 %v3076
  %v3250 = vunpack.c.l.b16 %v3077
  %v3251 = vunpack.c.h.b16 %v3077
  %v3252 = vunpack.c.l.b16 %v3078
  %v3253 = vunpack.c.h.b16 %v3078
  %v3254 = vunpack.c.l.b16 %v3079
  %v3255 = vunpack.c.h.b16 %v3079
  %v3256 = vunpack.c.l.b16 %v3080
  %v3257 = vunpack.c.h.b16 %v3080
  %v3258 = vunpack.c.l.b16 %v3081
  %v3259 = vunpack.c.h.b16 %v3081
  %v3260 = vunpack.c.l.b16 %v3082
  %v3261 = vunpack.c.h.b16 %v3082
  %v3262 = vunpack.c.l.b16 %v3083
  %v3263 = vunpack.c.h.b16 %v3083
  %v3264 = vunpack.c.l.b16 %v3084
  %v3265 = vunpack.c.h.b16 %v3084
  %v3266 = vunpack.c.l.b16 %v3085
  %v3267 = vunpack.c.h.b16 %v3085
  %v3268 = vunpack.c.l.b16 %v3086
  %v3269 = vunpack.c.h.b16 %v3086
  %v3270 = vunpack.c.l.b16 %v3087
  %v3271 = vunpack.c.h.b16 %v3087
  %v3272 = vunpack.c.l.b16 %v3088
  %v3273 = vunpack.c.h.b16 %v3088
  %v3274 = vunpack.c.l.b16 %v3089
  %v3275 = vunpack.c.h.b16 %v3089
  %v3276 = vunpack.c.l.b16 %v3090
  %v3277 = vunpack.c.h.b16 %v3090
  %v3278 = vunpack.c.l.b16 %v3091
  %v3279 = vunpack.c.h.b16 %v3091
  %v3280 = vunpack.c.l.b16 %v3092
  %v3281 = vunpack.c.h.b16 %v3092
  %v3282 = vunpack.c.l.b16 %v3093
  %v3283 = vunpack.c.h.b16 %v3093
  %v3284 = vunpack.c.l.b16 %v3094
  %v3285 = vunpack.c.h.b16 %v3094
  %v3286 = vunpack.c.l.b16 %v3095
  %v3287 = vunpack.c.h.b16 %v3095
  %v3288 = vpack.c.b16 %v3164, %v3160
  %v3289 = vpack.c.b16 %v3165, %v3161
  %v3290 = vpack.c.b16 %v3166, %v3162
  %v3291 = vpack.c.b16 %v3167, %v3163
  %v3292 = vpack.c.b16 %v3172, %v3168
  %v3293 = vpack.c.b16 %v3173, %v3169
  %v3294 = vpack.c.b16 %v3174, %v3170
  %v3295 = vpack.c.b16 %v3175, %v3171
  %v3296 = vpack.c.b16 %v3180, %v3176
  %v3297 = vpack.c.b16 %v3181, %v3177
  %v3298 = vpack.c.b16 %v3182, %v3178
  %v3299 = vpack.c.b16 %v3183, %v3179
  %v3300 = vpack.c.b16 %v3188, %v3184
  %v3301 = vpack.c.b16 %v3189, %v3185
  %v3302 = vpack.c.b16 %v3190, %v3186
  %v3303 = vpack.c.b16 %v3191, %v3187
  %v3304 = vpack.c.b16 %v3196, %v3192
  %v3305 = vpack.c.b16 %v3197, %v3193
  %v3306 = vpack.c.b16 %v3198, %v3194
  %v3307 = vpack.c.b16 %v3199, %v3195
  %v3308 = vpack.c.b16 %v3204, %v3200
  %v3309 = vpack.c.b16 %v3205, %v3201
  %v3310 = vpack.c.b16 %v3206, %v3202
  %v3311 = vpack.c.b16 %v3207, %v3203
  %v3312 = vpack.c.b16 %v3212, %v3208
  %v3313 = vpack.c.b16 %v3213, %v3209
  %v3314 = vpack.c.b16 %v3214, %v3210
  %v3315 = vpack.c.b16 %v3215, %v3211
  %v3316 = vpack.c.b16 %v3220, %v3216
  %v3317 = vpack.c.b16 %v3221, %v3217
  %v3318 = vpack.c.b16 %v3222, %v3218
  %v3319 = vpack.c.b16 %v3223, %v3219
  %v3320 = vpack.c.b16 %v3228, %v3224
  %v3321 = vpack.c.b16 %v3229, %v3225
  %v3322 = vpack.c.b16 %v3230, %v3226
  %v3323 = vpack.c.b16 %v3231, %v3227
  %v3324 = vpack.c.b16 %v3236, %v3232
  %v3325 = vpack.c.b16 %v3237, %v3233
  %v3326 = vpack.c.b16 %v3238, %v3234
  %v3327 = vpack.c.b16 %v3239, %v3235
  %v3328 = vpack.c.b16 %v3244, %v3240
  %v3329 = vpack.c.b16 %v3245, %v3241
  %v3330 = vpack.c.b16 %v3246, %v3242
  %v3331 = vpack.c.b16 %v3247, %v3243
  %v3332 = vpack.c.b16 %v3252, %v3248
  %v3333 = vpack.c.b16 %v3253, %v3249
  %v3334 = vpack.c.b16 %v3254, %v3250
  %v3335 = vpack.c.b16 %v3255, %v3251
  %v3336 = vpack.c.b16 %v3260, %v3256
  %v3337 = vpack.c.b16 %v3261, %v3257
  %v3338 = vpack.c.b16 %v3262, %v3258
  %v3339 = vpack.c.b16 %v3263, %v3259
  %v3340 = vpack.c.b16 %v3268, %v3264
  %v3341 = vpack.c.b16 %v3269, %v3265
  %v3342 = vpack.c.b16 %v3270, %v3266
  %v3343 = vpack.c.b16 %v3271, %v3267
  %v3344 = vpack.c.b16 %v3276, %v3272
  %v3345 = vpack.c.b16 %v3277, %v3273
  %v3346 = vpack.c.b16 %v3278, %v3274
  %v3347 = vpack.c.b16 %v3279, %v3275
  %v3348 = vpack.c.b16 %v3284, %v3280
  %v3349 = vpack.c.b16 %v3285, %v3281
  %v3350 = vpack.c.b16 %v3286, %v3282
  %v3351 = vpack.c.b16 %v3287, %v3283
  %3416 = vmatprep.subr.bf16.mxu0 %v3317
  %3417 = vmatpush1.bf16.msra.mxu0 %v3316
  %3418 = vmatprep.subr.bf16.mxu0 %v3313
  %3419 = vmatpush1.bf16.msra.mxu0 %v3312
  %3420 = vmatprep.subr.bf16.mxu0 %v3309
  %3421 = vmatpush1.bf16.msra.mxu0 %v3308
  %3422 = vmatprep.subr.bf16.mxu0 %v3305
  %3423 = vmatpush1.bf16.msra.mxu0 %v3304
  %3424 = vmatprep.subr.bf16.mxu0 %v3301
  %3425 = vmatpush1.bf16.msra.mxu0 %v3300
  %3426 = vmatprep.subr.bf16.mxu0 %v3297
  %3427 = vmatpush1.bf16.msra.mxu0 %v3296
  %3428 = vmatprep.subr.bf16.mxu0 %v3293
  %3429 = vmatpush1.bf16.msra.mxu0 %v3292
  %3430 = vmatprep.subr.bf16.mxu0 %v3289
  %3431 = vmatpush1.bf16.msra.mxu0 %v3288
  %3432 = vmatprep.subr.bf16.mxu0 %v3349
  %3433 = vmatpush2.bf16.msra.mxu0 %v3348
  %3434 = vmatprep.subr.bf16.mxu0 %v3345
  %3435 = vmatpush2.bf16.msra.mxu0 %v3344
  %3436 = vmatprep.subr.bf16.mxu0 %v3341
  %3437 = vmatpush2.bf16.msra.mxu0 %v3340
  %3438 = vmatprep.subr.bf16.mxu0 %v3337
  %3439 = vmatpush2.bf16.msra.mxu0 %v3336
  %3440 = vmatprep.subr.bf16.mxu0 %v3333
  %3441 = vmatpush2.bf16.msra.mxu0 %v3332
  %3442 = vmatprep.subr.bf16.mxu0 %v3329
  %3443 = vmatpush2.bf16.msra.mxu0 %v3328
  %3444 = vmatprep.subr.bf16.mxu0 %v3325
  %3445 = vmatpush2.bf16.msra.mxu0 %v3324
  %3446 = vmatprep.subr.bf16.mxu0 %v3321
  %3447 = vmatpush2.bf16.msra.mxu0 %v3320
  %3448 = vmatprep.mubr.bf16.mxu0 %v2536
  %3449 = vmatmul.mubr.bf16.gmra.mxu0 %v3031
  %v3450 = vpop.f32.mrf.mxu0
  %v3451 = vadd.f32 %v102, %v3450
  %v3452 = vpop.f32.mrf.mxu0
  %v3453 = vadd.f32 %v106, %v3452
  %v3454 = vpop.f32.mrf.mxu0
  %v3455 = vpop.f32.mrf.mxu0
  %3456 = vdwg.mxu0
  %3457 = vmatprep.subr.bf16.mxu0 %v3319
  %3458 = vmatpush1.bf16.msra.mxu0 %v3318
  %3459 = vmatprep.subr.bf16.mxu0 %v3315
  %3460 = vmatpush1.bf16.msra.mxu0 %v3314
  %3461 = vmatprep.subr.bf16.mxu0 %v3311
  %3462 = vmatpush1.bf16.msra.mxu0 %v3310
  %3463 = vmatprep.subr.bf16.mxu0 %v3307
  %3464 = vmatpush1.bf16.msra.mxu0 %v3306
  %3465 = vmatprep.subr.bf16.mxu0 %v3303
  %3466 = vmatpush1.bf16.msra.mxu0 %v3302
  %3467 = vmatprep.subr.bf16.mxu0 %v3299
  %3468 = vmatpush1.bf16.msra.mxu0 %v3298
  %3469 = vmatprep.subr.bf16.mxu0 %v3295
  %3470 = vmatpush1.bf16.msra.mxu0 %v3294
  %3471 = vmatprep.subr.bf16.mxu0 %v3291
  %3472 = vmatpush1.bf16.msra.mxu0 %v3290
  %3473 = vmatprep.subr.bf16.mxu0 %v3351
  %3474 = vmatpush2.bf16.msra.mxu0 %v3350
  %3475 = vmatprep.subr.bf16.mxu0 %v3347
  %3476 = vmatpush2.bf16.msra.mxu0 %v3346
  %3477 = vmatprep.subr.bf16.mxu0 %v3343
  %3478 = vmatpush2.bf16.msra.mxu0 %v3342
  %3479 = vmatprep.subr.bf16.mxu0 %v3339
  %3480 = vmatpush2.bf16.msra.mxu0 %v3338
  %3481 = vmatprep.subr.bf16.mxu0 %v3335
  %3482 = vmatpush2.bf16.msra.mxu0 %v3334
  %3483 = vmatprep.subr.bf16.mxu0 %v3331
  %3484 = vmatpush2.bf16.msra.mxu0 %v3330
  %3485 = vmatprep.subr.bf16.mxu0 %v3327
  %3486 = vmatpush2.bf16.msra.mxu0 %v3326
  %3487 = vmatprep.subr.bf16.mxu0 %v3323
  %3488 = vmatpush2.bf16.msra.mxu0 %v3322
  %3489 = vmatprep.mubr.bf16.mxu0 %v2536
  %3490 = vmatmul.mubr.bf16.gmra.mxu0 %v3031
  %v3491 = vpop.f32.mrf.mxu0
  %v3492 = vadd.f32 %v110, %v3491
  %v3493 = vpop.f32.mrf.mxu0
  %v3494 = vadd.f32 %v114, %v3493
  %v3495 = vpop.f32.mrf.mxu0
  %v3496 = vpop.f32.mrf.mxu0
  %3497 = vdwg.mxu0
  %v3498 = vxor.u32 %v3451, 2147483648
  %v3499 = vmul.f32 %v3498, 1.442695
  %v3500 = vpow.pop %v3499
  %v3501 = vadd.f32 %v3500, 1.0
  %v3502 = vrcp.pop %v3501
  %v3503 = vmul.f32 1.0, %v3502
  %v3504 = vxor.u32 %v3453, 2147483648
  %v3505 = vmul.f32 %v3504, 1.442695
  %v3506 = vpow.pop %v3505
  %v3507 = vadd.f32 %v3506, 1.0
  %v3508 = vrcp.pop %v3507
  %v3509 = vmul.f32 1.0, %v3508
  %v3510 = vtanh.pop %v3492
  %v3511 = vxor.u32 %v3494, 2147483648
  %v3512 = vmul.f32 %v3511, 1.442695
  %v3513 = vpow.pop %v3512
  %v3514 = vadd.f32 %v3513, 1.0
  %v3515 = vrcp.pop %v3514
  %v3516 = vmul.f32 1.0, %v3515
  %v3517 = vmul.f32 %v3509, %v2533
  %v3518 = vmul.f32 %v3503, %v3510
  %v3519 = vadd.f32 %v3517, %v3518
  %v3520 = vtanh.pop %v3519
  %v3521 = vmul.f32 %v3516, %v3520
  %v3522 = vpack.c.bf16 %v3521, %v3521
  %v3523 = vpack.c.bf16 %v3027, %v3027
  %v3524 = vld [vmem:[%s5] sm:$0xff]
  %v3525 = vld [vmem:[%s5 + $0x8] sm:$0xff]
  %v3526 = vld [vmem:[%s5 + $0x10] sm:$0xff]
  %v3527 = vld [vmem:[%s5 + $0x18] sm:$0xff]
  %v3528 = vld [vmem:[%s5 + $0x20] sm:$0xff]
  %v3529 = vld [vmem:[%s5 + $0x28] sm:$0xff]
  %v3530 = vld [vmem:[%s5 + $0x30] sm:$0xff]
  %v3531 = vld [vmem:[%s5 + $0x38] sm:$0xff]
  %v3532 = vld [vmem:[%s5 + $0x40] sm:$0xff]
  %v3533 = vld [vmem:[%s5 + $0x48] sm:$0xff]
  %v3534 = vld [vmem:[%s5 + $0x50] sm:$0xff]
  %v3535 = vld [vmem:[%s5 + $0x58] sm:$0xff]
  %v3536 = vld [vmem:[%s5 + $0x60] sm:$0xff]
  %v3537 = vld [vmem:[%s5 + $0x68] sm:$0xff]
  %v3538 = vld [vmem:[%s5 + $0x70] sm:$0xff]
  %v3539 = vld [vmem:[%s5 + $0x78] sm:$0xff]
  %v3540 = vld [vmem:[%s5 + $0x80] sm:$0xff]
  %v3541 = vld [vmem:[%s5 + $0x88] sm:$0xff]
  %v3542 = vld [vmem:[%s5 + $0x90] sm:$0xff]
  %v3543 = vld [vmem:[%s5 + $0x98] sm:$0xff]
  %v3544 = vld [vmem:[%s5 + $0xa0] sm:$0xff]
  %v3545 = vld [vmem:[%s5 + $0xa8] sm:$0xff]
  %v3546 = vld [vmem:[%s5 + $0xb0] sm:$0xff]
  %v3547 = vld [vmem:[%s5 + $0xb8] sm:$0xff]
  %v3548 = vld [vmem:[%s5 + $0xc0] sm:$0xff]
  %v3549 = vld [vmem:[%s5 + $0xc8] sm:$0xff]
  %v3550 = vld [vmem:[%s5 + $0xd0] sm:$0xff]
  %v3551 = vld [vmem:[%s5 + $0xd8] sm:$0xff]
  %v3552 = vld [vmem:[%s5 + $0xe0] sm:$0xff]
  %v3553 = vld [vmem:[%s5 + $0xe8] sm:$0xff]
  %v3554 = vld [vmem:[%s5 + $0xf0] sm:$0xff]
  %v3555 = vld [vmem:[%s5 + $0xf8] sm:$0xff]
  %v3556 = vld [vmem:[%s5 + $0x100] sm:$0xff]
  %v3557 = vld [vmem:[%s5 + $0x108] sm:$0xff]
  %v3558 = vld [vmem:[%s5 + $0x110] sm:$0xff]
  %v3559 = vld [vmem:[%s5 + $0x118] sm:$0xff]
  %v3560 = vld [vmem:[%s5 + $0x120] sm:$0xff]
  %v3561 = vld [vmem:[%s5 + $0x128] sm:$0xff]
  %v3562 = vld [vmem:[%s5 + $0x130] sm:$0xff]
  %v3563 = vld [vmem:[%s5 + $0x138] sm:$0xff]
  %v3564 = vld [vmem:[%s5 + $0x140] sm:$0xff]
  %v3565 = vld [vmem:[%s5 + $0x148] sm:$0xff]
  %v3566 = vld [vmem:[%s5 + $0x150] sm:$0xff]
  %v3567 = vld [vmem:[%s5 + $0x158] sm:$0xff]
  %v3568 = vld [vmem:[%s5 + $0x160] sm:$0xff]
  %v3569 = vld [vmem:[%s5 + $0x168] sm:$0xff]
  %v3570 = vld [vmem:[%s5 + $0x170] sm:$0xff]
  %v3571 = vld [vmem:[%s5 + $0x178] sm:$0xff]
  %v3572 = vld [vmem:[%s5 + $0x180] sm:$0xff]
  %v3573 = vld [vmem:[%s5 + $0x188] sm:$0xff]
  %v3574 = vld [vmem:[%s5 + $0x190] sm:$0xff]
  %v3575 = vld [vmem:[%s5 + $0x198] sm:$0xff]
  %v3576 = vld [vmem:[%s5 + $0x1a0] sm:$0xff]
  %v3577 = vld [vmem:[%s5 + $0x1a8] sm:$0xff]
  %v3578 = vld [vmem:[%s5 + $0x1b0] sm:$0xff]
  %v3579 = vld [vmem:[%s5 + $0x1b8] sm:$0xff]
  %v3580 = vld [vmem:[%s5 + $0x1c0] sm:$0xff]
  %v3581 = vld [vmem:[%s5 + $0x1c8] sm:$0xff]
  %v3582 = vld [vmem:[%s5 + $0x1d0] sm:$0xff]
  %v3583 = vld [vmem:[%s5 + $0x1d8] sm:$0xff]
  %v3584 = vld [vmem:[%s5 + $0x1e0] sm:$0xff]
  %v3585 = vld [vmem:[%s5 + $0x1e8] sm:$0xff]
  %v3586 = vld [vmem:[%s5 + $0x1f0] sm:$0xff]
  %v3587 = vld [vmem:[%s5 + $0x1f8] sm:$0xff]
  %v3652 = vunpack.c.l.b16 %v3524
  %v3653 = vunpack.c.h.b16 %v3524
  %v3654 = vunpack.c.l.b16 %v3525
  %v3655 = vunpack.c.h.b16 %v3525
  %v3656 = vunpack.c.l.b16 %v3526
  %v3657 = vunpack.c.h.b16 %v3526
  %v3658 = vunpack.c.l.b16 %v3527
  %v3659 = vunpack.c.h.b16 %v3527
  %v3660 = vunpack.c.l.b16 %v3528
  %v3661 = vunpack.c.h.b16 %v3528
  %v3662 = vunpack.c.l.b16 %v3529
  %v3663 = vunpack.c.h.b16 %v3529
  %v3664 = vunpack.c.l.b16 %v3530
  %v3665 = vunpack.c.h.b16 %v3530
  %v3666 = vunpack.c.l.b16 %v3531
  %v3667 = vunpack.c.h.b16 %v3531
  %v3668 = vunpack.c.l.b16 %v3532
  %v3669 = vunpack.c.h.b16 %v3532
  %v3670 = vunpack.c.l.b16 %v3533
  %v3671 = vunpack.c.h.b16 %v3533
  %v3672 = vunpack.c.l.b16 %v3534
  %v3673 = vunpack.c.h.b16 %v3534
  %v3674 = vunpack.c.l.b16 %v3535
  %v3675 = vunpack.c.h.b16 %v3535
  %v3676 = vunpack.c.l.b16 %v3536
  %v3677 = vunpack.c.h.b16 %v3536
  %v3678 = vunpack.c.l.b16 %v3537
  %v3679 = vunpack.c.h.b16 %v3537
  %v3680 = vunpack.c.l.b16 %v3538
  %v3681 = vunpack.c.h.b16 %v3538
  %v3682 = vunpack.c.l.b16 %v3539
  %v3683 = vunpack.c.h.b16 %v3539
  %v3684 = vunpack.c.l.b16 %v3540
  %v3685 = vunpack.c.h.b16 %v3540
  %v3686 = vunpack.c.l.b16 %v3541
  %v3687 = vunpack.c.h.b16 %v3541
  %v3688 = vunpack.c.l.b16 %v3542
  %v3689 = vunpack.c.h.b16 %v3542
  %v3690 = vunpack.c.l.b16 %v3543
  %v3691 = vunpack.c.h.b16 %v3543
  %v3692 = vunpack.c.l.b16 %v3544
  %v3693 = vunpack.c.h.b16 %v3544
  %v3694 = vunpack.c.l.b16 %v3545
  %v3695 = vunpack.c.h.b16 %v3545
  %v3696 = vunpack.c.l.b16 %v3546
  %v3697 = vunpack.c.h.b16 %v3546
  %v3698 = vunpack.c.l.b16 %v3547
  %v3699 = vunpack.c.h.b16 %v3547
  %v3700 = vunpack.c.l.b16 %v3548
  %v3701 = vunpack.c.h.b16 %v3548
  %v3702 = vunpack.c.l.b16 %v3549
  %v3703 = vunpack.c.h.b16 %v3549
  %v3704 = vunpack.c.l.b16 %v3550
  %v3705 = vunpack.c.h.b16 %v3550
  %v3706 = vunpack.c.l.b16 %v3551
  %v3707 = vunpack.c.h.b16 %v3551
  %v3708 = vunpack.c.l.b16 %v3552
  %v3709 = vunpack.c.h.b16 %v3552
  %v3710 = vunpack.c.l.b16 %v3553
  %v3711 = vunpack.c.h.b16 %v3553
  %v3712 = vunpack.c.l.b16 %v3554
  %v3713 = vunpack.c.h.b16 %v3554
  %v3714 = vunpack.c.l.b16 %v3555
  %v3715 = vunpack.c.h.b16 %v3555
  %v3716 = vunpack.c.l.b16 %v3556
  %v3717 = vunpack.c.h.b16 %v3556
  %v3718 = vunpack.c.l.b16 %v3557
  %v3719 = vunpack.c.h.b16 %v3557
  %v3720 = vunpack.c.l.b16 %v3558
  %v3721 = vunpack.c.h.b16 %v3558
  %v3722 = vunpack.c.l.b16 %v3559
  %v3723 = vunpack.c.h.b16 %v3559
  %v3724 = vunpack.c.l.b16 %v3560
  %v3725 = vunpack.c.h.b16 %v3560
  %v3726 = vunpack.c.l.b16 %v3561
  %v3727 = vunpack.c.h.b16 %v3561
  %v3728 = vunpack.c.l.b16 %v3562
  %v3729 = vunpack.c.h.b16 %v3562
  %v3730 = vunpack.c.l.b16 %v3563
  %v3731 = vunpack.c.h.b16 %v3563
  %v3732 = vunpack.c.l.b16 %v3564
  %v3733 = vunpack.c.h.b16 %v3564
  %v3734 = vunpack.c.l.b16 %v3565
  %v3735 = vunpack.c.h.b16 %v3565
  %v3736 = vunpack.c.l.b16 %v3566
  %v3737 = vunpack.c.h.b16 %v3566
  %v3738 = vunpack.c.l.b16 %v3567
  %v3739 = vunpack.c.h.b16 %v3567
  %v3740 = vunpack.c.l.b16 %v3568
  %v3741 = vunpack.c.h.b16 %v3568
  %v3742 = vunpack.c.l.b16 %v3569
  %v3743 = vunpack.c.h.b16 %v3569
  %v3744 = vunpack.c.l.b16 %v3570
  %v3745 = vunpack.c.h.b16 %v3570
  %v3746 = vunpack.c.l.b16 %v3571
  %v3747 = vunpack.c.h.b16 %v3571
  %v3748 = vunpack.c.l.b16 %v3572
  %v3749 = vunpack.c.h.b16 %v3572
  %v3750 = vunpack.c.l.b16 %v3573
  %v3751 = vunpack.c.h.b16 %v3573
  %v3752 = vunpack.c.l.b16 %v3574
  %v3753 = vunpack.c.h.b16 %v3574
  %v3754 = vunpack.c.l.b16 %v3575
  %v3755 = vunpack.c.h.b16 %v3575
  %v3756 = vunpack.c.l.b16 %v3576
  %v3757 = vunpack.c.h.b16 %v3576
  %v3758 = vunpack.c.l.b16 %v3577
  %v3759 = vunpack.c.h.b16 %v3577
  %v3760 = vunpack.c.l.b16 %v3578
  %v3761 = vunpack.c.h.b16 %v3578
  %v3762 = vunpack.c.l.b16 %v3579
  %v3763 = vunpack.c.h.b16 %v3579
  %v3764 = vunpack.c.l.b16 %v3580
  %v3765 = vunpack.c.h.b16 %v3580
  %v3766 = vunpack.c.l.b16 %v3581
  %v3767 = vunpack.c.h.b16 %v3581
  %v3768 = vunpack.c.l.b16 %v3582
  %v3769 = vunpack.c.h.b16 %v3582
  %v3770 = vunpack.c.l.b16 %v3583
  %v3771 = vunpack.c.h.b16 %v3583
  %v3772 = vunpack.c.l.b16 %v3584
  %v3773 = vunpack.c.h.b16 %v3584
  %v3774 = vunpack.c.l.b16 %v3585
  %v3775 = vunpack.c.h.b16 %v3585
  %v3776 = vunpack.c.l.b16 %v3586
  %v3777 = vunpack.c.h.b16 %v3586
  %v3778 = vunpack.c.l.b16 %v3587
  %v3779 = vunpack.c.h.b16 %v3587
  %v3780 = vpack.c.b16 %v3656, %v3652
  %v3781 = vpack.c.b16 %v3657, %v3653
  %v3782 = vpack.c.b16 %v3658, %v3654
  %v3783 = vpack.c.b16 %v3659, %v3655
  %v3784 = vpack.c.b16 %v3664, %v3660
  %v3785 = vpack.c.b16 %v3665, %v3661
  %v3786 = vpack.c.b16 %v3666, %v3662
  %v3787 = vpack.c.b16 %v3667, %v3663
  %v3788 = vpack.c.b16 %v3672, %v3668
  %v3789 = vpack.c.b16 %v3673, %v3669
  %v3790 = vpack.c.b16 %v3674, %v3670
  %v3791 = vpack.c.b16 %v3675, %v3671
  %v3792 = vpack.c.b16 %v3680, %v3676
  %v3793 = vpack.c.b16 %v3681, %v3677
  %v3794 = vpack.c.b16 %v3682, %v3678
  %v3795 = vpack.c.b16 %v3683, %v3679
  %v3796 = vpack.c.b16 %v3688, %v3684
  %v3797 = vpack.c.b16 %v3689, %v3685
  %v3798 = vpack.c.b16 %v3690, %v3686
  %v3799 = vpack.c.b16 %v3691, %v3687
  %v3800 = vpack.c.b16 %v3696, %v3692
  %v3801 = vpack.c.b16 %v3697, %v3693
  %v3802 = vpack.c.b16 %v3698, %v3694
  %v3803 = vpack.c.b16 %v3699, %v3695
  %v3804 = vpack.c.b16 %v3704, %v3700
  %v3805 = vpack.c.b16 %v3705, %v3701
  %v3806 = vpack.c.b16 %v3706, %v3702
  %v3807 = vpack.c.b16 %v3707, %v3703
  %v3808 = vpack.c.b16 %v3712, %v3708
  %v3809 = vpack.c.b16 %v3713, %v3709
  %v3810 = vpack.c.b16 %v3714, %v3710
  %v3811 = vpack.c.b16 %v3715, %v3711
  %v3812 = vpack.c.b16 %v3720, %v3716
  %v3813 = vpack.c.b16 %v3721, %v3717
  %v3814 = vpack.c.b16 %v3722, %v3718
  %v3815 = vpack.c.b16 %v3723, %v3719
  %v3816 = vpack.c.b16 %v3728, %v3724
  %v3817 = vpack.c.b16 %v3729, %v3725
  %v3818 = vpack.c.b16 %v3730, %v3726
  %v3819 = vpack.c.b16 %v3731, %v3727
  %v3820 = vpack.c.b16 %v3736, %v3732
  %v3821 = vpack.c.b16 %v3737, %v3733
  %v3822 = vpack.c.b16 %v3738, %v3734
  %v3823 = vpack.c.b16 %v3739, %v3735
  %v3824 = vpack.c.b16 %v3744, %v3740
  %v3825 = vpack.c.b16 %v3745, %v3741
  %v3826 = vpack.c.b16 %v3746, %v3742
  %v3827 = vpack.c.b16 %v3747, %v3743
  %v3828 = vpack.c.b16 %v3752, %v3748
  %v3829 = vpack.c.b16 %v3753, %v3749
  %v3830 = vpack.c.b16 %v3754, %v3750
  %v3831 = vpack.c.b16 %v3755, %v3751
  %v3832 = vpack.c.b16 %v3760, %v3756
  %v3833 = vpack.c.b16 %v3761, %v3757
  %v3834 = vpack.c.b16 %v3762, %v3758
  %v3835 = vpack.c.b16 %v3763, %v3759
  %v3836 = vpack.c.b16 %v3768, %v3764
  %v3837 = vpack.c.b16 %v3769, %v3765
  %v3838 = vpack.c.b16 %v3770, %v3766
  %v3839 = vpack.c.b16 %v3771, %v3767
  %v3840 = vpack.c.b16 %v3776, %v3772
  %v3841 = vpack.c.b16 %v3777, %v3773
  %v3842 = vpack.c.b16 %v3778, %v3774
  %v3843 = vpack.c.b16 %v3779, %v3775
  %3908 = vmatprep.subr.bf16.mxu0 %v3809
  %3909 = vmatpush1.bf16.msra.mxu0 %v3808
  %3910 = vmatprep.subr.bf16.mxu0 %v3805
  %3911 = vmatpush1.bf16.msra.mxu0 %v3804
  %3912 = vmatprep.subr.bf16.mxu0 %v3801
  %3913 = vmatpush1.bf16.msra.mxu0 %v3800
  %3914 = vmatprep.subr.bf16.mxu0 %v3797
  %3915 = vmatpush1.bf16.msra.mxu0 %v3796
  %3916 = vmatprep.subr.bf16.mxu0 %v3793
  %3917 = vmatpush1.bf16.msra.mxu0 %v3792
  %3918 = vmatprep.subr.bf16.mxu0 %v3789
  %3919 = vmatpush1.bf16.msra.mxu0 %v3788
  %3920 = vmatprep.subr.bf16.mxu0 %v3785
  %3921 = vmatpush1.bf16.msra.mxu0 %v3784
  %3922 = vmatprep.subr.bf16.mxu0 %v3781
  %3923 = vmatpush1.bf16.msra.mxu0 %v3780
  %3924 = vmatprep.subr.bf16.mxu0 %v3841
  %3925 = vmatpush2.bf16.msra.mxu0 %v3840
  %3926 = vmatprep.subr.bf16.mxu0 %v3837
  %3927 = vmatpush2.bf16.msra.mxu0 %v3836
  %3928 = vmatprep.subr.bf16.mxu0 %v3833
  %3929 = vmatpush2.bf16.msra.mxu0 %v3832
  %3930 = vmatprep.subr.bf16.mxu0 %v3829
  %3931 = vmatpush2.bf16.msra.mxu0 %v3828
  %3932 = vmatprep.subr.bf16.mxu0 %v3825
  %3933 = vmatpush2.bf16.msra.mxu0 %v3824
  %3934 = vmatprep.subr.bf16.mxu0 %v3821
  %3935 = vmatpush2.bf16.msra.mxu0 %v3820
  %3936 = vmatprep.subr.bf16.mxu0 %v3817
  %3937 = vmatpush2.bf16.msra.mxu0 %v3816
  %3938 = vmatprep.subr.bf16.mxu0 %v3813
  %3939 = vmatpush2.bf16.msra.mxu0 %v3812
  %3940 = vmatprep.mubr.bf16.mxu0 %v3523
  %3941 = vmatmul.mubr.bf16.gmra.mxu0 %v3522
  %v3942 = vpop.f32.mrf.mxu0
  %v3943 = vadd.f32 %v614, %v3942
  %v3944 = vpop.f32.mrf.mxu0
  %v3945 = vadd.f32 %v618, %v3944
  %v3946 = vpop.f32.mrf.mxu0
  %v3947 = vpop.f32.mrf.mxu0
  %3948 = vdwg.mxu0
  %3949 = vmatprep.subr.bf16.mxu0 %v3811
  %3950 = vmatpush1.bf16.msra.mxu0 %v3810
  %3951 = vmatprep.subr.bf16.mxu0 %v3807
  %3952 = vmatpush1.bf16.msra.mxu0 %v3806
  %3953 = vmatprep.subr.bf16.mxu0 %v3803
  %3954 = vmatpush1.bf16.msra.mxu0 %v3802
  %3955 = vmatprep.subr.bf16.mxu0 %v3799
  %3956 = vmatpush1.bf16.msra.mxu0 %v3798
  %3957 = vmatprep.subr.bf16.mxu0 %v3795
  %3958 = vmatpush1.bf16.msra.mxu0 %v3794
  %3959 = vmatprep.subr.bf16.mxu0 %v3791
  %3960 = vmatpush1.bf16.msra.mxu0 %v3790
  %3961 = vmatprep.subr.bf16.mxu0 %v3787
  %3962 = vmatpush1.bf16.msra.mxu0 %v3786
  %3963 = vmatprep.subr.bf16.mxu0 %v3783
  %3964 = vmatpush1.bf16.msra.mxu0 %v3782
  %3965 = vmatprep.subr.bf16.mxu0 %v3843
  %3966 = vmatpush2.bf16.msra.mxu0 %v3842
  %3967 = vmatprep.subr.bf16.mxu0 %v3839
  %3968 = vmatpush2.bf16.msra.mxu0 %v3838
  %3969 = vmatprep.subr.bf16.mxu0 %v3835
  %3970 = vmatpush2.bf16.msra.mxu0 %v3834
  %3971 = vmatprep.subr.bf16.mxu0 %v3831
  %3972 = vmatpush2.bf16.msra.mxu0 %v3830
  %3973 = vmatprep.subr.bf16.mxu0 %v3827
  %3974 = vmatpush2.bf16.msra.mxu0 %v3826
  %3975 = vmatprep.subr.bf16.mxu0 %v3823
  %3976 = vmatpush2.bf16.msra.mxu0 %v3822
  %3977 = vmatprep.subr.bf16.mxu0 %v3819
  %3978 = vmatpush2.bf16.msra.mxu0 %v3818
  %3979 = vmatprep.subr.bf16.mxu0 %v3815
  %3980 = vmatpush2.bf16.msra.mxu0 %v3814
  %3981 = vmatprep.mubr.bf16.mxu0 %v3523
  %3982 = vmatmul.mubr.bf16.gmra.mxu0 %v3522
  %v3983 = vpop.f32.mrf.mxu0
  %v3984 = vadd.f32 %v622, %v3983
  %v3985 = vpop.f32.mrf.mxu0
  %v3986 = vadd.f32 %v626, %v3985
  %v3987 = vpop.f32.mrf.mxu0
  %v3988 = vpop.f32.mrf.mxu0
  %3989 = vdwg.mxu0
  %v3990 = vxor.u32 %v3943, 2147483648
  %v3991 = vmul.f32 %v3990, 1.442695
  %v3992 = vpow.pop %v3991
  %v3993 = vadd.f32 %v3992, 1.0
  %v3994 = vrcp.pop %v3993
  %v3995 = vmul.f32 1.0, %v3994
  %v3996 = vxor.u32 %v3945, 2147483648
  %v3997 = vmul.f32 %v3996, 1.442695
  %v3998 = vpow.pop %v3997
  %v3999 = vadd.f32 %v3998, 1.0
  %v4000 = vrcp.pop %v3999
  %v4001 = vmul.f32 1.0, %v4000
  %v4002 = vtanh.pop %v3984
  %v4003 = vxor.u32 %v3986, 2147483648
  %v4004 = vmul.f32 %v4003, 1.442695
  %v4005 = vpow.pop %v4004
  %v4006 = vadd.f32 %v4005, 1.0
  %v4007 = vrcp.pop %v4006
  %v4008 = vmul.f32 1.0, %v4007
  %v4009 = vmul.f32 %v4001, %v3025
  %v4010 = vmul.f32 %v3995, %v4002
  %v4011 = vadd.f32 %v4009, %v4010
  %v4012 = vtanh.pop %v4011
  %v4013 = vmul.f32 %v4008, %v4012
  %s4014 = scalar_lea.vmem %s7, 24
  %4015 = vst [vmem:[%s4014] sm:$0xff] %v4013
  %s4016 = scalar_lea.vmem %s0, 16
  %v4017 = vld [vmem:[%s4016] sm:$0xf]
  %v4018 = vld [vmem:[%s3] sm:$0xff]
  %v4019 = vld [vmem:[%s3 + $0x8] sm:$0xff]
  %v4020 = vld [vmem:[%s3 + $0x10] sm:$0xff]
  %v4021 = vld [vmem:[%s3 + $0x18] sm:$0xff]
  %v4022 = vld [vmem:[%s3 + $0x20] sm:$0xff]
  %v4023 = vld [vmem:[%s3 + $0x28] sm:$0xff]
  %v4024 = vld [vmem:[%s3 + $0x30] sm:$0xff]
  %v4025 = vld [vmem:[%s3 + $0x38] sm:$0xff]
  %v4026 = vld [vmem:[%s3 + $0x40] sm:$0xff]
  %v4027 = vld [vmem:[%s3 + $0x48] sm:$0xff]
  %v4028 = vld [vmem:[%s3 + $0x50] sm:$0xff]
  %v4029 = vld [vmem:[%s3 + $0x58] sm:$0xff]
  %v4030 = vld [vmem:[%s3 + $0x60] sm:$0xff]
  %v4031 = vld [vmem:[%s3 + $0x68] sm:$0xff]
  %v4032 = vld [vmem:[%s3 + $0x70] sm:$0xff]
  %v4033 = vld [vmem:[%s3 + $0x78] sm:$0xff]
  %v4034 = vld [vmem:[%s3 + $0x80] sm:$0xff]
  %v4035 = vld [vmem:[%s3 + $0x88] sm:$0xff]
  %v4036 = vld [vmem:[%s3 + $0x90] sm:$0xff]
  %v4037 = vld [vmem:[%s3 + $0x98] sm:$0xff]
  %v4038 = vld [vmem:[%s3 + $0xa0] sm:$0xff]
  %v4039 = vld [vmem:[%s3 + $0xa8] sm:$0xff]
  %v4040 = vld [vmem:[%s3 + $0xb0] sm:$0xff]
  %v4041 = vld [vmem:[%s3 + $0xb8] sm:$0xff]
  %v4042 = vld [vmem:[%s3 + $0xc0] sm:$0xff]
  %v4043 = vld [vmem:[%s3 + $0xc8] sm:$0xff]
  %v4044 = vld [vmem:[%s3 + $0xd0] sm:$0xff]
  %v4045 = vld [vmem:[%s3 + $0xd8] sm:$0xff]
  %v4046 = vld [vmem:[%s3 + $0xe0] sm:$0xff]
  %v4047 = vld [vmem:[%s3 + $0xe8] sm:$0xff]
  %v4048 = vld [vmem:[%s3 + $0xf0] sm:$0xff]
  %v4049 = vld [vmem:[%s3 + $0xf8] sm:$0xff]
  %v4050 = vld [vmem:[%s3 + $0x100] sm:$0xff]
  %v4051 = vld [vmem:[%s3 + $0x108] sm:$0xff]
  %v4052 = vld [vmem:[%s3 + $0x110] sm:$0xff]
  %v4053 = vld [vmem:[%s3 + $0x118] sm:$0xff]
  %v4054 = vld [vmem:[%s3 + $0x120] sm:$0xff]
  %v4055 = vld [vmem:[%s3 + $0x128] sm:$0xff]
  %v4056 = vld [vmem:[%s3 + $0x130] sm:$0xff]
  %v4057 = vld [vmem:[%s3 + $0x138] sm:$0xff]
  %v4058 = vld [vmem:[%s3 + $0x140] sm:$0xff]
  %v4059 = vld [vmem:[%s3 + $0x148] sm:$0xff]
  %v4060 = vld [vmem:[%s3 + $0x150] sm:$0xff]
  %v4061 = vld [vmem:[%s3 + $0x158] sm:$0xff]
  %v4062 = vld [vmem:[%s3 + $0x160] sm:$0xff]
  %v4063 = vld [vmem:[%s3 + $0x168] sm:$0xff]
  %v4064 = vld [vmem:[%s3 + $0x170] sm:$0xff]
  %v4065 = vld [vmem:[%s3 + $0x178] sm:$0xff]
  %v4066 = vld [vmem:[%s3 + $0x180] sm:$0xff]
  %v4067 = vld [vmem:[%s3 + $0x188] sm:$0xff]
  %v4068 = vld [vmem:[%s3 + $0x190] sm:$0xff]
  %v4069 = vld [vmem:[%s3 + $0x198] sm:$0xff]
  %v4070 = vld [vmem:[%s3 + $0x1a0] sm:$0xff]
  %v4071 = vld [vmem:[%s3 + $0x1a8] sm:$0xff]
  %v4072 = vld [vmem:[%s3 + $0x1b0] sm:$0xff]
  %v4073 = vld [vmem:[%s3 + $0x1b8] sm:$0xff]
  %v4074 = vld [vmem:[%s3 + $0x1c0] sm:$0xff]
  %v4075 = vld [vmem:[%s3 + $0x1c8] sm:$0xff]
  %v4076 = vld [vmem:[%s3 + $0x1d0] sm:$0xff]
  %v4077 = vld [vmem:[%s3 + $0x1d8] sm:$0xff]
  %v4078 = vld [vmem:[%s3 + $0x1e0] sm:$0xff]
  %v4079 = vld [vmem:[%s3 + $0x1e8] sm:$0xff]
  %v4080 = vld [vmem:[%s3 + $0x1f0] sm:$0xff]
  %v4081 = vld [vmem:[%s3 + $0x1f8] sm:$0xff]
  %v4146 = vunpack.c.l.b16 %v4018
  %v4147 = vunpack.c.h.b16 %v4018
  %v4148 = vunpack.c.l.b16 %v4019
  %v4149 = vunpack.c.h.b16 %v4019
  %v4150 = vunpack.c.l.b16 %v4020
  %v4151 = vunpack.c.h.b16 %v4020
  %v4152 = vunpack.c.l.b16 %v4021
  %v4153 = vunpack.c.h.b16 %v4021
  %v4154 = vunpack.c.l.b16 %v4022
  %v4155 = vunpack.c.h.b16 %v4022
  %v4156 = vunpack.c.l.b16 %v4023
  %v4157 = vunpack.c.h.b16 %v4023
  %v4158 = vunpack.c.l.b16 %v4024
  %v4159 = vunpack.c.h.b16 %v4024
  %v4160 = vunpack.c.l.b16 %v4025
  %v4161 = vunpack.c.h.b16 %v4025
  %v4162 = vunpack.c.l.b16 %v4026
  %v4163 = vunpack.c.h.b16 %v4026
  %v4164 = vunpack.c.l.b16 %v4027
  %v4165 = vunpack.c.h.b16 %v4027
  %v4166 = vunpack.c.l.b16 %v4028
  %v4167 = vunpack.c.h.b16 %v4028
  %v4168 = vunpack.c.l.b16 %v4029
  %v4169 = vunpack.c.h.b16 %v4029
  %v4170 = vunpack.c.l.b16 %v4030
  %v4171 = vunpack.c.h.b16 %v4030
  %v4172 = vunpack.c.l.b16 %v4031
  %v4173 = vunpack.c.h.b16 %v4031
  %v4174 = vunpack.c.l.b16 %v4032
  %v4175 = vunpack.c.h.b16 %v4032
  %v4176 = vunpack.c.l.b16 %v4033
  %v4177 = vunpack.c.h.b16 %v4033
  %v4178 = vunpack.c.l.b16 %v4034
  %v4179 = vunpack.c.h.b16 %v4034
  %v4180 = vunpack.c.l.b16 %v4035
  %v4181 = vunpack.c.h.b16 %v4035
  %v4182 = vunpack.c.l.b16 %v4036
  %v4183 = vunpack.c.h.b16 %v4036
  %v4184 = vunpack.c.l.b16 %v4037
  %v4185 = vunpack.c.h.b16 %v4037
  %v4186 = vunpack.c.l.b16 %v4038
  %v4187 = vunpack.c.h.b16 %v4038
  %v4188 = vunpack.c.l.b16 %v4039
  %v4189 = vunpack.c.h.b16 %v4039
  %v4190 = vunpack.c.l.b16 %v4040
  %v4191 = vunpack.c.h.b16 %v4040
  %v4192 = vunpack.c.l.b16 %v4041
  %v4193 = vunpack.c.h.b16 %v4041
  %v4194 = vunpack.c.l.b16 %v4042
  %v4195 = vunpack.c.h.b16 %v4042
  %v4196 = vunpack.c.l.b16 %v4043
  %v4197 = vunpack.c.h.b16 %v4043
  %v4198 = vunpack.c.l.b16 %v4044
  %v4199 = vunpack.c.h.b16 %v4044
  %v4200 = vunpack.c.l.b16 %v4045
  %v4201 = vunpack.c.h.b16 %v4045
  %v4202 = vunpack.c.l.b16 %v4046
  %v4203 = vunpack.c.h.b16 %v4046
  %v4204 = vunpack.c.l.b16 %v4047
  %v4205 = vunpack.c.h.b16 %v4047
  %v4206 = vunpack.c.l.b16 %v4048
  %v4207 = vunpack.c.h.b16 %v4048
  %v4208 = vunpack.c.l.b16 %v4049
  %v4209 = vunpack.c.h.b16 %v4049
  %v4210 = vunpack.c.l.b16 %v4050
  %v4211 = vunpack.c.h.b16 %v4050
  %v4212 = vunpack.c.l.b16 %v4051
  %v4213 = vunpack.c.h.b16 %v4051
  %v4214 = vunpack.c.l.b16 %v4052
  %v4215 = vunpack.c.h.b16 %v4052
  %v4216 = vunpack.c.l.b16 %v4053
  %v4217 = vunpack.c.h.b16 %v4053
  %v4218 = vunpack.c.l.b16 %v4054
  %v4219 = vunpack.c.h.b16 %v4054
  %v4220 = vunpack.c.l.b16 %v4055
  %v4221 = vunpack.c.h.b16 %v4055
  %v4222 = vunpack.c.l.b16 %v4056
  %v4223 = vunpack.c.h.b16 %v4056
  %v4224 = vunpack.c.l.b16 %v4057
  %v4225 = vunpack.c.h.b16 %v4057
  %v4226 = vunpack.c.l.b16 %v4058
  %v4227 = vunpack.c.h.b16 %v4058
  %v4228 = vunpack.c.l.b16 %v4059
  %v4229 = vunpack.c.h.b16 %v4059
  %v4230 = vunpack.c.l.b16 %v4060
  %v4231 = vunpack.c.h.b16 %v4060
  %v4232 = vunpack.c.l.b16 %v4061
  %v4233 = vunpack.c.h.b16 %v4061
  %v4234 = vunpack.c.l.b16 %v4062
  %v4235 = vunpack.c.h.b16 %v4062
  %v4236 = vunpack.c.l.b16 %v4063
  %v4237 = vunpack.c.h.b16 %v4063
  %v4238 = vunpack.c.l.b16 %v4064
  %v4239 = vunpack.c.h.b16 %v4064
  %v4240 = vunpack.c.l.b16 %v4065
  %v4241 = vunpack.c.h.b16 %v4065
  %v4242 = vunpack.c.l.b16 %v4066
  %v4243 = vunpack.c.h.b16 %v4066
  %v4244 = vunpack.c.l.b16 %v4067
  %v4245 = vunpack.c.h.b16 %v4067
  %v4246 = vunpack.c.l.b16 %v4068
  %v4247 = vunpack.c.h.b16 %v4068
  %v4248 = vunpack.c.l.b16 %v4069
  %v4249 = vunpack.c.h.b16 %v4069
  %v4250 = vunpack.c.l.b16 %v4070
  %v4251 = vunpack.c.h.b16 %v4070
  %v4252 = vunpack.c.l.b16 %v4071
  %v4253 = vunpack.c.h.b16 %v4071
  %v4254 = vunpack.c.l.b16 %v4072
  %v4255 = vunpack.c.h.b16 %v4072
  %v4256 = vunpack.c.l.b16 %v4073
  %v4257 = vunpack.c.h.b16 %v4073
  %v4258 = vunpack.c.l.b16 %v4074
  %v4259 = vunpack.c.h.b16 %v4074
  %v4260 = vunpack.c.l.b16 %v4075
  %v4261 = vunpack.c.h.b16 %v4075
  %v4262 = vunpack.c.l.b16 %v4076
  %v4263 = vunpack.c.h.b16 %v4076
  %v4264 = vunpack.c.l.b16 %v4077
  %v4265 = vunpack.c.h.b16 %v4077
  %v4266 = vunpack.c.l.b16 %v4078
  %v4267 = vunpack.c.h.b16 %v4078
  %v4268 = vunpack.c.l.b16 %v4079
  %v4269 = vunpack.c.h.b16 %v4079
  %v4270 = vunpack.c.l.b16 %v4080
  %v4271 = vunpack.c.h.b16 %v4080
  %v4272 = vunpack.c.l.b16 %v4081
  %v4273 = vunpack.c.h.b16 %v4081
  %v4274 = vpack.c.b16 %v4150, %v4146
  %v4275 = vpack.c.b16 %v4151, %v4147
  %v4276 = vpack.c.b16 %v4152, %v4148
  %v4277 = vpack.c.b16 %v4153, %v4149
  %v4278 = vpack.c.b16 %v4158, %v4154
  %v4279 = vpack.c.b16 %v4159, %v4155
  %v4280 = vpack.c.b16 %v4160, %v4156
  %v4281 = vpack.c.b16 %v4161, %v4157
  %v4282 = vpack.c.b16 %v4166, %v4162
  %v4283 = vpack.c.b16 %v4167, %v4163
  %v4284 = vpack.c.b16 %v4168, %v4164
  %v4285 = vpack.c.b16 %v4169, %v4165
  %v4286 = vpack.c.b16 %v4174, %v4170
  %v4287 = vpack.c.b16 %v4175, %v4171
  %v4288 = vpack.c.b16 %v4176, %v4172
  %v4289 = vpack.c.b16 %v4177, %v4173
  %v4290 = vpack.c.b16 %v4182, %v4178
  %v4291 = vpack.c.b16 %v4183, %v4179
  %v4292 = vpack.c.b16 %v4184, %v4180
  %v4293 = vpack.c.b16 %v4185, %v4181
  %v4294 = vpack.c.b16 %v4190, %v4186
  %v4295 = vpack.c.b16 %v4191, %v4187
  %v4296 = vpack.c.b16 %v4192, %v4188
  %v4297 = vpack.c.b16 %v4193, %v4189
  %v4298 = vpack.c.b16 %v4198, %v4194
  %v4299 = vpack.c.b16 %v4199, %v4195
  %v4300 = vpack.c.b16 %v4200, %v4196
  %v4301 = vpack.c.b16 %v4201, %v4197
  %v4302 = vpack.c.b16 %v4206, %v4202
  %v4303 = vpack.c.b16 %v4207, %v4203
  %v4304 = vpack.c.b16 %v4208, %v4204
  %v4305 = vpack.c.b16 %v4209, %v4205
  %v4306 = vpack.c.b16 %v4214, %v4210
  %v4307 = vpack.c.b16 %v4215, %v4211
  %v4308 = vpack.c.b16 %v4216, %v4212
  %v4309 = vpack.c.b16 %v4217, %v4213
  %v4310 = vpack.c.b16 %v4222, %v4218
  %v4311 = vpack.c.b16 %v4223, %v4219
  %v4312 = vpack.c.b16 %v4224, %v4220
  %v4313 = vpack.c.b16 %v4225, %v4221
  %v4314 = vpack.c.b16 %v4230, %v4226
  %v4315 = vpack.c.b16 %v4231, %v4227
  %v4316 = vpack.c.b16 %v4232, %v4228
  %v4317 = vpack.c.b16 %v4233, %v4229
  %v4318 = vpack.c.b16 %v4238, %v4234
  %v4319 = vpack.c.b16 %v4239, %v4235
  %v4320 = vpack.c.b16 %v4240, %v4236
  %v4321 = vpack.c.b16 %v4241, %v4237
  %v4322 = vpack.c.b16 %v4246, %v4242
  %v4323 = vpack.c.b16 %v4247, %v4243
  %v4324 = vpack.c.b16 %v4248, %v4244
  %v4325 = vpack.c.b16 %v4249, %v4245
  %v4326 = vpack.c.b16 %v4254, %v4250
  %v4327 = vpack.c.b16 %v4255, %v4251
  %v4328 = vpack.c.b16 %v4256, %v4252
  %v4329 = vpack.c.b16 %v4257, %v4253
  %v4330 = vpack.c.b16 %v4262, %v4258
  %v4331 = vpack.c.b16 %v4263, %v4259
  %v4332 = vpack.c.b16 %v4264, %v4260
  %v4333 = vpack.c.b16 %v4265, %v4261
  %v4334 = vpack.c.b16 %v4270, %v4266
  %v4335 = vpack.c.b16 %v4271, %v4267
  %v4336 = vpack.c.b16 %v4272, %v4268
  %v4337 = vpack.c.b16 %v4273, %v4269
  %4402 = vmatprep.subr.bf16.mxu0 %v4303
  %4403 = vmatpush1.bf16.msra.mxu0 %v4302
  %4404 = vmatprep.subr.bf16.mxu0 %v4299
  %4405 = vmatpush1.bf16.msra.mxu0 %v4298
  %4406 = vmatprep.subr.bf16.mxu0 %v4295
  %4407 = vmatpush1.bf16.msra.mxu0 %v4294
  %4408 = vmatprep.subr.bf16.mxu0 %v4291
  %4409 = vmatpush1.bf16.msra.mxu0 %v4290
  %4410 = vmatprep.subr.bf16.mxu0 %v4287
  %4411 = vmatpush1.bf16.msra.mxu0 %v4286
  %4412 = vmatprep.subr.bf16.mxu0 %v4283
  %4413 = vmatpush1.bf16.msra.mxu0 %v4282
  %4414 = vmatprep.subr.bf16.mxu0 %v4279
  %4415 = vmatpush1.bf16.msra.mxu0 %v4278
  %4416 = vmatprep.subr.bf16.mxu0 %v4275
  %4417 = vmatpush1.bf16.msra.mxu0 %v4274
  %4418 = vmatprep.subr.bf16.mxu0 %v4335
  %4419 = vmatpush2.bf16.msra.mxu0 %v4334
  %4420 = vmatprep.subr.bf16.mxu0 %v4331
  %4421 = vmatpush2.bf16.msra.mxu0 %v4330
  %4422 = vmatprep.subr.bf16.mxu0 %v4327
  %4423 = vmatpush2.bf16.msra.mxu0 %v4326
  %4424 = vmatprep.subr.bf16.mxu0 %v4323
  %4425 = vmatpush2.bf16.msra.mxu0 %v4322
  %4426 = vmatprep.subr.bf16.mxu0 %v4319
  %4427 = vmatpush2.bf16.msra.mxu0 %v4318
  %4428 = vmatprep.subr.bf16.mxu0 %v4315
  %4429 = vmatpush2.bf16.msra.mxu0 %v4314
  %4430 = vmatprep.subr.bf16.mxu0 %v4311
  %4431 = vmatpush2.bf16.msra.mxu0 %v4310
  %4432 = vmatprep.subr.bf16.mxu0 %v4307
  %4433 = vmatpush2.bf16.msra.mxu0 %v4306
  %4434 = vmatprep.mubr.bf16.mxu0 %v3522
  %4435 = vmatmul.mubr.bf16.gmra.mxu0 %v4017
  %v4436 = vpop.f32.mrf.mxu0
  %v4437 = vadd.f32 %v102, %v4436
  %v4438 = vpop.f32.mrf.mxu0
  %v4439 = vadd.f32 %v106, %v4438
  %v4440 = vpop.f32.mrf.mxu0
  %v4441 = vpop.f32.mrf.mxu0
  %4442 = vdwg.mxu0
  %4443 = vmatprep.subr.bf16.mxu0 %v4305
  %4444 = vmatpush1.bf16.msra.mxu0 %v4304
  %4445 = vmatprep.subr.bf16.mxu0 %v4301
  %4446 = vmatpush1.bf16.msra.mxu0 %v4300
  %4447 = vmatprep.subr.bf16.mxu0 %v4297
  %4448 = vmatpush1.bf16.msra.mxu0 %v4296
  %4449 = vmatprep.subr.bf16.mxu0 %v4293
  %4450 = vmatpush1.bf16.msra.mxu0 %v4292
  %4451 = vmatprep.subr.bf16.mxu0 %v4289
  %4452 = vmatpush1.bf16.msra.mxu0 %v4288
  %4453 = vmatprep.subr.bf16.mxu0 %v4285
  %4454 = vmatpush1.bf16.msra.mxu0 %v4284
  %4455 = vmatprep.subr.bf16.mxu0 %v4281
  %4456 = vmatpush1.bf16.msra.mxu0 %v4280
  %4457 = vmatprep.subr.bf16.mxu0 %v4277
  %4458 = vmatpush1.bf16.msra.mxu0 %v4276
  %4459 = vmatprep.subr.bf16.mxu0 %v4337
  %4460 = vmatpush2.bf16.msra.mxu0 %v4336
  %4461 = vmatprep.subr.bf16.mxu0 %v4333
  %4462 = vmatpush2.bf16.msra.mxu0 %v4332
  %4463 = vmatprep.subr.bf16.mxu0 %v4329
  %4464 = vmatpush2.bf16.msra.mxu0 %v4328
  %4465 = vmatprep.subr.bf16.mxu0 %v4325
  %4466 = vmatpush2.bf16.msra.mxu0 %v4324
  %4467 = vmatprep.subr.bf16.mxu0 %v4321
  %4468 = vmatpush2.bf16.msra.mxu0 %v4320
  %4469 = vmatprep.subr.bf16.mxu0 %v4317
  %4470 = vmatpush2.bf16.msra.mxu0 %v4316
  %4471 = vmatprep.subr.bf16.mxu0 %v4313
  %4472 = vmatpush2.bf16.msra.mxu0 %v4312
  %4473 = vmatprep.subr.bf16.mxu0 %v4309
  %4474 = vmatpush2.bf16.msra.mxu0 %v4308
  %4475 = vmatprep.mubr.bf16.mxu0 %v3522
  %4476 = vmatmul.mubr.bf16.gmra.mxu0 %v4017
  %v4477 = vpop.f32.mrf.mxu0
  %v4478 = vadd.f32 %v110, %v4477
  %v4479 = vpop.f32.mrf.mxu0
  %v4480 = vadd.f32 %v114, %v4479
  %v4481 = vpop.f32.mrf.mxu0
  %v4482 = vpop.f32.mrf.mxu0
  %4483 = vdwg.mxu0
  %v4484 = vxor.u32 %v4437, 2147483648
  %v4485 = vmul.f32 %v4484, 1.442695
  %v4486 = vpow.pop %v4485
  %v4487 = vadd.f32 %v4486, 1.0
  %v4488 = vrcp.pop %v4487
  %v4489 = vmul.f32 1.0, %v4488
  %v4490 = vxor.u32 %v4439, 2147483648
  %v4491 = vmul.f32 %v4490, 1.442695
  %v4492 = vpow.pop %v4491
  %v4493 = vadd.f32 %v4492, 1.0
  %v4494 = vrcp.pop %v4493
  %v4495 = vmul.f32 1.0, %v4494
  %v4496 = vtanh.pop %v4478
  %v4497 = vxor.u32 %v4480, 2147483648
  %v4498 = vmul.f32 %v4497, 1.442695
  %v4499 = vpow.pop %v4498
  %v4500 = vadd.f32 %v4499, 1.0
  %v4501 = vrcp.pop %v4500
  %v4502 = vmul.f32 1.0, %v4501
  %v4503 = vmul.f32 %v4495, %v3519
  %v4504 = vmul.f32 %v4489, %v4496
  %v4505 = vadd.f32 %v4503, %v4504
  %v4506 = vtanh.pop %v4505
  %v4507 = vmul.f32 %v4502, %v4506
  %v4508 = vpack.c.bf16 %v4507, %v4507
  %v4509 = vpack.c.bf16 %v4013, %v4013
  %v4510 = vld [vmem:[%s5] sm:$0xff]
  %v4511 = vld [vmem:[%s5 + $0x8] sm:$0xff]
  %v4512 = vld [vmem:[%s5 + $0x10] sm:$0xff]
  %v4513 = vld [vmem:[%s5 + $0x18] sm:$0xff]
  %v4514 = vld [vmem:[%s5 + $0x20] sm:$0xff]
  %v4515 = vld [vmem:[%s5 + $0x28] sm:$0xff]
  %v4516 = vld [vmem:[%s5 + $0x30] sm:$0xff]
  %v4517 = vld [vmem:[%s5 + $0x38] sm:$0xff]
  %v4518 = vld [vmem:[%s5 + $0x40] sm:$0xff]
  %v4519 = vld [vmem:[%s5 + $0x48] sm:$0xff]
  %v4520 = vld [vmem:[%s5 + $0x50] sm:$0xff]
  %v4521 = vld [vmem:[%s5 + $0x58] sm:$0xff]
  %v4522 = vld [vmem:[%s5 + $0x60] sm:$0xff]
  %v4523 = vld [vmem:[%s5 + $0x68] sm:$0xff]
  %v4524 = vld [vmem:[%s5 + $0x70] sm:$0xff]
  %v4525 = vld [vmem:[%s5 + $0x78] sm:$0xff]
  %v4526 = vld [vmem:[%s5 + $0x80] sm:$0xff]
  %v4527 = vld [vmem:[%s5 + $0x88] sm:$0xff]
  %v4528 = vld [vmem:[%s5 + $0x90] sm:$0xff]
  %v4529 = vld [vmem:[%s5 + $0x98] sm:$0xff]
  %v4530 = vld [vmem:[%s5 + $0xa0] sm:$0xff]
  %v4531 = vld [vmem:[%s5 + $0xa8] sm:$0xff]
  %v4532 = vld [vmem:[%s5 + $0xb0] sm:$0xff]
  %v4533 = vld [vmem:[%s5 + $0xb8] sm:$0xff]
  %v4534 = vld [vmem:[%s5 + $0xc0] sm:$0xff]
  %v4535 = vld [vmem:[%s5 + $0xc8] sm:$0xff]
  %v4536 = vld [vmem:[%s5 + $0xd0] sm:$0xff]
  %v4537 = vld [vmem:[%s5 + $0xd8] sm:$0xff]
  %v4538 = vld [vmem:[%s5 + $0xe0] sm:$0xff]
  %v4539 = vld [vmem:[%s5 + $0xe8] sm:$0xff]
  %v4540 = vld [vmem:[%s5 + $0xf0] sm:$0xff]
  %v4541 = vld [vmem:[%s5 + $0xf8] sm:$0xff]
  %v4542 = vld [vmem:[%s5 + $0x100] sm:$0xff]
  %v4543 = vld [vmem:[%s5 + $0x108] sm:$0xff]
  %v4544 = vld [vmem:[%s5 + $0x110] sm:$0xff]
  %v4545 = vld [vmem:[%s5 + $0x118] sm:$0xff]
  %v4546 = vld [vmem:[%s5 + $0x120] sm:$0xff]
  %v4547 = vld [vmem:[%s5 + $0x128] sm:$0xff]
  %v4548 = vld [vmem:[%s5 + $0x130] sm:$0xff]
  %v4549 = vld [vmem:[%s5 + $0x138] sm:$0xff]
  %v4550 = vld [vmem:[%s5 + $0x140] sm:$0xff]
  %v4551 = vld [vmem:[%s5 + $0x148] sm:$0xff]
  %v4552 = vld [vmem:[%s5 + $0x150] sm:$0xff]
  %v4553 = vld [vmem:[%s5 + $0x158] sm:$0xff]
  %v4554 = vld [vmem:[%s5 + $0x160] sm:$0xff]
  %v4555 = vld [vmem:[%s5 + $0x168] sm:$0xff]
  %v4556 = vld [vmem:[%s5 + $0x170] sm:$0xff]
  %v4557 = vld [vmem:[%s5 + $0x178] sm:$0xff]
  %v4558 = vld [vmem:[%s5 + $0x180] sm:$0xff]
  %v4559 = vld [vmem:[%s5 + $0x188] sm:$0xff]
  %v4560 = vld [vmem:[%s5 + $0x190] sm:$0xff]
  %v4561 = vld [vmem:[%s5 + $0x198] sm:$0xff]
  %v4562 = vld [vmem:[%s5 + $0x1a0] sm:$0xff]
  %v4563 = vld [vmem:[%s5 + $0x1a8] sm:$0xff]
  %v4564 = vld [vmem:[%s5 + $0x1b0] sm:$0xff]
  %v4565 = vld [vmem:[%s5 + $0x1b8] sm:$0xff]
  %v4566 = vld [vmem:[%s5 + $0x1c0] sm:$0xff]
  %v4567 = vld [vmem:[%s5 + $0x1c8] sm:$0xff]
  %v4568 = vld [vmem:[%s5 + $0x1d0] sm:$0xff]
  %v4569 = vld [vmem:[%s5 + $0x1d8] sm:$0xff]
  %v4570 = vld [vmem:[%s5 + $0x1e0] sm:$0xff]
  %v4571 = vld [vmem:[%s5 + $0x1e8] sm:$0xff]
  %v4572 = vld [vmem:[%s5 + $0x1f0] sm:$0xff]
  %v4573 = vld [vmem:[%s5 + $0x1f8] sm:$0xff]
  %v4638 = vunpack.c.l.b16 %v4510
  %v4639 = vunpack.c.h.b16 %v4510
  %v4640 = vunpack.c.l.b16 %v4511
  %v4641 = vunpack.c.h.b16 %v4511
  %v4642 = vunpack.c.l.b16 %v4512
  %v4643 = vunpack.c.h.b16 %v4512
  %v4644 = vunpack.c.l.b16 %v4513
  %v4645 = vunpack.c.h.b16 %v4513
  %v4646 = vunpack.c.l.b16 %v4514
  %v4647 = vunpack.c.h.b16 %v4514
  %v4648 = vunpack.c.l.b16 %v4515
  %v4649 = vunpack.c.h.b16 %v4515
  %v4650 = vunpack.c.l.b16 %v4516
  %v4651 = vunpack.c.h.b16 %v4516
  %v4652 = vunpack.c.l.b16 %v4517
  %v4653 = vunpack.c.h.b16 %v4517
  %v4654 = vunpack.c.l.b16 %v4518
  %v4655 = vunpack.c.h.b16 %v4518
  %v4656 = vunpack.c.l.b16 %v4519
  %v4657 = vunpack.c.h.b16 %v4519
  %v4658 = vunpack.c.l.b16 %v4520
  %v4659 = vunpack.c.h.b16 %v4520
  %v4660 = vunpack.c.l.b16 %v4521
  %v4661 = vunpack.c.h.b16 %v4521
  %v4662 = vunpack.c.l.b16 %v4522
  %v4663 = vunpack.c.h.b16 %v4522
  %v4664 = vunpack.c.l.b16 %v4523
  %v4665 = vunpack.c.h.b16 %v4523
  %v4666 = vunpack.c.l.b16 %v4524
  %v4667 = vunpack.c.h.b16 %v4524
  %v4668 = vunpack.c.l.b16 %v4525
  %v4669 = vunpack.c.h.b16 %v4525
  %v4670 = vunpack.c.l.b16 %v4526
  %v4671 = vunpack.c.h.b16 %v4526
  %v4672 = vunpack.c.l.b16 %v4527
  %v4673 = vunpack.c.h.b16 %v4527
  %v4674 = vunpack.c.l.b16 %v4528
  %v4675 = vunpack.c.h.b16 %v4528
  %v4676 = vunpack.c.l.b16 %v4529
  %v4677 = vunpack.c.h.b16 %v4529
  %v4678 = vunpack.c.l.b16 %v4530
  %v4679 = vunpack.c.h.b16 %v4530
  %v4680 = vunpack.c.l.b16 %v4531
  %v4681 = vunpack.c.h.b16 %v4531
  %v4682 = vunpack.c.l.b16 %v4532
  %v4683 = vunpack.c.h.b16 %v4532
  %v4684 = vunpack.c.l.b16 %v4533
  %v4685 = vunpack.c.h.b16 %v4533
  %v4686 = vunpack.c.l.b16 %v4534
  %v4687 = vunpack.c.h.b16 %v4534
  %v4688 = vunpack.c.l.b16 %v4535
  %v4689 = vunpack.c.h.b16 %v4535
  %v4690 = vunpack.c.l.b16 %v4536
  %v4691 = vunpack.c.h.b16 %v4536
  %v4692 = vunpack.c.l.b16 %v4537
  %v4693 = vunpack.c.h.b16 %v4537
  %v4694 = vunpack.c.l.b16 %v4538
  %v4695 = vunpack.c.h.b16 %v4538
  %v4696 = vunpack.c.l.b16 %v4539
  %v4697 = vunpack.c.h.b16 %v4539
  %v4698 = vunpack.c.l.b16 %v4540
  %v4699 = vunpack.c.h.b16 %v4540
  %v4700 = vunpack.c.l.b16 %v4541
  %v4701 = vunpack.c.h.b16 %v4541
  %v4702 = vunpack.c.l.b16 %v4542
  %v4703 = vunpack.c.h.b16 %v4542
  %v4704 = vunpack.c.l.b16 %v4543
  %v4705 = vunpack.c.h.b16 %v4543
  %v4706 = vunpack.c.l.b16 %v4544
  %v4707 = vunpack.c.h.b16 %v4544
  %v4708 = vunpack.c.l.b16 %v4545
  %v4709 = vunpack.c.h.b16 %v4545
  %v4710 = vunpack.c.l.b16 %v4546
  %v4711 = vunpack.c.h.b16 %v4546
  %v4712 = vunpack.c.l.b16 %v4547
  %v4713 = vunpack.c.h.b16 %v4547
  %v4714 = vunpack.c.l.b16 %v4548
  %v4715 = vunpack.c.h.b16 %v4548
  %v4716 = vunpack.c.l.b16 %v4549
  %v4717 = vunpack.c.h.b16 %v4549
  %v4718 = vunpack.c.l.b16 %v4550
  %v4719 = vunpack.c.h.b16 %v4550
  %v4720 = vunpack.c.l.b16 %v4551
  %v4721 = vunpack.c.h.b16 %v4551
  %v4722 = vunpack.c.l.b16 %v4552
  %v4723 = vunpack.c.h.b16 %v4552
  %v4724 = vunpack.c.l.b16 %v4553
  %v4725 = vunpack.c.h.b16 %v4553
  %v4726 = vunpack.c.l.b16 %v4554
  %v4727 = vunpack.c.h.b16 %v4554
  %v4728 = vunpack.c.l.b16 %v4555
  %v4729 = vunpack.c.h.b16 %v4555
  %v4730 = vunpack.c.l.b16 %v4556
  %v4731 = vunpack.c.h.b16 %v4556
  %v4732 = vunpack.c.l.b16 %v4557
  %v4733 = vunpack.c.h.b16 %v4557
  %v4734 = vunpack.c.l.b16 %v4558
  %v4735 = vunpack.c.h.b16 %v4558
  %v4736 = vunpack.c.l.b16 %v4559
  %v4737 = vunpack.c.h.b16 %v4559
  %v4738 = vunpack.c.l.b16 %v4560
  %v4739 = vunpack.c.h.b16 %v4560
  %v4740 = vunpack.c.l.b16 %v4561
  %v4741 = vunpack.c.h.b16 %v4561
  %v4742 = vunpack.c.l.b16 %v4562
  %v4743 = vunpack.c.h.b16 %v4562
  %v4744 = vunpack.c.l.b16 %v4563
  %v4745 = vunpack.c.h.b16 %v4563
  %v4746 = vunpack.c.l.b16 %v4564
  %v4747 = vunpack.c.h.b16 %v4564
  %v4748 = vunpack.c.l.b16 %v4565
  %v4749 = vunpack.c.h.b16 %v4565
  %v4750 = vunpack.c.l.b16 %v4566
  %v4751 = vunpack.c.h.b16 %v4566
  %v4752 = vunpack.c.l.b16 %v4567
  %v4753 = vunpack.c.h.b16 %v4567
  %v4754 = vunpack.c.l.b16 %v4568
  %v4755 = vunpack.c.h.b16 %v4568
  %v4756 = vunpack.c.l.b16 %v4569
  %v4757 = vunpack.c.h.b16 %v4569
  %v4758 = vunpack.c.l.b16 %v4570
  %v4759 = vunpack.c.h.b16 %v4570
  %v4760 = vunpack.c.l.b16 %v4571
  %v4761 = vunpack.c.h.b16 %v4571
  %v4762 = vunpack.c.l.b16 %v4572
  %v4763 = vunpack.c.h.b16 %v4572
  %v4764 = vunpack.c.l.b16 %v4573
  %v4765 = vunpack.c.h.b16 %v4573
  %v4766 = vpack.c.b16 %v4642, %v4638
  %v4767 = vpack.c.b16 %v4643, %v4639
  %v4768 = vpack.c.b16 %v4644, %v4640
  %v4769 = vpack.c.b16 %v4645, %v4641
  %v4770 = vpack.c.b16 %v4650, %v4646
  %v4771 = vpack.c.b16 %v4651, %v4647
  %v4772 = vpack.c.b16 %v4652, %v4648
  %v4773 = vpack.c.b16 %v4653, %v4649
  %v4774 = vpack.c.b16 %v4658, %v4654
  %v4775 = vpack.c.b16 %v4659, %v4655
  %v4776 = vpack.c.b16 %v4660, %v4656
  %v4777 = vpack.c.b16 %v4661, %v4657
  %v4778 = vpack.c.b16 %v4666, %v4662
  %v4779 = vpack.c.b16 %v4667, %v4663
  %v4780 = vpack.c.b16 %v4668, %v4664
  %v4781 = vpack.c.b16 %v4669, %v4665
  %v4782 = vpack.c.b16 %v4674, %v4670
  %v4783 = vpack.c.b16 %v4675, %v4671
  %v4784 = vpack.c.b16 %v4676, %v4672
  %v4785 = vpack.c.b16 %v4677, %v4673
  %v4786 = vpack.c.b16 %v4682, %v4678
  %v4787 = vpack.c.b16 %v4683, %v4679
  %v4788 = vpack.c.b16 %v4684, %v4680
  %v4789 = vpack.c.b16 %v4685, %v4681
  %v4790 = vpack.c.b16 %v4690, %v4686
  %v4791 = vpack.c.b16 %v4691, %v4687
  %v4792 = vpack.c.b16 %v4692, %v4688
  %v4793 = vpack.c.b16 %v4693, %v4689
  %v4794 = vpack.c.b16 %v4698, %v4694
  %v4795 = vpack.c.b16 %v4699, %v4695
  %v4796 = vpack.c.b16 %v4700, %v4696
  %v4797 = vpack.c.b16 %v4701, %v4697
  %v4798 = vpack.c.b16 %v4706, %v4702
  %v4799 = vpack.c.b16 %v4707, %v4703
  %v4800 = vpack.c.b16 %v4708, %v4704
  %v4801 = vpack.c.b16 %v4709, %v4705
  %v4802 = vpack.c.b16 %v4714, %v4710
  %v4803 = vpack.c.b16 %v4715, %v4711
  %v4804 = vpack.c.b16 %v4716, %v4712
  %v4805 = vpack.c.b16 %v4717, %v4713
  %v4806 = vpack.c.b16 %v4722, %v4718
  %v4807 = vpack.c.b16 %v4723, %v4719
  %v4808 = vpack.c.b16 %v4724, %v4720
  %v4809 = vpack.c.b16 %v4725, %v4721
  %v4810 = vpack.c.b16 %v4730, %v4726
  %v4811 = vpack.c.b16 %v4731, %v4727
  %v4812 = vpack.c.b16 %v4732, %v4728
  %v4813 = vpack.c.b16 %v4733, %v4729
  %v4814 = vpack.c.b16 %v4738, %v4734
  %v4815 = vpack.c.b16 %v4739, %v4735
  %v4816 = vpack.c.b16 %v4740, %v4736
  %v4817 = vpack.c.b16 %v4741, %v4737
  %v4818 = vpack.c.b16 %v4746, %v4742
  %v4819 = vpack.c.b16 %v4747, %v4743
  %v4820 = vpack.c.b16 %v4748, %v4744
  %v4821 = vpack.c.b16 %v4749, %v4745
  %v4822 = vpack.c.b16 %v4754, %v4750
  %v4823 = vpack.c.b16 %v4755, %v4751
  %v4824 = vpack.c.b16 %v4756, %v4752
  %v4825 = vpack.c.b16 %v4757, %v4753
  %v4826 = vpack.c.b16 %v4762, %v4758
  %v4827 = vpack.c.b16 %v4763, %v4759
  %v4828 = vpack.c.b16 %v4764, %v4760
  %v4829 = vpack.c.b16 %v4765, %v4761
  %4894 = vmatprep.subr.bf16.mxu0 %v4795
  %4895 = vmatpush1.bf16.msra.mxu0 %v4794
  %4896 = vmatprep.subr.bf16.mxu0 %v4791
  %4897 = vmatpush1.bf16.msra.mxu0 %v4790
  %4898 = vmatprep.subr.bf16.mxu0 %v4787
  %4899 = vmatpush1.bf16.msra.mxu0 %v4786
  %4900 = vmatprep.subr.bf16.mxu0 %v4783
  %4901 = vmatpush1.bf16.msra.mxu0 %v4782
  %4902 = vmatprep.subr.bf16.mxu0 %v4779
  %4903 = vmatpush1.bf16.msra.mxu0 %v4778
  %4904 = vmatprep.subr.bf16.mxu0 %v4775
  %4905 = vmatpush1.bf16.msra.mxu0 %v4774
  %4906 = vmatprep.subr.bf16.mxu0 %v4771
  %4907 = vmatpush1.bf16.msra.mxu0 %v4770
  %4908 = vmatprep.subr.bf16.mxu0 %v4767
  %4909 = vmatpush1.bf16.msra.mxu0 %v4766
  %4910 = vmatprep.subr.bf16.mxu0 %v4827
  %4911 = vmatpush2.bf16.msra.mxu0 %v4826
  %4912 = vmatprep.subr.bf16.mxu0 %v4823
  %4913 = vmatpush2.bf16.msra.mxu0 %v4822
  %4914 = vmatprep.subr.bf16.mxu0 %v4819
  %4915 = vmatpush2.bf16.msra.mxu0 %v4818
  %4916 = vmatprep.subr.bf16.mxu0 %v4815
  %4917 = vmatpush2.bf16.msra.mxu0 %v4814
  %4918 = vmatprep.subr.bf16.mxu0 %v4811
  %4919 = vmatpush2.bf16.msra.mxu0 %v4810
  %4920 = vmatprep.subr.bf16.mxu0 %v4807
  %4921 = vmatpush2.bf16.msra.mxu0 %v4806
  %4922 = vmatprep.subr.bf16.mxu0 %v4803
  %4923 = vmatpush2.bf16.msra.mxu0 %v4802
  %4924 = vmatprep.subr.bf16.mxu0 %v4799
  %4925 = vmatpush2.bf16.msra.mxu0 %v4798
  %4926 = vmatprep.mubr.bf16.mxu0 %v4509
  %4927 = vmatmul.mubr.bf16.gmra.mxu0 %v4508
  %v4928 = vpop.f32.mrf.mxu0
  %v4929 = vadd.f32 %v614, %v4928
  %v4930 = vpop.f32.mrf.mxu0
  %v4931 = vadd.f32 %v618, %v4930
  %v4932 = vpop.f32.mrf.mxu0
  %v4933 = vpop.f32.mrf.mxu0
  %4934 = vdwg.mxu0
  %4935 = vmatprep.subr.bf16.mxu0 %v4797
  %4936 = vmatpush1.bf16.msra.mxu0 %v4796
  %4937 = vmatprep.subr.bf16.mxu0 %v4793
  %4938 = vmatpush1.bf16.msra.mxu0 %v4792
  %4939 = vmatprep.subr.bf16.mxu0 %v4789
  %4940 = vmatpush1.bf16.msra.mxu0 %v4788
  %4941 = vmatprep.subr.bf16.mxu0 %v4785
  %4942 = vmatpush1.bf16.msra.mxu0 %v4784
  %4943 = vmatprep.subr.bf16.mxu0 %v4781
  %4944 = vmatpush1.bf16.msra.mxu0 %v4780
  %4945 = vmatprep.subr.bf16.mxu0 %v4777
  %4946 = vmatpush1.bf16.msra.mxu0 %v4776
  %4947 = vmatprep.subr.bf16.mxu0 %v4773
  %4948 = vmatpush1.bf16.msra.mxu0 %v4772
  %4949 = vmatprep.subr.bf16.mxu0 %v4769
  %4950 = vmatpush1.bf16.msra.mxu0 %v4768
  %4951 = vmatprep.subr.bf16.mxu0 %v4829
  %4952 = vmatpush2.bf16.msra.mxu0 %v4828
  %4953 = vmatprep.subr.bf16.mxu0 %v4825
  %4954 = vmatpush2.bf16.msra.mxu0 %v4824
  %4955 = vmatprep.subr.bf16.mxu0 %v4821
  %4956 = vmatpush2.bf16.msra.mxu0 %v4820
  %4957 = vmatprep.subr.bf16.mxu0 %v4817
  %4958 = vmatpush2.bf16.msra.mxu0 %v4816
  %4959 = vmatprep.subr.bf16.mxu0 %v4813
  %4960 = vmatpush2.bf16.msra.mxu0 %v4812
  %4961 = vmatprep.subr.bf16.mxu0 %v4809
  %4962 = vmatpush2.bf16.msra.mxu0 %v4808
  %4963 = vmatprep.subr.bf16.mxu0 %v4805
  %4964 = vmatpush2.bf16.msra.mxu0 %v4804
  %4965 = vmatprep.subr.bf16.mxu0 %v4801
  %4966 = vmatpush2.bf16.msra.mxu0 %v4800
  %4967 = vmatprep.mubr.bf16.mxu0 %v4509
  %4968 = vmatmul.mubr.bf16.gmra.mxu0 %v4508
  %v4969 = vpop.f32.mrf.mxu0
  %v4970 = vadd.f32 %v622, %v4969
  %v4971 = vpop.f32.mrf.mxu0
  %v4972 = vadd.f32 %v626, %v4971
  %v4973 = vpop.f32.mrf.mxu0
  %v4974 = vpop.f32.mrf.mxu0
  %4975 = vdwg.mxu0
  %v4976 = vxor.u32 %v4929, 2147483648
  %v4977 = vmul.f32 %v4976, 1.442695
  %v4978 = vpow.pop %v4977
  %v4979 = vadd.f32 %v4978, 1.0
  %v4980 = vrcp.pop %v4979
  %v4981 = vmul.f32 1.0, %v4980
  %v4982 = vxor.u32 %v4931, 2147483648
  %v4983 = vmul.f32 %v4982, 1.442695
  %v4984 = vpow.pop %v4983
  %v4985 = vadd.f32 %v4984, 1.0
  %v4986 = vrcp.pop %v4985
  %v4987 = vmul.f32 1.0, %v4986
  %v4988 = vtanh.pop %v4970
  %v4989 = vxor.u32 %v4972, 2147483648
  %v4990 = vmul.f32 %v4989, 1.442695
  %v4991 = vpow.pop %v4990
  %v4992 = vadd.f32 %v4991, 1.0
  %v4993 = vrcp.pop %v4992
  %v4994 = vmul.f32 1.0, %v4993
  %v4995 = vmul.f32 %v4987, %v4011
  %v4996 = vmul.f32 %v4981, %v4988
  %v4997 = vadd.f32 %v4995, %v4996
  %v4998 = vtanh.pop %v4997
  %v4999 = vmul.f32 %v4994, %v4998
  %s5000 = scalar_lea.vmem %s7, 32
  %5001 = vst [vmem:[%s5000] sm:$0xff] %v4999
  %s5002 = scalar_lea.vmem %s0, 20
  %v5003 = vld [vmem:[%s5002] sm:$0xf]
  %v5004 = vld [vmem:[%s3] sm:$0xff]
  %v5005 = vld [vmem:[%s3 + $0x8] sm:$0xff]
  %v5006 = vld [vmem:[%s3 + $0x10] sm:$0xff]
  %v5007 = vld [vmem:[%s3 + $0x18] sm:$0xff]
  %v5008 = vld [vmem:[%s3 + $0x20] sm:$0xff]
  %v5009 = vld [vmem:[%s3 + $0x28] sm:$0xff]
  %v5010 = vld [vmem:[%s3 + $0x30] sm:$0xff]
  %v5011 = vld [vmem:[%s3 + $0x38] sm:$0xff]
  %v5012 = vld [vmem:[%s3 + $0x40] sm:$0xff]
  %v5013 = vld [vmem:[%s3 + $0x48] sm:$0xff]
  %v5014 = vld [vmem:[%s3 + $0x50] sm:$0xff]
  %v5015 = vld [vmem:[%s3 + $0x58] sm:$0xff]
  %v5016 = vld [vmem:[%s3 + $0x60] sm:$0xff]
  %v5017 = vld [vmem:[%s3 + $0x68] sm:$0xff]
  %v5018 = vld [vmem:[%s3 + $0x70] sm:$0xff]
  %v5019 = vld [vmem:[%s3 + $0x78] sm:$0xff]
  %v5020 = vld [vmem:[%s3 + $0x80] sm:$0xff]
  %v5021 = vld [vmem:[%s3 + $0x88] sm:$0xff]
  %v5022 = vld [vmem:[%s3 + $0x90] sm:$0xff]
  %v5023 = vld [vmem:[%s3 + $0x98] sm:$0xff]
  %v5024 = vld [vmem:[%s3 + $0xa0] sm:$0xff]
  %v5025 = vld [vmem:[%s3 + $0xa8] sm:$0xff]
  %v5026 = vld [vmem:[%s3 + $0xb0] sm:$0xff]
  %v5027 = vld [vmem:[%s3 + $0xb8] sm:$0xff]
  %v5028 = vld [vmem:[%s3 + $0xc0] sm:$0xff]
  %v5029 = vld [vmem:[%s3 + $0xc8] sm:$0xff]
  %v5030 = vld [vmem:[%s3 + $0xd0] sm:$0xff]
  %v5031 = vld [vmem:[%s3 + $0xd8] sm:$0xff]
  %v5032 = vld [vmem:[%s3 + $0xe0] sm:$0xff]
  %v5033 = vld [vmem:[%s3 + $0xe8] sm:$0xff]
  %v5034 = vld [vmem:[%s3 + $0xf0] sm:$0xff]
  %v5035 = vld [vmem:[%s3 + $0xf8] sm:$0xff]
  %v5036 = vld [vmem:[%s3 + $0x100] sm:$0xff]
  %v5037 = vld [vmem:[%s3 + $0x108] sm:$0xff]
  %v5038 = vld [vmem:[%s3 + $0x110] sm:$0xff]
  %v5039 = vld [vmem:[%s3 + $0x118] sm:$0xff]
  %v5040 = vld [vmem:[%s3 + $0x120] sm:$0xff]
  %v5041 = vld [vmem:[%s3 + $0x128] sm:$0xff]
  %v5042 = vld [vmem:[%s3 + $0x130] sm:$0xff]
  %v5043 = vld [vmem:[%s3 + $0x138] sm:$0xff]
  %v5044 = vld [vmem:[%s3 + $0x140] sm:$0xff]
  %v5045 = vld [vmem:[%s3 + $0x148] sm:$0xff]
  %v5046 = vld [vmem:[%s3 + $0x150] sm:$0xff]
  %v5047 = vld [vmem:[%s3 + $0x158] sm:$0xff]
  %v5048 = vld [vmem:[%s3 + $0x160] sm:$0xff]
  %v5049 = vld [vmem:[%s3 + $0x168] sm:$0xff]
  %v5050 = vld [vmem:[%s3 + $0x170] sm:$0xff]
  %v5051 = vld [vmem:[%s3 + $0x178] sm:$0xff]
  %v5052 = vld [vmem:[%s3 + $0x180] sm:$0xff]
  %v5053 = vld [vmem:[%s3 + $0x188] sm:$0xff]
  %v5054 = vld [vmem:[%s3 + $0x190] sm:$0xff]
  %v5055 = vld [vmem:[%s3 + $0x198] sm:$0xff]
  %v5056 = vld [vmem:[%s3 + $0x1a0] sm:$0xff]
  %v5057 = vld [vmem:[%s3 + $0x1a8] sm:$0xff]
  %v5058 = vld [vmem:[%s3 + $0x1b0] sm:$0xff]
  %v5059 = vld [vmem:[%s3 + $0x1b8] sm:$0xff]
  %v5060 = vld [vmem:[%s3 + $0x1c0] sm:$0xff]
  %v5061 = vld [vmem:[%s3 + $0x1c8] sm:$0xff]
  %v5062 = vld [vmem:[%s3 + $0x1d0] sm:$0xff]
  %v5063 = vld [vmem:[%s3 + $0x1d8] sm:$0xff]
  %v5064 = vld [vmem:[%s3 + $0x1e0] sm:$0xff]
  %v5065 = vld [vmem:[%s3 + $0x1e8] sm:$0xff]
  %v5066 = vld [vmem:[%s3 + $0x1f0] sm:$0xff]
  %v5067 = vld [vmem:[%s3 + $0x1f8] sm:$0xff]
  %v5132 = vunpack.c.l.b16 %v5004
  %v5133 = vunpack.c.h.b16 %v5004
  %v5134 = vunpack.c.l.b16 %v5005
  %v5135 = vunpack.c.h.b16 %v5005
  %v5136 = vunpack.c.l.b16 %v5006
  %v5137 = vunpack.c.h.b16 %v5006
  %v5138 = vunpack.c.l.b16 %v5007
  %v5139 = vunpack.c.h.b16 %v5007
  %v5140 = vunpack.c.l.b16 %v5008
  %v5141 = vunpack.c.h.b16 %v5008
  %v5142 = vunpack.c.l.b16 %v5009
  %v5143 = vunpack.c.h.b16 %v5009
  %v5144 = vunpack.c.l.b16 %v5010
  %v5145 = vunpack.c.h.b16 %v5010
  %v5146 = vunpack.c.l.b16 %v5011
  %v5147 = vunpack.c.h.b16 %v5011
  %v5148 = vunpack.c.l.b16 %v5012
  %v5149 = vunpack.c.h.b16 %v5012
  %v5150 = vunpack.c.l.b16 %v5013
  %v5151 = vunpack.c.h.b16 %v5013
  %v5152 = vunpack.c.l.b16 %v5014
  %v5153 = vunpack.c.h.b16 %v5014
  %v5154 = vunpack.c.l.b16 %v5015
  %v5155 = vunpack.c.h.b16 %v5015
  %v5156 = vunpack.c.l.b16 %v5016
  %v5157 = vunpack.c.h.b16 %v5016
  %v5158 = vunpack.c.l.b16 %v5017
  %v5159 = vunpack.c.h.b16 %v5017
  %v5160 = vunpack.c.l.b16 %v5018
  %v5161 = vunpack.c.h.b16 %v5018
  %v5162 = vunpack.c.l.b16 %v5019
  %v5163 = vunpack.c.h.b16 %v5019
  %v5164 = vunpack.c.l.b16 %v5020
  %v5165 = vunpack.c.h.b16 %v5020
  %v5166 = vunpack.c.l.b16 %v5021
  %v5167 = vunpack.c.h.b16 %v5021
  %v5168 = vunpack.c.l.b16 %v5022
  %v5169 = vunpack.c.h.b16 %v5022
  %v5170 = vunpack.c.l.b16 %v5023
  %v5171 = vunpack.c.h.b16 %v5023
  %v5172 = vunpack.c.l.b16 %v5024
  %v5173 = vunpack.c.h.b16 %v5024
  %v5174 = vunpack.c.l.b16 %v5025
  %v5175 = vunpack.c.h.b16 %v5025
  %v5176 = vunpack.c.l.b16 %v5026
  %v5177 = vunpack.c.h.b16 %v5026
  %v5178 = vunpack.c.l.b16 %v5027
  %v5179 = vunpack.c.h.b16 %v5027
  %v5180 = vunpack.c.l.b16 %v5028
  %v5181 = vunpack.c.h.b16 %v5028
  %v5182 = vunpack.c.l.b16 %v5029
  %v5183 = vunpack.c.h.b16 %v5029
  %v5184 = vunpack.c.l.b16 %v5030
  %v5185 = vunpack.c.h.b16 %v5030
  %v5186 = vunpack.c.l.b16 %v5031
  %v5187 = vunpack.c.h.b16 %v5031
  %v5188 = vunpack.c.l.b16 %v5032
  %v5189 = vunpack.c.h.b16 %v5032
  %v5190 = vunpack.c.l.b16 %v5033
  %v5191 = vunpack.c.h.b16 %v5033
  %v5192 = vunpack.c.l.b16 %v5034
  %v5193 = vunpack.c.h.b16 %v5034
  %v5194 = vunpack.c.l.b16 %v5035
  %v5195 = vunpack.c.h.b16 %v5035
  %v5196 = vunpack.c.l.b16 %v5036
  %v5197 = vunpack.c.h.b16 %v5036
  %v5198 = vunpack.c.l.b16 %v5037
  %v5199 = vunpack.c.h.b16 %v5037
  %v5200 = vunpack.c.l.b16 %v5038
  %v5201 = vunpack.c.h.b16 %v5038
  %v5202 = vunpack.c.l.b16 %v5039
  %v5203 = vunpack.c.h.b16 %v5039
  %v5204 = vunpack.c.l.b16 %v5040
  %v5205 = vunpack.c.h.b16 %v5040
  %v5206 = vunpack.c.l.b16 %v5041
  %v5207 = vunpack.c.h.b16 %v5041
  %v5208 = vunpack.c.l.b16 %v5042
  %v5209 = vunpack.c.h.b16 %v5042
  %v5210 = vunpack.c.l.b16 %v5043
  %v5211 = vunpack.c.h.b16 %v5043
  %v5212 = vunpack.c.l.b16 %v5044
  %v5213 = vunpack.c.h.b16 %v5044
  %v5214 = vunpack.c.l.b16 %v5045
  %v5215 = vunpack.c.h.b16 %v5045
  %v5216 = vunpack.c.l.b16 %v5046
  %v5217 = vunpack.c.h.b16 %v5046
  %v5218 = vunpack.c.l.b16 %v5047
  %v5219 = vunpack.c.h.b16 %v5047
  %v5220 = vunpack.c.l.b16 %v5048
  %v5221 = vunpack.c.h.b16 %v5048
  %v5222 = vunpack.c.l.b16 %v5049
  %v5223 = vunpack.c.h.b16 %v5049
  %v5224 = vunpack.c.l.b16 %v5050
  %v5225 = vunpack.c.h.b16 %v5050
  %v5226 = vunpack.c.l.b16 %v5051
  %v5227 = vunpack.c.h.b16 %v5051
  %v5228 = vunpack.c.l.b16 %v5052
  %v5229 = vunpack.c.h.b16 %v5052
  %v5230 = vunpack.c.l.b16 %v5053
  %v5231 = vunpack.c.h.b16 %v5053
  %v5232 = vunpack.c.l.b16 %v5054
  %v5233 = vunpack.c.h.b16 %v5054
  %v5234 = vunpack.c.l.b16 %v5055
  %v5235 = vunpack.c.h.b16 %v5055
  %v5236 = vunpack.c.l.b16 %v5056
  %v5237 = vunpack.c.h.b16 %v5056
  %v5238 = vunpack.c.l.b16 %v5057
  %v5239 = vunpack.c.h.b16 %v5057
  %v5240 = vunpack.c.l.b16 %v5058
  %v5241 = vunpack.c.h.b16 %v5058
  %v5242 = vunpack.c.l.b16 %v5059
  %v5243 = vunpack.c.h.b16 %v5059
  %v5244 = vunpack.c.l.b16 %v5060
  %v5245 = vunpack.c.h.b16 %v5060
  %v5246 = vunpack.c.l.b16 %v5061
  %v5247 = vunpack.c.h.b16 %v5061
  %v5248 = vunpack.c.l.b16 %v5062
  %v5249 = vunpack.c.h.b16 %v5062
  %v5250 = vunpack.c.l.b16 %v5063
  %v5251 = vunpack.c.h.b16 %v5063
  %v5252 = vunpack.c.l.b16 %v5064
  %v5253 = vunpack.c.h.b16 %v5064
  %v5254 = vunpack.c.l.b16 %v5065
  %v5255 = vunpack.c.h.b16 %v5065
  %v5256 = vunpack.c.l.b16 %v5066
  %v5257 = vunpack.c.h.b16 %v5066
  %v5258 = vunpack.c.l.b16 %v5067
  %v5259 = vunpack.c.h.b16 %v5067
  %v5260 = vpack.c.b16 %v5136, %v5132
  %v5261 = vpack.c.b16 %v5137, %v5133
  %v5262 = vpack.c.b16 %v5138, %v5134
  %v5263 = vpack.c.b16 %v5139, %v5135
  %v5264 = vpack.c.b16 %v5144, %v5140
  %v5265 = vpack.c.b16 %v5145, %v5141
  %v5266 = vpack.c.b16 %v5146, %v5142
  %v5267 = vpack.c.b16 %v5147, %v5143
  %v5268 = vpack.c.b16 %v5152, %v5148
  %v5269 = vpack.c.b16 %v5153, %v5149
  %v5270 = vpack.c.b16 %v5154, %v5150
  %v5271 = vpack.c.b16 %v5155, %v5151
  %v5272 = vpack.c.b16 %v5160, %v5156
  %v5273 = vpack.c.b16 %v5161, %v5157
  %v5274 = vpack.c.b16 %v5162, %v5158
  %v5275 = vpack.c.b16 %v5163, %v5159
  %v5276 = vpack.c.b16 %v5168, %v5164
  %v5277 = vpack.c.b16 %v5169, %v5165
  %v5278 = vpack.c.b16 %v5170, %v5166
  %v5279 = vpack.c.b16 %v5171, %v5167
  %v5280 = vpack.c.b16 %v5176, %v5172
  %v5281 = vpack.c.b16 %v5177, %v5173
  %v5282 = vpack.c.b16 %v5178, %v5174
  %v5283 = vpack.c.b16 %v5179, %v5175
  %v5284 = vpack.c.b16 %v5184, %v5180
  %v5285 = vpack.c.b16 %v5185, %v5181
  %v5286 = vpack.c.b16 %v5186, %v5182
  %v5287 = vpack.c.b16 %v5187, %v5183
  %v5288 = vpack.c.b16 %v5192, %v5188
  %v5289 = vpack.c.b16 %v5193, %v5189
  %v5290 = vpack.c.b16 %v5194, %v5190
  %v5291 = vpack.c.b16 %v5195, %v5191
  %v5292 = vpack.c.b16 %v5200, %v5196
  %v5293 = vpack.c.b16 %v5201, %v5197
  %v5294 = vpack.c.b16 %v5202, %v5198
  %v5295 = vpack.c.b16 %v5203, %v5199
  %v5296 = vpack.c.b16 %v5208, %v5204
  %v5297 = vpack.c.b16 %v5209, %v5205
  %v5298 = vpack.c.b16 %v5210, %v5206
  %v5299 = vpack.c.b16 %v5211, %v5207
  %v5300 = vpack.c.b16 %v5216, %v5212
  %v5301 = vpack.c.b16 %v5217, %v5213
  %v5302 = vpack.c.b16 %v5218, %v5214
  %v5303 = vpack.c.b16 %v5219, %v5215
  %v5304 = vpack.c.b16 %v5224, %v5220
  %v5305 = vpack.c.b16 %v5225, %v5221
  %v5306 = vpack.c.b16 %v5226, %v5222
  %v5307 = vpack.c.b16 %v5227, %v5223
  %v5308 = vpack.c.b16 %v5232, %v5228
  %v5309 = vpack.c.b16 %v5233, %v5229
  %v5310 = vpack.c.b16 %v5234, %v5230
  %v5311 = vpack.c.b16 %v5235, %v5231
  %v5312 = vpack.c.b16 %v5240, %v5236
  %v5313 = vpack.c.b16 %v5241, %v5237
  %v5314 = vpack.c.b16 %v5242, %v5238
  %v5315 = vpack.c.b16 %v5243, %v5239
  %v5316 = vpack.c.b16 %v5248, %v5244
  %v5317 = vpack.c.b16 %v5249, %v5245
  %v5318 = vpack.c.b16 %v5250, %v5246
  %v5319 = vpack.c.b16 %v5251, %v5247
  %v5320 = vpack.c.b16 %v5256, %v5252
  %v5321 = vpack.c.b16 %v5257, %v5253
  %v5322 = vpack.c.b16 %v5258, %v5254
  %v5323 = vpack.c.b16 %v5259, %v5255
  %5388 = vmatprep.subr.bf16.mxu0 %v5289
  %5389 = vmatpush1.bf16.msra.mxu0 %v5288
  %5390 = vmatprep.subr.bf16.mxu0 %v5285
  %5391 = vmatpush1.bf16.msra.mxu0 %v5284
  %5392 = vmatprep.subr.bf16.mxu0 %v5281
  %5393 = vmatpush1.bf16.msra.mxu0 %v5280
  %5394 = vmatprep.subr.bf16.mxu0 %v5277
  %5395 = vmatpush1.bf16.msra.mxu0 %v5276
  %5396 = vmatprep.subr.bf16.mxu0 %v5273
  %5397 = vmatpush1.bf16.msra.mxu0 %v5272
  %5398 = vmatprep.subr.bf16.mxu0 %v5269
  %5399 = vmatpush1.bf16.msra.mxu0 %v5268
  %5400 = vmatprep.subr.bf16.mxu0 %v5265
  %5401 = vmatpush1.bf16.msra.mxu0 %v5264
  %5402 = vmatprep.subr.bf16.mxu0 %v5261
  %5403 = vmatpush1.bf16.msra.mxu0 %v5260
  %5404 = vmatprep.subr.bf16.mxu0 %v5321
  %5405 = vmatpush2.bf16.msra.mxu0 %v5320
  %5406 = vmatprep.subr.bf16.mxu0 %v5317
  %5407 = vmatpush2.bf16.msra.mxu0 %v5316
  %5408 = vmatprep.subr.bf16.mxu0 %v5313
  %5409 = vmatpush2.bf16.msra.mxu0 %v5312
  %5410 = vmatprep.subr.bf16.mxu0 %v5309
  %5411 = vmatpush2.bf16.msra.mxu0 %v5308
  %5412 = vmatprep.subr.bf16.mxu0 %v5305
  %5413 = vmatpush2.bf16.msra.mxu0 %v5304
  %5414 = vmatprep.subr.bf16.mxu0 %v5301
  %5415 = vmatpush2.bf16.msra.mxu0 %v5300
  %5416 = vmatprep.subr.bf16.mxu0 %v5297
  %5417 = vmatpush2.bf16.msra.mxu0 %v5296
  %5418 = vmatprep.subr.bf16.mxu0 %v5293
  %5419 = vmatpush2.bf16.msra.mxu0 %v5292
  %5420 = vmatprep.mubr.bf16.mxu0 %v4508
  %5421 = vmatmul.mubr.bf16.gmra.mxu0 %v5003
  %v5422 = vpop.f32.mrf.mxu0
  %v5423 = vadd.f32 %v102, %v5422
  %v5424 = vpop.f32.mrf.mxu0
  %v5425 = vadd.f32 %v106, %v5424
  %v5426 = vpop.f32.mrf.mxu0
  %v5427 = vpop.f32.mrf.mxu0
  %5428 = vdwg.mxu0
  %5429 = vmatprep.subr.bf16.mxu0 %v5291
  %5430 = vmatpush1.bf16.msra.mxu0 %v5290
  %5431 = vmatprep.subr.bf16.mxu0 %v5287
  %5432 = vmatpush1.bf16.msra.mxu0 %v5286
  %5433 = vmatprep.subr.bf16.mxu0 %v5283
  %5434 = vmatpush1.bf16.msra.mxu0 %v5282
  %5435 = vmatprep.subr.bf16.mxu0 %v5279
  %5436 = vmatpush1.bf16.msra.mxu0 %v5278
  %5437 = vmatprep.subr.bf16.mxu0 %v5275
  %5438 = vmatpush1.bf16.msra.mxu0 %v5274
  %5439 = vmatprep.subr.bf16.mxu0 %v5271
  %5440 = vmatpush1.bf16.msra.mxu0 %v5270
  %5441 = vmatprep.subr.bf16.mxu0 %v5267
  %5442 = vmatpush1.bf16.msra.mxu0 %v5266
  %5443 = vmatprep.subr.bf16.mxu0 %v5263
  %5444 = vmatpush1.bf16.msra.mxu0 %v5262
  %5445 = vmatprep.subr.bf16.mxu0 %v5323
  %5446 = vmatpush2.bf16.msra.mxu0 %v5322
  %5447 = vmatprep.subr.bf16.mxu0 %v5319
  %5448 = vmatpush2.bf16.msra.mxu0 %v5318
  %5449 = vmatprep.subr.bf16.mxu0 %v5315
  %5450 = vmatpush2.bf16.msra.mxu0 %v5314
  %5451 = vmatprep.subr.bf16.mxu0 %v5311
  %5452 = vmatpush2.bf16.msra.mxu0 %v5310
  %5453 = vmatprep.subr.bf16.mxu0 %v5307
  %5454 = vmatpush2.bf16.msra.mxu0 %v5306
  %5455 = vmatprep.subr.bf16.mxu0 %v5303
  %5456 = vmatpush2.bf16.msra.mxu0 %v5302
  %5457 = vmatprep.subr.bf16.mxu0 %v5299
  %5458 = vmatpush2.bf16.msra.mxu0 %v5298
  %5459 = vmatprep.subr.bf16.mxu0 %v5295
  %5460 = vmatpush2.bf16.msra.mxu0 %v5294
  %5461 = vmatprep.mubr.bf16.mxu0 %v4508
  %5462 = vmatmul.mubr.bf16.gmra.mxu0 %v5003
  %v5463 = vpop.f32.mrf.mxu0
  %v5464 = vadd.f32 %v110, %v5463
  %v5465 = vpop.f32.mrf.mxu0
  %v5466 = vadd.f32 %v114, %v5465
  %v5467 = vpop.f32.mrf.mxu0
  %v5468 = vpop.f32.mrf.mxu0
  %5469 = vdwg.mxu0
  %v5470 = vxor.u32 %v5423, 2147483648
  %v5471 = vmul.f32 %v5470, 1.442695
  %v5472 = vpow.pop %v5471
  %v5473 = vadd.f32 %v5472, 1.0
  %v5474 = vrcp.pop %v5473
  %v5475 = vmul.f32 1.0, %v5474
  %v5476 = vxor.u32 %v5425, 2147483648
  %v5477 = vmul.f32 %v5476, 1.442695
  %v5478 = vpow.pop %v5477
  %v5479 = vadd.f32 %v5478, 1.0
  %v5480 = vrcp.pop %v5479
  %v5481 = vmul.f32 1.0, %v5480
  %v5482 = vtanh.pop %v5464
  %v5483 = vxor.u32 %v5466, 2147483648
  %v5484 = vmul.f32 %v5483, 1.442695
  %v5485 = vpow.pop %v5484
  %v5486 = vadd.f32 %v5485, 1.0
  %v5487 = vrcp.pop %v5486
  %v5488 = vmul.f32 1.0, %v5487
  %v5489 = vmul.f32 %v5481, %v4505
  %v5490 = vmul.f32 %v5475, %v5482
  %v5491 = vadd.f32 %v5489, %v5490
  %v5492 = vtanh.pop %v5491
  %v5493 = vmul.f32 %v5488, %v5492
  %v5494 = vpack.c.bf16 %v5493, %v5493
  %v5495 = vpack.c.bf16 %v4999, %v4999
  %v5496 = vld [vmem:[%s5] sm:$0xff]
  %v5497 = vld [vmem:[%s5 + $0x8] sm:$0xff]
  %v5498 = vld [vmem:[%s5 + $0x10] sm:$0xff]
  %v5499 = vld [vmem:[%s5 + $0x18] sm:$0xff]
  %v5500 = vld [vmem:[%s5 + $0x20] sm:$0xff]
  %v5501 = vld [vmem:[%s5 + $0x28] sm:$0xff]
  %v5502 = vld [vmem:[%s5 + $0x30] sm:$0xff]
  %v5503 = vld [vmem:[%s5 + $0x38] sm:$0xff]
  %v5504 = vld [vmem:[%s5 + $0x40] sm:$0xff]
  %v5505 = vld [vmem:[%s5 + $0x48] sm:$0xff]
  %v5506 = vld [vmem:[%s5 + $0x50] sm:$0xff]
  %v5507 = vld [vmem:[%s5 + $0x58] sm:$0xff]
  %v5508 = vld [vmem:[%s5 + $0x60] sm:$0xff]
  %v5509 = vld [vmem:[%s5 + $0x68] sm:$0xff]
  %v5510 = vld [vmem:[%s5 + $0x70] sm:$0xff]
  %v5511 = vld [vmem:[%s5 + $0x78] sm:$0xff]
  %v5512 = vld [vmem:[%s5 + $0x80] sm:$0xff]
  %v5513 = vld [vmem:[%s5 + $0x88] sm:$0xff]
  %v5514 = vld [vmem:[%s5 + $0x90] sm:$0xff]
  %v5515 = vld [vmem:[%s5 + $0x98] sm:$0xff]
  %v5516 = vld [vmem:[%s5 + $0xa0] sm:$0xff]
  %v5517 = vld [vmem:[%s5 + $0xa8] sm:$0xff]
  %v5518 = vld [vmem:[%s5 + $0xb0] sm:$0xff]
  %v5519 = vld [vmem:[%s5 + $0xb8] sm:$0xff]
  %v5520 = vld [vmem:[%s5 + $0xc0] sm:$0xff]
  %v5521 = vld [vmem:[%s5 + $0xc8] sm:$0xff]
  %v5522 = vld [vmem:[%s5 + $0xd0] sm:$0xff]
  %v5523 = vld [vmem:[%s5 + $0xd8] sm:$0xff]
  %v5524 = vld [vmem:[%s5 + $0xe0] sm:$0xff]
  %v5525 = vld [vmem:[%s5 + $0xe8] sm:$0xff]
  %v5526 = vld [vmem:[%s5 + $0xf0] sm:$0xff]
  %v5527 = vld [vmem:[%s5 + $0xf8] sm:$0xff]
  %v5528 = vld [vmem:[%s5 + $0x100] sm:$0xff]
  %v5529 = vld [vmem:[%s5 + $0x108] sm:$0xff]
  %v5530 = vld [vmem:[%s5 + $0x110] sm:$0xff]
  %v5531 = vld [vmem:[%s5 + $0x118] sm:$0xff]
  %v5532 = vld [vmem:[%s5 + $0x120] sm:$0xff]
  %v5533 = vld [vmem:[%s5 + $0x128] sm:$0xff]
  %v5534 = vld [vmem:[%s5 + $0x130] sm:$0xff]
  %v5535 = vld [vmem:[%s5 + $0x138] sm:$0xff]
  %v5536 = vld [vmem:[%s5 + $0x140] sm:$0xff]
  %v5537 = vld [vmem:[%s5 + $0x148] sm:$0xff]
  %v5538 = vld [vmem:[%s5 + $0x150] sm:$0xff]
  %v5539 = vld [vmem:[%s5 + $0x158] sm:$0xff]
  %v5540 = vld [vmem:[%s5 + $0x160] sm:$0xff]
  %v5541 = vld [vmem:[%s5 + $0x168] sm:$0xff]
  %v5542 = vld [vmem:[%s5 + $0x170] sm:$0xff]
  %v5543 = vld [vmem:[%s5 + $0x178] sm:$0xff]
  %v5544 = vld [vmem:[%s5 + $0x180] sm:$0xff]
  %v5545 = vld [vmem:[%s5 + $0x188] sm:$0xff]
  %v5546 = vld [vmem:[%s5 + $0x190] sm:$0xff]
  %v5547 = vld [vmem:[%s5 + $0x198] sm:$0xff]
  %v5548 = vld [vmem:[%s5 + $0x1a0] sm:$0xff]
  %v5549 = vld [vmem:[%s5 + $0x1a8] sm:$0xff]
  %v5550 = vld [vmem:[%s5 + $0x1b0] sm:$0xff]
  %v5551 = vld [vmem:[%s5 + $0x1b8] sm:$0xff]
  %v5552 = vld [vmem:[%s5 + $0x1c0] sm:$0xff]
  %v5553 = vld [vmem:[%s5 + $0x1c8] sm:$0xff]
  %v5554 = vld [vmem:[%s5 + $0x1d0] sm:$0xff]
  %v5555 = vld [vmem:[%s5 + $0x1d8] sm:$0xff]
  %v5556 = vld [vmem:[%s5 + $0x1e0] sm:$0xff]
  %v5557 = vld [vmem:[%s5 + $0x1e8] sm:$0xff]
  %v5558 = vld [vmem:[%s5 + $0x1f0] sm:$0xff]
  %v5559 = vld [vmem:[%s5 + $0x1f8] sm:$0xff]
  %v5624 = vunpack.c.l.b16 %v5496
  %v5625 = vunpack.c.h.b16 %v5496
  %v5626 = vunpack.c.l.b16 %v5497
  %v5627 = vunpack.c.h.b16 %v5497
  %v5628 = vunpack.c.l.b16 %v5498
  %v5629 = vunpack.c.h.b16 %v5498
  %v5630 = vunpack.c.l.b16 %v5499
  %v5631 = vunpack.c.h.b16 %v5499
  %v5632 = vunpack.c.l.b16 %v5500
  %v5633 = vunpack.c.h.b16 %v5500
  %v5634 = vunpack.c.l.b16 %v5501
  %v5635 = vunpack.c.h.b16 %v5501
  %v5636 = vunpack.c.l.b16 %v5502
  %v5637 = vunpack.c.h.b16 %v5502
  %v5638 = vunpack.c.l.b16 %v5503
  %v5639 = vunpack.c.h.b16 %v5503
  %v5640 = vunpack.c.l.b16 %v5504
  %v5641 = vunpack.c.h.b16 %v5504
  %v5642 = vunpack.c.l.b16 %v5505
  %v5643 = vunpack.c.h.b16 %v5505
  %v5644 = vunpack.c.l.b16 %v5506
  %v5645 = vunpack.c.h.b16 %v5506
  %v5646 = vunpack.c.l.b16 %v5507
  %v5647 = vunpack.c.h.b16 %v5507
  %v5648 = vunpack.c.l.b16 %v5508
  %v5649 = vunpack.c.h.b16 %v5508
  %v5650 = vunpack.c.l.b16 %v5509
  %v5651 = vunpack.c.h.b16 %v5509
  %v5652 = vunpack.c.l.b16 %v5510
  %v5653 = vunpack.c.h.b16 %v5510
  %v5654 = vunpack.c.l.b16 %v5511
  %v5655 = vunpack.c.h.b16 %v5511
  %v5656 = vunpack.c.l.b16 %v5512
  %v5657 = vunpack.c.h.b16 %v5512
  %v5658 = vunpack.c.l.b16 %v5513
  %v5659 = vunpack.c.h.b16 %v5513
  %v5660 = vunpack.c.l.b16 %v5514
  %v5661 = vunpack.c.h.b16 %v5514
  %v5662 = vunpack.c.l.b16 %v5515
  %v5663 = vunpack.c.h.b16 %v5515
  %v5664 = vunpack.c.l.b16 %v5516
  %v5665 = vunpack.c.h.b16 %v5516
  %v5666 = vunpack.c.l.b16 %v5517
  %v5667 = vunpack.c.h.b16 %v5517
  %v5668 = vunpack.c.l.b16 %v5518
  %v5669 = vunpack.c.h.b16 %v5518
  %v5670 = vunpack.c.l.b16 %v5519
  %v5671 = vunpack.c.h.b16 %v5519
  %v5672 = vunpack.c.l.b16 %v5520
  %v5673 = vunpack.c.h.b16 %v5520
  %v5674 = vunpack.c.l.b16 %v5521
  %v5675 = vunpack.c.h.b16 %v5521
  %v5676 = vunpack.c.l.b16 %v5522
  %v5677 = vunpack.c.h.b16 %v5522
  %v5678 = vunpack.c.l.b16 %v5523
  %v5679 = vunpack.c.h.b16 %v5523
  %v5680 = vunpack.c.l.b16 %v5524
  %v5681 = vunpack.c.h.b16 %v5524
  %v5682 = vunpack.c.l.b16 %v5525
  %v5683 = vunpack.c.h.b16 %v5525
  %v5684 = vunpack.c.l.b16 %v5526
  %v5685 = vunpack.c.h.b16 %v5526
  %v5686 = vunpack.c.l.b16 %v5527
  %v5687 = vunpack.c.h.b16 %v5527
  %v5688 = vunpack.c.l.b16 %v5528
  %v5689 = vunpack.c.h.b16 %v5528
  %v5690 = vunpack.c.l.b16 %v5529
  %v5691 = vunpack.c.h.b16 %v5529
  %v5692 = vunpack.c.l.b16 %v5530
  %v5693 = vunpack.c.h.b16 %v5530
  %v5694 = vunpack.c.l.b16 %v5531
  %v5695 = vunpack.c.h.b16 %v5531
  %v5696 = vunpack.c.l.b16 %v5532
  %v5697 = vunpack.c.h.b16 %v5532
  %v5698 = vunpack.c.l.b16 %v5533
  %v5699 = vunpack.c.h.b16 %v5533
  %v5700 = vunpack.c.l.b16 %v5534
  %v5701 = vunpack.c.h.b16 %v5534
  %v5702 = vunpack.c.l.b16 %v5535
  %v5703 = vunpack.c.h.b16 %v5535
  %v5704 = vunpack.c.l.b16 %v5536
  %v5705 = vunpack.c.h.b16 %v5536
  %v5706 = vunpack.c.l.b16 %v5537
  %v5707 = vunpack.c.h.b16 %v5537
  %v5708 = vunpack.c.l.b16 %v5538
  %v5709 = vunpack.c.h.b16 %v5538
  %v5710 = vunpack.c.l.b16 %v5539
  %v5711 = vunpack.c.h.b16 %v5539
  %v5712 = vunpack.c.l.b16 %v5540
  %v5713 = vunpack.c.h.b16 %v5540
  %v5714 = vunpack.c.l.b16 %v5541
  %v5715 = vunpack.c.h.b16 %v5541
  %v5716 = vunpack.c.l.b16 %v5542
  %v5717 = vunpack.c.h.b16 %v5542
  %v5718 = vunpack.c.l.b16 %v5543
  %v5719 = vunpack.c.h.b16 %v5543
  %v5720 = vunpack.c.l.b16 %v5544
  %v5721 = vunpack.c.h.b16 %v5544
  %v5722 = vunpack.c.l.b16 %v5545
  %v5723 = vunpack.c.h.b16 %v5545
  %v5724 = vunpack.c.l.b16 %v5546
  %v5725 = vunpack.c.h.b16 %v5546
  %v5726 = vunpack.c.l.b16 %v5547
  %v5727 = vunpack.c.h.b16 %v5547
  %v5728 = vunpack.c.l.b16 %v5548
  %v5729 = vunpack.c.h.b16 %v5548
  %v5730 = vunpack.c.l.b16 %v5549
  %v5731 = vunpack.c.h.b16 %v5549
  %v5732 = vunpack.c.l.b16 %v5550
  %v5733 = vunpack.c.h.b16 %v5550
  %v5734 = vunpack.c.l.b16 %v5551
  %v5735 = vunpack.c.h.b16 %v5551
  %v5736 = vunpack.c.l.b16 %v5552
  %v5737 = vunpack.c.h.b16 %v5552
  %v5738 = vunpack.c.l.b16 %v5553
  %v5739 = vunpack.c.h.b16 %v5553
  %v5740 = vunpack.c.l.b16 %v5554
  %v5741 = vunpack.c.h.b16 %v5554
  %v5742 = vunpack.c.l.b16 %v5555
  %v5743 = vunpack.c.h.b16 %v5555
  %v5744 = vunpack.c.l.b16 %v5556
  %v5745 = vunpack.c.h.b16 %v5556
  %v5746 = vunpack.c.l.b16 %v5557
  %v5747 = vunpack.c.h.b16 %v5557
  %v5748 = vunpack.c.l.b16 %v5558
  %v5749 = vunpack.c.h.b16 %v5558
  %v5750 = vunpack.c.l.b16 %v5559
  %v5751 = vunpack.c.h.b16 %v5559
  %v5752 = vpack.c.b16 %v5628, %v5624
  %v5753 = vpack.c.b16 %v5629, %v5625
  %v5754 = vpack.c.b16 %v5630, %v5626
  %v5755 = vpack.c.b16 %v5631, %v5627
  %v5756 = vpack.c.b16 %v5636, %v5632
  %v5757 = vpack.c.b16 %v5637, %v5633
  %v5758 = vpack.c.b16 %v5638, %v5634
  %v5759 = vpack.c.b16 %v5639, %v5635
  %v5760 = vpack.c.b16 %v5644, %v5640
  %v5761 = vpack.c.b16 %v5645, %v5641
  %v5762 = vpack.c.b16 %v5646, %v5642
  %v5763 = vpack.c.b16 %v5647, %v5643
  %v5764 = vpack.c.b16 %v5652, %v5648
  %v5765 = vpack.c.b16 %v5653, %v5649
  %v5766 = vpack.c.b16 %v5654, %v5650
  %v5767 = vpack.c.b16 %v5655, %v5651
  %v5768 = vpack.c.b16 %v5660, %v5656
  %v5769 = vpack.c.b16 %v5661, %v5657
  %v5770 = vpack.c.b16 %v5662, %v5658
  %v5771 = vpack.c.b16 %v5663, %v5659
  %v5772 = vpack.c.b16 %v5668, %v5664
  %v5773 = vpack.c.b16 %v5669, %v5665
  %v5774 = vpack.c.b16 %v5670, %v5666
  %v5775 = vpack.c.b16 %v5671, %v5667
  %v5776 = vpack.c.b16 %v5676, %v5672
  %v5777 = vpack.c.b16 %v5677, %v5673
  %v5778 = vpack.c.b16 %v5678, %v5674
  %v5779 = vpack.c.b16 %v5679, %v5675
  %v5780 = vpack.c.b16 %v5684, %v5680
  %v5781 = vpack.c.b16 %v5685, %v5681
  %v5782 = vpack.c.b16 %v5686, %v5682
  %v5783 = vpack.c.b16 %v5687, %v5683
  %v5784 = vpack.c.b16 %v5692, %v5688
  %v5785 = vpack.c.b16 %v5693, %v5689
  %v5786 = vpack.c.b16 %v5694, %v5690
  %v5787 = vpack.c.b16 %v5695, %v5691
  %v5788 = vpack.c.b16 %v5700, %v5696
  %v5789 = vpack.c.b16 %v5701, %v5697
  %v5790 = vpack.c.b16 %v5702, %v5698
  %v5791 = vpack.c.b16 %v5703, %v5699
  %v5792 = vpack.c.b16 %v5708, %v5704
  %v5793 = vpack.c.b16 %v5709, %v5705
  %v5794 = vpack.c.b16 %v5710, %v5706
  %v5795 = vpack.c.b16 %v5711, %v5707
  %v5796 = vpack.c.b16 %v5716, %v5712
  %v5797 = vpack.c.b16 %v5717, %v5713
  %v5798 = vpack.c.b16 %v5718, %v5714
  %v5799 = vpack.c.b16 %v5719, %v5715
  %v5800 = vpack.c.b16 %v5724, %v5720
  %v5801 = vpack.c.b16 %v5725, %v5721
  %v5802 = vpack.c.b16 %v5726, %v5722
  %v5803 = vpack.c.b16 %v5727, %v5723
  %v5804 = vpack.c.b16 %v5732, %v5728
  %v5805 = vpack.c.b16 %v5733, %v5729
  %v5806 = vpack.c.b16 %v5734, %v5730
  %v5807 = vpack.c.b16 %v5735, %v5731
  %v5808 = vpack.c.b16 %v5740, %v5736
  %v5809 = vpack.c.b16 %v5741, %v5737
  %v5810 = vpack.c.b16 %v5742, %v5738
  %v5811 = vpack.c.b16 %v5743, %v5739
  %v5812 = vpack.c.b16 %v5748, %v5744
  %v5813 = vpack.c.b16 %v5749, %v5745
  %v5814 = vpack.c.b16 %v5750, %v5746
  %v5815 = vpack.c.b16 %v5751, %v5747
  %5880 = vmatprep.subr.bf16.mxu0 %v5781
  %5881 = vmatpush1.bf16.msra.mxu0 %v5780
  %5882 = vmatprep.subr.bf16.mxu0 %v5777
  %5883 = vmatpush1.bf16.msra.mxu0 %v5776
  %5884 = vmatprep.subr.bf16.mxu0 %v5773
  %5885 = vmatpush1.bf16.msra.mxu0 %v5772
  %5886 = vmatprep.subr.bf16.mxu0 %v5769
  %5887 = vmatpush1.bf16.msra.mxu0 %v5768
  %5888 = vmatprep.subr.bf16.mxu0 %v5765
  %5889 = vmatpush1.bf16.msra.mxu0 %v5764
  %5890 = vmatprep.subr.bf16.mxu0 %v5761
  %5891 = vmatpush1.bf16.msra.mxu0 %v5760
  %5892 = vmatprep.subr.bf16.mxu0 %v5757
  %5893 = vmatpush1.bf16.msra.mxu0 %v5756
  %5894 = vmatprep.subr.bf16.mxu0 %v5753
  %5895 = vmatpush1.bf16.msra.mxu0 %v5752
  %5896 = vmatprep.subr.bf16.mxu0 %v5813
  %5897 = vmatpush2.bf16.msra.mxu0 %v5812
  %5898 = vmatprep.subr.bf16.mxu0 %v5809
  %5899 = vmatpush2.bf16.msra.mxu0 %v5808
  %5900 = vmatprep.subr.bf16.mxu0 %v5805
  %5901 = vmatpush2.bf16.msra.mxu0 %v5804
  %5902 = vmatprep.subr.bf16.mxu0 %v5801
  %5903 = vmatpush2.bf16.msra.mxu0 %v5800
  %5904 = vmatprep.subr.bf16.mxu0 %v5797
  %5905 = vmatpush2.bf16.msra.mxu0 %v5796
  %5906 = vmatprep.subr.bf16.mxu0 %v5793
  %5907 = vmatpush2.bf16.msra.mxu0 %v5792
  %5908 = vmatprep.subr.bf16.mxu0 %v5789
  %5909 = vmatpush2.bf16.msra.mxu0 %v5788
  %5910 = vmatprep.subr.bf16.mxu0 %v5785
  %5911 = vmatpush2.bf16.msra.mxu0 %v5784
  %5912 = vmatprep.mubr.bf16.mxu0 %v5495
  %5913 = vmatmul.mubr.bf16.gmra.mxu0 %v5494
  %v5914 = vpop.f32.mrf.mxu0
  %v5915 = vadd.f32 %v614, %v5914
  %v5916 = vpop.f32.mrf.mxu0
  %v5917 = vadd.f32 %v618, %v5916
  %v5918 = vpop.f32.mrf.mxu0
  %v5919 = vpop.f32.mrf.mxu0
  %5920 = vdwg.mxu0
  %5921 = vmatprep.subr.bf16.mxu0 %v5783
  %5922 = vmatpush1.bf16.msra.mxu0 %v5782
  %5923 = vmatprep.subr.bf16.mxu0 %v5779
  %5924 = vmatpush1.bf16.msra.mxu0 %v5778
  %5925 = vmatprep.subr.bf16.mxu0 %v5775
  %5926 = vmatpush1.bf16.msra.mxu0 %v5774
  %5927 = vmatprep.subr.bf16.mxu0 %v5771
  %5928 = vmatpush1.bf16.msra.mxu0 %v5770
  %5929 = vmatprep.subr.bf16.mxu0 %v5767
  %5930 = vmatpush1.bf16.msra.mxu0 %v5766
  %5931 = vmatprep.subr.bf16.mxu0 %v5763
  %5932 = vmatpush1.bf16.msra.mxu0 %v5762
  %5933 = vmatprep.subr.bf16.mxu0 %v5759
  %5934 = vmatpush1.bf16.msra.mxu0 %v5758
  %5935 = vmatprep.subr.bf16.mxu0 %v5755
  %5936 = vmatpush1.bf16.msra.mxu0 %v5754
  %5937 = vmatprep.subr.bf16.mxu0 %v5815
  %5938 = vmatpush2.bf16.msra.mxu0 %v5814
  %5939 = vmatprep.subr.bf16.mxu0 %v5811
  %5940 = vmatpush2.bf16.msra.mxu0 %v5810
  %5941 = vmatprep.subr.bf16.mxu0 %v5807
  %5942 = vmatpush2.bf16.msra.mxu0 %v5806
  %5943 = vmatprep.subr.bf16.mxu0 %v5803
  %5944 = vmatpush2.bf16.msra.mxu0 %v5802
  %5945 = vmatprep.subr.bf16.mxu0 %v5799
  %5946 = vmatpush2.bf16.msra.mxu0 %v5798
  %5947 = vmatprep.subr.bf16.mxu0 %v5795
  %5948 = vmatpush2.bf16.msra.mxu0 %v5794
  %5949 = vmatprep.subr.bf16.mxu0 %v5791
  %5950 = vmatpush2.bf16.msra.mxu0 %v5790
  %5951 = vmatprep.subr.bf16.mxu0 %v5787
  %5952 = vmatpush2.bf16.msra.mxu0 %v5786
  %5953 = vmatprep.mubr.bf16.mxu0 %v5495
  %5954 = vmatmul.mubr.bf16.gmra.mxu0 %v5494
  %v5955 = vpop.f32.mrf.mxu0
  %v5956 = vadd.f32 %v622, %v5955
  %v5957 = vpop.f32.mrf.mxu0
  %v5958 = vadd.f32 %v626, %v5957
  %v5959 = vpop.f32.mrf.mxu0
  %v5960 = vpop.f32.mrf.mxu0
  %5961 = vdwg.mxu0
  %v5962 = vxor.u32 %v5915, 2147483648
  %v5963 = vmul.f32 %v5962, 1.442695
  %v5964 = vpow.pop %v5963
  %v5965 = vadd.f32 %v5964, 1.0
  %v5966 = vrcp.pop %v5965
  %v5967 = vmul.f32 1.0, %v5966
  %v5968 = vxor.u32 %v5917, 2147483648
  %v5969 = vmul.f32 %v5968, 1.442695
  %v5970 = vpow.pop %v5969
  %v5971 = vadd.f32 %v5970, 1.0
  %v5972 = vrcp.pop %v5971
  %v5973 = vmul.f32 1.0, %v5972
  %v5974 = vtanh.pop %v5956
  %v5975 = vxor.u32 %v5958, 2147483648
  %v5976 = vmul.f32 %v5975, 1.442695
  %v5977 = vpow.pop %v5976
  %v5978 = vadd.f32 %v5977, 1.0
  %v5979 = vrcp.pop %v5978
  %v5980 = vmul.f32 1.0, %v5979
  %v5981 = vmul.f32 %v5973, %v4997
  %v5982 = vmul.f32 %v5967, %v5974
  %v5983 = vadd.f32 %v5981, %v5982
  %v5984 = vtanh.pop %v5983
  %v5985 = vmul.f32 %v5980, %v5984
  %s5986 = scalar_lea.vmem %s7, 40
  %5987 = vst [vmem:[%s5986] sm:$0xff] %v5985
  %s5988 = scalar_lea.vmem %s0, 24
  %v5989 = vld [vmem:[%s5988] sm:$0xf]
  %v5990 = vld [vmem:[%s3] sm:$0xff]
  %v5991 = vld [vmem:[%s3 + $0x8] sm:$0xff]
  %v5992 = vld [vmem:[%s3 + $0x10] sm:$0xff]
  %v5993 = vld [vmem:[%s3 + $0x18] sm:$0xff]
  %v5994 = vld [vmem:[%s3 + $0x20] sm:$0xff]
  %v5995 = vld [vmem:[%s3 + $0x28] sm:$0xff]
  %v5996 = vld [vmem:[%s3 + $0x30] sm:$0xff]
  %v5997 = vld [vmem:[%s3 + $0x38] sm:$0xff]
  %v5998 = vld [vmem:[%s3 + $0x40] sm:$0xff]
  %v5999 = vld [vmem:[%s3 + $0x48] sm:$0xff]
  %v6000 = vld [vmem:[%s3 + $0x50] sm:$0xff]
  %v6001 = vld [vmem:[%s3 + $0x58] sm:$0xff]
  %v6002 = vld [vmem:[%s3 + $0x60] sm:$0xff]
  %v6003 = vld [vmem:[%s3 + $0x68] sm:$0xff]
  %v6004 = vld [vmem:[%s3 + $0x70] sm:$0xff]
  %v6005 = vld [vmem:[%s3 + $0x78] sm:$0xff]
  %v6006 = vld [vmem:[%s3 + $0x80] sm:$0xff]
  %v6007 = vld [vmem:[%s3 + $0x88] sm:$0xff]
  %v6008 = vld [vmem:[%s3 + $0x90] sm:$0xff]
  %v6009 = vld [vmem:[%s3 + $0x98] sm:$0xff]
  %v6010 = vld [vmem:[%s3 + $0xa0] sm:$0xff]
  %v6011 = vld [vmem:[%s3 + $0xa8] sm:$0xff]
  %v6012 = vld [vmem:[%s3 + $0xb0] sm:$0xff]
  %v6013 = vld [vmem:[%s3 + $0xb8] sm:$0xff]
  %v6014 = vld [vmem:[%s3 + $0xc0] sm:$0xff]
  %v6015 = vld [vmem:[%s3 + $0xc8] sm:$0xff]
  %v6016 = vld [vmem:[%s3 + $0xd0] sm:$0xff]
  %v6017 = vld [vmem:[%s3 + $0xd8] sm:$0xff]
  %v6018 = vld [vmem:[%s3 + $0xe0] sm:$0xff]
  %v6019 = vld [vmem:[%s3 + $0xe8] sm:$0xff]
  %v6020 = vld [vmem:[%s3 + $0xf0] sm:$0xff]
  %v6021 = vld [vmem:[%s3 + $0xf8] sm:$0xff]
  %v6022 = vld [vmem:[%s3 + $0x100] sm:$0xff]
  %v6023 = vld [vmem:[%s3 + $0x108] sm:$0xff]
  %v6024 = vld [vmem:[%s3 + $0x110] sm:$0xff]
  %v6025 = vld [vmem:[%s3 + $0x118] sm:$0xff]
  %v6026 = vld [vmem:[%s3 + $0x120] sm:$0xff]
  %v6027 = vld [vmem:[%s3 + $0x128] sm:$0xff]
  %v6028 = vld [vmem:[%s3 + $0x130] sm:$0xff]
  %v6029 = vld [vmem:[%s3 + $0x138] sm:$0xff]
  %v6030 = vld [vmem:[%s3 + $0x140] sm:$0xff]
  %v6031 = vld [vmem:[%s3 + $0x148] sm:$0xff]
  %v6032 = vld [vmem:[%s3 + $0x150] sm:$0xff]
  %v6033 = vld [vmem:[%s3 + $0x158] sm:$0xff]
  %v6034 = vld [vmem:[%s3 + $0x160] sm:$0xff]
  %v6035 = vld [vmem:[%s3 + $0x168] sm:$0xff]
  %v6036 = vld [vmem:[%s3 + $0x170] sm:$0xff]
  %v6037 = vld [vmem:[%s3 + $0x178] sm:$0xff]
  %v6038 = vld [vmem:[%s3 + $0x180] sm:$0xff]
  %v6039 = vld [vmem:[%s3 + $0x188] sm:$0xff]
  %v6040 = vld [vmem:[%s3 + $0x190] sm:$0xff]
  %v6041 = vld [vmem:[%s3 + $0x198] sm:$0xff]
  %v6042 = vld [vmem:[%s3 + $0x1a0] sm:$0xff]
  %v6043 = vld [vmem:[%s3 + $0x1a8] sm:$0xff]
  %v6044 = vld [vmem:[%s3 + $0x1b0] sm:$0xff]
  %v6045 = vld [vmem:[%s3 + $0x1b8] sm:$0xff]
  %v6046 = vld [vmem:[%s3 + $0x1c0] sm:$0xff]
  %v6047 = vld [vmem:[%s3 + $0x1c8] sm:$0xff]
  %v6048 = vld [vmem:[%s3 + $0x1d0] sm:$0xff]
  %v6049 = vld [vmem:[%s3 + $0x1d8] sm:$0xff]
  %v6050 = vld [vmem:[%s3 + $0x1e0] sm:$0xff]
  %v6051 = vld [vmem:[%s3 + $0x1e8] sm:$0xff]
  %v6052 = vld [vmem:[%s3 + $0x1f0] sm:$0xff]
  %v6053 = vld [vmem:[%s3 + $0x1f8] sm:$0xff]
  %v6118 = vunpack.c.l.b16 %v5990
  %v6119 = vunpack.c.h.b16 %v5990
  %v6120 = vunpack.c.l.b16 %v5991
  %v6121 = vunpack.c.h.b16 %v5991
  %v6122 = vunpack.c.l.b16 %v5992
  %v6123 = vunpack.c.h.b16 %v5992
  %v6124 = vunpack.c.l.b16 %v5993
  %v6125 = vunpack.c.h.b16 %v5993
  %v6126 = vunpack.c.l.b16 %v5994
  %v6127 = vunpack.c.h.b16 %v5994
  %v6128 = vunpack.c.l.b16 %v5995
  %v6129 = vunpack.c.h.b16 %v5995
  %v6130 = vunpack.c.l.b16 %v5996
  %v6131 = vunpack.c.h.b16 %v5996
  %v6132 = vunpack.c.l.b16 %v5997
  %v6133 = vunpack.c.h.b16 %v5997
  %v6134 = vunpack.c.l.b16 %v5998
  %v6135 = vunpack.c.h.b16 %v5998
  %v6136 = vunpack.c.l.b16 %v5999
  %v6137 = vunpack.c.h.b16 %v5999
  %v6138 = vunpack.c.l.b16 %v6000
  %v6139 = vunpack.c.h.b16 %v6000
  %v6140 = vunpack.c.l.b16 %v6001
  %v6141 = vunpack.c.h.b16 %v6001
  %v6142 = vunpack.c.l.b16 %v6002
  %v6143 = vunpack.c.h.b16 %v6002
  %v6144 = vunpack.c.l.b16 %v6003
  %v6145 = vunpack.c.h.b16 %v6003
  %v6146 = vunpack.c.l.b16 %v6004
  %v6147 = vunpack.c.h.b16 %v6004
  %v6148 = vunpack.c.l.b16 %v6005
  %v6149 = vunpack.c.h.b16 %v6005
  %v6150 = vunpack.c.l.b16 %v6006
  %v6151 = vunpack.c.h.b16 %v6006
  %v6152 = vunpack.c.l.b16 %v6007
  %v6153 = vunpack.c.h.b16 %v6007
  %v6154 = vunpack.c.l.b16 %v6008
  %v6155 = vunpack.c.h.b16 %v6008
  %v6156 = vunpack.c.l.b16 %v6009
  %v6157 = vunpack.c.h.b16 %v6009
  %v6158 = vunpack.c.l.b16 %v6010
  %v6159 = vunpack.c.h.b16 %v6010
  %v6160 = vunpack.c.l.b16 %v6011
  %v6161 = vunpack.c.h.b16 %v6011
  %v6162 = vunpack.c.l.b16 %v6012
  %v6163 = vunpack.c.h.b16 %v6012
  %v6164 = vunpack.c.l.b16 %v6013
  %v6165 = vunpack.c.h.b16 %v6013
  %v6166 = vunpack.c.l.b16 %v6014
  %v6167 = vunpack.c.h.b16 %v6014
  %v6168 = vunpack.c.l.b16 %v6015
  %v6169 = vunpack.c.h.b16 %v6015
  %v6170 = vunpack.c.l.b16 %v6016
  %v6171 = vunpack.c.h.b16 %v6016
  %v6172 = vunpack.c.l.b16 %v6017
  %v6173 = vunpack.c.h.b16 %v6017
  %v6174 = vunpack.c.l.b16 %v6018
  %v6175 = vunpack.c.h.b16 %v6018
  %v6176 = vunpack.c.l.b16 %v6019
  %v6177 = vunpack.c.h.b16 %v6019
  %v6178 = vunpack.c.l.b16 %v6020
  %v6179 = vunpack.c.h.b16 %v6020
  %v6180 = vunpack.c.l.b16 %v6021
  %v6181 = vunpack.c.h.b16 %v6021
  %v6182 = vunpack.c.l.b16 %v6022
  %v6183 = vunpack.c.h.b16 %v6022
  %v6184 = vunpack.c.l.b16 %v6023
  %v6185 = vunpack.c.h.b16 %v6023
  %v6186 = vunpack.c.l.b16 %v6024
  %v6187 = vunpack.c.h.b16 %v6024
  %v6188 = vunpack.c.l.b16 %v6025
  %v6189 = vunpack.c.h.b16 %v6025
  %v6190 = vunpack.c.l.b16 %v6026
  %v6191 = vunpack.c.h.b16 %v6026
  %v6192 = vunpack.c.l.b16 %v6027
  %v6193 = vunpack.c.h.b16 %v6027
  %v6194 = vunpack.c.l.b16 %v6028
  %v6195 = vunpack.c.h.b16 %v6028
  %v6196 = vunpack.c.l.b16 %v6029
  %v6197 = vunpack.c.h.b16 %v6029
  %v6198 = vunpack.c.l.b16 %v6030
  %v6199 = vunpack.c.h.b16 %v6030
  %v6200 = vunpack.c.l.b16 %v6031
  %v6201 = vunpack.c.h.b16 %v6031
  %v6202 = vunpack.c.l.b16 %v6032
  %v6203 = vunpack.c.h.b16 %v6032
  %v6204 = vunpack.c.l.b16 %v6033
  %v6205 = vunpack.c.h.b16 %v6033
  %v6206 = vunpack.c.l.b16 %v6034
  %v6207 = vunpack.c.h.b16 %v6034
  %v6208 = vunpack.c.l.b16 %v6035
  %v6209 = vunpack.c.h.b16 %v6035
  %v6210 = vunpack.c.l.b16 %v6036
  %v6211 = vunpack.c.h.b16 %v6036
  %v6212 = vunpack.c.l.b16 %v6037
  %v6213 = vunpack.c.h.b16 %v6037
  %v6214 = vunpack.c.l.b16 %v6038
  %v6215 = vunpack.c.h.b16 %v6038
  %v6216 = vunpack.c.l.b16 %v6039
  %v6217 = vunpack.c.h.b16 %v6039
  %v6218 = vunpack.c.l.b16 %v6040
  %v6219 = vunpack.c.h.b16 %v6040
  %v6220 = vunpack.c.l.b16 %v6041
  %v6221 = vunpack.c.h.b16 %v6041
  %v6222 = vunpack.c.l.b16 %v6042
  %v6223 = vunpack.c.h.b16 %v6042
  %v6224 = vunpack.c.l.b16 %v6043
  %v6225 = vunpack.c.h.b16 %v6043
  %v6226 = vunpack.c.l.b16 %v6044
  %v6227 = vunpack.c.h.b16 %v6044
  %v6228 = vunpack.c.l.b16 %v6045
  %v6229 = vunpack.c.h.b16 %v6045
  %v6230 = vunpack.c.l.b16 %v6046
  %v6231 = vunpack.c.h.b16 %v6046
  %v6232 = vunpack.c.l.b16 %v6047
  %v6233 = vunpack.c.h.b16 %v6047
  %v6234 = vunpack.c.l.b16 %v6048
  %v6235 = vunpack.c.h.b16 %v6048
  %v6236 = vunpack.c.l.b16 %v6049
  %v6237 = vunpack.c.h.b16 %v6049
  %v6238 = vunpack.c.l.b16 %v6050
  %v6239 = vunpack.c.h.b16 %v6050
  %v6240 = vunpack.c.l.b16 %v6051
  %v6241 = vunpack.c.h.b16 %v6051
  %v6242 = vunpack.c.l.b16 %v6052
  %v6243 = vunpack.c.h.b16 %v6052
  %v6244 = vunpack.c.l.b16 %v6053
  %v6245 = vunpack.c.h.b16 %v6053
  %v6246 = vpack.c.b16 %v6122, %v6118
  %v6247 = vpack.c.b16 %v6123, %v6119
  %v6248 = vpack.c.b16 %v6124, %v6120
  %v6249 = vpack.c.b16 %v6125, %v6121
  %v6250 = vpack.c.b16 %v6130, %v6126
  %v6251 = vpack.c.b16 %v6131, %v6127
  %v6252 = vpack.c.b16 %v6132, %v6128
  %v6253 = vpack.c.b16 %v6133, %v6129
  %v6254 = vpack.c.b16 %v6138, %v6134
  %v6255 = vpack.c.b16 %v6139, %v6135
  %v6256 = vpack.c.b16 %v6140, %v6136
  %v6257 = vpack.c.b16 %v6141, %v6137
  %v6258 = vpack.c.b16 %v6146, %v6142
  %v6259 = vpack.c.b16 %v6147, %v6143
  %v6260 = vpack.c.b16 %v6148, %v6144
  %v6261 = vpack.c.b16 %v6149, %v6145
  %v6262 = vpack.c.b16 %v6154, %v6150
  %v6263 = vpack.c.b16 %v6155, %v6151
  %v6264 = vpack.c.b16 %v6156, %v6152
  %v6265 = vpack.c.b16 %v6157, %v6153
  %v6266 = vpack.c.b16 %v6162, %v6158
  %v6267 = vpack.c.b16 %v6163, %v6159
  %v6268 = vpack.c.b16 %v6164, %v6160
  %v6269 = vpack.c.b16 %v6165, %v6161
  %v6270 = vpack.c.b16 %v6170, %v6166
  %v6271 = vpack.c.b16 %v6171, %v6167
  %v6272 = vpack.c.b16 %v6172, %v6168
  %v6273 = vpack.c.b16 %v6173, %v6169
  %v6274 = vpack.c.b16 %v6178, %v6174
  %v6275 = vpack.c.b16 %v6179, %v6175
  %v6276 = vpack.c.b16 %v6180, %v6176
  %v6277 = vpack.c.b16 %v6181, %v6177
  %v6278 = vpack.c.b16 %v6186, %v6182
  %v6279 = vpack.c.b16 %v6187, %v6183
  %v6280 = vpack.c.b16 %v6188, %v6184
  %v6281 = vpack.c.b16 %v6189, %v6185
  %v6282 = vpack.c.b16 %v6194, %v6190
  %v6283 = vpack.c.b16 %v6195, %v6191
  %v6284 = vpack.c.b16 %v6196, %v6192
  %v6285 = vpack.c.b16 %v6197, %v6193
  %v6286 = vpack.c.b16 %v6202, %v6198
  %v6287 = vpack.c.b16 %v6203, %v6199
  %v6288 = vpack.c.b16 %v6204, %v6200
  %v6289 = vpack.c.b16 %v6205, %v6201
  %v6290 = vpack.c.b16 %v6210, %v6206
  %v6291 = vpack.c.b16 %v6211, %v6207
  %v6292 = vpack.c.b16 %v6212, %v6208
  %v6293 = vpack.c.b16 %v6213, %v6209
  %v6294 = vpack.c.b16 %v6218, %v6214
  %v6295 = vpack.c.b16 %v6219, %v6215
  %v6296 = vpack.c.b16 %v6220, %v6216
  %v6297 = vpack.c.b16 %v6221, %v6217
  %v6298 = vpack.c.b16 %v6226, %v6222
  %v6299 = vpack.c.b16 %v6227, %v6223
  %v6300 = vpack.c.b16 %v6228, %v6224
  %v6301 = vpack.c.b16 %v6229, %v6225
  %v6302 = vpack.c.b16 %v6234, %v6230
  %v6303 = vpack.c.b16 %v6235, %v6231
  %v6304 = vpack.c.b16 %v6236, %v6232
  %v6305 = vpack.c.b16 %v6237, %v6233
  %v6306 = vpack.c.b16 %v6242, %v6238
  %v6307 = vpack.c.b16 %v6243, %v6239
  %v6308 = vpack.c.b16 %v6244, %v6240
  %v6309 = vpack.c.b16 %v6245, %v6241
  %6374 = vmatprep.subr.bf16.mxu0 %v6275
  %6375 = vmatpush1.bf16.msra.mxu0 %v6274
  %6376 = vmatprep.subr.bf16.mxu0 %v6271
  %6377 = vmatpush1.bf16.msra.mxu0 %v6270
  %6378 = vmatprep.subr.bf16.mxu0 %v6267
  %6379 = vmatpush1.bf16.msra.mxu0 %v6266
  %6380 = vmatprep.subr.bf16.mxu0 %v6263
  %6381 = vmatpush1.bf16.msra.mxu0 %v6262
  %6382 = vmatprep.subr.bf16.mxu0 %v6259
  %6383 = vmatpush1.bf16.msra.mxu0 %v6258
  %6384 = vmatprep.subr.bf16.mxu0 %v6255
  %6385 = vmatpush1.bf16.msra.mxu0 %v6254
  %6386 = vmatprep.subr.bf16.mxu0 %v6251
  %6387 = vmatpush1.bf16.msra.mxu0 %v6250
  %6388 = vmatprep.subr.bf16.mxu0 %v6247
  %6389 = vmatpush1.bf16.msra.mxu0 %v6246
  %6390 = vmatprep.subr.bf16.mxu0 %v6307
  %6391 = vmatpush2.bf16.msra.mxu0 %v6306
  %6392 = vmatprep.subr.bf16.mxu0 %v6303
  %6393 = vmatpush2.bf16.msra.mxu0 %v6302
  %6394 = vmatprep.subr.bf16.mxu0 %v6299
  %6395 = vmatpush2.bf16.msra.mxu0 %v6298
  %6396 = vmatprep.subr.bf16.mxu0 %v6295
  %6397 = vmatpush2.bf16.msra.mxu0 %v6294
  %6398 = vmatprep.subr.bf16.mxu0 %v6291
  %6399 = vmatpush2.bf16.msra.mxu0 %v6290
  %6400 = vmatprep.subr.bf16.mxu0 %v6287
  %6401 = vmatpush2.bf16.msra.mxu0 %v6286
  %6402 = vmatprep.subr.bf16.mxu0 %v6283
  %6403 = vmatpush2.bf16.msra.mxu0 %v6282
  %6404 = vmatprep.subr.bf16.mxu0 %v6279
  %6405 = vmatpush2.bf16.msra.mxu0 %v6278
  %6406 = vmatprep.mubr.bf16.mxu0 %v5494
  %6407 = vmatmul.mubr.bf16.gmra.mxu0 %v5989
  %v6408 = vpop.f32.mrf.mxu0
  %v6409 = vadd.f32 %v102, %v6408
  %v6410 = vpop.f32.mrf.mxu0
  %v6411 = vadd.f32 %v106, %v6410
  %v6412 = vpop.f32.mrf.mxu0
  %v6413 = vpop.f32.mrf.mxu0
  %6414 = vdwg.mxu0
  %6415 = vmatprep.subr.bf16.mxu0 %v6277
  %6416 = vmatpush1.bf16.msra.mxu0 %v6276
  %6417 = vmatprep.subr.bf16.mxu0 %v6273
  %6418 = vmatpush1.bf16.msra.mxu0 %v6272
  %6419 = vmatprep.subr.bf16.mxu0 %v6269
  %6420 = vmatpush1.bf16.msra.mxu0 %v6268
  %6421 = vmatprep.subr.bf16.mxu0 %v6265
  %6422 = vmatpush1.bf16.msra.mxu0 %v6264
  %6423 = vmatprep.subr.bf16.mxu0 %v6261
  %6424 = vmatpush1.bf16.msra.mxu0 %v6260
  %6425 = vmatprep.subr.bf16.mxu0 %v6257
  %6426 = vmatpush1.bf16.msra.mxu0 %v6256
  %6427 = vmatprep.subr.bf16.mxu0 %v6253
  %6428 = vmatpush1.bf16.msra.mxu0 %v6252
  %6429 = vmatprep.subr.bf16.mxu0 %v6249
  %6430 = vmatpush1.bf16.msra.mxu0 %v6248
  %6431 = vmatprep.subr.bf16.mxu0 %v6309
  %6432 = vmatpush2.bf16.msra.mxu0 %v6308
  %6433 = vmatprep.subr.bf16.mxu0 %v6305
  %6434 = vmatpush2.bf16.msra.mxu0 %v6304
  %6435 = vmatprep.subr.bf16.mxu0 %v6301
  %6436 = vmatpush2.bf16.msra.mxu0 %v6300
  %6437 = vmatprep.subr.bf16.mxu0 %v6297
  %6438 = vmatpush2.bf16.msra.mxu0 %v6296
  %6439 = vmatprep.subr.bf16.mxu0 %v6293
  %6440 = vmatpush2.bf16.msra.mxu0 %v6292
  %6441 = vmatprep.subr.bf16.mxu0 %v6289
  %6442 = vmatpush2.bf16.msra.mxu0 %v6288
  %6443 = vmatprep.subr.bf16.mxu0 %v6285
  %6444 = vmatpush2.bf16.msra.mxu0 %v6284
  %6445 = vmatprep.subr.bf16.mxu0 %v6281
  %6446 = vmatpush2.bf16.msra.mxu0 %v6280
  %6447 = vmatprep.mubr.bf16.mxu0 %v5494
  %6448 = vmatmul.mubr.bf16.gmra.mxu0 %v5989
  %v6449 = vpop.f32.mrf.mxu0
  %v6450 = vadd.f32 %v110, %v6449
  %v6451 = vpop.f32.mrf.mxu0
  %v6452 = vadd.f32 %v114, %v6451
  %v6453 = vpop.f32.mrf.mxu0
  %v6454 = vpop.f32.mrf.mxu0
  %6455 = vdwg.mxu0
  %v6456 = vxor.u32 %v6409, 2147483648
  %v6457 = vmul.f32 %v6456, 1.442695
  %v6458 = vpow.pop %v6457
  %v6459 = vadd.f32 %v6458, 1.0
  %v6460 = vrcp.pop %v6459
  %v6461 = vmul.f32 1.0, %v6460
  %v6462 = vxor.u32 %v6411, 2147483648
  %v6463 = vmul.f32 %v6462, 1.442695
  %v6464 = vpow.pop %v6463
  %v6465 = vadd.f32 %v6464, 1.0
  %v6466 = vrcp.pop %v6465
  %v6467 = vmul.f32 1.0, %v6466
  %v6468 = vtanh.pop %v6450
  %v6469 = vxor.u32 %v6452, 2147483648
  %v6470 = vmul.f32 %v6469, 1.442695
  %v6471 = vpow.pop %v6470
  %v6472 = vadd.f32 %v6471, 1.0
  %v6473 = vrcp.pop %v6472
  %v6474 = vmul.f32 1.0, %v6473
  %v6475 = vmul.f32 %v6467, %v5491
  %v6476 = vmul.f32 %v6461, %v6468
  %v6477 = vadd.f32 %v6475, %v6476
  %v6478 = vtanh.pop %v6477
  %v6479 = vmul.f32 %v6474, %v6478
  %v6480 = vpack.c.bf16 %v6479, %v6479
  %v6481 = vpack.c.bf16 %v5985, %v5985
  %v6482 = vld [vmem:[%s5] sm:$0xff]
  %v6483 = vld [vmem:[%s5 + $0x8] sm:$0xff]
  %v6484 = vld [vmem:[%s5 + $0x10] sm:$0xff]
  %v6485 = vld [vmem:[%s5 + $0x18] sm:$0xff]
  %v6486 = vld [vmem:[%s5 + $0x20] sm:$0xff]
  %v6487 = vld [vmem:[%s5 + $0x28] sm:$0xff]
  %v6488 = vld [vmem:[%s5 + $0x30] sm:$0xff]
  %v6489 = vld [vmem:[%s5 + $0x38] sm:$0xff]
  %v6490 = vld [vmem:[%s5 + $0x40] sm:$0xff]
  %v6491 = vld [vmem:[%s5 + $0x48] sm:$0xff]
  %v6492 = vld [vmem:[%s5 + $0x50] sm:$0xff]
  %v6493 = vld [vmem:[%s5 + $0x58] sm:$0xff]
  %v6494 = vld [vmem:[%s5 + $0x60] sm:$0xff]
  %v6495 = vld [vmem:[%s5 + $0x68] sm:$0xff]
  %v6496 = vld [vmem:[%s5 + $0x70] sm:$0xff]
  %v6497 = vld [vmem:[%s5 + $0x78] sm:$0xff]
  %v6498 = vld [vmem:[%s5 + $0x80] sm:$0xff]
  %v6499 = vld [vmem:[%s5 + $0x88] sm:$0xff]
  %v6500 = vld [vmem:[%s5 + $0x90] sm:$0xff]
  %v6501 = vld [vmem:[%s5 + $0x98] sm:$0xff]
  %v6502 = vld [vmem:[%s5 + $0xa0] sm:$0xff]
  %v6503 = vld [vmem:[%s5 + $0xa8] sm:$0xff]
  %v6504 = vld [vmem:[%s5 + $0xb0] sm:$0xff]
  %v6505 = vld [vmem:[%s5 + $0xb8] sm:$0xff]
  %v6506 = vld [vmem:[%s5 + $0xc0] sm:$0xff]
  %v6507 = vld [vmem:[%s5 + $0xc8] sm:$0xff]
  %v6508 = vld [vmem:[%s5 + $0xd0] sm:$0xff]
  %v6509 = vld [vmem:[%s5 + $0xd8] sm:$0xff]
  %v6510 = vld [vmem:[%s5 + $0xe0] sm:$0xff]
  %v6511 = vld [vmem:[%s5 + $0xe8] sm:$0xff]
  %v6512 = vld [vmem:[%s5 + $0xf0] sm:$0xff]
  %v6513 = vld [vmem:[%s5 + $0xf8] sm:$0xff]
  %v6514 = vld [vmem:[%s5 + $0x100] sm:$0xff]
  %v6515 = vld [vmem:[%s5 + $0x108] sm:$0xff]
  %v6516 = vld [vmem:[%s5 + $0x110] sm:$0xff]
  %v6517 = vld [vmem:[%s5 + $0x118] sm:$0xff]
  %v6518 = vld [vmem:[%s5 + $0x120] sm:$0xff]
  %v6519 = vld [vmem:[%s5 + $0x128] sm:$0xff]
  %v6520 = vld [vmem:[%s5 + $0x130] sm:$0xff]
  %v6521 = vld [vmem:[%s5 + $0x138] sm:$0xff]
  %v6522 = vld [vmem:[%s5 + $0x140] sm:$0xff]
  %v6523 = vld [vmem:[%s5 + $0x148] sm:$0xff]
  %v6524 = vld [vmem:[%s5 + $0x150] sm:$0xff]
  %v6525 = vld [vmem:[%s5 + $0x158] sm:$0xff]
  %v6526 = vld [vmem:[%s5 + $0x160] sm:$0xff]
  %v6527 = vld [vmem:[%s5 + $0x168] sm:$0xff]
  %v6528 = vld [vmem:[%s5 + $0x170] sm:$0xff]
  %v6529 = vld [vmem:[%s5 + $0x178] sm:$0xff]
  %v6530 = vld [vmem:[%s5 + $0x180] sm:$0xff]
  %v6531 = vld [vmem:[%s5 + $0x188] sm:$0xff]
  %v6532 = vld [vmem:[%s5 + $0x190] sm:$0xff]
  %v6533 = vld [vmem:[%s5 + $0x198] sm:$0xff]
  %v6534 = vld [vmem:[%s5 + $0x1a0] sm:$0xff]
  %v6535 = vld [vmem:[%s5 + $0x1a8] sm:$0xff]
  %v6536 = vld [vmem:[%s5 + $0x1b0] sm:$0xff]
  %v6537 = vld [vmem:[%s5 + $0x1b8] sm:$0xff]
  %v6538 = vld [vmem:[%s5 + $0x1c0] sm:$0xff]
  %v6539 = vld [vmem:[%s5 + $0x1c8] sm:$0xff]
  %v6540 = vld [vmem:[%s5 + $0x1d0] sm:$0xff]
  %v6541 = vld [vmem:[%s5 + $0x1d8] sm:$0xff]
  %v6542 = vld [vmem:[%s5 + $0x1e0] sm:$0xff]
  %v6543 = vld [vmem:[%s5 + $0x1e8] sm:$0xff]
  %v6544 = vld [vmem:[%s5 + $0x1f0] sm:$0xff]
  %v6545 = vld [vmem:[%s5 + $0x1f8] sm:$0xff]
  %v6610 = vunpack.c.l.b16 %v6482
  %v6611 = vunpack.c.h.b16 %v6482
  %v6612 = vunpack.c.l.b16 %v6483
  %v6613 = vunpack.c.h.b16 %v6483
  %v6614 = vunpack.c.l.b16 %v6484
  %v6615 = vunpack.c.h.b16 %v6484
  %v6616 = vunpack.c.l.b16 %v6485
  %v6617 = vunpack.c.h.b16 %v6485
  %v6618 = vunpack.c.l.b16 %v6486
  %v6619 = vunpack.c.h.b16 %v6486
  %v6620 = vunpack.c.l.b16 %v6487
  %v6621 = vunpack.c.h.b16 %v6487
  %v6622 = vunpack.c.l.b16 %v6488
  %v6623 = vunpack.c.h.b16 %v6488
  %v6624 = vunpack.c.l.b16 %v6489
  %v6625 = vunpack.c.h.b16 %v6489
  %v6626 = vunpack.c.l.b16 %v6490
  %v6627 = vunpack.c.h.b16 %v6490
  %v6628 = vunpack.c.l.b16 %v6491
  %v6629 = vunpack.c.h.b16 %v6491
  %v6630 = vunpack.c.l.b16 %v6492
  %v6631 = vunpack.c.h.b16 %v6492
  %v6632 = vunpack.c.l.b16 %v6493
  %v6633 = vunpack.c.h.b16 %v6493
  %v6634 = vunpack.c.l.b16 %v6494
  %v6635 = vunpack.c.h.b16 %v6494
  %v6636 = vunpack.c.l.b16 %v6495
  %v6637 = vunpack.c.h.b16 %v6495
  %v6638 = vunpack.c.l.b16 %v6496
  %v6639 = vunpack.c.h.b16 %v6496
  %v6640 = vunpack.c.l.b16 %v6497
  %v6641 = vunpack.c.h.b16 %v6497
  %v6642 = vunpack.c.l.b16 %v6498
  %v6643 = vunpack.c.h.b16 %v6498
  %v6644 = vunpack.c.l.b16 %v6499
  %v6645 = vunpack.c.h.b16 %v6499
  %v6646 = vunpack.c.l.b16 %v6500
  %v6647 = vunpack.c.h.b16 %v6500
  %v6648 = vunpack.c.l.b16 %v6501
  %v6649 = vunpack.c.h.b16 %v6501
  %v6650 = vunpack.c.l.b16 %v6502
  %v6651 = vunpack.c.h.b16 %v6502
  %v6652 = vunpack.c.l.b16 %v6503
  %v6653 = vunpack.c.h.b16 %v6503
  %v6654 = vunpack.c.l.b16 %v6504
  %v6655 = vunpack.c.h.b16 %v6504
  %v6656 = vunpack.c.l.b16 %v6505
  %v6657 = vunpack.c.h.b16 %v6505
  %v6658 = vunpack.c.l.b16 %v6506
  %v6659 = vunpack.c.h.b16 %v6506
  %v6660 = vunpack.c.l.b16 %v6507
  %v6661 = vunpack.c.h.b16 %v6507
  %v6662 = vunpack.c.l.b16 %v6508
  %v6663 = vunpack.c.h.b16 %v6508
  %v6664 = vunpack.c.l.b16 %v6509
  %v6665 = vunpack.c.h.b16 %v6509
  %v6666 = vunpack.c.l.b16 %v6510
  %v6667 = vunpack.c.h.b16 %v6510
  %v6668 = vunpack.c.l.b16 %v6511
  %v6669 = vunpack.c.h.b16 %v6511
  %v6670 = vunpack.c.l.b16 %v6512
  %v6671 = vunpack.c.h.b16 %v6512
  %v6672 = vunpack.c.l.b16 %v6513
  %v6673 = vunpack.c.h.b16 %v6513
  %v6674 = vunpack.c.l.b16 %v6514
  %v6675 = vunpack.c.h.b16 %v6514
  %v6676 = vunpack.c.l.b16 %v6515
  %v6677 = vunpack.c.h.b16 %v6515
  %v6678 = vunpack.c.l.b16 %v6516
  %v6679 = vunpack.c.h.b16 %v6516
  %v6680 = vunpack.c.l.b16 %v6517
  %v6681 = vunpack.c.h.b16 %v6517
  %v6682 = vunpack.c.l.b16 %v6518
  %v6683 = vunpack.c.h.b16 %v6518
  %v6684 = vunpack.c.l.b16 %v6519
  %v6685 = vunpack.c.h.b16 %v6519
  %v6686 = vunpack.c.l.b16 %v6520
  %v6687 = vunpack.c.h.b16 %v6520
  %v6688 = vunpack.c.l.b16 %v6521
  %v6689 = vunpack.c.h.b16 %v6521
  %v6690 = vunpack.c.l.b16 %v6522
  %v6691 = vunpack.c.h.b16 %v6522
  %v6692 = vunpack.c.l.b16 %v6523
  %v6693 = vunpack.c.h.b16 %v6523
  %v6694 = vunpack.c.l.b16 %v6524
  %v6695 = vunpack.c.h.b16 %v6524
  %v6696 = vunpack.c.l.b16 %v6525
  %v6697 = vunpack.c.h.b16 %v6525
  %v6698 = vunpack.c.l.b16 %v6526
  %v6699 = vunpack.c.h.b16 %v6526
  %v6700 = vunpack.c.l.b16 %v6527
  %v6701 = vunpack.c.h.b16 %v6527
  %v6702 = vunpack.c.l.b16 %v6528
  %v6703 = vunpack.c.h.b16 %v6528
  %v6704 = vunpack.c.l.b16 %v6529
  %v6705 = vunpack.c.h.b16 %v6529
  %v6706 = vunpack.c.l.b16 %v6530
  %v6707 = vunpack.c.h.b16 %v6530
  %v6708 = vunpack.c.l.b16 %v6531
  %v6709 = vunpack.c.h.b16 %v6531
  %v6710 = vunpack.c.l.b16 %v6532
  %v6711 = vunpack.c.h.b16 %v6532
  %v6712 = vunpack.c.l.b16 %v6533
  %v6713 = vunpack.c.h.b16 %v6533
  %v6714 = vunpack.c.l.b16 %v6534
  %v6715 = vunpack.c.h.b16 %v6534
  %v6716 = vunpack.c.l.b16 %v6535
  %v6717 = vunpack.c.h.b16 %v6535
  %v6718 = vunpack.c.l.b16 %v6536
  %v6719 = vunpack.c.h.b16 %v6536
  %v6720 = vunpack.c.l.b16 %v6537
  %v6721 = vunpack.c.h.b16 %v6537
  %v6722 = vunpack.c.l.b16 %v6538
  %v6723 = vunpack.c.h.b16 %v6538
  %v6724 = vunpack.c.l.b16 %v6539
  %v6725 = vunpack.c.h.b16 %v6539
  %v6726 = vunpack.c.l.b16 %v6540
  %v6727 = vunpack.c.h.b16 %v6540
  %v6728 = vunpack.c.l.b16 %v6541
  %v6729 = vunpack.c.h.b16 %v6541
  %v6730 = vunpack.c.l.b16 %v6542
  %v6731 = vunpack.c.h.b16 %v6542
  %v6732 = vunpack.c.l.b16 %v6543
  %v6733 = vunpack.c.h.b16 %v6543
  %v6734 = vunpack.c.l.b16 %v6544
  %v6735 = vunpack.c.h.b16 %v6544
  %v6736 = vunpack.c.l.b16 %v6545
  %v6737 = vunpack.c.h.b16 %v6545
  %v6738 = vpack.c.b16 %v6614, %v6610
  %v6739 = vpack.c.b16 %v6615, %v6611
  %v6740 = vpack.c.b16 %v6616, %v6612
  %v6741 = vpack.c.b16 %v6617, %v6613
  %v6742 = vpack.c.b16 %v6622, %v6618
  %v6743 = vpack.c.b16 %v6623, %v6619
  %v6744 = vpack.c.b16 %v6624, %v6620
  %v6745 = vpack.c.b16 %v6625, %v6621
  %v6746 = vpack.c.b16 %v6630, %v6626
  %v6747 = vpack.c.b16 %v6631, %v6627
  %v6748 = vpack.c.b16 %v6632, %v6628
  %v6749 = vpack.c.b16 %v6633, %v6629
  %v6750 = vpack.c.b16 %v6638, %v6634
  %v6751 = vpack.c.b16 %v6639, %v6635
  %v6752 = vpack.c.b16 %v6640, %v6636
  %v6753 = vpack.c.b16 %v6641, %v6637
  %v6754 = vpack.c.b16 %v6646, %v6642
  %v6755 = vpack.c.b16 %v6647, %v6643
  %v6756 = vpack.c.b16 %v6648, %v6644
  %v6757 = vpack.c.b16 %v6649, %v6645
  %v6758 = vpack.c.b16 %v6654, %v6650
  %v6759 = vpack.c.b16 %v6655, %v6651
  %v6760 = vpack.c.b16 %v6656, %v6652
  %v6761 = vpack.c.b16 %v6657, %v6653
  %v6762 = vpack.c.b16 %v6662, %v6658
  %v6763 = vpack.c.b16 %v6663, %v6659
  %v6764 = vpack.c.b16 %v6664, %v6660
  %v6765 = vpack.c.b16 %v6665, %v6661
  %v6766 = vpack.c.b16 %v6670, %v6666
  %v6767 = vpack.c.b16 %v6671, %v6667
  %v6768 = vpack.c.b16 %v6672, %v6668
  %v6769 = vpack.c.b16 %v6673, %v6669
  %v6770 = vpack.c.b16 %v6678, %v6674
  %v6771 = vpack.c.b16 %v6679, %v6675
  %v6772 = vpack.c.b16 %v6680, %v6676
  %v6773 = vpack.c.b16 %v6681, %v6677
  %v6774 = vpack.c.b16 %v6686, %v6682
  %v6775 = vpack.c.b16 %v6687, %v6683
  %v6776 = vpack.c.b16 %v6688, %v6684
  %v6777 = vpack.c.b16 %v6689, %v6685
  %v6778 = vpack.c.b16 %v6694, %v6690
  %v6779 = vpack.c.b16 %v6695, %v6691
  %v6780 = vpack.c.b16 %v6696, %v6692
  %v6781 = vpack.c.b16 %v6697, %v6693
  %v6782 = vpack.c.b16 %v6702, %v6698
  %v6783 = vpack.c.b16 %v6703, %v6699
  %v6784 = vpack.c.b16 %v6704, %v6700
  %v6785 = vpack.c.b16 %v6705, %v6701
  %v6786 = vpack.c.b16 %v6710, %v6706
  %v6787 = vpack.c.b16 %v6711, %v6707
  %v6788 = vpack.c.b16 %v6712, %v6708
  %v6789 = vpack.c.b16 %v6713, %v6709
  %v6790 = vpack.c.b16 %v6718, %v6714
  %v6791 = vpack.c.b16 %v6719, %v6715
  %v6792 = vpack.c.b16 %v6720, %v6716
  %v6793 = vpack.c.b16 %v6721, %v6717
  %v6794 = vpack.c.b16 %v6726, %v6722
  %v6795 = vpack.c.b16 %v6727, %v6723
  %v6796 = vpack.c.b16 %v6728, %v6724
  %v6797 = vpack.c.b16 %v6729, %v6725
  %v6798 = vpack.c.b16 %v6734, %v6730
  %v6799 = vpack.c.b16 %v6735, %v6731
  %v6800 = vpack.c.b16 %v6736, %v6732
  %v6801 = vpack.c.b16 %v6737, %v6733
  %6866 = vmatprep.subr.bf16.mxu0 %v6767
  %6867 = vmatpush1.bf16.msra.mxu0 %v6766
  %6868 = vmatprep.subr.bf16.mxu0 %v6763
  %6869 = vmatpush1.bf16.msra.mxu0 %v6762
  %6870 = vmatprep.subr.bf16.mxu0 %v6759
  %6871 = vmatpush1.bf16.msra.mxu0 %v6758
  %6872 = vmatprep.subr.bf16.mxu0 %v6755
  %6873 = vmatpush1.bf16.msra.mxu0 %v6754
  %6874 = vmatprep.subr.bf16.mxu0 %v6751
  %6875 = vmatpush1.bf16.msra.mxu0 %v6750
  %6876 = vmatprep.subr.bf16.mxu0 %v6747
  %6877 = vmatpush1.bf16.msra.mxu0 %v6746
  %6878 = vmatprep.subr.bf16.mxu0 %v6743
  %6879 = vmatpush1.bf16.msra.mxu0 %v6742
  %6880 = vmatprep.subr.bf16.mxu0 %v6739
  %6881 = vmatpush1.bf16.msra.mxu0 %v6738
  %6882 = vmatprep.subr.bf16.mxu0 %v6799
  %6883 = vmatpush2.bf16.msra.mxu0 %v6798
  %6884 = vmatprep.subr.bf16.mxu0 %v6795
  %6885 = vmatpush2.bf16.msra.mxu0 %v6794
  %6886 = vmatprep.subr.bf16.mxu0 %v6791
  %6887 = vmatpush2.bf16.msra.mxu0 %v6790
  %6888 = vmatprep.subr.bf16.mxu0 %v6787
  %6889 = vmatpush2.bf16.msra.mxu0 %v6786
  %6890 = vmatprep.subr.bf16.mxu0 %v6783
  %6891 = vmatpush2.bf16.msra.mxu0 %v6782
  %6892 = vmatprep.subr.bf16.mxu0 %v6779
  %6893 = vmatpush2.bf16.msra.mxu0 %v6778
  %6894 = vmatprep.subr.bf16.mxu0 %v6775
  %6895 = vmatpush2.bf16.msra.mxu0 %v6774
  %6896 = vmatprep.subr.bf16.mxu0 %v6771
  %6897 = vmatpush2.bf16.msra.mxu0 %v6770
  %6898 = vmatprep.mubr.bf16.mxu0 %v6481
  %6899 = vmatmul.mubr.bf16.gmra.mxu0 %v6480
  %v6900 = vpop.f32.mrf.mxu0
  %v6901 = vadd.f32 %v614, %v6900
  %v6902 = vpop.f32.mrf.mxu0
  %v6903 = vadd.f32 %v618, %v6902
  %v6904 = vpop.f32.mrf.mxu0
  %v6905 = vpop.f32.mrf.mxu0
  %6906 = vdwg.mxu0
  %6907 = vmatprep.subr.bf16.mxu0 %v6769
  %6908 = vmatpush1.bf16.msra.mxu0 %v6768
  %6909 = vmatprep.subr.bf16.mxu0 %v6765
  %6910 = vmatpush1.bf16.msra.mxu0 %v6764
  %6911 = vmatprep.subr.bf16.mxu0 %v6761
  %6912 = vmatpush1.bf16.msra.mxu0 %v6760
  %6913 = vmatprep.subr.bf16.mxu0 %v6757
  %6914 = vmatpush1.bf16.msra.mxu0 %v6756
  %6915 = vmatprep.subr.bf16.mxu0 %v6753
  %6916 = vmatpush1.bf16.msra.mxu0 %v6752
  %6917 = vmatprep.subr.bf16.mxu0 %v6749
  %6918 = vmatpush1.bf16.msra.mxu0 %v6748
  %6919 = vmatprep.subr.bf16.mxu0 %v6745
  %6920 = vmatpush1.bf16.msra.mxu0 %v6744
  %6921 = vmatprep.subr.bf16.mxu0 %v6741
  %6922 = vmatpush1.bf16.msra.mxu0 %v6740
  %6923 = vmatprep.subr.bf16.mxu0 %v6801
  %6924 = vmatpush2.bf16.msra.mxu0 %v6800
  %6925 = vmatprep.subr.bf16.mxu0 %v6797
  %6926 = vmatpush2.bf16.msra.mxu0 %v6796
  %6927 = vmatprep.subr.bf16.mxu0 %v6793
  %6928 = vmatpush2.bf16.msra.mxu0 %v6792
  %6929 = vmatprep.subr.bf16.mxu0 %v6789
  %6930 = vmatpush2.bf16.msra.mxu0 %v6788
  %6931 = vmatprep.subr.bf16.mxu0 %v6785
  %6932 = vmatpush2.bf16.msra.mxu0 %v6784
  %6933 = vmatprep.subr.bf16.mxu0 %v6781
  %6934 = vmatpush2.bf16.msra.mxu0 %v6780
  %6935 = vmatprep.subr.bf16.mxu0 %v6777
  %6936 = vmatpush2.bf16.msra.mxu0 %v6776
  %6937 = vmatprep.subr.bf16.mxu0 %v6773
  %6938 = vmatpush2.bf16.msra.mxu0 %v6772
  %6939 = vmatprep.mubr.bf16.mxu0 %v6481
  %6940 = vmatmul.mubr.bf16.gmra.mxu0 %v6480
  %v6941 = vpop.f32.mrf.mxu0
  %v6942 = vadd.f32 %v622, %v6941
  %v6943 = vpop.f32.mrf.mxu0
  %v6944 = vadd.f32 %v626, %v6943
  %v6945 = vpop.f32.mrf.mxu0
  %v6946 = vpop.f32.mrf.mxu0
  %6947 = vdwg.mxu0
  %v6948 = vxor.u32 %v6901, 2147483648
  %v6949 = vmul.f32 %v6948, 1.442695
  %v6950 = vpow.pop %v6949
  %v6951 = vadd.f32 %v6950, 1.0
  %v6952 = vrcp.pop %v6951
  %v6953 = vmul.f32 1.0, %v6952
  %v6954 = vxor.u32 %v6903, 2147483648
  %v6955 = vmul.f32 %v6954, 1.442695
  %v6956 = vpow.pop %v6955
  %v6957 = vadd.f32 %v6956, 1.0
  %v6958 = vrcp.pop %v6957
  %v6959 = vmul.f32 1.0, %v6958
  %v6960 = vtanh.pop %v6942
  %v6961 = vxor.u32 %v6944, 2147483648
  %v6962 = vmul.f32 %v6961, 1.442695
  %v6963 = vpow.pop %v6962
  %v6964 = vadd.f32 %v6963, 1.0
  %v6965 = vrcp.pop %v6964
  %v6966 = vmul.f32 1.0, %v6965
  %v6967 = vmul.f32 %v6959, %v5983
  %v6968 = vmul.f32 %v6953, %v6960
  %v6969 = vadd.f32 %v6967, %v6968
  %v6970 = vtanh.pop %v6969
  %v6971 = vmul.f32 %v6966, %v6970
  %s6972 = scalar_lea.vmem %s7, 48
  %6973 = vst [vmem:[%s6972] sm:$0xff] %v6971
  %s6974 = scalar_lea.vmem %s0, 28
  %v6975 = vld [vmem:[%s6974] sm:$0xf]
  %v6976 = vld [vmem:[%s3] sm:$0xff]
  %v6977 = vld [vmem:[%s3 + $0x8] sm:$0xff]
  %v6978 = vld [vmem:[%s3 + $0x10] sm:$0xff]
  %v6979 = vld [vmem:[%s3 + $0x18] sm:$0xff]
  %v6980 = vld [vmem:[%s3 + $0x20] sm:$0xff]
  %v6981 = vld [vmem:[%s3 + $0x28] sm:$0xff]
  %v6982 = vld [vmem:[%s3 + $0x30] sm:$0xff]
  %v6983 = vld [vmem:[%s3 + $0x38] sm:$0xff]
  %v6984 = vld [vmem:[%s3 + $0x40] sm:$0xff]
  %v6985 = vld [vmem:[%s3 + $0x48] sm:$0xff]
  %v6986 = vld [vmem:[%s3 + $0x50] sm:$0xff]
  %v6987 = vld [vmem:[%s3 + $0x58] sm:$0xff]
  %v6988 = vld [vmem:[%s3 + $0x60] sm:$0xff]
  %v6989 = vld [vmem:[%s3 + $0x68] sm:$0xff]
  %v6990 = vld [vmem:[%s3 + $0x70] sm:$0xff]
  %v6991 = vld [vmem:[%s3 + $0x78] sm:$0xff]
  %v6992 = vld [vmem:[%s3 + $0x80] sm:$0xff]
  %v6993 = vld [vmem:[%s3 + $0x88] sm:$0xff]
  %v6994 = vld [vmem:[%s3 + $0x90] sm:$0xff]
  %v6995 = vld [vmem:[%s3 + $0x98] sm:$0xff]
  %v6996 = vld [vmem:[%s3 + $0xa0] sm:$0xff]
  %v6997 = vld [vmem:[%s3 + $0xa8] sm:$0xff]
  %v6998 = vld [vmem:[%s3 + $0xb0] sm:$0xff]
  %v6999 = vld [vmem:[%s3 + $0xb8] sm:$0xff]
  %v7000 = vld [vmem:[%s3 + $0xc0] sm:$0xff]
  %v7001 = vld [vmem:[%s3 + $0xc8] sm:$0xff]
  %v7002 = vld [vmem:[%s3 + $0xd0] sm:$0xff]
  %v7003 = vld [vmem:[%s3 + $0xd8] sm:$0xff]
  %v7004 = vld [vmem:[%s3 + $0xe0] sm:$0xff]
  %v7005 = vld [vmem:[%s3 + $0xe8] sm:$0xff]
  %v7006 = vld [vmem:[%s3 + $0xf0] sm:$0xff]
  %v7007 = vld [vmem:[%s3 + $0xf8] sm:$0xff]
  %v7008 = vld [vmem:[%s3 + $0x100] sm:$0xff]
  %v7009 = vld [vmem:[%s3 + $0x108] sm:$0xff]
  %v7010 = vld [vmem:[%s3 + $0x110] sm:$0xff]
  %v7011 = vld [vmem:[%s3 + $0x118] sm:$0xff]
  %v7012 = vld [vmem:[%s3 + $0x120] sm:$0xff]
  %v7013 = vld [vmem:[%s3 + $0x128] sm:$0xff]
  %v7014 = vld [vmem:[%s3 + $0x130] sm:$0xff]
  %v7015 = vld [vmem:[%s3 + $0x138] sm:$0xff]
  %v7016 = vld [vmem:[%s3 + $0x140] sm:$0xff]
  %v7017 = vld [vmem:[%s3 + $0x148] sm:$0xff]
  %v7018 = vld [vmem:[%s3 + $0x150] sm:$0xff]
  %v7019 = vld [vmem:[%s3 + $0x158] sm:$0xff]
  %v7020 = vld [vmem:[%s3 + $0x160] sm:$0xff]
  %v7021 = vld [vmem:[%s3 + $0x168] sm:$0xff]
  %v7022 = vld [vmem:[%s3 + $0x170] sm:$0xff]
  %v7023 = vld [vmem:[%s3 + $0x178] sm:$0xff]
  %v7024 = vld [vmem:[%s3 + $0x180] sm:$0xff]
  %v7025 = vld [vmem:[%s3 + $0x188] sm:$0xff]
  %v7026 = vld [vmem:[%s3 + $0x190] sm:$0xff]
  %v7027 = vld [vmem:[%s3 + $0x198] sm:$0xff]
  %v7028 = vld [vmem:[%s3 + $0x1a0] sm:$0xff]
  %v7029 = vld [vmem:[%s3 + $0x1a8] sm:$0xff]
  %v7030 = vld [vmem:[%s3 + $0x1b0] sm:$0xff]
  %v7031 = vld [vmem:[%s3 + $0x1b8] sm:$0xff]
  %v7032 = vld [vmem:[%s3 + $0x1c0] sm:$0xff]
  %v7033 = vld [vmem:[%s3 + $0x1c8] sm:$0xff]
  %v7034 = vld [vmem:[%s3 + $0x1d0] sm:$0xff]
  %v7035 = vld [vmem:[%s3 + $0x1d8] sm:$0xff]
  %v7036 = vld [vmem:[%s3 + $0x1e0] sm:$0xff]
  %v7037 = vld [vmem:[%s3 + $0x1e8] sm:$0xff]
  %v7038 = vld [vmem:[%s3 + $0x1f0] sm:$0xff]
  %v7039 = vld [vmem:[%s3 + $0x1f8] sm:$0xff]
  %v7104 = vunpack.c.l.b16 %v6976
  %v7105 = vunpack.c.h.b16 %v6976
  %v7106 = vunpack.c.l.b16 %v6977
  %v7107 = vunpack.c.h.b16 %v6977
  %v7108 = vunpack.c.l.b16 %v6978
  %v7109 = vunpack.c.h.b16 %v6978
  %v7110 = vunpack.c.l.b16 %v6979
  %v7111 = vunpack.c.h.b16 %v6979
  %v7112 = vunpack.c.l.b16 %v6980
  %v7113 = vunpack.c.h.b16 %v6980
  %v7114 = vunpack.c.l.b16 %v6981
  %v7115 = vunpack.c.h.b16 %v6981
  %v7116 = vunpack.c.l.b16 %v6982
  %v7117 = vunpack.c.h.b16 %v6982
  %v7118 = vunpack.c.l.b16 %v6983
  %v7119 = vunpack.c.h.b16 %v6983
  %v7120 = vunpack.c.l.b16 %v6984
  %v7121 = vunpack.c.h.b16 %v6984
  %v7122 = vunpack.c.l.b16 %v6985
  %v7123 = vunpack.c.h.b16 %v6985
  %v7124 = vunpack.c.l.b16 %v6986
  %v7125 = vunpack.c.h.b16 %v6986
  %v7126 = vunpack.c.l.b16 %v6987
  %v7127 = vunpack.c.h.b16 %v6987
  %v7128 = vunpack.c.l.b16 %v6988
  %v7129 = vunpack.c.h.b16 %v6988
  %v7130 = vunpack.c.l.b16 %v6989
  %v7131 = vunpack.c.h.b16 %v6989
  %v7132 = vunpack.c.l.b16 %v6990
  %v7133 = vunpack.c.h.b16 %v6990
  %v7134 = vunpack.c.l.b16 %v6991
  %v7135 = vunpack.c.h.b16 %v6991
  %v7136 = vunpack.c.l.b16 %v6992
  %v7137 = vunpack.c.h.b16 %v6992
  %v7138 = vunpack.c.l.b16 %v6993
  %v7139 = vunpack.c.h.b16 %v6993
  %v7140 = vunpack.c.l.b16 %v6994
  %v7141 = vunpack.c.h.b16 %v6994
  %v7142 = vunpack.c.l.b16 %v6995
  %v7143 = vunpack.c.h.b16 %v6995
  %v7144 = vunpack.c.l.b16 %v6996
  %v7145 = vunpack.c.h.b16 %v6996
  %v7146 = vunpack.c.l.b16 %v6997
  %v7147 = vunpack.c.h.b16 %v6997
  %v7148 = vunpack.c.l.b16 %v6998
  %v7149 = vunpack.c.h.b16 %v6998
  %v7150 = vunpack.c.l.b16 %v6999
  %v7151 = vunpack.c.h.b16 %v6999
  %v7152 = vunpack.c.l.b16 %v7000
  %v7153 = vunpack.c.h.b16 %v7000
  %v7154 = vunpack.c.l.b16 %v7001
  %v7155 = vunpack.c.h.b16 %v7001
  %v7156 = vunpack.c.l.b16 %v7002
  %v7157 = vunpack.c.h.b16 %v7002
  %v7158 = vunpack.c.l.b16 %v7003
  %v7159 = vunpack.c.h.b16 %v7003
  %v7160 = vunpack.c.l.b16 %v7004
  %v7161 = vunpack.c.h.b16 %v7004
  %v7162 = vunpack.c.l.b16 %v7005
  %v7163 = vunpack.c.h.b16 %v7005
  %v7164 = vunpack.c.l.b16 %v7006
  %v7165 = vunpack.c.h.b16 %v7006
  %v7166 = vunpack.c.l.b16 %v7007
  %v7167 = vunpack.c.h.b16 %v7007
  %v7168 = vunpack.c.l.b16 %v7008
  %v7169 = vunpack.c.h.b16 %v7008
  %v7170 = vunpack.c.l.b16 %v7009
  %v7171 = vunpack.c.h.b16 %v7009
  %v7172 = vunpack.c.l.b16 %v7010
  %v7173 = vunpack.c.h.b16 %v7010
  %v7174 = vunpack.c.l.b16 %v7011
  %v7175 = vunpack.c.h.b16 %v7011
  %v7176 = vunpack.c.l.b16 %v7012
  %v7177 = vunpack.c.h.b16 %v7012
  %v7178 = vunpack.c.l.b16 %v7013
  %v7179 = vunpack.c.h.b16 %v7013
  %v7180 = vunpack.c.l.b16 %v7014
  %v7181 = vunpack.c.h.b16 %v7014
  %v7182 = vunpack.c.l.b16 %v7015
  %v7183 = vunpack.c.h.b16 %v7015
  %v7184 = vunpack.c.l.b16 %v7016
  %v7185 = vunpack.c.h.b16 %v7016
  %v7186 = vunpack.c.l.b16 %v7017
  %v7187 = vunpack.c.h.b16 %v7017
  %v7188 = vunpack.c.l.b16 %v7018
  %v7189 = vunpack.c.h.b16 %v7018
  %v7190 = vunpack.c.l.b16 %v7019
  %v7191 = vunpack.c.h.b16 %v7019
  %v7192 = vunpack.c.l.b16 %v7020
  %v7193 = vunpack.c.h.b16 %v7020
  %v7194 = vunpack.c.l.b16 %v7021
  %v7195 = vunpack.c.h.b16 %v7021
  %v7196 = vunpack.c.l.b16 %v7022
  %v7197 = vunpack.c.h.b16 %v7022
  %v7198 = vunpack.c.l.b16 %v7023
  %v7199 = vunpack.c.h.b16 %v7023
  %v7200 = vunpack.c.l.b16 %v7024
  %v7201 = vunpack.c.h.b16 %v7024
  %v7202 = vunpack.c.l.b16 %v7025
  %v7203 = vunpack.c.h.b16 %v7025
  %v7204 = vunpack.c.l.b16 %v7026
  %v7205 = vunpack.c.h.b16 %v7026
  %v7206 = vunpack.c.l.b16 %v7027
  %v7207 = vunpack.c.h.b16 %v7027
  %v7208 = vunpack.c.l.b16 %v7028
  %v7209 = vunpack.c.h.b16 %v7028
  %v7210 = vunpack.c.l.b16 %v7029
  %v7211 = vunpack.c.h.b16 %v7029
  %v7212 = vunpack.c.l.b16 %v7030
  %v7213 = vunpack.c.h.b16 %v7030
  %v7214 = vunpack.c.l.b16 %v7031
  %v7215 = vunpack.c.h.b16 %v7031
  %v7216 = vunpack.c.l.b16 %v7032
  %v7217 = vunpack.c.h.b16 %v7032
  %v7218 = vunpack.c.l.b16 %v7033
  %v7219 = vunpack.c.h.b16 %v7033
  %v7220 = vunpack.c.l.b16 %v7034
  %v7221 = vunpack.c.h.b16 %v7034
  %v7222 = vunpack.c.l.b16 %v7035
  %v7223 = vunpack.c.h.b16 %v7035
  %v7224 = vunpack.c.l.b16 %v7036
  %v7225 = vunpack.c.h.b16 %v7036
  %v7226 = vunpack.c.l.b16 %v7037
  %v7227 = vunpack.c.h.b16 %v7037
  %v7228 = vunpack.c.l.b16 %v7038
  %v7229 = vunpack.c.h.b16 %v7038
  %v7230 = vunpack.c.l.b16 %v7039
  %v7231 = vunpack.c.h.b16 %v7039
  %v7232 = vpack.c.b16 %v7108, %v7104
  %v7233 = vpack.c.b16 %v7109, %v7105
  %v7234 = vpack.c.b16 %v7110, %v7106
  %v7235 = vpack.c.b16 %v7111, %v7107
  %v7236 = vpack.c.b16 %v7116, %v7112
  %v7237 = vpack.c.b16 %v7117, %v7113
  %v7238 = vpack.c.b16 %v7118, %v7114
  %v7239 = vpack.c.b16 %v7119, %v7115
  %v7240 = vpack.c.b16 %v7124, %v7120
  %v7241 = vpack.c.b16 %v7125, %v7121
  %v7242 = vpack.c.b16 %v7126, %v7122
  %v7243 = vpack.c.b16 %v7127, %v7123
  %v7244 = vpack.c.b16 %v7132, %v7128
  %v7245 = vpack.c.b16 %v7133, %v7129
  %v7246 = vpack.c.b16 %v7134, %v7130
  %v7247 = vpack.c.b16 %v7135, %v7131
  %v7248 = vpack.c.b16 %v7140, %v7136
  %v7249 = vpack.c.b16 %v7141, %v7137
  %v7250 = vpack.c.b16 %v7142, %v7138
  %v7251 = vpack.c.b16 %v7143, %v7139
  %v7252 = vpack.c.b16 %v7148, %v7144
  %v7253 = vpack.c.b16 %v7149, %v7145
  %v7254 = vpack.c.b16 %v7150, %v7146
  %v7255 = vpack.c.b16 %v7151, %v7147
  %v7256 = vpack.c.b16 %v7156, %v7152
  %v7257 = vpack.c.b16 %v7157, %v7153
  %v7258 = vpack.c.b16 %v7158, %v7154
  %v7259 = vpack.c.b16 %v7159, %v7155
  %v7260 = vpack.c.b16 %v7164, %v7160
  %v7261 = vpack.c.b16 %v7165, %v7161
  %v7262 = vpack.c.b16 %v7166, %v7162
  %v7263 = vpack.c.b16 %v7167, %v7163
  %v7264 = vpack.c.b16 %v7172, %v7168
  %v7265 = vpack.c.b16 %v7173, %v7169
  %v7266 = vpack.c.b16 %v7174, %v7170
  %v7267 = vpack.c.b16 %v7175, %v7171
  %v7268 = vpack.c.b16 %v7180, %v7176
  %v7269 = vpack.c.b16 %v7181, %v7177
  %v7270 = vpack.c.b16 %v7182, %v7178
  %v7271 = vpack.c.b16 %v7183, %v7179
  %v7272 = vpack.c.b16 %v7188, %v7184
  %v7273 = vpack.c.b16 %v7189, %v7185
  %v7274 = vpack.c.b16 %v7190, %v7186
  %v7275 = vpack.c.b16 %v7191, %v7187
  %v7276 = vpack.c.b16 %v7196, %v7192
  %v7277 = vpack.c.b16 %v7197, %v7193
  %v7278 = vpack.c.b16 %v7198, %v7194
  %v7279 = vpack.c.b16 %v7199, %v7195
  %v7280 = vpack.c.b16 %v7204, %v7200
  %v7281 = vpack.c.b16 %v7205, %v7201
  %v7282 = vpack.c.b16 %v7206, %v7202
  %v7283 = vpack.c.b16 %v7207, %v7203
  %v7284 = vpack.c.b16 %v7212, %v7208
  %v7285 = vpack.c.b16 %v7213, %v7209
  %v7286 = vpack.c.b16 %v7214, %v7210
  %v7287 = vpack.c.b16 %v7215, %v7211
  %v7288 = vpack.c.b16 %v7220, %v7216
  %v7289 = vpack.c.b16 %v7221, %v7217
  %v7290 = vpack.c.b16 %v7222, %v7218
  %v7291 = vpack.c.b16 %v7223, %v7219
  %v7292 = vpack.c.b16 %v7228, %v7224
  %v7293 = vpack.c.b16 %v7229, %v7225
  %v7294 = vpack.c.b16 %v7230, %v7226
  %v7295 = vpack.c.b16 %v7231, %v7227
  %7360 = vmatprep.subr.bf16.mxu0 %v7261
  %7361 = vmatpush1.bf16.msra.mxu0 %v7260
  %7362 = vmatprep.subr.bf16.mxu0 %v7257
  %7363 = vmatpush1.bf16.msra.mxu0 %v7256
  %7364 = vmatprep.subr.bf16.mxu0 %v7253
  %7365 = vmatpush1.bf16.msra.mxu0 %v7252
  %7366 = vmatprep.subr.bf16.mxu0 %v7249
  %7367 = vmatpush1.bf16.msra.mxu0 %v7248
  %7368 = vmatprep.subr.bf16.mxu0 %v7245
  %7369 = vmatpush1.bf16.msra.mxu0 %v7244
  %7370 = vmatprep.subr.bf16.mxu0 %v7241
  %7371 = vmatpush1.bf16.msra.mxu0 %v7240
  %7372 = vmatprep.subr.bf16.mxu0 %v7237
  %7373 = vmatpush1.bf16.msra.mxu0 %v7236
  %7374 = vmatprep.subr.bf16.mxu0 %v7233
  %7375 = vmatpush1.bf16.msra.mxu0 %v7232
  %7376 = vmatprep.subr.bf16.mxu0 %v7293
  %7377 = vmatpush2.bf16.msra.mxu0 %v7292
  %7378 = vmatprep.subr.bf16.mxu0 %v7289
  %7379 = vmatpush2.bf16.msra.mxu0 %v7288
  %7380 = vmatprep.subr.bf16.mxu0 %v7285
  %7381 = vmatpush2.bf16.msra.mxu0 %v7284
  %7382 = vmatprep.subr.bf16.mxu0 %v7281
  %7383 = vmatpush2.bf16.msra.mxu0 %v7280
  %7384 = vmatprep.subr.bf16.mxu0 %v7277
  %7385 = vmatpush2.bf16.msra.mxu0 %v7276
  %7386 = vmatprep.subr.bf16.mxu0 %v7273
  %7387 = vmatpush2.bf16.msra.mxu0 %v7272
  %7388 = vmatprep.subr.bf16.mxu0 %v7269
  %7389 = vmatpush2.bf16.msra.mxu0 %v7268
  %7390 = vmatprep.subr.bf16.mxu0 %v7265
  %7391 = vmatpush2.bf16.msra.mxu0 %v7264
  %7392 = vmatprep.mubr.bf16.mxu0 %v6480
  %7393 = vmatmul.mubr.bf16.gmra.mxu0 %v6975
  %v7394 = vpop.f32.mrf.mxu0
  %v7395 = vadd.f32 %v102, %v7394
  %v7396 = vpop.f32.mrf.mxu0
  %v7397 = vadd.f32 %v106, %v7396
  %v7398 = vpop.f32.mrf.mxu0
  %v7399 = vpop.f32.mrf.mxu0
  %7400 = vdwg.mxu0
  %7401 = vmatprep.subr.bf16.mxu0 %v7263
  %7402 = vmatpush1.bf16.msra.mxu0 %v7262
  %7403 = vmatprep.subr.bf16.mxu0 %v7259
  %7404 = vmatpush1.bf16.msra.mxu0 %v7258
  %7405 = vmatprep.subr.bf16.mxu0 %v7255
  %7406 = vmatpush1.bf16.msra.mxu0 %v7254
  %7407 = vmatprep.subr.bf16.mxu0 %v7251
  %7408 = vmatpush1.bf16.msra.mxu0 %v7250
  %7409 = vmatprep.subr.bf16.mxu0 %v7247
  %7410 = vmatpush1.bf16.msra.mxu0 %v7246
  %7411 = vmatprep.subr.bf16.mxu0 %v7243
  %7412 = vmatpush1.bf16.msra.mxu0 %v7242
  %7413 = vmatprep.subr.bf16.mxu0 %v7239
  %7414 = vmatpush1.bf16.msra.mxu0 %v7238
  %7415 = vmatprep.subr.bf16.mxu0 %v7235
  %7416 = vmatpush1.bf16.msra.mxu0 %v7234
  %7417 = vmatprep.subr.bf16.mxu0 %v7295
  %7418 = vmatpush2.bf16.msra.mxu0 %v7294
  %7419 = vmatprep.subr.bf16.mxu0 %v7291
  %7420 = vmatpush2.bf16.msra.mxu0 %v7290
  %7421 = vmatprep.subr.bf16.mxu0 %v7287
  %7422 = vmatpush2.bf16.msra.mxu0 %v7286
  %7423 = vmatprep.subr.bf16.mxu0 %v7283
  %7424 = vmatpush2.bf16.msra.mxu0 %v7282
  %7425 = vmatprep.subr.bf16.mxu0 %v7279
  %7426 = vmatpush2.bf16.msra.mxu0 %v7278
  %7427 = vmatprep.subr.bf16.mxu0 %v7275
  %7428 = vmatpush2.bf16.msra.mxu0 %v7274
  %7429 = vmatprep.subr.bf16.mxu0 %v7271
  %7430 = vmatpush2.bf16.msra.mxu0 %v7270
  %7431 = vmatprep.subr.bf16.mxu0 %v7267
  %7432 = vmatpush2.bf16.msra.mxu0 %v7266
  %7433 = vmatprep.mubr.bf16.mxu0 %v6480
  %7434 = vmatmul.mubr.bf16.gmra.mxu0 %v6975
  %v7435 = vpop.f32.mrf.mxu0
  %v7436 = vadd.f32 %v110, %v7435
  %v7437 = vpop.f32.mrf.mxu0
  %v7438 = vadd.f32 %v114, %v7437
  %v7439 = vpop.f32.mrf.mxu0
  %v7440 = vpop.f32.mrf.mxu0
  %7441 = vdwg.mxu0
  %v7442 = vxor.u32 %v7395, 2147483648
  %v7443 = vmul.f32 %v7442, 1.442695
  %v7444 = vpow.pop %v7443
  %v7445 = vadd.f32 %v7444, 1.0
  %v7446 = vrcp.pop %v7445
  %v7447 = vmul.f32 1.0, %v7446
  %v7448 = vxor.u32 %v7397, 2147483648
  %v7449 = vmul.f32 %v7448, 1.442695
  %v7450 = vpow.pop %v7449
  %v7451 = vadd.f32 %v7450, 1.0
  %v7452 = vrcp.pop %v7451
  %v7453 = vmul.f32 1.0, %v7452
  %v7454 = vtanh.pop %v7436
  %v7455 = vxor.u32 %v7438, 2147483648
  %v7456 = vmul.f32 %v7455, 1.442695
  %v7457 = vpow.pop %v7456
  %v7458 = vadd.f32 %v7457, 1.0
  %v7459 = vrcp.pop %v7458
  %v7460 = vmul.f32 1.0, %v7459
  %v7461 = vmul.f32 %v7453, %v6477
  %v7462 = vmul.f32 %v7447, %v7454
  %v7463 = vadd.f32 %v7461, %v7462
  %v7464 = vtanh.pop %v7463
  %v7465 = vmul.f32 %v7460, %v7464
  %v7466 = vpack.c.bf16 %v7465, %v7465
  %v7467 = vpack.c.bf16 %v6971, %v6971
  %v7468 = vld [vmem:[%s5] sm:$0xff]
  %v7469 = vld [vmem:[%s5 + $0x8] sm:$0xff]
  %v7470 = vld [vmem:[%s5 + $0x10] sm:$0xff]
  %v7471 = vld [vmem:[%s5 + $0x18] sm:$0xff]
  %v7472 = vld [vmem:[%s5 + $0x20] sm:$0xff]
  %v7473 = vld [vmem:[%s5 + $0x28] sm:$0xff]
  %v7474 = vld [vmem:[%s5 + $0x30] sm:$0xff]
  %v7475 = vld [vmem:[%s5 + $0x38] sm:$0xff]
  %v7476 = vld [vmem:[%s5 + $0x40] sm:$0xff]
  %v7477 = vld [vmem:[%s5 + $0x48] sm:$0xff]
  %v7478 = vld [vmem:[%s5 + $0x50] sm:$0xff]
  %v7479 = vld [vmem:[%s5 + $0x58] sm:$0xff]
  %v7480 = vld [vmem:[%s5 + $0x60] sm:$0xff]
  %v7481 = vld [vmem:[%s5 + $0x68] sm:$0xff]
  %v7482 = vld [vmem:[%s5 + $0x70] sm:$0xff]
  %v7483 = vld [vmem:[%s5 + $0x78] sm:$0xff]
  %v7484 = vld [vmem:[%s5 + $0x80] sm:$0xff]
  %v7485 = vld [vmem:[%s5 + $0x88] sm:$0xff]
  %v7486 = vld [vmem:[%s5 + $0x90] sm:$0xff]
  %v7487 = vld [vmem:[%s5 + $0x98] sm:$0xff]
  %v7488 = vld [vmem:[%s5 + $0xa0] sm:$0xff]
  %v7489 = vld [vmem:[%s5 + $0xa8] sm:$0xff]
  %v7490 = vld [vmem:[%s5 + $0xb0] sm:$0xff]
  %v7491 = vld [vmem:[%s5 + $0xb8] sm:$0xff]
  %v7492 = vld [vmem:[%s5 + $0xc0] sm:$0xff]
  %v7493 = vld [vmem:[%s5 + $0xc8] sm:$0xff]
  %v7494 = vld [vmem:[%s5 + $0xd0] sm:$0xff]
  %v7495 = vld [vmem:[%s5 + $0xd8] sm:$0xff]
  %v7496 = vld [vmem:[%s5 + $0xe0] sm:$0xff]
  %v7497 = vld [vmem:[%s5 + $0xe8] sm:$0xff]
  %v7498 = vld [vmem:[%s5 + $0xf0] sm:$0xff]
  %v7499 = vld [vmem:[%s5 + $0xf8] sm:$0xff]
  %v7500 = vld [vmem:[%s5 + $0x100] sm:$0xff]
  %v7501 = vld [vmem:[%s5 + $0x108] sm:$0xff]
  %v7502 = vld [vmem:[%s5 + $0x110] sm:$0xff]
  %v7503 = vld [vmem:[%s5 + $0x118] sm:$0xff]
  %v7504 = vld [vmem:[%s5 + $0x120] sm:$0xff]
  %v7505 = vld [vmem:[%s5 + $0x128] sm:$0xff]
  %v7506 = vld [vmem:[%s5 + $0x130] sm:$0xff]
  %v7507 = vld [vmem:[%s5 + $0x138] sm:$0xff]
  %v7508 = vld [vmem:[%s5 + $0x140] sm:$0xff]
  %v7509 = vld [vmem:[%s5 + $0x148] sm:$0xff]
  %v7510 = vld [vmem:[%s5 + $0x150] sm:$0xff]
  %v7511 = vld [vmem:[%s5 + $0x158] sm:$0xff]
  %v7512 = vld [vmem:[%s5 + $0x160] sm:$0xff]
  %v7513 = vld [vmem:[%s5 + $0x168] sm:$0xff]
  %v7514 = vld [vmem:[%s5 + $0x170] sm:$0xff]
  %v7515 = vld [vmem:[%s5 + $0x178] sm:$0xff]
  %v7516 = vld [vmem:[%s5 + $0x180] sm:$0xff]
  %v7517 = vld [vmem:[%s5 + $0x188] sm:$0xff]
  %v7518 = vld [vmem:[%s5 + $0x190] sm:$0xff]
  %v7519 = vld [vmem:[%s5 + $0x198] sm:$0xff]
  %v7520 = vld [vmem:[%s5 + $0x1a0] sm:$0xff]
  %v7521 = vld [vmem:[%s5 + $0x1a8] sm:$0xff]
  %v7522 = vld [vmem:[%s5 + $0x1b0] sm:$0xff]
  %v7523 = vld [vmem:[%s5 + $0x1b8] sm:$0xff]
  %v7524 = vld [vmem:[%s5 + $0x1c0] sm:$0xff]
  %v7525 = vld [vmem:[%s5 + $0x1c8] sm:$0xff]
  %v7526 = vld [vmem:[%s5 + $0x1d0] sm:$0xff]
  %v7527 = vld [vmem:[%s5 + $0x1d8] sm:$0xff]
  %v7528 = vld [vmem:[%s5 + $0x1e0] sm:$0xff]
  %v7529 = vld [vmem:[%s5 + $0x1e8] sm:$0xff]
  %v7530 = vld [vmem:[%s5 + $0x1f0] sm:$0xff]
  %v7531 = vld [vmem:[%s5 + $0x1f8] sm:$0xff]
  %v7596 = vunpack.c.l.b16 %v7468
  %v7597 = vunpack.c.h.b16 %v7468
  %v7598 = vunpack.c.l.b16 %v7469
  %v7599 = vunpack.c.h.b16 %v7469
  %v7600 = vunpack.c.l.b16 %v7470
  %v7601 = vunpack.c.h.b16 %v7470
  %v7602 = vunpack.c.l.b16 %v7471
  %v7603 = vunpack.c.h.b16 %v7471
  %v7604 = vunpack.c.l.b16 %v7472
  %v7605 = vunpack.c.h.b16 %v7472
  %v7606 = vunpack.c.l.b16 %v7473
  %v7607 = vunpack.c.h.b16 %v7473
  %v7608 = vunpack.c.l.b16 %v7474
  %v7609 = vunpack.c.h.b16 %v7474
  %v7610 = vunpack.c.l.b16 %v7475
  %v7611 = vunpack.c.h.b16 %v7475
  %v7612 = vunpack.c.l.b16 %v7476
  %v7613 = vunpack.c.h.b16 %v7476
  %v7614 = vunpack.c.l.b16 %v7477
  %v7615 = vunpack.c.h.b16 %v7477
  %v7616 = vunpack.c.l.b16 %v7478
  %v7617 = vunpack.c.h.b16 %v7478
  %v7618 = vunpack.c.l.b16 %v7479
  %v7619 = vunpack.c.h.b16 %v7479
  %v7620 = vunpack.c.l.b16 %v7480
  %v7621 = vunpack.c.h.b16 %v7480
  %v7622 = vunpack.c.l.b16 %v7481
  %v7623 = vunpack.c.h.b16 %v7481
  %v7624 = vunpack.c.l.b16 %v7482
  %v7625 = vunpack.c.h.b16 %v7482
  %v7626 = vunpack.c.l.b16 %v7483
  %v7627 = vunpack.c.h.b16 %v7483
  %v7628 = vunpack.c.l.b16 %v7484
  %v7629 = vunpack.c.h.b16 %v7484
  %v7630 = vunpack.c.l.b16 %v7485
  %v7631 = vunpack.c.h.b16 %v7485
  %v7632 = vunpack.c.l.b16 %v7486
  %v7633 = vunpack.c.h.b16 %v7486
  %v7634 = vunpack.c.l.b16 %v7487
  %v7635 = vunpack.c.h.b16 %v7487
  %v7636 = vunpack.c.l.b16 %v7488
  %v7637 = vunpack.c.h.b16 %v7488
  %v7638 = vunpack.c.l.b16 %v7489
  %v7639 = vunpack.c.h.b16 %v7489
  %v7640 = vunpack.c.l.b16 %v7490
  %v7641 = vunpack.c.h.b16 %v7490
  %v7642 = vunpack.c.l.b16 %v7491
  %v7643 = vunpack.c.h.b16 %v7491
  %v7644 = vunpack.c.l.b16 %v7492
  %v7645 = vunpack.c.h.b16 %v7492
  %v7646 = vunpack.c.l.b16 %v7493
  %v7647 = vunpack.c.h.b16 %v7493
  %v7648 = vunpack.c.l.b16 %v7494
  %v7649 = vunpack.c.h.b16 %v7494
  %v7650 = vunpack.c.l.b16 %v7495
  %v7651 = vunpack.c.h.b16 %v7495
  %v7652 = vunpack.c.l.b16 %v7496
  %v7653 = vunpack.c.h.b16 %v7496
  %v7654 = vunpack.c.l.b16 %v7497
  %v7655 = vunpack.c.h.b16 %v7497
  %v7656 = vunpack.c.l.b16 %v7498
  %v7657 = vunpack.c.h.b16 %v7498
  %v7658 = vunpack.c.l.b16 %v7499
  %v7659 = vunpack.c.h.b16 %v7499
  %v7660 = vunpack.c.l.b16 %v7500
  %v7661 = vunpack.c.h.b16 %v7500
  %v7662 = vunpack.c.l.b16 %v7501
  %v7663 = vunpack.c.h.b16 %v7501
  %v7664 = vunpack.c.l.b16 %v7502
  %v7665 = vunpack.c.h.b16 %v7502
  %v7666 = vunpack.c.l.b16 %v7503
  %v7667 = vunpack.c.h.b16 %v7503
  %v7668 = vunpack.c.l.b16 %v7504
  %v7669 = vunpack.c.h.b16 %v7504
  %v7670 = vunpack.c.l.b16 %v7505
  %v7671 = vunpack.c.h.b16 %v7505
  %v7672 = vunpack.c.l.b16 %v7506
  %v7673 = vunpack.c.h.b16 %v7506
  %v7674 = vunpack.c.l.b16 %v7507
  %v7675 = vunpack.c.h.b16 %v7507
  %v7676 = vunpack.c.l.b16 %v7508
  %v7677 = vunpack.c.h.b16 %v7508
  %v7678 = vunpack.c.l.b16 %v7509
  %v7679 = vunpack.c.h.b16 %v7509
  %v7680 = vunpack.c.l.b16 %v7510
  %v7681 = vunpack.c.h.b16 %v7510
  %v7682 = vunpack.c.l.b16 %v7511
  %v7683 = vunpack.c.h.b16 %v7511
  %v7684 = vunpack.c.l.b16 %v7512
  %v7685 = vunpack.c.h.b16 %v7512
  %v7686 = vunpack.c.l.b16 %v7513
  %v7687 = vunpack.c.h.b16 %v7513
  %v7688 = vunpack.c.l.b16 %v7514
  %v7689 = vunpack.c.h.b16 %v7514
  %v7690 = vunpack.c.l.b16 %v7515
  %v7691 = vunpack.c.h.b16 %v7515
  %v7692 = vunpack.c.l.b16 %v7516
  %v7693 = vunpack.c.h.b16 %v7516
  %v7694 = vunpack.c.l.b16 %v7517
  %v7695 = vunpack.c.h.b16 %v7517
  %v7696 = vunpack.c.l.b16 %v7518
  %v7697 = vunpack.c.h.b16 %v7518
  %v7698 = vunpack.c.l.b16 %v7519
  %v7699 = vunpack.c.h.b16 %v7519
  %v7700 = vunpack.c.l.b16 %v7520
  %v7701 = vunpack.c.h.b16 %v7520
  %v7702 = vunpack.c.l.b16 %v7521
  %v7703 = vunpack.c.h.b16 %v7521
  %v7704 = vunpack.c.l.b16 %v7522
  %v7705 = vunpack.c.h.b16 %v7522
  %v7706 = vunpack.c.l.b16 %v7523
  %v7707 = vunpack.c.h.b16 %v7523
  %v7708 = vunpack.c.l.b16 %v7524
  %v7709 = vunpack.c.h.b16 %v7524
  %v7710 = vunpack.c.l.b16 %v7525
  %v7711 = vunpack.c.h.b16 %v7525
  %v7712 = vunpack.c.l.b16 %v7526
  %v7713 = vunpack.c.h.b16 %v7526
  %v7714 = vunpack.c.l.b16 %v7527
  %v7715 = vunpack.c.h.b16 %v7527
  %v7716 = vunpack.c.l.b16 %v7528
  %v7717 = vunpack.c.h.b16 %v7528
  %v7718 = vunpack.c.l.b16 %v7529
  %v7719 = vunpack.c.h.b16 %v7529
  %v7720 = vunpack.c.l.b16 %v7530
  %v7721 = vunpack.c.h.b16 %v7530
  %v7722 = vunpack.c.l.b16 %v7531
  %v7723 = vunpack.c.h.b16 %v7531
  %v7724 = vpack.c.b16 %v7600, %v7596
  %v7725 = vpack.c.b16 %v7601, %v7597
  %v7726 = vpack.c.b16 %v7602, %v7598
  %v7727 = vpack.c.b16 %v7603, %v7599
  %v7728 = vpack.c.b16 %v7608, %v7604
  %v7729 = vpack.c.b16 %v7609, %v7605
  %v7730 = vpack.c.b16 %v7610, %v7606
  %v7731 = vpack.c.b16 %v7611, %v7607
  %v7732 = vpack.c.b16 %v7616, %v7612
  %v7733 = vpack.c.b16 %v7617, %v7613
  %v7734 = vpack.c.b16 %v7618, %v7614
  %v7735 = vpack.c.b16 %v7619, %v7615
  %v7736 = vpack.c.b16 %v7624, %v7620
  %v7737 = vpack.c.b16 %v7625, %v7621
  %v7738 = vpack.c.b16 %v7626, %v7622
  %v7739 = vpack.c.b16 %v7627, %v7623
  %v7740 = vpack.c.b16 %v7632, %v7628
  %v7741 = vpack.c.b16 %v7633, %v7629
  %v7742 = vpack.c.b16 %v7634, %v7630
  %v7743 = vpack.c.b16 %v7635, %v7631
  %v7744 = vpack.c.b16 %v7640, %v7636
  %v7745 = vpack.c.b16 %v7641, %v7637
  %v7746 = vpack.c.b16 %v7642, %v7638
  %v7747 = vpack.c.b16 %v7643, %v7639
  %v7748 = vpack.c.b16 %v7648, %v7644
  %v7749 = vpack.c.b16 %v7649, %v7645
  %v7750 = vpack.c.b16 %v7650, %v7646
  %v7751 = vpack.c.b16 %v7651, %v7647
  %v7752 = vpack.c.b16 %v7656, %v7652
  %v7753 = vpack.c.b16 %v7657, %v7653
  %v7754 = vpack.c.b16 %v7658, %v7654
  %v7755 = vpack.c.b16 %v7659, %v7655
  %v7756 = vpack.c.b16 %v7664, %v7660
  %v7757 = vpack.c.b16 %v7665, %v7661
  %v7758 = vpack.c.b16 %v7666, %v7662
  %v7759 = vpack.c.b16 %v7667, %v7663
  %v7760 = vpack.c.b16 %v7672, %v7668
  %v7761 = vpack.c.b16 %v7673, %v7669
  %v7762 = vpack.c.b16 %v7674, %v7670
  %v7763 = vpack.c.b16 %v7675, %v7671
  %v7764 = vpack.c.b16 %v7680, %v7676
  %v7765 = vpack.c.b16 %v7681, %v7677
  %v7766 = vpack.c.b16 %v7682, %v7678
  %v7767 = vpack.c.b16 %v7683, %v7679
  %v7768 = vpack.c.b16 %v7688, %v7684
  %v7769 = vpack.c.b16 %v7689, %v7685
  %v7770 = vpack.c.b16 %v7690, %v7686
  %v7771 = vpack.c.b16 %v7691, %v7687
  %v7772 = vpack.c.b16 %v7696, %v7692
  %v7773 = vpack.c.b16 %v7697, %v7693
  %v7774 = vpack.c.b16 %v7698, %v7694
  %v7775 = vpack.c.b16 %v7699, %v7695
  %v7776 = vpack.c.b16 %v7704, %v7700
  %v7777 = vpack.c.b16 %v7705, %v7701
  %v7778 = vpack.c.b16 %v7706, %v7702
  %v7779 = vpack.c.b16 %v7707, %v7703
  %v7780 = vpack.c.b16 %v7712, %v7708
  %v7781 = vpack.c.b16 %v7713, %v7709
  %v7782 = vpack.c.b16 %v7714, %v7710
  %v7783 = vpack.c.b16 %v7715, %v7711
  %v7784 = vpack.c.b16 %v7720, %v7716
  %v7785 = vpack.c.b16 %v7721, %v7717
  %v7786 = vpack.c.b16 %v7722, %v7718
  %v7787 = vpack.c.b16 %v7723, %v7719
  %7852 = vmatprep.subr.bf16.mxu0 %v7753
  %7853 = vmatpush1.bf16.msra.mxu0 %v7752
  %7854 = vmatprep.subr.bf16.mxu0 %v7749
  %7855 = vmatpush1.bf16.msra.mxu0 %v7748
  %7856 = vmatprep.subr.bf16.mxu0 %v7745
  %7857 = vmatpush1.bf16.msra.mxu0 %v7744
  %7858 = vmatprep.subr.bf16.mxu0 %v7741
  %7859 = vmatpush1.bf16.msra.mxu0 %v7740
  %7860 = vmatprep.subr.bf16.mxu0 %v7737
  %7861 = vmatpush1.bf16.msra.mxu0 %v7736
  %7862 = vmatprep.subr.bf16.mxu0 %v7733
  %7863 = vmatpush1.bf16.msra.mxu0 %v7732
  %7864 = vmatprep.subr.bf16.mxu0 %v7729
  %7865 = vmatpush1.bf16.msra.mxu0 %v7728
  %7866 = vmatprep.subr.bf16.mxu0 %v7725
  %7867 = vmatpush1.bf16.msra.mxu0 %v7724
  %7868 = vmatprep.subr.bf16.mxu0 %v7785
  %7869 = vmatpush2.bf16.msra.mxu0 %v7784
  %7870 = vmatprep.subr.bf16.mxu0 %v7781
  %7871 = vmatpush2.bf16.msra.mxu0 %v7780
  %7872 = vmatprep.subr.bf16.mxu0 %v7777
  %7873 = vmatpush2.bf16.msra.mxu0 %v7776
  %7874 = vmatprep.subr.bf16.mxu0 %v7773
  %7875 = vmatpush2.bf16.msra.mxu0 %v7772
  %7876 = vmatprep.subr.bf16.mxu0 %v7769
  %7877 = vmatpush2.bf16.msra.mxu0 %v7768
  %7878 = vmatprep.subr.bf16.mxu0 %v7765
  %7879 = vmatpush2.bf16.msra.mxu0 %v7764
  %7880 = vmatprep.subr.bf16.mxu0 %v7761
  %7881 = vmatpush2.bf16.msra.mxu0 %v7760
  %7882 = vmatprep.subr.bf16.mxu0 %v7757
  %7883 = vmatpush2.bf16.msra.mxu0 %v7756
  %7884 = vmatprep.mubr.bf16.mxu0 %v7467
  %7885 = vmatmul.mubr.bf16.gmra.mxu0 %v7466
  %v7886 = vpop.f32.mrf.mxu0
  %v7887 = vadd.f32 %v614, %v7886
  %v7888 = vpop.f32.mrf.mxu0
  %v7889 = vadd.f32 %v618, %v7888
  %v7890 = vpop.f32.mrf.mxu0
  %v7891 = vpop.f32.mrf.mxu0
  %7892 = vdwg.mxu0
  %7893 = vmatprep.subr.bf16.mxu0 %v7755
  %7894 = vmatpush1.bf16.msra.mxu0 %v7754
  %7895 = vmatprep.subr.bf16.mxu0 %v7751
  %7896 = vmatpush1.bf16.msra.mxu0 %v7750
  %7897 = vmatprep.subr.bf16.mxu0 %v7747
  %7898 = vmatpush1.bf16.msra.mxu0 %v7746
  %7899 = vmatprep.subr.bf16.mxu0 %v7743
  %7900 = vmatpush1.bf16.msra.mxu0 %v7742
  %7901 = vmatprep.subr.bf16.mxu0 %v7739
  %7902 = vmatpush1.bf16.msra.mxu0 %v7738
  %7903 = vmatprep.subr.bf16.mxu0 %v7735
  %7904 = vmatpush1.bf16.msra.mxu0 %v7734
  %7905 = vmatprep.subr.bf16.mxu0 %v7731
  %7906 = vmatpush1.bf16.msra.mxu0 %v7730
  %7907 = vmatprep.subr.bf16.mxu0 %v7727
  %7908 = vmatpush1.bf16.msra.mxu0 %v7726
  %7909 = vmatprep.subr.bf16.mxu0 %v7787
  %7910 = vmatpush2.bf16.msra.mxu0 %v7786
  %7911 = vmatprep.subr.bf16.mxu0 %v7783
  %7912 = vmatpush2.bf16.msra.mxu0 %v7782
  %7913 = vmatprep.subr.bf16.mxu0 %v7779
  %7914 = vmatpush2.bf16.msra.mxu0 %v7778
  %7915 = vmatprep.subr.bf16.mxu0 %v7775
  %7916 = vmatpush2.bf16.msra.mxu0 %v7774
  %7917 = vmatprep.subr.bf16.mxu0 %v7771
  %7918 = vmatpush2.bf16.msra.mxu0 %v7770
  %7919 = vmatprep.subr.bf16.mxu0 %v7767
  %7920 = vmatpush2.bf16.msra.mxu0 %v7766
  %7921 = vmatprep.subr.bf16.mxu0 %v7763
  %7922 = vmatpush2.bf16.msra.mxu0 %v7762
  %7923 = vmatprep.subr.bf16.mxu0 %v7759
  %7924 = vmatpush2.bf16.msra.mxu0 %v7758
  %7925 = vmatprep.mubr.bf16.mxu0 %v7467
  %7926 = vmatmul.mubr.bf16.gmra.mxu0 %v7466
  %v7927 = vpop.f32.mrf.mxu0
  %v7928 = vadd.f32 %v622, %v7927
  %v7929 = vpop.f32.mrf.mxu0
  %v7930 = vadd.f32 %v626, %v7929
  %v7931 = vpop.f32.mrf.mxu0
  %v7932 = vpop.f32.mrf.mxu0
  %7933 = vdwg.mxu0
  %v7934 = vxor.u32 %v7887, 2147483648
  %v7935 = vmul.f32 %v7934, 1.442695
  %v7936 = vpow.pop %v7935
  %v7937 = vadd.f32 %v7936, 1.0
  %v7938 = vrcp.pop %v7937
  %v7939 = vmul.f32 1.0, %v7938
  %v7940 = vxor.u32 %v7889, 2147483648
  %v7941 = vmul.f32 %v7940, 1.442695
  %v7942 = vpow.pop %v7941
  %v7943 = vadd.f32 %v7942, 1.0
  %v7944 = vrcp.pop %v7943
  %v7945 = vmul.f32 1.0, %v7944
  %v7946 = vtanh.pop %v7928
  %v7947 = vxor.u32 %v7930, 2147483648
  %v7948 = vmul.f32 %v7947, 1.442695
  %v7949 = vpow.pop %v7948
  %v7950 = vadd.f32 %v7949, 1.0
  %v7951 = vrcp.pop %v7950
  %v7952 = vmul.f32 1.0, %v7951
  %v7953 = vmul.f32 %v7945, %v6969
  %v7954 = vmul.f32 %v7939, %v7946
  %v7955 = vadd.f32 %v7953, %v7954
  %v7956 = vtanh.pop %v7955
  %v7957 = vmul.f32 %v7952, %v7956
  %s7958 = scalar_lea.vmem %s7, 56
  %7959 = vst [vmem:[%s7958] sm:$0xff] %v7957
  %7960 = vst [vmem:[%s8] sm:$0xff] %v7955
  // Predicated region
  $region30: #{_lambda_.1} parent=0 // pred_check
    _
  $region31: #{_lambda_.1} parent=0 // pred_check_branch
    %7962 = sbr.rel (0) target = $region33
  $region32: #{_lambda_.1} parent=0 // pred_region
    _
  $region33: #{_lambda_.1} parent=0 // pred_fallthru
    _
  // Predicated region
  $region34: #{_lambda_.1} parent=0 // pred_check
    _
  $region35: #{_lambda_.1} parent=0 // pred_check_branch
    %7964 = sbr.rel (0) target = $region37
  $region36: #{_lambda_.1} parent=0 // pred_region
    _
  $region37: #{_lambda_.1} parent=0 // pred_fallthru
    _
  // Predicated region
  $region38: #{_lambda_.1} parent=0 // pred_check
    _
  $region39: #{_lambda_.1} parent=0 // pred_check_branch
    %7966 = sbr.rel (0) target = $region41
  $region40: #{_lambda_.1} parent=0 // pred_region
    _
  $region41: #{_lambda_.1} parent=0 // pred_fallthru
    _
  // Predicated region
  $region42: #{_lambda_.1} parent=0 // pred_check
    _
  $region43: #{_lambda_.1} parent=0 // pred_check_branch
    %7968 = sbr.rel (0) target = $region45
  $region44: #{_lambda_.1} parent=0 // pred_region
    _
  $region45: #{_lambda_.1} parent=0 // pred_fallthru
    _

</llo_original>
